<compile_context>
chip_gen: v5e
topology: v5e:2x2
jax: 0.10.0
libtpu: 0.0.40
codegen_flags: <defaults>
</compile_context>

<pallas_src>
import functools

import jax
import jax.numpy as jnp
from jax import lax
from jax.experimental import pallas as pl
from jax.experimental.pallas import tpu as pltpu

K = 3                       # 3x3 kernels everywhere
NTAP = K * K
CIN_PAD = 8                 # layer-1 input channels padded 1 -> 8 only
# Set to jnp.bfloat16 on v6e/v7x for large problem sizes (accumulation stays
# f32 either way).  f32 keeps the reference check exact; at 16x16 the model is
# latency-bound, not MXU-bound, so f32 costs nothing here.
COMPUTE_DTYPE = jnp.float32


# ------------------------------ fused kernel ------------------------------ #
def _fused_wave_unet_kernel(x_ref, w1_ref, b1_ref, w2_ref, b2_ref,
                            w3_ref, b3_ref, w4_ref, b4_ref,
                            o_ref, a1_ref, a2_ref, a3_ref, *, H, W):
    """One batch element: 4 fused conv layers, activations stay in VMEM.

    x_ref : (1, H+2, W+2, CIN_PAD)   spatially pre-padded input (ch 0 real)
    w*_ref: per-layer weights flattened over the 9 taps, (9, Cin, Cout)-style
    b*_ref: biases as (1, Cout)
    o_ref : (1, H*W, 1)              single real output channel
    a*_ref: VMEM scratch (H+2, W+2, C) holding inter-layer activations + halo
    """
    HW = H * W
    cd = COMPUTE_DTYPE
    f32 = jnp.float32

    # Zero the scratch buffers so the spatial halo reads as zeros ("same"
    # padding); the interiors are fully overwritten below.
    a1_ref[...] = jnp.zeros_like(a1_ref)
    a2_ref[...] = jnp.zeros_like(a2_ref)
    a3_ref[...] = jnp.zeros_like(a3_ref)

    # ---- layer 1: Conv2d(1 -> 64) + ReLU  (Cin padded to 8) --------------- #
    acc = jnp.zeros((HW, 64), f32)
    for t in range(NTAP):
        kh, kw = divmod(t, K)
        xs = x_ref[0, kh:kh + H, kw:kw + W, :].reshape(HW, CIN_PAD)
        acc += jnp.dot(xs.astype(cd), w1_ref[t].astype(cd),
                       preferred_element_type=f32)
    acc = jnp.maximum(acc + b1_ref[...], 0.0)
    a1_ref[1:H + 1, 1:W + 1, :] = acc.reshape(H, W, 64)

    # ---- layer 2: Conv2d(64 -> 128) + ReLU --------------------------------- #
    acc = jnp.zeros((HW, 128), f32)
    for t in range(NTAP):
        kh, kw = divmod(t, K)
        xs = a1_ref[kh:kh + H, kw:kw + W, :].reshape(HW, 64)
        acc += jnp.dot(xs.astype(cd), w2_ref[t].astype(cd),
                       preferred_element_type=f32)
    acc = jnp.maximum(acc + b2_ref[...], 0.0)
    a2_ref[1:H + 1, 1:W + 1, :] = acc.reshape(H, W, 128)

    # ---- layer 3: ConvTranspose2d(128 -> 64) + ReLU (as flipped conv) ------ #
    acc = jnp.zeros((HW, 64), f32)
    for t in range(NTAP):
        kh, kw = divmod(t, K)
        xs = a2_ref[kh:kh + H, kw:kw + W, :].reshape(HW, 128)
        acc += jnp.dot(xs.astype(cd), w3_ref[t].astype(cd),
                       preferred_element_type=f32)
    acc = jnp.maximum(acc + b3_ref[...], 0.0)
    a3_ref[1:H + 1, 1:W + 1, :] = acc.reshape(H, W, 64)

    # ---- layer 4: ConvTranspose2d(64 -> 1), no ReLU ------------------------ #
    # Cout == 1: elementwise multiply-accumulate over taps on the VPU, then a
    # single cross-lane reduction; only the real output channel is stored.
    acc = jnp.zeros((HW, 64), f32)
    for t in range(NTAP):
        kh, kw = divmod(t, K)
        xs = a3_ref[kh:kh + H, kw:kw + W, :].reshape(HW, 64)
        acc += xs * w4_ref[t:t + 1, :]
    out = jnp.sum(acc, axis=-1, keepdims=True) + b4_ref[...]     # (HW, 1)
    o_ref[0] = out.astype(o_ref.dtype)


# ------------------------------ forward pass ------------------------------- #
def wave_unet_forward(x_nchw, packed):
    """Pallas forward.  x_nchw: (N,1,H,W) f32 -> (N,1,H,W) f32."""
    w1p, b1p, w2p, b2p, w3p, b3p, w4p, b4p = packed
    N, _, H, W = x_nchw.shape
    HW = H * W
    # NCHW -> NHWC, add the spatial halo, pad the single channel to CIN_PAD.
    xp = jnp.pad(jnp.transpose(x_nchw, (0, 2, 3, 1)),
                 ((0, 0), (1, 1), (1, 1), (0, CIN_PAD - 1)))

    kernel = functools.partial(_fused_wave_unet_kernel, H=H, W=W)
    out = pl.pallas_call(
        kernel,
        out_shape=jax.ShapeDtypeStruct((N, HW, 1), jnp.float32),
        grid_spec=pltpu.PrefetchScalarGridSpec(
            num_scalar_prefetch=0,
            grid=(N,),
            in_specs=[
                pl.BlockSpec((1, H + 2, W + 2, CIN_PAD), lambda n: (n, 0, 0, 0)),
                pl.BlockSpec((NTAP, CIN_PAD, 64), lambda n: (0, 0, 0)),
                pl.BlockSpec((1, 64), lambda n: (0, 0)),
                pl.BlockSpec((NTAP, 64, 128), lambda n: (0, 0, 0)),
                pl.BlockSpec((1, 128), lambda n: (0, 0)),
                pl.BlockSpec((NTAP, 128, 64), lambda n: (0, 0, 0)),
                pl.BlockSpec((1, 64), lambda n: (0, 0)),
                pl.BlockSpec((NTAP, 64), lambda n: (0, 0)),
                pl.BlockSpec((1, 1), lambda n: (0, 0)),
            ],
            out_specs=pl.BlockSpec((1, HW, 1), lambda n: (n, 0, 0)),
            scratch_shapes=[
                pltpu.VMEM((H + 2, W + 2, 64), jnp.float32),
                pltpu.VMEM((H + 2, W + 2, 128), jnp.float32),
                pltpu.VMEM((H + 2, W + 2, 64), jnp.float32),
            ],
        ),
        compiler_params=pltpu.CompilerParams(
            dimension_semantics=("parallel",)),
    )(xp, w1p, b1p, w2p, b2p, w3p, b3p, w4p, b4p)
    return out.reshape(N, 1, H, W)


# --------------------------- parameter handling ---------------------------- #
def _conv_to_hwio(w):
    """Conv2d weight (Cout, Cin, K, K) -> HWIO (K, K, Cin, Cout)."""
    return jnp.transpose(w, (2, 3, 1, 0))


def _convT_to_conv_hwio(w_t):
    """ConvTranspose2d weight (Cin, Cout, K, K) -> equivalent same-conv HWIO."""
    return jnp.transpose(w_t[:, :, ::-1, ::-1], (2, 3, 0, 1))


def init_params(key):
    """Deterministic synthetic parameters matching WaveUNet's shapes,
    as a list of (HWIO weight, bias, apply_relu)."""
    ks = jax.random.split(key, 8)
    s = 0.05
    w1 = jax.random.normal(ks[0], (64, 1, K, K), jnp.float32) * s      # Conv2d
    b1 = jax.random.normal(ks[1], (64,), jnp.float32) * s
    w2 = jax.random.normal(ks[2], (128, 64, K, K), jnp.float32) * s    # Conv2d
    b2 = jax.random.normal(ks[3], (128,), jnp.float32) * s
    w3 = jax.random.normal(ks[4], (128, 64, K, K), jnp.float32) * s    # ConvT
    b3 = jax.random.normal(ks[5], (64,), jnp.float32) * s
    w4 = jax.random.normal(ks[6], (64, 1, K, K), jnp.float32) * s      # ConvT
    b4 = jax.random.normal(ks[7], (1,), jnp.float32) * s
    return [
        (_conv_to_hwio(w1), b1, True),
        (_conv_to_hwio(w2), b2, True),
        (_convT_to_conv_hwio(w3), b3, True),
        (_convT_to_conv_hwio(w4), b4, False),
    ]


def pack_params(layers):
    """One-time packing hoisted out of the forward path: flatten the 3x3 taps
    and pad only layer-1's single input channel to CIN_PAD."""
    (w1, b1, _), (w2, b2, _), (w3, b3, _), (w4, b4, _) = layers
    w1p = jnp.pad(w1, ((0, 0), (0, 0), (0, CIN_PAD - 1), (0, 0))
                  ).reshape(NTAP, CIN_PAD, 64)
    w2p = w2.reshape(NTAP, 64, 128)
    w3p = w3.reshape(NTAP, 128, 64)
    w4p = w4.reshape(NTAP, 64)                       # Cout == 1 squeezed
    return (w1p, b1.reshape(1, 64), w2p, b2.reshape(1, 128),
            w3p, b3.reshape(1, 64), w4p, b4.reshape(1, 1))


# ------------------------------- reference --------------------------------- #
def wave_unet_reference(x_nchw, layers):
    """Pure-JAX f32 reference for verification."""
    x = jnp.transpose(x_nchw, (0, 2, 3, 1))
    for w_hwio, b, relu in layers:
        x = lax.conv_general_dilated(
            x, w_hwio, window_strides=(1, 1), padding="SAME",
            dimension_numbers=("NHWC", "HWIO", "NHWC")) + b
        if relu:
            x = jnp.maximum(x, 0.0)
    return jnp.transpose(x, (0, 3, 1, 2))


# ---------------------------------- main ----------------------------------- #
if __name__ == "__main__":
    key = jax.random.PRNGKey(0)
    k_x, k_p = jax.random.split(key)

    N, C, H, W = 2, 1, 16, 16
    x = jax.random.normal(k_x, (N, C, H, W), jnp.float32)

    layers = init_params(k_p)
    packed = pack_params(layers)          # hoisted: done once, not per forward

    fwd = jax.jit(wave_unet_forward)
    out = jax.block_until_ready(fwd(x, packed))

    assert out.shape == (N, 1, H, W), out.shape
    ref = jax.block_until_ready(wave_unet_reference(x, layers))
    if not jnp.allclose(out, ref, atol=1e-4, rtol=1e-4):
        raise AssertionError("Pallas WaveUNet output mismatch vs reference")

    print("KERNEL_OK")
</pallas_src>

<mosaic_0001>
module attributes {stable_mosaic.version = 11 : i64} {
  func.func @_fused_wave_unet_kernel(%arg0: i32, %arg1: memref<1x18x18x8xf32, #tpu.memory_space<vmem>>, %arg2: memref<9x8x64xf32, #tpu.memory_space<vmem>>, %arg3: memref<1x64xf32, #tpu.memory_space<vmem>>, %arg4: memref<9x64x128xf32, #tpu.memory_space<vmem>>, %arg5: memref<1x128xf32, #tpu.memory_space<vmem>>, %arg6: memref<9x128x64xf32, #tpu.memory_space<vmem>>, %arg7: memref<1x64xf32, #tpu.memory_space<vmem>>, %arg8: memref<9x64xf32, #tpu.memory_space<vmem>>, %arg9: memref<1x1xf32, #tpu.memory_space<vmem>>, %arg10: memref<1x256x1xf32, #tpu.memory_space<vmem>>, %arg11: memref<18x18x64xf32, #tpu.memory_space<vmem>>, %arg12: memref<18x18x128xf32, #tpu.memory_space<vmem>>, %arg13: memref<18x18x64xf32, #tpu.memory_space<vmem>>) attributes {dimension_semantics = [#tpu.dimension_semantics<parallel>], iteration_bounds = array<i64: 2>, scalar_prefetch = 0 : i64, scratch_operands = 3 : i64, tpu.core_type = #tpu.core_type<tc>, window_params = [{transform_indices = @transform_0, window_bounds = array<i64: 1, 18, 18, 8>}, {pipeline_mode = #tpu.pipeline_mode<synchronous>, transform_indices = @transform_1, window_bounds = array<i64: 9, 8, 64>}, {pipeline_mode = #tpu.pipeline_mode<synchronous>, transform_indices = @transform_2, window_bounds = array<i64: 1, 64>}, {pipeline_mode = #tpu.pipeline_mode<synchronous>, transform_indices = @transform_3, window_bounds = array<i64: 9, 64, 128>}, {pipeline_mode = #tpu.pipeline_mode<synchronous>, transform_indices = @transform_4, window_bounds = array<i64: 1, 128>}, {pipeline_mode = #tpu.pipeline_mode<synchronous>, transform_indices = @transform_5, window_bounds = array<i64: 9, 128, 64>}, {pipeline_mode = #tpu.pipeline_mode<synchronous>, transform_indices = @transform_6, window_bounds = array<i64: 1, 64>}, {pipeline_mode = #tpu.pipeline_mode<synchronous>, transform_indices = @transform_7, window_bounds = array<i64: 9, 64>}, {pipeline_mode = #tpu.pipeline_mode<synchronous>, transform_indices = @transform_8, window_bounds = array<i64: 1, 1>}, {transform_indices = @transform_9, window_bounds = array<i64: 1, 256, 1>}]} {
    %cst = arith.constant 0.000000e+00 : f32
    %0 = vector.broadcast %cst : f32 to vector<18x18x64xf32>
    %c0 = arith.constant 0 : index
    %c0_0 = arith.constant 0 : index
    %c0_1 = arith.constant 0 : index
    %1 = vector.load %arg11[%c0, %c0_0, %c0_1] : memref<18x18x64xf32, #tpu.memory_space<vmem>>, vector<18x18x64xf32>
    tpu.vector_store %arg11[%c0, %c0_0, %c0_1], %0 {strides = array<i32>} : memref<18x18x64xf32, #tpu.memory_space<vmem>>, vector<18x18x64xf32>,
    %cst_2 = arith.constant 0.000000e+00 : f32
    %2 = vector.broadcast %cst_2 : f32 to vector<18x18x128xf32>
    %c0_3 = arith.constant 0 : index
    %c0_4 = arith.constant 0 : index
    %c0_5 = arith.constant 0 : index
    %3 = vector.load %arg12[%c0_3, %c0_4, %c0_5] : memref<18x18x128xf32, #tpu.memory_space<vmem>>, vector<18x18x128xf32>
    tpu.vector_store %arg12[%c0_3, %c0_4, %c0_5], %2 {strides = array<i32>} : memref<18x18x128xf32, #tpu.memory_space<vmem>>, vector<18x18x128xf32>,
    %cst_6 = arith.constant 0.000000e+00 : f32
    %4 = vector.broadcast %cst_6 : f32 to vector<18x18x64xf32>
    %c0_7 = arith.constant 0 : index
    %c0_8 = arith.constant 0 : index
    %c0_9 = arith.constant 0 : index
    %5 = vector.load %arg13[%c0_7, %c0_8, %c0_9] : memref<18x18x64xf32, #tpu.memory_space<vmem>>, vector<18x18x64xf32>
    tpu.vector_store %arg13[%c0_7, %c0_8, %c0_9], %4 {strides = array<i32>} : memref<18x18x64xf32, #tpu.memory_space<vmem>>, vector<18x18x64xf32>,
    %cst_10 = arith.constant 0.000000e+00 : f32
    %6 = vector.broadcast %cst_10 : f32 to vector<256x64xf32>
    %c0_11 = arith.constant 0 : index
    %c0_12 = arith.constant 0 : index
    %c0_13 = arith.constant 0 : index
    %c0_14 = arith.constant 0 : index
    %7 = vector.load %arg1[%c0_11, %c0_12, %c0_13, %c0_14] : memref<1x18x18x8xf32, #tpu.memory_space<vmem>>, vector<1x16x16x8xf32>
    %8 = vector.shape_cast %7 : vector<1x16x16x8xf32> to vector<16x16x8xf32>
    %9 = vector.shape_cast %8 : vector<16x16x8xf32> to vector<256x8xf32>
    %c0_15 = arith.constant 0 : index
    %c0_16 = arith.constant 0 : index
    %c0_17 = arith.constant 0 : index
    %10 = vector.load %arg2[%c0_15, %c0_16, %c0_17] : memref<9x8x64xf32, #tpu.memory_space<vmem>>, vector<1x8x64xf32>
    %11 = vector.shape_cast %10 : vector<1x8x64xf32> to vector<8x64xf32>
    %cst_18 = arith.constant dense<0.000000e+00> : vector<256x64xf32>
    %12 = tpu.matmul %9, %11, %cst_18 {dimension_numbers = #tpu.dot_dimension_numbers<[1], [0], [0], [1], [0, 0, 1, 1], [], []>} : vector<256x8xf32>, vector<8x64xf32>, vector<256x64xf32> -> vector<256x64xf32>
    %13 = arith.addf %6, %12 : vector<256x64xf32>
    %c0_19 = arith.constant 0 : index
    %c0_20 = arith.constant 0 : index
    %c1 = arith.constant 1 : index
    %c0_21 = arith.constant 0 : index
    %14 = vector.load %arg1[%c0_19, %c0_20, %c1, %c0_21] : memref<1x18x18x8xf32, #tpu.memory_space<vmem>>, vector<1x16x16x8xf32>
    %15 = vector.shape_cast %14 : vector<1x16x16x8xf32> to vector<16x16x8xf32>
    %16 = vector.shape_cast %15 : vector<16x16x8xf32> to vector<256x8xf32>
    %c1_22 = arith.constant 1 : index
    %c0_23 = arith.constant 0 : index
    %c0_24 = arith.constant 0 : index
    %17 = vector.load %arg2[%c1_22, %c0_23, %c0_24] : memref<9x8x64xf32, #tpu.memory_space<vmem>>, vector<1x8x64xf32>
    %18 = vector.shape_cast %17 : vector<1x8x64xf32> to vector<8x64xf32>
    %cst_25 = arith.constant dense<0.000000e+00> : vector<256x64xf32>
    %19 = tpu.matmul %16, %18, %cst_25 {dimension_numbers = #tpu.dot_dimension_numbers<[1], [0], [0], [1], [0, 0, 1, 1], [], []>} : vector<256x8xf32>, vector<8x64xf32>, vector<256x64xf32> -> vector<256x64xf32>
    %20 = arith.addf %13, %19 : vector<256x64xf32>
    %c0_26 = arith.constant 0 : index
    %c0_27 = arith.constant 0 : index
    %c2 = arith.constant 2 : index
    %c0_28 = arith.constant 0 : index
    %21 = vector.load %arg1[%c0_26, %c0_27, %c2, %c0_28] : memref<1x18x18x8xf32, #tpu.memory_space<vmem>>, vector<1x16x16x8xf32>
    %22 = vector.shape_cast %21 : vector<1x16x16x8xf32> to vector<16x16x8xf32>
    %23 = vector.shape_cast %22 : vector<16x16x8xf32> to vector<256x8xf32>
    %c2_29 = arith.constant 2 : index
    %c0_30 = arith.constant 0 : index
    %c0_31 = arith.constant 0 : index
    %24 = vector.load %arg2[%c2_29, %c0_30, %c0_31] : memref<9x8x64xf32, #tpu.memory_space<vmem>>, vector<1x8x64xf32>
    %25 = vector.shape_cast %24 : vector<1x8x64xf32> to vector<8x64xf32>
    %cst_32 = arith.constant dense<0.000000e+00> : vector<256x64xf32>
    %26 = tpu.matmul %23, %25, %cst_32 {dimension_numbers = #tpu.dot_dimension_numbers<[1], [0], [0], [1], [0, 0, 1, 1], [], []>} : vector<256x8xf32>, vector<8x64xf32>, vector<256x64xf32> -> vector<256x64xf32>
    %27 = arith.addf %20, %26 : vector<256x64xf32>
    %c0_33 = arith.constant 0 : index
    %c1_34 = arith.constant 1 : index
    %c0_35 = arith.constant 0 : index
    %c0_36 = arith.constant 0 : index
    %28 = vector.load %arg1[%c0_33, %c1_34, %c0_35, %c0_36] : memref<1x18x18x8xf32, #tpu.memory_space<vmem>>, vector<1x16x16x8xf32>
    %29 = vector.shape_cast %28 : vector<1x16x16x8xf32> to vector<16x16x8xf32>
    %30 = vector.shape_cast %29 : vector<16x16x8xf32> to vector<256x8xf32>
    %c3 = arith.constant 3 : index
    %c0_37 = arith.constant 0 : index
    %c0_38 = arith.constant 0 : index
    %31 = vector.load %arg2[%c3, %c0_37, %c0_38] : memref<9x8x64xf32, #tpu.memory_space<vmem>>, vector<1x8x64xf32>
    %32 = vector.shape_cast %31 : vector<1x8x64xf32> to vector<8x64xf32>
    %cst_39 = arith.constant dense<0.000000e+00> : vector<256x64xf32>
    %33 = tpu.matmul %30, %32, %cst_39 {dimension_numbers = #tpu.dot_dimension_numbers<[1], [0], [0], [1], [0, 0, 1, 1], [], []>} : vector<256x8xf32>, vector<8x64xf32>, vector<256x64xf32> -> vector<256x64xf32>
    %34 = arith.addf %27, %33 : vector<256x64xf32>
    %c0_40 = arith.constant 0 : index
    %c1_41 = arith.constant 1 : index
    %c1_42 = arith.constant 1 : index
    %c0_43 = arith.constant 0 : index
    %35 = vector.load %arg1[%c0_40, %c1_41, %c1_42, %c0_43] : memref<1x18x18x8xf32, #tpu.memory_space<vmem>>, vector<1x16x16x8xf32>
    %36 = vector.shape_cast %35 : vector<1x16x16x8xf32> to vector<16x16x8xf32>
    %37 = vector.shape_cast %36 : vector<16x16x8xf32> to vector<256x8xf32>
    %c4 = arith.constant 4 : index
    %c0_44 = arith.constant 0 : index
    %c0_45 = arith.constant 0 : index
    %38 = vector.load %arg2[%c4, %c0_44, %c0_45] : memref<9x8x64xf32, #tpu.memory_space<vmem>>, vector<1x8x64xf32>
    %39 = vector.shape_cast %38 : vector<1x8x64xf32> to vector<8x64xf32>
    %cst_46 = arith.constant dense<0.000000e+00> : vector<256x64xf32>
    %40 = tpu.matmul %37, %39, %cst_46 {dimension_numbers = #tpu.dot_dimension_numbers<[1], [0], [0], [1], [0, 0, 1, 1], [], []>} : vector<256x8xf32>, vector<8x64xf32>, vector<256x64xf32> -> vector<256x64xf32>
    %41 = arith.addf %34, %40 : vector<256x64xf32>
    %c0_47 = arith.constant 0 : index
    %c1_48 = arith.constant 1 : index
    %c2_49 = arith.constant 2 : index
    %c0_50 = arith.constant 0 : index
    %42 = vector.load %arg1[%c0_47, %c1_48, %c2_49, %c0_50] : memref<1x18x18x8xf32, #tpu.memory_space<vmem>>, vector<1x16x16x8xf32>
    %43 = vector.shape_cast %42 : vector<1x16x16x8xf32> to vector<16x16x8xf32>
    %44 = vector.shape_cast %43 : vector<16x16x8xf32> to vector<256x8xf32>
    %c5 = arith.constant 5 : index
    %c0_51 = arith.constant 0 : index
    %c0_52 = arith.constant 0 : index
    %45 = vector.load %arg2[%c5, %c0_51, %c0_52] : memref<9x8x64xf32, #tpu.memory_space<vmem>>, vector<1x8x64xf32>
    %46 = vector.shape_cast %45 : vector<1x8x64xf32> to vector<8x64xf32>
    %cst_53 = arith.constant dense<0.000000e+00> : vector<256x64xf32>
    %47 = tpu.matmul %44, %46, %cst_53 {dimension_numbers = #tpu.dot_dimension_numbers<[1], [0], [0], [1], [0, 0, 1, 1], [], []>} : vector<256x8xf32>, vector<8x64xf32>, vector<256x64xf32> -> vector<256x64xf32>
    %48 = arith.addf %41, %47 : vector<256x64xf32>
    %c0_54 = arith.constant 0 : index
    %c2_55 = arith.constant 2 : index
    %c0_56 = arith.constant 0 : index
    %c0_57 = arith.constant 0 : index
    %49 = vector.load %arg1[%c0_54, %c2_55, %c0_56, %c0_57] : memref<1x18x18x8xf32, #tpu.memory_space<vmem>>, vector<1x16x16x8xf32>
    %50 = vector.shape_cast %49 : vector<1x16x16x8xf32> to vector<16x16x8xf32>
    %51 = vector.shape_cast %50 : vector<16x16x8xf32> to vector<256x8xf32>
    %c6 = arith.constant 6 : index
    %c0_58 = arith.constant 0 : index
    %c0_59 = arith.constant 0 : index
    %52 = vector.load %arg2[%c6, %c0_58, %c0_59] : memref<9x8x64xf32, #tpu.memory_space<vmem>>, vector<1x8x64xf32>
    %53 = vector.shape_cast %52 : vector<1x8x64xf32> to vector<8x64xf32>
    %cst_60 = arith.constant dense<0.000000e+00> : vector<256x64xf32>
    %54 = tpu.matmul %51, %53, %cst_60 {dimension_numbers = #tpu.dot_dimension_numbers<[1], [0], [0], [1], [0, 0, 1, 1], [], []>} : vector<256x8xf32>, vector<8x64xf32>, vector<256x64xf32> -> vector<256x64xf32>
    %55 = arith.addf %48, %54 : vector<256x64xf32>
    %c0_61 = arith.constant 0 : index
    %c2_62 = arith.constant 2 : index
    %c1_63 = arith.constant 1 : index
    %c0_64 = arith.constant 0 : index
    %56 = vector.load %arg1[%c0_61, %c2_62, %c1_63, %c0_64] : memref<1x18x18x8xf32, #tpu.memory_space<vmem>>, vector<1x16x16x8xf32>
    %57 = vector.shape_cast %56 : vector<1x16x16x8xf32> to vector<16x16x8xf32>
    %58 = vector.shape_cast %57 : vector<16x16x8xf32> to vector<256x8xf32>
    %c7 = arith.constant 7 : index
    %c0_65 = arith.constant 0 : index
    %c0_66 = arith.constant 0 : index
    %59 = vector.load %arg2[%c7, %c0_65, %c0_66] : memref<9x8x64xf32, #tpu.memory_space<vmem>>, vector<1x8x64xf32>
    %60 = vector.shape_cast %59 : vector<1x8x64xf32> to vector<8x64xf32>
    %cst_67 = arith.constant dense<0.000000e+00> : vector<256x64xf32>
    %61 = tpu.matmul %58, %60, %cst_67 {dimension_numbers = #tpu.dot_dimension_numbers<[1], [0], [0], [1], [0, 0, 1, 1], [], []>} : vector<256x8xf32>, vector<8x64xf32>, vector<256x64xf32> -> vector<256x64xf32>
    %62 = arith.addf %55, %61 : vector<256x64xf32>
    %c0_68 = arith.constant 0 : index
    %c2_69 = arith.constant 2 : index
    %c2_70 = arith.constant 2 : index
    %c0_71 = arith.constant 0 : index
    %63 = vector.load %arg1[%c0_68, %c2_69, %c2_70, %c0_71] : memref<1x18x18x8xf32, #tpu.memory_space<vmem>>, vector<1x16x16x8xf32>
    %64 = vector.shape_cast %63 : vector<1x16x16x8xf32> to vector<16x16x8xf32>
    %65 = vector.shape_cast %64 : vector<16x16x8xf32> to vector<256x8xf32>
    %c8 = arith.constant 8 : index
    %c0_72 = arith.constant 0 : index
    %c0_73 = arith.constant 0 : index
    %66 = vector.load %arg2[%c8, %c0_72, %c0_73] : memref<9x8x64xf32, #tpu.memory_space<vmem>>, vector<1x8x64xf32>
    %67 = vector.shape_cast %66 : vector<1x8x64xf32> to vector<8x64xf32>
    %cst_74 = arith.constant dense<0.000000e+00> : vector<256x64xf32>
    %68 = tpu.matmul %65, %67, %cst_74 {dimension_numbers = #tpu.dot_dimension_numbers<[1], [0], [0], [1], [0, 0, 1, 1], [], []>} : vector<256x8xf32>, vector<8x64xf32>, vector<256x64xf32> -> vector<256x64xf32>
    %69 = arith.addf %62, %68 : vector<256x64xf32>
    %c0_75 = arith.constant 0 : index
    %c0_76 = arith.constant 0 : index
    %70 = vector.load %arg3[%c0_75, %c0_76] : memref<1x64xf32, #tpu.memory_space<vmem>>, vector<1x64xf32>
    %71 = vector.broadcast %70 : vector<1x64xf32> to vector<256x64xf32>
    %72 = arith.addf %69, %71 : vector<256x64xf32>
    %cst_77 = arith.constant 0.000000e+00 : f32
    %73 = vector.broadcast %cst_77 : f32 to vector<256x64xf32>
    %74 = arith.maximumf %72, %73 : vector<256x64xf32>
    %75 = vector.shape_cast %74 : vector<256x64xf32> to vector<16x16x64xf32>
    %c1_78 = arith.constant 1 : index
    %c1_79 = arith.constant 1 : index
    %c0_80 = arith.constant 0 : index
    %76 = vector.load %arg11[%c1_78, %c1_79, %c0_80] : memref<18x18x64xf32, #tpu.memory_space<vmem>>, vector<16x16x64xf32>
    tpu.vector_store %arg11[%c1_78, %c1_79, %c0_80], %75 {strides = array<i32>} : memref<18x18x64xf32, #tpu.memory_space<vmem>>, vector<16x16x64xf32>,
    %cst_81 = arith.constant 0.000000e+00 : f32
    %77 = vector.broadcast %cst_81 : f32 to vector<256x128xf32>
    %c0_82 = arith.constant 0 : index
    %c0_83 = arith.constant 0 : index
    %c0_84 = arith.constant 0 : index
    %78 = vector.load %arg11[%c0_82, %c0_83, %c0_84] : memref<18x18x64xf32, #tpu.memory_space<vmem>>, vector<16x16x64xf32>
    %79 = vector.shape_cast %78 : vector<16x16x64xf32> to vector<256x64xf32>
    %c0_85 = arith.constant 0 : index
    %c0_86 = arith.constant 0 : index
    %c0_87 = arith.constant 0 : index
    %80 = vector.load %arg4[%c0_85, %c0_86, %c0_87] : memref<9x64x128xf32, #tpu.memory_space<vmem>>, vector<1x64x128xf32>
    %81 = vector.shape_cast %80 : vector<1x64x128xf32> to vector<64x128xf32>
    %cst_88 = arith.constant dense<0.000000e+00> : vector<256x128xf32>
    %82 = tpu.matmul %79, %81, %cst_88 {dimension_numbers = #tpu.dot_dimension_numbers<[1], [0], [0], [1], [0, 0, 1, 1], [], []>} : vector<256x64xf32>, vector<64x128xf32>, vector<256x128xf32> -> vector<256x128xf32>
    %83 = arith.addf %77, %82 : vector<256x128xf32>
    %c0_89 = arith.constant 0 : index
    %c1_90 = arith.constant 1 : index
    %c0_91 = arith.constant 0 : index
    %84 = vector.load %arg11[%c0_89, %c1_90, %c0_91] : memref<18x18x64xf32, #tpu.memory_space<vmem>>, vector<16x16x64xf32>
    %85 = vector.shape_cast %84 : vector<16x16x64xf32> to vector<256x64xf32>
    %c1_92 = arith.constant 1 : index
    %c0_93 = arith.constant 0 : index
    %c0_94 = arith.constant 0 : index
    %86 = vector.load %arg4[%c1_92, %c0_93, %c0_94] : memref<9x64x128xf32, #tpu.memory_space<vmem>>, vector<1x64x128xf32>
    %87 = vector.shape_cast %86 : vector<1x64x128xf32> to vector<64x128xf32>
    %cst_95 = arith.constant dense<0.000000e+00> : vector<256x128xf32>
    %88 = tpu.matmul %85, %87, %cst_95 {dimension_numbers = #tpu.dot_dimension_numbers<[1], [0], [0], [1], [0, 0, 1, 1], [], []>} : vector<256x64xf32>, vector<64x128xf32>, vector<256x128xf32> -> vector<256x128xf32>
    %89 = arith.addf %83, %88 : vector<256x128xf32>
    %c0_96 = arith.constant 0 : index
    %c2_97 = arith.constant 2 : index
    %c0_98 = arith.constant 0 : index
    %90 = vector.load %arg11[%c0_96, %c2_97, %c0_98] : memref<18x18x64xf32, #tpu.memory_space<vmem>>, vector<16x16x64xf32>
    %91 = vector.shape_cast %90 : vector<16x16x64xf32> to vector<256x64xf32>
    %c2_99 = arith.constant 2 : index
    %c0_100 = arith.constant 0 : index
    %c0_101 = arith.constant 0 : index
    %92 = vector.load %arg4[%c2_99, %c0_100, %c0_101] : memref<9x64x128xf32, #tpu.memory_space<vmem>>, vector<1x64x128xf32>
    %93 = vector.shape_cast %92 : vector<1x64x128xf32> to vector<64x128xf32>
    %cst_102 = arith.constant dense<0.000000e+00> : vector<256x128xf32>
    %94 = tpu.matmul %91, %93, %cst_102 {dimension_numbers = #tpu.dot_dimension_numbers<[1], [0], [0], [1], [0, 0, 1, 1], [], []>} : vector<256x64xf32>, vector<64x128xf32>, vector<256x128xf32> -> vector<256x128xf32>
    %95 = arith.addf %89, %94 : vector<256x128xf32>
    %c1_103 = arith.constant 1 : index
    %c0_104 = arith.constant 0 : index
    %c0_105 = arith.constant 0 : index
    %96 = vector.load %arg11[%c1_103, %c0_104, %c0_105] : memref<18x18x64xf32, #tpu.memory_space<vmem>>, vector<16x16x64xf32>
    %97 = vector.shape_cast %96 : vector<16x16x64xf32> to vector<256x64xf32>
    %c3_106 = arith.constant 3 : index
    %c0_107 = arith.constant 0 : index
    %c0_108 = arith.constant 0 : index
    %98 = vector.load %arg4[%c3_106, %c0_107, %c0_108] : memref<9x64x128xf32, #tpu.memory_space<vmem>>, vector<1x64x128xf32>
    %99 = vector.shape_cast %98 : vector<1x64x128xf32> to vector<64x128xf32>
    %cst_109 = arith.constant dense<0.000000e+00> : vector<256x128xf32>
    %100 = tpu.matmul %97, %99, %cst_109 {dimension_numbers = #tpu.dot_dimension_numbers<[1], [0], [0], [1], [0, 0, 1, 1], [], []>} : vector<256x64xf32>, vector<64x128xf32>, vector<256x128xf32> -> vector<256x128xf32>
    %101 = arith.addf %95, %100 : vector<256x128xf32>
    %c1_110 = arith.constant 1 : index
    %c1_111 = arith.constant 1 : index
    %c0_112 = arith.constant 0 : index
    %102 = vector.load %arg11[%c1_110, %c1_111, %c0_112] : memref<18x18x64xf32, #tpu.memory_space<vmem>>, vector<16x16x64xf32>
    %103 = vector.shape_cast %102 : vector<16x16x64xf32> to vector<256x64xf32>
    %c4_113 = arith.constant 4 : index
    %c0_114 = arith.constant 0 : index
    %c0_115 = arith.constant 0 : index
    %104 = vector.load %arg4[%c4_113, %c0_114, %c0_115] : memref<9x64x128xf32, #tpu.memory_space<vmem>>, vector<1x64x128xf32>
    %105 = vector.shape_cast %104 : vector<1x64x128xf32> to vector<64x128xf32>
    %cst_116 = arith.constant dense<0.000000e+00> : vector<256x128xf32>
    %106 = tpu.matmul %103, %105, %cst_116 {dimension_numbers = #tpu.dot_dimension_numbers<[1], [0], [0], [1], [0, 0, 1, 1], [], []>} : vector<256x64xf32>, vector<64x128xf32>, vector<256x128xf32> -> vector<256x128xf32>
    %107 = arith.addf %101, %106 : vector<256x128xf32>
    %c1_117 = arith.constant 1 : index
    %c2_118 = arith.constant 2 : index
    %c0_119 = arith.constant 0 : index
    %108 = vector.load %arg11[%c1_117, %c2_118, %c0_119] : memref<18x18x64xf32, #tpu.memory_space<vmem>>, vector<16x16x64xf32>
    %109 = vector.shape_cast %108 : vector<16x16x64xf32> to vector<256x64xf32>
    %c5_120 = arith.constant 5 : index
    %c0_121 = arith.constant 0 : index
    %c0_122 = arith.constant 0 : index
    %110 = vector.load %arg4[%c5_120, %c0_121, %c0_122] : memref<9x64x128xf32, #tpu.memory_space<vmem>>, vector<1x64x128xf32>
    %111 = vector.shape_cast %110 : vector<1x64x128xf32> to vector<64x128xf32>
    %cst_123 = arith.constant dense<0.000000e+00> : vector<256x128xf32>
    %112 = tpu.matmul %109, %111, %cst_123 {dimension_numbers = #tpu.dot_dimension_numbers<[1], [0], [0], [1], [0, 0, 1, 1], [], []>} : vector<256x64xf32>, vector<64x128xf32>, vector<256x128xf32> -> vector<256x128xf32>
    %113 = arith.addf %107, %112 : vector<256x128xf32>
    %c2_124 = arith.constant 2 : index
    %c0_125 = arith.constant 0 : index
    %c0_126 = arith.constant 0 : index
    %114 = vector.load %arg11[%c2_124, %c0_125, %c0_126] : memref<18x18x64xf32, #tpu.memory_space<vmem>>, vector<16x16x64xf32>
    %115 = vector.shape_cast %114 : vector<16x16x64xf32> to vector<256x64xf32>
    %c6_127 = arith.constant 6 : index
    %c0_128 = arith.constant 0 : index
    %c0_129 = arith.constant 0 : index
    %116 = vector.load %arg4[%c6_127, %c0_128, %c0_129] : memref<9x64x128xf32, #tpu.memory_space<vmem>>, vector<1x64x128xf32>
    %117 = vector.shape_cast %116 : vector<1x64x128xf32> to vector<64x128xf32>
    %cst_130 = arith.constant dense<0.000000e+00> : vector<256x128xf32>
    %118 = tpu.matmul %115, %117, %cst_130 {dimension_numbers = #tpu.dot_dimension_numbers<[1], [0], [0], [1], [0, 0, 1, 1], [], []>} : vector<256x64xf32>, vector<64x128xf32>, vector<256x128xf32> -> vector<256x128xf32>
    %119 = arith.addf %113, %118 : vector<256x128xf32>
    %c2_131 = arith.constant 2 : index
    %c1_132 = arith.constant 1 : index
    %c0_133 = arith.constant 0 : index
    %120 = vector.load %arg11[%c2_131, %c1_132, %c0_133] : memref<18x18x64xf32, #tpu.memory_space<vmem>>, vector<16x16x64xf32>
    %121 = vector.shape_cast %120 : vector<16x16x64xf32> to vector<256x64xf32>
    %c7_134 = arith.constant 7 : index
    %c0_135 = arith.constant 0 : index
    %c0_136 = arith.constant 0 : index
    %122 = vector.load %arg4[%c7_134, %c0_135, %c0_136] : memref<9x64x128xf32, #tpu.memory_space<vmem>>, vector<1x64x128xf32>
    %123 = vector.shape_cast %122 : vector<1x64x128xf32> to vector<64x128xf32>
    %cst_137 = arith.constant dense<0.000000e+00> : vector<256x128xf32>
    %124 = tpu.matmul %121, %123, %cst_137 {dimension_numbers = #tpu.dot_dimension_numbers<[1], [0], [0], [1], [0, 0, 1, 1], [], []>} : vector<256x64xf32>, vector<64x128xf32>, vector<256x128xf32> -> vector<256x128xf32>
    %125 = arith.addf %119, %124 : vector<256x128xf32>
    %c2_138 = arith.constant 2 : index
    %c2_139 = arith.constant 2 : index
    %c0_140 = arith.constant 0 : index
    %126 = vector.load %arg11[%c2_138, %c2_139, %c0_140] : memref<18x18x64xf32, #tpu.memory_space<vmem>>, vector<16x16x64xf32>
    %127 = vector.shape_cast %126 : vector<16x16x64xf32> to vector<256x64xf32>
    %c8_141 = arith.constant 8 : index
    %c0_142 = arith.constant 0 : index
    %c0_143 = arith.constant 0 : index
    %128 = vector.load %arg4[%c8_141, %c0_142, %c0_143] : memref<9x64x128xf32, #tpu.memory_space<vmem>>, vector<1x64x128xf32>
    %129 = vector.shape_cast %128 : vector<1x64x128xf32> to vector<64x128xf32>
    %cst_144 = arith.constant dense<0.000000e+00> : vector<256x128xf32>
    %130 = tpu.matmul %127, %129, %cst_144 {dimension_numbers = #tpu.dot_dimension_numbers<[1], [0], [0], [1], [0, 0, 1, 1], [], []>} : vector<256x64xf32>, vector<64x128xf32>, vector<256x128xf32> -> vector<256x128xf32>
    %131 = arith.addf %125, %130 : vector<256x128xf32>
    %c0_145 = arith.constant 0 : index
    %c0_146 = arith.constant 0 : index
    %132 = vector.load %arg5[%c0_145, %c0_146] : memref<1x128xf32, #tpu.memory_space<vmem>>, vector<1x128xf32>
    %133 = vector.broadcast %132 : vector<1x128xf32> to vector<256x128xf32>
    %134 = arith.addf %131, %133 : vector<256x128xf32>
    %cst_147 = arith.constant 0.000000e+00 : f32
    %135 = vector.broadcast %cst_147 : f32 to vector<256x128xf32>
    %136 = arith.maximumf %134, %135 : vector<256x128xf32>
    %137 = vector.shape_cast %136 : vector<256x128xf32> to vector<16x16x128xf32>
    %c1_148 = arith.constant 1 : index
    %c1_149 = arith.constant 1 : index
    %c0_150 = arith.constant 0 : index
    %138 = vector.load %arg12[%c1_148, %c1_149, %c0_150] : memref<18x18x128xf32, #tpu.memory_space<vmem>>, vector<16x16x128xf32>
    tpu.vector_store %arg12[%c1_148, %c1_149, %c0_150], %137 {strides = array<i32>} : memref<18x18x128xf32, #tpu.memory_space<vmem>>, vector<16x16x128xf32>,
    %cst_151 = arith.constant 0.000000e+00 : f32
    %139 = vector.broadcast %cst_151 : f32 to vector<256x64xf32>
    %c0_152 = arith.constant 0 : index
    %c0_153 = arith.constant 0 : index
    %c0_154 = arith.constant 0 : index
    %140 = vector.load %arg12[%c0_152, %c0_153, %c0_154] : memref<18x18x128xf32, #tpu.memory_space<vmem>>, vector<16x16x128xf32>
    %141 = vector.shape_cast %140 : vector<16x16x128xf32> to vector<256x128xf32>
    %c0_155 = arith.constant 0 : index
    %c0_156 = arith.constant 0 : index
    %c0_157 = arith.constant 0 : index
    %142 = vector.load %arg6[%c0_155, %c0_156, %c0_157] : memref<9x128x64xf32, #tpu.memory_space<vmem>>, vector<1x128x64xf32>
    %143 = vector.shape_cast %142 : vector<1x128x64xf32> to vector<128x64xf32>
    %cst_158 = arith.constant dense<0.000000e+00> : vector<256x64xf32>
    %144 = tpu.matmul %141, %143, %cst_158 {dimension_numbers = #tpu.dot_dimension_numbers<[1], [0], [0], [1], [0, 0, 1, 1], [], []>} : vector<256x128xf32>, vector<128x64xf32>, vector<256x64xf32> -> vector<256x64xf32>
    %145 = arith.addf %139, %144 : vector<256x64xf32>
    %c0_159 = arith.constant 0 : index
    %c1_160 = arith.constant 1 : index
    %c0_161 = arith.constant 0 : index
    %146 = vector.load %arg12[%c0_159, %c1_160, %c0_161] : memref<18x18x128xf32, #tpu.memory_space<vmem>>, vector<16x16x128xf32>
    %147 = vector.shape_cast %146 : vector<16x16x128xf32> to vector<256x128xf32>
    %c1_162 = arith.constant 1 : index
    %c0_163 = arith.constant 0 : index
    %c0_164 = arith.constant 0 : index
    %148 = vector.load %arg6[%c1_162, %c0_163, %c0_164] : memref<9x128x64xf32, #tpu.memory_space<vmem>>, vector<1x128x64xf32>
    %149 = vector.shape_cast %148 : vector<1x128x64xf32> to vector<128x64xf32>
    %cst_165 = arith.constant dense<0.000000e+00> : vector<256x64xf32>
    %150 = tpu.matmul %147, %149, %cst_165 {dimension_numbers = #tpu.dot_dimension_numbers<[1], [0], [0], [1], [0, 0, 1, 1], [], []>} : vector<256x128xf32>, vector<128x64xf32>, vector<256x64xf32> -> vector<256x64xf32>
    %151 = arith.addf %145, %150 : vector<256x64xf32>
    %c0_166 = arith.constant 0 : index
    %c2_167 = arith.constant 2 : index
    %c0_168 = arith.constant 0 : index
    %152 = vector.load %arg12[%c0_166, %c2_167, %c0_168] : memref<18x18x128xf32, #tpu.memory_space<vmem>>, vector<16x16x128xf32>
    %153 = vector.shape_cast %152 : vector<16x16x128xf32> to vector<256x128xf32>
    %c2_169 = arith.constant 2 : index
    %c0_170 = arith.constant 0 : index
    %c0_171 = arith.constant 0 : index
    %154 = vector.load %arg6[%c2_169, %c0_170, %c0_171] : memref<9x128x64xf32, #tpu.memory_space<vmem>>, vector<1x128x64xf32>
    %155 = vector.shape_cast %154 : vector<1x128x64xf32> to vector<128x64xf32>
    %cst_172 = arith.constant dense<0.000000e+00> : vector<256x64xf32>
    %156 = tpu.matmul %153, %155, %cst_172 {dimension_numbers = #tpu.dot_dimension_numbers<[1], [0], [0], [1], [0, 0, 1, 1], [], []>} : vector<256x128xf32>, vector<128x64xf32>, vector<256x64xf32> -> vector<256x64xf32>
    %157 = arith.addf %151, %156 : vector<256x64xf32>
    %c1_173 = arith.constant 1 : index
    %c0_174 = arith.constant 0 : index
    %c0_175 = arith.constant 0 : index
    %158 = vector.load %arg12[%c1_173, %c0_174, %c0_175] : memref<18x18x128xf32, #tpu.memory_space<vmem>>, vector<16x16x128xf32>
    %159 = vector.shape_cast %158 : vector<16x16x128xf32> to vector<256x128xf32>
    %c3_176 = arith.constant 3 : index
    %c0_177 = arith.constant 0 : index
    %c0_178 = arith.constant 0 : index
    %160 = vector.load %arg6[%c3_176, %c0_177, %c0_178] : memref<9x128x64xf32, #tpu.memory_space<vmem>>, vector<1x128x64xf32>
    %161 = vector.shape_cast %160 : vector<1x128x64xf32> to vector<128x64xf32>
    %cst_179 = arith.constant dense<0.000000e+00> : vector<256x64xf32>
    %162 = tpu.matmul %159, %161, %cst_179 {dimension_numbers = #tpu.dot_dimension_numbers<[1], [0], [0], [1], [0, 0, 1, 1], [], []>} : vector<256x128xf32>, vector<128x64xf32>, vector<256x64xf32> -> vector<256x64xf32>
    %163 = arith.addf %157, %162 : vector<256x64xf32>
    %c1_180 = arith.constant 1 : index
    %c1_181 = arith.constant 1 : index
    %c0_182 = arith.constant 0 : index
    %164 = vector.load %arg12[%c1_180, %c1_181, %c0_182] : memref<18x18x128xf32, #tpu.memory_space<vmem>>, vector<16x16x128xf32>
    %165 = vector.shape_cast %164 : vector<16x16x128xf32> to vector<256x128xf32>
    %c4_183 = arith.constant 4 : index
    %c0_184 = arith.constant 0 : index
    %c0_185 = arith.constant 0 : index
    %166 = vector.load %arg6[%c4_183, %c0_184, %c0_185] : memref<9x128x64xf32, #tpu.memory_space<vmem>>, vector<1x128x64xf32>
    %167 = vector.shape_cast %166 : vector<1x128x64xf32> to vector<128x64xf32>
    %cst_186 = arith.constant dense<0.000000e+00> : vector<256x64xf32>
    %168 = tpu.matmul %165, %167, %cst_186 {dimension_numbers = #tpu.dot_dimension_numbers<[1], [0], [0], [1], [0, 0, 1, 1], [], []>} : vector<256x128xf32>, vector<128x64xf32>, vector<256x64xf32> -> vector<256x64xf32>
    %169 = arith.addf %163, %168 : vector<256x64xf32>
    %c1_187 = arith.constant 1 : index
    %c2_188 = arith.constant 2 : index
    %c0_189 = arith.constant 0 : index
    %170 = vector.load %arg12[%c1_187, %c2_188, %c0_189] : memref<18x18x128xf32, #tpu.memory_space<vmem>>, vector<16x16x128xf32>
    %171 = vector.shape_cast %170 : vector<16x16x128xf32> to vector<256x128xf32>
    %c5_190 = arith.constant 5 : index
    %c0_191 = arith.constant 0 : index
    %c0_192 = arith.constant 0 : index
    %172 = vector.load %arg6[%c5_190, %c0_191, %c0_192] : memref<9x128x64xf32, #tpu.memory_space<vmem>>, vector<1x128x64xf32>
    %173 = vector.shape_cast %172 : vector<1x128x64xf32> to vector<128x64xf32>
    %cst_193 = arith.constant dense<0.000000e+00> : vector<256x64xf32>
    %174 = tpu.matmul %171, %173, %cst_193 {dimension_numbers = #tpu.dot_dimension_numbers<[1], [0], [0], [1], [0, 0, 1, 1], [], []>} : vector<256x128xf32>, vector<128x64xf32>, vector<256x64xf32> -> vector<256x64xf32>
    %175 = arith.addf %169, %174 : vector<256x64xf32>
    %c2_194 = arith.constant 2 : index
    %c0_195 = arith.constant 0 : index
    %c0_196 = arith.constant 0 : index
    %176 = vector.load %arg12[%c2_194, %c0_195, %c0_196] : memref<18x18x128xf32, #tpu.memory_space<vmem>>, vector<16x16x128xf32>
    %177 = vector.shape_cast %176 : vector<16x16x128xf32> to vector<256x128xf32>
    %c6_197 = arith.constant 6 : index
    %c0_198 = arith.constant 0 : index
    %c0_199 = arith.constant 0 : index
    %178 = vector.load %arg6[%c6_197, %c0_198, %c0_199] : memref<9x128x64xf32, #tpu.memory_space<vmem>>, vector<1x128x64xf32>
    %179 = vector.shape_cast %178 : vector<1x128x64xf32> to vector<128x64xf32>
    %cst_200 = arith.constant dense<0.000000e+00> : vector<256x64xf32>
    %180 = tpu.matmul %177, %179, %cst_200 {dimension_numbers = #tpu.dot_dimension_numbers<[1], [0], [0], [1], [0, 0, 1, 1], [], []>} : vector<256x128xf32>, vector<128x64xf32>, vector<256x64xf32> -> vector<256x64xf32>
    %181 = arith.addf %175, %180 : vector<256x64xf32>
    %c2_201 = arith.constant 2 : index
    %c1_202 = arith.constant 1 : index
    %c0_203 = arith.constant 0 : index
    %182 = vector.load %arg12[%c2_201, %c1_202, %c0_203] : memref<18x18x128xf32, #tpu.memory_space<vmem>>, vector<16x16x128xf32>
    %183 = vector.shape_cast %182 : vector<16x16x128xf32> to vector<256x128xf32>
    %c7_204 = arith.constant 7 : index
    %c0_205 = arith.constant 0 : index
    %c0_206 = arith.constant 0 : index
    %184 = vector.load %arg6[%c7_204, %c0_205, %c0_206] : memref<9x128x64xf32, #tpu.memory_space<vmem>>, vector<1x128x64xf32>
    %185 = vector.shape_cast %184 : vector<1x128x64xf32> to vector<128x64xf32>
    %cst_207 = arith.constant dense<0.000000e+00> : vector<256x64xf32>
    %186 = tpu.matmul %183, %185, %cst_207 {dimension_numbers = #tpu.dot_dimension_numbers<[1], [0], [0], [1], [0, 0, 1, 1], [], []>} : vector<256x128xf32>, vector<128x64xf32>, vector<256x64xf32> -> vector<256x64xf32>
    %187 = arith.addf %181, %186 : vector<256x64xf32>
    %c2_208 = arith.constant 2 : index
    %c2_209 = arith.constant 2 : index
    %c0_210 = arith.constant 0 : index
    %188 = vector.load %arg12[%c2_208, %c2_209, %c0_210] : memref<18x18x128xf32, #tpu.memory_space<vmem>>, vector<16x16x128xf32>
    %189 = vector.shape_cast %188 : vector<16x16x128xf32> to vector<256x128xf32>
    %c8_211 = arith.constant 8 : index
    %c0_212 = arith.constant 0 : index
    %c0_213 = arith.constant 0 : index
    %190 = vector.load %arg6[%c8_211, %c0_212, %c0_213] : memref<9x128x64xf32, #tpu.memory_space<vmem>>, vector<1x128x64xf32>
    %191 = vector.shape_cast %190 : vector<1x128x64xf32> to vector<128x64xf32>
    %cst_214 = arith.constant dense<0.000000e+00> : vector<256x64xf32>
    %192 = tpu.matmul %189, %191, %cst_214 {dimension_numbers = #tpu.dot_dimension_numbers<[1], [0], [0], [1], [0, 0, 1, 1], [], []>} : vector<256x128xf32>, vector<128x64xf32>, vector<256x64xf32> -> vector<256x64xf32>
    %193 = arith.addf %187, %192 : vector<256x64xf32>
    %c0_215 = arith.constant 0 : index
    %c0_216 = arith.constant 0 : index
    %194 = vector.load %arg7[%c0_215, %c0_216] : memref<1x64xf32, #tpu.memory_space<vmem>>, vector<1x64xf32>
    %195 = vector.broadcast %194 : vector<1x64xf32> to vector<256x64xf32>
    %196 = arith.addf %193, %195 : vector<256x64xf32>
    %cst_217 = arith.constant 0.000000e+00 : f32
    %197 = vector.broadcast %cst_217 : f32 to vector<256x64xf32>
    %198 = arith.maximumf %196, %197 : vector<256x64xf32>
    %199 = vector.shape_cast %198 : vector<256x64xf32> to vector<16x16x64xf32>
    %c1_218 = arith.constant 1 : index
    %c1_219 = arith.constant 1 : index
    %c0_220 = arith.constant 0 : index
    %200 = vector.load %arg13[%c1_218, %c1_219, %c0_220] : memref<18x18x64xf32, #tpu.memory_space<vmem>>, vector<16x16x64xf32>
    tpu.vector_store %arg13[%c1_218, %c1_219, %c0_220], %199 {strides = array<i32>} : memref<18x18x64xf32, #tpu.memory_space<vmem>>, vector<16x16x64xf32>,
    %cst_221 = arith.constant 0.000000e+00 : f32
    %201 = vector.broadcast %cst_221 : f32 to vector<256x64xf32>
    %c0_222 = arith.constant 0 : index
    %c0_223 = arith.constant 0 : index
    %c0_224 = arith.constant 0 : index
    %202 = vector.load %arg13[%c0_222, %c0_223, %c0_224] : memref<18x18x64xf32, #tpu.memory_space<vmem>>, vector<16x16x64xf32>
    %203 = vector.shape_cast %202 : vector<16x16x64xf32> to vector<256x64xf32>
    %c0_225 = arith.constant 0 : index
    %c0_226 = arith.constant 0 : index
    %204 = vector.load %arg8[%c0_225, %c0_226] : memref<9x64xf32, #tpu.memory_space<vmem>>, vector<1x64xf32>
    %205 = vector.broadcast %204 : vector<1x64xf32> to vector<256x64xf32>
    %206 = arith.mulf %203, %205 : vector<256x64xf32>
    %207 = arith.addf %201, %206 : vector<256x64xf32>
    %c0_227 = arith.constant 0 : index
    %c1_228 = arith.constant 1 : index
    %c0_229 = arith.constant 0 : index
    %208 = vector.load %arg13[%c0_227, %c1_228, %c0_229] : memref<18x18x64xf32, #tpu.memory_space<vmem>>, vector<16x16x64xf32>
    %209 = vector.shape_cast %208 : vector<16x16x64xf32> to vector<256x64xf32>
    %c1_230 = arith.constant 1 : index
    %c0_231 = arith.constant 0 : index
    %210 = vector.load %arg8[%c1_230, %c0_231] : memref<9x64xf32, #tpu.memory_space<vmem>>, vector<1x64xf32>
    %211 = vector.broadcast %210 : vector<1x64xf32> to vector<256x64xf32>
    %212 = arith.mulf %209, %211 : vector<256x64xf32>
    %213 = arith.addf %207, %212 : vector<256x64xf32>
    %c0_232 = arith.constant 0 : index
    %c2_233 = arith.constant 2 : index
    %c0_234 = arith.constant 0 : index
    %214 = vector.load %arg13[%c0_232, %c2_233, %c0_234] : memref<18x18x64xf32, #tpu.memory_space<vmem>>, vector<16x16x64xf32>
    %215 = vector.shape_cast %214 : vector<16x16x64xf32> to vector<256x64xf32>
    %c2_235 = arith.constant 2 : index
    %c0_236 = arith.constant 0 : index
    %216 = vector.load %arg8[%c2_235, %c0_236] : memref<9x64xf32, #tpu.memory_space<vmem>>, vector<1x64xf32>
    %217 = vector.broadcast %216 : vector<1x64xf32> to vector<256x64xf32>
    %218 = arith.mulf %215, %217 : vector<256x64xf32>
    %219 = arith.addf %213, %218 : vector<256x64xf32>
    %c1_237 = arith.constant 1 : index
    %c0_238 = arith.constant 0 : index
    %c0_239 = arith.constant 0 : index
    %220 = vector.load %arg13[%c1_237, %c0_238, %c0_239] : memref<18x18x64xf32, #tpu.memory_space<vmem>>, vector<16x16x64xf32>
    %221 = vector.shape_cast %220 : vector<16x16x64xf32> to vector<256x64xf32>
    %c3_240 = arith.constant 3 : index
    %c0_241 = arith.constant 0 : index
    %222 = vector.load %arg8[%c3_240, %c0_241] : memref<9x64xf32, #tpu.memory_space<vmem>>, vector<1x64xf32>
    %223 = vector.broadcast %222 : vector<1x64xf32> to vector<256x64xf32>
    %224 = arith.mulf %221, %223 : vector<256x64xf32>
    %225 = arith.addf %219, %224 : vector<256x64xf32>
    %c1_242 = arith.constant 1 : index
    %c1_243 = arith.constant 1 : index
    %c0_244 = arith.constant 0 : index
    %226 = vector.load %arg13[%c1_242, %c1_243, %c0_244] : memref<18x18x64xf32, #tpu.memory_space<vmem>>, vector<16x16x64xf32>
    %227 = vector.shape_cast %226 : vector<16x16x64xf32> to vector<256x64xf32>
    %c4_245 = arith.constant 4 : index
    %c0_246 = arith.constant 0 : index
    %228 = vector.load %arg8[%c4_245, %c0_246] : memref<9x64xf32, #tpu.memory_space<vmem>>, vector<1x64xf32>
    %229 = vector.broadcast %228 : vector<1x64xf32> to vector<256x64xf32>
    %230 = arith.mulf %227, %229 : vector<256x64xf32>
    %231 = arith.addf %225, %230 : vector<256x64xf32>
    %c1_247 = arith.constant 1 : index
    %c2_248 = arith.constant 2 : index
    %c0_249 = arith.constant 0 : index
    %232 = vector.load %arg13[%c1_247, %c2_248, %c0_249] : memref<18x18x64xf32, #tpu.memory_space<vmem>>, vector<16x16x64xf32>
    %233 = vector.shape_cast %232 : vector<16x16x64xf32> to vector<256x64xf32>
    %c5_250 = arith.constant 5 : index
    %c0_251 = arith.constant 0 : index
    %234 = vector.load %arg8[%c5_250, %c0_251] : memref<9x64xf32, #tpu.memory_space<vmem>>, vector<1x64xf32>
    %235 = vector.broadcast %234 : vector<1x64xf32> to vector<256x64xf32>
    %236 = arith.mulf %233, %235 : vector<256x64xf32>
    %237 = arith.addf %231, %236 : vector<256x64xf32>
    %c2_252 = arith.constant 2 : index
    %c0_253 = arith.constant 0 : index
    %c0_254 = arith.constant 0 : index
    %238 = vector.load %arg13[%c2_252, %c0_253, %c0_254] : memref<18x18x64xf32, #tpu.memory_space<vmem>>, vector<16x16x64xf32>
    %239 = vector.shape_cast %238 : vector<16x16x64xf32> to vector<256x64xf32>
    %c6_255 = arith.constant 6 : index
    %c0_256 = arith.constant 0 : index
    %240 = vector.load %arg8[%c6_255, %c0_256] : memref<9x64xf32, #tpu.memory_space<vmem>>, vector<1x64xf32>
    %241 = vector.broadcast %240 : vector<1x64xf32> to vector<256x64xf32>
    %242 = arith.mulf %239, %241 : vector<256x64xf32>
    %243 = arith.addf %237, %242 : vector<256x64xf32>
    %c2_257 = arith.constant 2 : index
    %c1_258 = arith.constant 1 : index
    %c0_259 = arith.constant 0 : index
    %244 = vector.load %arg13[%c2_257, %c1_258, %c0_259] : memref<18x18x64xf32, #tpu.memory_space<vmem>>, vector<16x16x64xf32>
    %245 = vector.shape_cast %244 : vector<16x16x64xf32> to vector<256x64xf32>
    %c7_260 = arith.constant 7 : index
    %c0_261 = arith.constant 0 : index
    %246 = vector.load %arg8[%c7_260, %c0_261] : memref<9x64xf32, #tpu.memory_space<vmem>>, vector<1x64xf32>
    %247 = vector.broadcast %246 : vector<1x64xf32> to vector<256x64xf32>
    %248 = arith.mulf %245, %247 : vector<256x64xf32>
    %249 = arith.addf %243, %248 : vector<256x64xf32>
    %c2_262 = arith.constant 2 : index
    %c2_263 = arith.constant 2 : index
    %c0_264 = arith.constant 0 : index
    %250 = vector.load %arg13[%c2_262, %c2_263, %c0_264] : memref<18x18x64xf32, #tpu.memory_space<vmem>>, vector<16x16x64xf32>
    %251 = vector.shape_cast %250 : vector<16x16x64xf32> to vector<256x64xf32>
    %c8_265 = arith.constant 8 : index
    %c0_266 = arith.constant 0 : index
    %252 = vector.load %arg8[%c8_265, %c0_266] : memref<9x64xf32, #tpu.memory_space<vmem>>, vector<1x64xf32>
    %253 = vector.broadcast %252 : vector<1x64xf32> to vector<256x64xf32>
    %254 = arith.mulf %251, %253 : vector<256x64xf32>
    %255 = arith.addf %249, %254 : vector<256x64xf32>
    %cst_267 = arith.constant dense<0.000000e+00> : vector<256xf32>
    %256 = vector.multi_reduction <add>, %255, %cst_267 [1] : vector<256x64xf32> to vector<256xf32>
    %257 = vector.shape_cast %256 : vector<256xf32> to vector<256x1xf32>
    %c0_268 = arith.constant 0 : index
    %c0_269 = arith.constant 0 : index
    %258 = vector.load %arg9[%c0_268, %c0_269] : memref<1x1xf32, #tpu.memory_space<vmem>>, vector<1x1xf32>
    %259 = vector.broadcast %258 : vector<1x1xf32> to vector<256x1xf32>
    %260 = arith.addf %257, %259 : vector<256x1xf32>
    %c0_270 = arith.constant 0 : index
    %c0_271 = arith.constant 0 : index
    %c0_272 = arith.constant 0 : index
    %261 = vector.load %arg10[%c0_270, %c0_271, %c0_272] : memref<1x256x1xf32, #tpu.memory_space<vmem>>, vector<1x256x1xf32>
    %262 = vector.shape_cast %261 : vector<1x256x1xf32> to vector<256x1xf32>
    %263 = vector.shape_cast %260 : vector<256x1xf32> to vector<1x256x1xf32>
    tpu.vector_store %arg10[%c0_270, %c0_271, %c0_272], %263 {strides = array<i32>} : memref<1x256x1xf32, #tpu.memory_space<vmem>>, vector<1x256x1xf32>,
    return
  }
  func.func @transform_0(%arg0: i32) -> (i32, i32, i32, i32) {
    %c0_i32 = arith.constant 0 : i32
    %c0_i32_0 = arith.constant 0 : i32
    %c0_i32_1 = arith.constant 0 : i32
    %c0_i32_2 = arith.constant 0 : i32
    return %arg0, %c0_i32, %c0_i32_0, %c0_i32_1 : i32, i32, i32, i32
  }
  func.func @transform_1(%arg0: i32) -> (i32, i32, i32) {
    %c0_i32 = arith.constant 0 : i32
    %c0_i32_0 = arith.constant 0 : i32
    %c0_i32_1 = arith.constant 0 : i32
    %c0_i32_2 = arith.constant 0 : i32
    return %c0_i32, %c0_i32_0, %c0_i32_1 : i32, i32, i32
  }
  func.func @transform_2(%arg0: i32) -> (i32, i32) {
    %c0_i32 = arith.constant 0 : i32
    %c0_i32_0 = arith.constant 0 : i32
    %c0_i32_1 = arith.constant 0 : i32
    return %c0_i32, %c0_i32_0 : i32, i32
  }
  func.func @transform_3(%arg0: i32) -> (i32, i32, i32) {
    %c0_i32 = arith.constant 0 : i32
    %c0_i32_0 = arith.constant 0 : i32
    %c0_i32_1 = arith.constant 0 : i32
    %c0_i32_2 = arith.constant 0 : i32
    return %c0_i32, %c0_i32_0, %c0_i32_1 : i32, i32, i32
  }
  func.func @transform_4(%arg0: i32) -> (i32, i32) {
    %c0_i32 = arith.constant 0 : i32
    %c0_i32_0 = arith.constant 0 : i32
    %c0_i32_1 = arith.constant 0 : i32
    return %c0_i32, %c0_i32_0 : i32, i32
  }
  func.func @transform_5(%arg0: i32) -> (i32, i32, i32) {
    %c0_i32 = arith.constant 0 : i32
    %c0_i32_0 = arith.constant 0 : i32
    %c0_i32_1 = arith.constant 0 : i32
    %c0_i32_2 = arith.constant 0 : i32
    return %c0_i32, %c0_i32_0, %c0_i32_1 : i32, i32, i32
  }
  func.func @transform_6(%arg0: i32) -> (i32, i32) {
    %c0_i32 = arith.constant 0 : i32
    %c0_i32_0 = arith.constant 0 : i32
    %c0_i32_1 = arith.constant 0 : i32
    return %c0_i32, %c0_i32_0 : i32, i32
  }
  func.func @transform_7(%arg0: i32) -> (i32, i32) {
    %c0_i32 = arith.constant 0 : i32
    %c0_i32_0 = arith.constant 0 : i32
    %c0_i32_1 = arith.constant 0 : i32
    return %c0_i32, %c0_i32_0 : i32, i32
  }
  func.func @transform_8(%arg0: i32) -> (i32, i32) {
    %c0_i32 = arith.constant 0 : i32
    %c0_i32_0 = arith.constant 0 : i32
    %c0_i32_1 = arith.constant 0 : i32
    return %c0_i32, %c0_i32_0 : i32, i32
  }
  func.func @transform_9(%arg0: i32) -> (i32, i32, i32) {
    %c0_i32 = arith.constant 0 : i32
    %c0_i32_0 = arith.constant 0 : i32
    %c0_i32_1 = arith.constant 0 : i32
    return %arg0, %c0_i32, %c0_i32_0 : i32, i32, i32
  }
}

</mosaic_0001>

<llo_original>
// kernel: wave_unet_forward.1
$region0: #{wave_unet_forward.1}
  #allocation0 [shape = 'u32[]', space=smem, size = 0x4, offset = 0x4, fixed_abs, tag = 'smem constant byte address 0x4 - core index']
  #allocation1 [shape = 'u32[72,128]{1,0:T(1,128)}', space=vmem, size = 0x9000, scoped, tag = 'internal scratch']
  #allocation2 [shape = 'f32[18,18,64]{2,1,0:T(8,128)}', space=vmem, size = 0x36000, scoped, tag = 'scratch operand']
  #allocation3 [shape = 'f32[18,18,128]{2,1,0:T(8,128)}', space=vmem, size = 0x36000, scoped, tag = 'scratch operand']
  #allocation4 [shape = 'f32[18,18,64]{2,1,0:T(8,128)}', space=vmem, size = 0x36000, scoped, tag = 'scratch operand']
  #allocation5 [shape = 'f32[1,1]{1,0:T(1,128)S(1)}', space=vmem, size = 0x200, scoped, tag = 'scoped memory for wave_unet_forward.1']
  %s0 = inlined_call_operand.vmem [shape: f32[2,18,18,8], index: 0, kind: input, shape index: {}]
  %s1 = inlined_call_operand.vmem [shape: f32[9,8,64], index: 1, kind: input, shape index: {}]
  %s2 = inlined_call_operand.vmem [shape: f32[1,64], index: 2, kind: input, shape index: {}]
  %s3 = inlined_call_operand.vmem [shape: f32[9,64,128], index: 3, kind: input, shape index: {}]
  %s4 = inlined_call_operand.vmem [shape: f32[1,128], index: 4, kind: input, shape index: {}]
  %s5 = inlined_call_operand.vmem [shape: f32[9,128,64], index: 5, kind: input, shape index: {}]
  %s6 = inlined_call_operand.vmem [shape: f32[1,64], index: 6, kind: input, shape index: {}]
  %s7 = inlined_call_operand.vmem [shape: f32[9,64], index: 7, kind: input, shape index: {}]
  %s8 = inlined_call_operand.<no memory space> [shape: f32[1,1], index: 8, kind: input, shape index: {}]
  %s9 = inlined_call_operand.vmem [shape: f32[2,256,1], index: 9, kind: output, shape index: {}]
  %s10 = sld [smem:[#allocation0]]
  $region69: #{wave_unet_forward.1} parent=0
    _
  %s12 = ssub.s32 1, %s10
  %s13 = scalar_select 0, %s12, %s10
  %v14 = vstv %s8
  %15 = vst [vmem:[#allocation5] sm:$0x1] %v14
  loop: start=0, step=1, limit=4
  $region2: #{wave_unet_forward.1} parent=0 // loop_pre_header
    _
  $region3: #{wave_unet_forward.1} parent=0 // loop_header
    %s17 = sphi 0, %s21
    %p18 = scmp.ge.s32.totalorder %s17, 4
    %s27 = sphi 0, %s29
    %s30 = sphi 0, %s27
    %s31 = sphi 0, %s30
    %s47 = sphi 0, %s31
    %s51 = sphi 0, %s51
    %s53 = sphi 0, %s51
    %s54 = sphi 0, %s53
    %s68 = sphi 0, %s54
    %s72 = sphi 0, %s72
    %s74 = sphi 0, %s72
    %s75 = sphi 0, %s74
    %s89 = sphi 0, %s75
    %s93 = sphi 0, %s93
    %s95 = sphi 0, %s93
    %s96 = sphi 0, %s95
    %s110 = sphi 0, %s96
    %s114 = sphi 0, %s114
    %s116 = sphi 0, %s114
    %s117 = sphi 0, %s116
    %s131 = sphi 0, %s117
    %s135 = sphi 0, %s135
    %s137 = sphi 0, %s135
    %s138 = sphi 0, %s137
    %s152 = sphi 0, %s138
    %s156 = sphi 0, %s156
    %s158 = sphi 0, %s156
    %s159 = sphi 0, %s158
    %s173 = sphi 0, %s159
    %s177 = sphi 0, %s177
    %s179 = sphi 0, %s177
    %s180 = sphi 0, %s179
    %s194 = sphi 0, %s180
    %s198 = sphi 0, %s198
    %s200 = sphi 0, %s198
    %s201 = sphi 0, %s200
    %s215 = sphi 0, %s201
    %s221 = sphi 0, %s223
    %s224 = sphi 0, %s221
    %s225 = sphi 0, %s224
    %s241 = sphi 0, %s225
  $region4: #{wave_unet_forward.1} parent=0 // loop_header_branch
    %20 = sbr.rel (%p18) target = $region8
  $region5: #{wave_unet_forward.1} parent=0 // loop_body
    %s22 = ssub.s32 %s17, 1
    %s23 = ssub.s32 %s17, 2
    %s24 = sadd.s32 %s17, 1
    %s25 = ssub.s32 %s17, %s24
    %p26 = scmp.eq.s32.totalorder %s25, 0
    %s28 = sadd.s32 %s27, 1
    %s29 = scalar_select %p26, %s27, %s28
    %p32 = pneg %p26
    %p33 = scmp.eq.s32.totalorder %s17, 1
    %p34 = por %p32, %p33
    %p35 = scmp.ne.s32.totalorder %s27, %s30
    %p36 = scmp.eq.s32.totalorder %s17, 0
    %p37 = por %p35, %p36
    %p38 = scmp.ne.s32.totalorder %s27, %s30
    %p39 = scmp.eq.s32.totalorder %s22, 1
    %p40 = por %p38, %p39
    %p41 = scmp.ne.s32.totalorder %s30, %s31
    %p42 = scmp.eq.s32.totalorder %s22, 0
    %p43 = por %p41, %p42
    %p44 = scmp.ne.s32.totalorder %s30, %s31
    %p45 = scmp.eq.s32.totalorder %s23, 1
    %p46 = por %p44, %p45
    %p48 = scmp.ne.s32.totalorder %s31, %s47
    %p49 = scmp.eq.s32.totalorder %s23, 0
    %p50 = por %p48, %p49
    %s52 = sadd.s32 %s51, 1
    %p55 = scmp.eq.s32.totalorder %s17, 1
    %p56 = scmp.ne.s32.totalorder %s51, %s53
    %p57 = scmp.eq.s32.totalorder %s17, 0
    %p58 = por %p56, %p57
    %p59 = scmp.ne.s32.totalorder %s51, %s53
    %p60 = scmp.eq.s32.totalorder %s22, 1
    %p61 = por %p59, %p60
    %p62 = scmp.ne.s32.totalorder %s53, %s54
    %p63 = scmp.eq.s32.totalorder %s22, 0
    %p64 = por %p62, %p63
    %p65 = scmp.ne.s32.totalorder %s53, %s54
    %p66 = scmp.eq.s32.totalorder %s23, 1
    %p67 = por %p65, %p66
    %p69 = scmp.ne.s32.totalorder %s54, %s68
    %p70 = scmp.eq.s32.totalorder %s23, 0
    %p71 = por %p69, %p70
    %s73 = sadd.s32 %s72, 1
    %p76 = scmp.eq.s32.totalorder %s17, 1
    %p77 = scmp.ne.s32.totalorder %s72, %s74
    %p78 = scmp.eq.s32.totalorder %s17, 0
    %p79 = por %p77, %p78
    %p80 = scmp.ne.s32.totalorder %s72, %s74
    %p81 = scmp.eq.s32.totalorder %s22, 1
    %p82 = por %p80, %p81
    %p83 = scmp.ne.s32.totalorder %s74, %s75
    %p84 = scmp.eq.s32.totalorder %s22, 0
    %p85 = por %p83, %p84
    %p86 = scmp.ne.s32.totalorder %s74, %s75
    %p87 = scmp.eq.s32.totalorder %s23, 1
    %p88 = por %p86, %p87
    %p90 = scmp.ne.s32.totalorder %s75, %s89
    %p91 = scmp.eq.s32.totalorder %s23, 0
    %p92 = por %p90, %p91
    %s94 = sadd.s32 %s93, 1
    %p97 = scmp.eq.s32.totalorder %s17, 1
    %p98 = scmp.ne.s32.totalorder %s93, %s95
    %p99 = scmp.eq.s32.totalorder %s17, 0
    %p100 = por %p98, %p99
    %p101 = scmp.ne.s32.totalorder %s93, %s95
    %p102 = scmp.eq.s32.totalorder %s22, 1
    %p103 = por %p101, %p102
    %p104 = scmp.ne.s32.totalorder %s95, %s96
    %p105 = scmp.eq.s32.totalorder %s22, 0
    %p106 = por %p104, %p105
    %p107 = scmp.ne.s32.totalorder %s95, %s96
    %p108 = scmp.eq.s32.totalorder %s23, 1
    %p109 = por %p107, %p108
    %p111 = scmp.ne.s32.totalorder %s96, %s110
    %p112 = scmp.eq.s32.totalorder %s23, 0
    %p113 = por %p111, %p112
    %s115 = sadd.s32 %s114, 1
    %p118 = scmp.eq.s32.totalorder %s17, 1
    %p119 = scmp.ne.s32.totalorder %s114, %s116
    %p120 = scmp.eq.s32.totalorder %s17, 0
    %p121 = por %p119, %p120
    %p122 = scmp.ne.s32.totalorder %s114, %s116
    %p123 = scmp.eq.s32.totalorder %s22, 1
    %p124 = por %p122, %p123
    %p125 = scmp.ne.s32.totalorder %s116, %s117
    %p126 = scmp.eq.s32.totalorder %s22, 0
    %p127 = por %p125, %p126
    %p128 = scmp.ne.s32.totalorder %s116, %s117
    %p129 = scmp.eq.s32.totalorder %s23, 1
    %p130 = por %p128, %p129
    %p132 = scmp.ne.s32.totalorder %s117, %s131
    %p133 = scmp.eq.s32.totalorder %s23, 0
    %p134 = por %p132, %p133
    %s136 = sadd.s32 %s135, 1
    %p139 = scmp.eq.s32.totalorder %s17, 1
    %p140 = scmp.ne.s32.totalorder %s135, %s137
    %p141 = scmp.eq.s32.totalorder %s17, 0
    %p142 = por %p140, %p141
    %p143 = scmp.ne.s32.totalorder %s135, %s137
    %p144 = scmp.eq.s32.totalorder %s22, 1
    %p145 = por %p143, %p144
    %p146 = scmp.ne.s32.totalorder %s137, %s138
    %p147 = scmp.eq.s32.totalorder %s22, 0
    %p148 = por %p146, %p147
    %p149 = scmp.ne.s32.totalorder %s137, %s138
    %p150 = scmp.eq.s32.totalorder %s23, 1
    %p151 = por %p149, %p150
    %p153 = scmp.ne.s32.totalorder %s138, %s152
    %p154 = scmp.eq.s32.totalorder %s23, 0
    %p155 = por %p153, %p154
    %s157 = sadd.s32 %s156, 1
    %p160 = scmp.eq.s32.totalorder %s17, 1
    %p161 = scmp.ne.s32.totalorder %s156, %s158
    %p162 = scmp.eq.s32.totalorder %s17, 0
    %p163 = por %p161, %p162
    %p164 = scmp.ne.s32.totalorder %s156, %s158
    %p165 = scmp.eq.s32.totalorder %s22, 1
    %p166 = por %p164, %p165
    %p167 = scmp.ne.s32.totalorder %s158, %s159
    %p168 = scmp.eq.s32.totalorder %s22, 0
    %p169 = por %p167, %p168
    %p170 = scmp.ne.s32.totalorder %s158, %s159
    %p171 = scmp.eq.s32.totalorder %s23, 1
    %p172 = por %p170, %p171
    %p174 = scmp.ne.s32.totalorder %s159, %s173
    %p175 = scmp.eq.s32.totalorder %s23, 0
    %p176 = por %p174, %p175
    %s178 = sadd.s32 %s177, 1
    %p181 = scmp.eq.s32.totalorder %s17, 1
    %p182 = scmp.ne.s32.totalorder %s177, %s179
    %p183 = scmp.eq.s32.totalorder %s17, 0
    %p184 = por %p182, %p183
    %p185 = scmp.ne.s32.totalorder %s177, %s179
    %p186 = scmp.eq.s32.totalorder %s22, 1
    %p187 = por %p185, %p186
    %p188 = scmp.ne.s32.totalorder %s179, %s180
    %p189 = scmp.eq.s32.totalorder %s22, 0
    %p190 = por %p188, %p189
    %p191 = scmp.ne.s32.totalorder %s179, %s180
    %p192 = scmp.eq.s32.totalorder %s23, 1
    %p193 = por %p191, %p192
    %p195 = scmp.ne.s32.totalorder %s180, %s194
    %p196 = scmp.eq.s32.totalorder %s23, 0
    %p197 = por %p195, %p196
    %s199 = sadd.s32 %s198, 1
    %p202 = scmp.eq.s32.totalorder %s17, 1
    %p203 = scmp.ne.s32.totalorder %s198, %s200
    %p204 = scmp.eq.s32.totalorder %s17, 0
    %p205 = por %p203, %p204
    %p206 = scmp.ne.s32.totalorder %s198, %s200
    %p207 = scmp.eq.s32.totalorder %s22, 1
    %p208 = por %p206, %p207
    %p209 = scmp.ne.s32.totalorder %s200, %s201
    %p210 = scmp.eq.s32.totalorder %s22, 0
    %p211 = por %p209, %p210
    %p212 = scmp.ne.s32.totalorder %s200, %s201
    %p213 = scmp.eq.s32.totalorder %s23, 1
    %p214 = por %p212, %p213
    %p216 = scmp.ne.s32.totalorder %s201, %s215
    %p217 = scmp.eq.s32.totalorder %s23, 0
    %p218 = por %p216, %p217
    %s219 = ssub.s32 %s17, %s24
    %p220 = scmp.eq.s32.totalorder %s219, 0
    %s222 = sadd.s32 %s221, 1
    %s223 = scalar_select %p220, %s221, %s222
    %p226 = pneg %p220
    %p227 = scmp.eq.s32.totalorder %s17, 1
    %p228 = por %p226, %p227
    %p229 = scmp.ne.s32.totalorder %s221, %s224
    %p230 = scmp.eq.s32.totalorder %s17, 0
    %p231 = por %p229, %p230
    %p232 = scmp.ne.s32.totalorder %s221, %s224
    %p233 = scmp.eq.s32.totalorder %s22, 1
    %p234 = por %p232, %p233
    %p235 = scmp.ne.s32.totalorder %s224, %s225
    %p236 = scmp.eq.s32.totalorder %s22, 0
    %p237 = por %p235, %p236
    %p238 = scmp.ne.s32.totalorder %s224, %s225
    %p239 = scmp.eq.s32.totalorder %s23, 1
    %p240 = por %p238, %p239
    %p242 = scmp.ne.s32.totalorder %s225, %s241
    %p243 = scmp.eq.s32.totalorder %s23, 0
    %p244 = por %p242, %p243
    %p245 = scmp.le.s32.totalorder 1, %s17
    %p246 = scmp.lt.s32.totalorder %s17, 3
    %p247 = pnand %p245, %p246
    %p248 = pneg %p247
    // Predicated region
    $region9: #{wave_unet_forward.1} parent=5 // pred_check
      _
    $region10: #{wave_unet_forward.1} parent=5 // pred_check_branch
      %250 = sbr.rel (%p247) target = $region12
    $region11: #{wave_unet_forward.1} parent=5 // pred_region
      %s251 = ssub.s32 %s17, 1
      // Predicated region
      $region13: #{wave_unet_forward.1} parent=11 // pred_check
        %p252 = pneg %p64
      $region14: #{wave_unet_forward.1} parent=11 // pred_check_branch
        %254 = sbr.rel (%p252) target = $region16
      $region15: #{wave_unet_forward.1} parent=11 // pred_region
        _
      $region16: #{wave_unet_forward.1} parent=11 // pred_fallthru
        _
      // Predicated region
      $region17: #{wave_unet_forward.1} parent=11 // pred_check
        %p255 = pneg %p85
      $region18: #{wave_unet_forward.1} parent=11 // pred_check_branch
        %257 = sbr.rel (%p255) target = $region20
      $region19: #{wave_unet_forward.1} parent=11 // pred_region
        _
      $region20: #{wave_unet_forward.1} parent=11 // pred_fallthru
        _
      // Predicated region
      $region21: #{wave_unet_forward.1} parent=11 // pred_check
        %p258 = pneg %p106
      $region22: #{wave_unet_forward.1} parent=11 // pred_check_branch
        %260 = sbr.rel (%p258) target = $region24
      $region23: #{wave_unet_forward.1} parent=11 // pred_region
        _
      $region24: #{wave_unet_forward.1} parent=11 // pred_fallthru
        _
      // Predicated region
      $region25: #{wave_unet_forward.1} parent=11 // pred_check
        %p261 = pneg %p127
      $region26: #{wave_unet_forward.1} parent=11 // pred_check_branch
        %263 = sbr.rel (%p261) target = $region28
      $region27: #{wave_unet_forward.1} parent=11 // pred_region
        _
      $region28: #{wave_unet_forward.1} parent=11 // pred_fallthru
        _
      // Predicated region
      $region29: #{wave_unet_forward.1} parent=11 // pred_check
        %p264 = pneg %p148
      $region30: #{wave_unet_forward.1} parent=11 // pred_check_branch
        %266 = sbr.rel (%p264) target = $region32
      $region31: #{wave_unet_forward.1} parent=11 // pred_region
        _
      $region32: #{wave_unet_forward.1} parent=11 // pred_fallthru
        _
      // Predicated region
      $region33: #{wave_unet_forward.1} parent=11 // pred_check
        %p267 = pneg %p169
      $region34: #{wave_unet_forward.1} parent=11 // pred_check_branch
        %269 = sbr.rel (%p267) target = $region36
      $region35: #{wave_unet_forward.1} parent=11 // pred_region
        _
      $region36: #{wave_unet_forward.1} parent=11 // pred_fallthru
        _
      // Predicated region
      $region37: #{wave_unet_forward.1} parent=11 // pred_check
        %p270 = pneg %p190
      $region38: #{wave_unet_forward.1} parent=11 // pred_check_branch
        %272 = sbr.rel (%p270) target = $region40
      $region39: #{wave_unet_forward.1} parent=11 // pred_region
        _
      $region40: #{wave_unet_forward.1} parent=11 // pred_fallthru
        _
      // Predicated region
      $region41: #{wave_unet_forward.1} parent=11 // pred_check
        %p273 = pneg %p211
      $region42: #{wave_unet_forward.1} parent=11 // pred_check_branch
        %275 = sbr.rel (%p273) target = $region44
      $region43: #{wave_unet_forward.1} parent=11 // pred_region
        _
      $region44: #{wave_unet_forward.1} parent=11 // pred_fallthru
        _
    $region12: #{wave_unet_forward.1} parent=5 // pred_fallthru
      _
    %p276 = scmp.lt.s32.totalorder %s17, 2
    // Predicated region
    $region45: #{wave_unet_forward.1} parent=5 // pred_check
      %p277 = pneg %p276
    $region46: #{wave_unet_forward.1} parent=5 // pred_check_branch
      %279 = sbr.rel (%p277) target = $region48
    $region47: #{wave_unet_forward.1} parent=5 // pred_region
      // Predicated region
      $region49: #{wave_unet_forward.1} parent=47 // pred_check
        %p280 = pneg %p37
      $region50: #{wave_unet_forward.1} parent=47 // pred_check_branch
        %282 = sbr.rel (%p280) target = $region52
      $region51: #{wave_unet_forward.1} parent=47 // pred_region
        %p283 = scmp.lt.s32.totalorder %s17, 1
        %s284 = scalar_select %p283, %s17, 1
        %s285 = smul.addr %s284, 54
        %s286 = smul.addr %s285, 8
        %s287 = scalar_lea.vmem %s0, %s286
      $region52: #{wave_unet_forward.1} parent=47 // pred_fallthru
        _
    $region48: #{wave_unet_forward.1} parent=5 // pred_fallthru
      _
    %p288 = scmp.le.s32.totalorder 1, %s17
    %p289 = scmp.lt.s32.totalorder %s17, 3
    %p290 = pnand %p288, %p289
    %p291 = pneg %p290
    // Predicated region
    $region53: #{wave_unet_forward.1} parent=5 // pred_check
      _
    $region54: #{wave_unet_forward.1} parent=5 // pred_check_branch
      %293 = sbr.rel (%p290) target = $region56
    $region55: #{wave_unet_forward.1} parent=5 // pred_region
      %s294 = ssub.s32 %s17, 1
      %p295 = scmp.lt.s32.totalorder %s22, 1
      %s296 = scalar_select %p295, %s22, 1
      %s297 = smul.addr %s296, 54
      %s298 = smul.addr %s297, 8
      %s299 = scalar_lea.vmem %s0, %s298
      %p300 = pneg %p43
      %p301 = pneg %p40
      %p302 = pneg %p64
      %p303 = pneg %p61
      %p304 = pneg %p85
      %p305 = pneg %p82
      %p306 = pneg %p106
      %p307 = pneg %p103
      %p308 = pneg %p127
      %p309 = pneg %p124
      %p310 = pneg %p148
      %p311 = pneg %p145
      %p312 = pneg %p169
      %p313 = pneg %p166
      %p314 = pneg %p190
      %p315 = pneg %p187
      %p316 = pneg %p211
      %p317 = pneg %p208
      %p318 = pneg %p237
      %p319 = pneg %p234
      %p320 = scmp.lt.s32.totalorder %s22, 1
      %s321 = scalar_select %p320, %s22, 1
      %s322 = smul.addr %s321, 32
      %s323 = smul.addr %s322, 8
      %s324 = scalar_lea.vmem %s9, %s323
      %p325 = scmp.lt.s32.totalorder %s22, 1
      %s326 = scalar_select %p325, %s22, 1
      %s327 = smul.addr %s326, 54
      %s328 = smul.addr %s327, 8
      %s329 = scalar_lea.vmem %s0, %s328
      %p330 = scmp.lt.s32.totalorder %s22, 1
      %s331 = scalar_select %p330, %s22, 1
      %s332 = smul.addr %s331, 32
      %s333 = smul.addr %s332, 8
      %s334 = scalar_lea.vmem %s9, %s333
      %vm335 = vcmask 523264
      %336 = vst.msk [vmem:[#allocation2] sm:$0xff] %vm335, 0.0
      %337 = vst.msk [vmem:[#allocation2 + $0x8] sm:$0xff] %vm335, 0.0
      %vm338 = vcmask 517120
      %339 = vst.msk [vmem:[#allocation2 + $0x10] sm:$0x3] %vm338, 0.0
      %340 = vst.msk [vmem:[#allocation2 + $0x18] sm:$0xff] %vm335, 0.0
      %341 = vst.msk [vmem:[#allocation2 + $0x20] sm:$0xff] %vm335, 0.0
      %342 = vst.msk [vmem:[#allocation2 + $0x28] sm:$0x3] %vm338, 0.0
      %343 = vst.msk [vmem:[#allocation2 + $0x30] sm:$0xff] %vm335, 0.0
      %344 = vst.msk [vmem:[#allocation2 + $0x38] sm:$0xff] %vm335, 0.0
      %345 = vst.msk [vmem:[#allocation2 + $0x40] sm:$0x3] %vm338, 0.0
      %346 = vst.msk [vmem:[#allocation2 + $0x48] sm:$0xff] %vm335, 0.0
      %347 = vst.msk [vmem:[#allocation2 + $0x50] sm:$0xff] %vm335, 0.0
      %348 = vst.msk [vmem:[#allocation2 + $0x58] sm:$0x3] %vm338, 0.0
      %349 = vst.msk [vmem:[#allocation2 + $0x60] sm:$0xff] %vm335, 0.0
      %350 = vst.msk [vmem:[#allocation2 + $0x68] sm:$0xff] %vm335, 0.0
      %351 = vst.msk [vmem:[#allocation2 + $0x70] sm:$0x3] %vm338, 0.0
      %352 = vst.msk [vmem:[#allocation2 + $0x78] sm:$0xff] %vm335, 0.0
      %353 = vst.msk [vmem:[#allocation2 + $0x80] sm:$0xff] %vm335, 0.0
      %354 = vst.msk [vmem:[#allocation2 + $0x88] sm:$0x3] %vm338, 0.0
      %355 = vst.msk [vmem:[#allocation2 + $0x90] sm:$0xff] %vm335, 0.0
      %356 = vst.msk [vmem:[#allocation2 + $0x98] sm:$0xff] %vm335, 0.0
      %357 = vst.msk [vmem:[#allocation2 + $0xa0] sm:$0x3] %vm338, 0.0
      %358 = vst.msk [vmem:[#allocation2 + $0xa8] sm:$0xff] %vm335, 0.0
      %359 = vst.msk [vmem:[#allocation2 + $0xb0] sm:$0xff] %vm335, 0.0
      %360 = vst.msk [vmem:[#allocation2 + $0xb8] sm:$0x3] %vm338, 0.0
      %361 = vst.msk [vmem:[#allocation2 + $0xc0] sm:$0xff] %vm335, 0.0
      %362 = vst.msk [vmem:[#allocation2 + $0xc8] sm:$0xff] %vm335, 0.0
      %363 = vst.msk [vmem:[#allocation2 + $0xd0] sm:$0x3] %vm338, 0.0
      %364 = vst.msk [vmem:[#allocation2 + $0xd8] sm:$0xff] %vm335, 0.0
      %365 = vst.msk [vmem:[#allocation2 + $0xe0] sm:$0xff] %vm335, 0.0
      %366 = vst.msk [vmem:[#allocation2 + $0xe8] sm:$0x3] %vm338, 0.0
      %367 = vst.msk [vmem:[#allocation2 + $0xf0] sm:$0xff] %vm335, 0.0
      %368 = vst.msk [vmem:[#allocation2 + $0xf8] sm:$0xff] %vm335, 0.0
      %369 = vst.msk [vmem:[#allocation2 + $0x100] sm:$0x3] %vm338, 0.0
      %370 = vst.msk [vmem:[#allocation2 + $0x108] sm:$0xff] %vm335, 0.0
      %371 = vst.msk [vmem:[#allocation2 + $0x110] sm:$0xff] %vm335, 0.0
      %372 = vst.msk [vmem:[#allocation2 + $0x118] sm:$0x3] %vm338, 0.0
      %373 = vst.msk [vmem:[#allocation2 + $0x120] sm:$0xff] %vm335, 0.0
      %374 = vst.msk [vmem:[#allocation2 + $0x128] sm:$0xff] %vm335, 0.0
      %375 = vst.msk [vmem:[#allocation2 + $0x130] sm:$0x3] %vm338, 0.0
      %376 = vst.msk [vmem:[#allocation2 + $0x138] sm:$0xff] %vm335, 0.0
      %377 = vst.msk [vmem:[#allocation2 + $0x140] sm:$0xff] %vm335, 0.0
      %378 = vst.msk [vmem:[#allocation2 + $0x148] sm:$0x3] %vm338, 0.0
      %379 = vst.msk [vmem:[#allocation2 + $0x150] sm:$0xff] %vm335, 0.0
      %380 = vst.msk [vmem:[#allocation2 + $0x158] sm:$0xff] %vm335, 0.0
      %381 = vst.msk [vmem:[#allocation2 + $0x160] sm:$0x3] %vm338, 0.0
      %382 = vst.msk [vmem:[#allocation2 + $0x168] sm:$0xff] %vm335, 0.0
      %383 = vst.msk [vmem:[#allocation2 + $0x170] sm:$0xff] %vm335, 0.0
      %384 = vst.msk [vmem:[#allocation2 + $0x178] sm:$0x3] %vm338, 0.0
      %385 = vst.msk [vmem:[#allocation2 + $0x180] sm:$0xff] %vm335, 0.0
      %386 = vst.msk [vmem:[#allocation2 + $0x188] sm:$0xff] %vm335, 0.0
      %387 = vst.msk [vmem:[#allocation2 + $0x190] sm:$0x3] %vm338, 0.0
      %388 = vst.msk [vmem:[#allocation2 + $0x198] sm:$0xff] %vm335, 0.0
      %389 = vst.msk [vmem:[#allocation2 + $0x1a0] sm:$0xff] %vm335, 0.0
      %390 = vst.msk [vmem:[#allocation2 + $0x1a8] sm:$0x3] %vm338, 0.0
      %391 = vst [vmem:[#allocation3] sm:$0xff] 0.0
      %392 = vst [vmem:[#allocation3 + $0x8] sm:$0xff] 0.0
      %393 = vst [vmem:[#allocation3 + $0x10] sm:$0x3] 0.0
      %394 = vst [vmem:[#allocation3 + $0x18] sm:$0xff] 0.0
      %395 = vst [vmem:[#allocation3 + $0x20] sm:$0xff] 0.0
      %396 = vst [vmem:[#allocation3 + $0x28] sm:$0x3] 0.0
      %397 = vst [vmem:[#allocation3 + $0x30] sm:$0xff] 0.0
      %398 = vst [vmem:[#allocation3 + $0x38] sm:$0xff] 0.0
      %399 = vst [vmem:[#allocation3 + $0x40] sm:$0x3] 0.0
      %400 = vst [vmem:[#allocation3 + $0x48] sm:$0xff] 0.0
      %401 = vst [vmem:[#allocation3 + $0x50] sm:$0xff] 0.0
      %402 = vst [vmem:[#allocation3 + $0x58] sm:$0x3] 0.0
      %403 = vst [vmem:[#allocation3 + $0x60] sm:$0xff] 0.0
      %404 = vst [vmem:[#allocation3 + $0x68] sm:$0xff] 0.0
      %405 = vst [vmem:[#allocation3 + $0x70] sm:$0x3] 0.0
      %406 = vst [vmem:[#allocation3 + $0x78] sm:$0xff] 0.0
      %407 = vst [vmem:[#allocation3 + $0x80] sm:$0xff] 0.0
      %408 = vst [vmem:[#allocation3 + $0x88] sm:$0x3] 0.0
      %409 = vst [vmem:[#allocation3 + $0x90] sm:$0xff] 0.0
      %410 = vst [vmem:[#allocation3 + $0x98] sm:$0xff] 0.0
      %411 = vst [vmem:[#allocation3 + $0xa0] sm:$0x3] 0.0
      %412 = vst [vmem:[#allocation3 + $0xa8] sm:$0xff] 0.0
      %413 = vst [vmem:[#allocation3 + $0xb0] sm:$0xff] 0.0
      %414 = vst [vmem:[#allocation3 + $0xb8] sm:$0x3] 0.0
      %415 = vst [vmem:[#allocation3 + $0xc0] sm:$0xff] 0.0
      %416 = vst [vmem:[#allocation3 + $0xc8] sm:$0xff] 0.0
      %417 = vst [vmem:[#allocation3 + $0xd0] sm:$0x3] 0.0
      %418 = vst [vmem:[#allocation3 + $0xd8] sm:$0xff] 0.0
      %419 = vst [vmem:[#allocation3 + $0xe0] sm:$0xff] 0.0
      %420 = vst [vmem:[#allocation3 + $0xe8] sm:$0x3] 0.0
      %421 = vst [vmem:[#allocation3 + $0xf0] sm:$0xff] 0.0
      %422 = vst [vmem:[#allocation3 + $0xf8] sm:$0xff] 0.0
      %423 = vst [vmem:[#allocation3 + $0x100] sm:$0x3] 0.0
      %424 = vst [vmem:[#allocation3 + $0x108] sm:$0xff] 0.0
      %425 = vst [vmem:[#allocation3 + $0x110] sm:$0xff] 0.0
      %426 = vst [vmem:[#allocation3 + $0x118] sm:$0x3] 0.0
      %427 = vst [vmem:[#allocation3 + $0x120] sm:$0xff] 0.0
      %428 = vst [vmem:[#allocation3 + $0x128] sm:$0xff] 0.0
      %429 = vst [vmem:[#allocation3 + $0x130] sm:$0x3] 0.0
      %430 = vst [vmem:[#allocation3 + $0x138] sm:$0xff] 0.0
      %431 = vst [vmem:[#allocation3 + $0x140] sm:$0xff] 0.0
      %432 = vst [vmem:[#allocation3 + $0x148] sm:$0x3] 0.0
      %433 = vst [vmem:[#allocation3 + $0x150] sm:$0xff] 0.0
      %434 = vst [vmem:[#allocation3 + $0x158] sm:$0xff] 0.0
      %435 = vst [vmem:[#allocation3 + $0x160] sm:$0x3] 0.0
      %436 = vst [vmem:[#allocation3 + $0x168] sm:$0xff] 0.0
      %437 = vst [vmem:[#allocation3 + $0x170] sm:$0xff] 0.0
      %438 = vst [vmem:[#allocation3 + $0x178] sm:$0x3] 0.0
      %439 = vst [vmem:[#allocation3 + $0x180] sm:$0xff] 0.0
      %440 = vst [vmem:[#allocation3 + $0x188] sm:$0xff] 0.0
      %441 = vst [vmem:[#allocation3 + $0x190] sm:$0x3] 0.0
      %442 = vst [vmem:[#allocation3 + $0x198] sm:$0xff] 0.0
      %443 = vst [vmem:[#allocation3 + $0x1a0] sm:$0xff] 0.0
      %444 = vst [vmem:[#allocation3 + $0x1a8] sm:$0x3] 0.0
      %445 = vst.msk [vmem:[#allocation4] sm:$0xff] %vm335, 0.0
      %446 = vst.msk [vmem:[#allocation4 + $0x8] sm:$0xff] %vm335, 0.0
      %447 = vst.msk [vmem:[#allocation4 + $0x10] sm:$0x3] %vm338, 0.0
      %448 = vst.msk [vmem:[#allocation4 + $0x18] sm:$0xff] %vm335, 0.0
      %449 = vst.msk [vmem:[#allocation4 + $0x20] sm:$0xff] %vm335, 0.0
      %450 = vst.msk [vmem:[#allocation4 + $0x28] sm:$0x3] %vm338, 0.0
      %451 = vst.msk [vmem:[#allocation4 + $0x30] sm:$0xff] %vm335, 0.0
      %452 = vst.msk [vmem:[#allocation4 + $0x38] sm:$0xff] %vm335, 0.0
      %453 = vst.msk [vmem:[#allocation4 + $0x40] sm:$0x3] %vm338, 0.0
      %454 = vst.msk [vmem:[#allocation4 + $0x48] sm:$0xff] %vm335, 0.0
      %455 = vst.msk [vmem:[#allocation4 + $0x50] sm:$0xff] %vm335, 0.0
      %456 = vst.msk [vmem:[#allocation4 + $0x58] sm:$0x3] %vm338, 0.0
      %457 = vst.msk [vmem:[#allocation4 + $0x60] sm:$0xff] %vm335, 0.0
      %458 = vst.msk [vmem:[#allocation4 + $0x68] sm:$0xff] %vm335, 0.0
      %459 = vst.msk [vmem:[#allocation4 + $0x70] sm:$0x3] %vm338, 0.0
      %460 = vst.msk [vmem:[#allocation4 + $0x78] sm:$0xff] %vm335, 0.0
      %461 = vst.msk [vmem:[#allocation4 + $0x80] sm:$0xff] %vm335, 0.0
      %462 = vst.msk [vmem:[#allocation4 + $0x88] sm:$0x3] %vm338, 0.0
      %463 = vst.msk [vmem:[#allocation4 + $0x90] sm:$0xff] %vm335, 0.0
      %464 = vst.msk [vmem:[#allocation4 + $0x98] sm:$0xff] %vm335, 0.0
      %465 = vst.msk [vmem:[#allocation4 + $0xa0] sm:$0x3] %vm338, 0.0
      %466 = vst.msk [vmem:[#allocation4 + $0xa8] sm:$0xff] %vm335, 0.0
      %467 = vst.msk [vmem:[#allocation4 + $0xb0] sm:$0xff] %vm335, 0.0
      %468 = vst.msk [vmem:[#allocation4 + $0xb8] sm:$0x3] %vm338, 0.0
      %469 = vst.msk [vmem:[#allocation4 + $0xc0] sm:$0xff] %vm335, 0.0
      %470 = vst.msk [vmem:[#allocation4 + $0xc8] sm:$0xff] %vm335, 0.0
      %471 = vst.msk [vmem:[#allocation4 + $0xd0] sm:$0x3] %vm338, 0.0
      %472 = vst.msk [vmem:[#allocation4 + $0xd8] sm:$0xff] %vm335, 0.0
      %473 = vst.msk [vmem:[#allocation4 + $0xe0] sm:$0xff] %vm335, 0.0
      %474 = vst.msk [vmem:[#allocation4 + $0xe8] sm:$0x3] %vm338, 0.0
      %475 = vst.msk [vmem:[#allocation4 + $0xf0] sm:$0xff] %vm335, 0.0
      %476 = vst.msk [vmem:[#allocation4 + $0xf8] sm:$0xff] %vm335, 0.0
      %477 = vst.msk [vmem:[#allocation4 + $0x100] sm:$0x3] %vm338, 0.0
      %478 = vst.msk [vmem:[#allocation4 + $0x108] sm:$0xff] %vm335, 0.0
      %479 = vst.msk [vmem:[#allocation4 + $0x110] sm:$0xff] %vm335, 0.0
      %480 = vst.msk [vmem:[#allocation4 + $0x118] sm:$0x3] %vm338, 0.0
      %481 = vst.msk [vmem:[#allocation4 + $0x120] sm:$0xff] %vm335, 0.0
      %482 = vst.msk [vmem:[#allocation4 + $0x128] sm:$0xff] %vm335, 0.0
      %483 = vst.msk [vmem:[#allocation4 + $0x130] sm:$0x3] %vm338, 0.0
      %484 = vst.msk [vmem:[#allocation4 + $0x138] sm:$0xff] %vm335, 0.0
      %485 = vst.msk [vmem:[#allocation4 + $0x140] sm:$0xff] %vm335, 0.0
      %486 = vst.msk [vmem:[#allocation4 + $0x148] sm:$0x3] %vm338, 0.0
      %487 = vst.msk [vmem:[#allocation4 + $0x150] sm:$0xff] %vm335, 0.0
      %488 = vst.msk [vmem:[#allocation4 + $0x158] sm:$0xff] %vm335, 0.0
      %489 = vst.msk [vmem:[#allocation4 + $0x160] sm:$0x3] %vm338, 0.0
      %490 = vst.msk [vmem:[#allocation4 + $0x168] sm:$0xff] %vm335, 0.0
      %491 = vst.msk [vmem:[#allocation4 + $0x170] sm:$0xff] %vm335, 0.0
      %492 = vst.msk [vmem:[#allocation4 + $0x178] sm:$0x3] %vm338, 0.0
      %493 = vst.msk [vmem:[#allocation4 + $0x180] sm:$0xff] %vm335, 0.0
      %494 = vst.msk [vmem:[#allocation4 + $0x188] sm:$0xff] %vm335, 0.0
      %495 = vst.msk [vmem:[#allocation4 + $0x190] sm:$0x3] %vm338, 0.0
      %496 = vst.msk [vmem:[#allocation4 + $0x198] sm:$0xff] %vm335, 0.0
      %497 = vst.msk [vmem:[#allocation4 + $0x1a0] sm:$0xff] %vm335, 0.0
      %498 = vst.msk [vmem:[#allocation4 + $0x1a8] sm:$0x3] %vm338, 0.0
      %v499 = vld [vmem:[%s329] sm:$0xff]
      %v500 = vld [vmem:[%s329 + $0x8] sm:$0xff]
      %v501 = vld [vmem:[%s329 + $0x18] sm:$0xff]
      %v502 = vld [vmem:[%s329 + $0x20] sm:$0xff]
      %v503 = vld [vmem:[%s329 + $0x30] sm:$0xff]
      %v504 = vld [vmem:[%s329 + $0x38] sm:$0xff]
      %v505 = vld [vmem:[%s329 + $0x48] sm:$0xff]
      %v506 = vld [vmem:[%s329 + $0x50] sm:$0xff]
      %v507 = vld [vmem:[%s329 + $0x60] sm:$0xff]
      %v508 = vld [vmem:[%s329 + $0x68] sm:$0xff]
      %v509 = vld [vmem:[%s329 + $0x78] sm:$0xff]
      %v510 = vld [vmem:[%s329 + $0x80] sm:$0xff]
      %v511 = vld [vmem:[%s329 + $0x90] sm:$0xff]
      %v512 = vld [vmem:[%s329 + $0x98] sm:$0xff]
      %v513 = vld [vmem:[%s329 + $0xa8] sm:$0xff]
      %v514 = vld [vmem:[%s329 + $0xb0] sm:$0xff]
      %v515 = vld [vmem:[%s329 + $0xc0] sm:$0xff]
      %v516 = vld [vmem:[%s329 + $0xc8] sm:$0xff]
      %v517 = vld [vmem:[%s329 + $0xd8] sm:$0xff]
      %v518 = vld [vmem:[%s329 + $0xe0] sm:$0xff]
      %v519 = vld [vmem:[%s329 + $0xf0] sm:$0xff]
      %v520 = vld [vmem:[%s329 + $0xf8] sm:$0xff]
      %v521 = vld [vmem:[%s329 + $0x108] sm:$0xff]
      %v522 = vld [vmem:[%s329 + $0x110] sm:$0xff]
      %v523 = vld [vmem:[%s329 + $0x120] sm:$0xff]
      %v524 = vld [vmem:[%s329 + $0x128] sm:$0xff]
      %v525 = vld [vmem:[%s329 + $0x138] sm:$0xff]
      %v526 = vld [vmem:[%s329 + $0x140] sm:$0xff]
      %v527 = vld [vmem:[%s329 + $0x150] sm:$0xff]
      %v528 = vld [vmem:[%s329 + $0x158] sm:$0xff]
      %v529 = vld [vmem:[%s329 + $0x168] sm:$0xff]
      %v530 = vld [vmem:[%s329 + $0x170] sm:$0xff]
      %v531 = vld [vmem:[%s1] sm:$0xff]
      %v532 = vld [vmem:[%s329 + $0x1] sm:$0xff]
      %v533 = vld [vmem:[%s329 + $0x9] sm:$0xff]
      %v534 = vld [vmem:[%s329 + $0x19] sm:$0xff]
      %v535 = vld [vmem:[%s329 + $0x21] sm:$0xff]
      %v536 = vld [vmem:[%s329 + $0x31] sm:$0xff]
      %v537 = vld [vmem:[%s329 + $0x39] sm:$0xff]
      %v538 = vld [vmem:[%s329 + $0x49] sm:$0xff]
      %v539 = vld [vmem:[%s329 + $0x51] sm:$0xff]
      %v540 = vld [vmem:[%s329 + $0x61] sm:$0xff]
      %v541 = vld [vmem:[%s329 + $0x69] sm:$0xff]
      %v542 = vld [vmem:[%s329 + $0x79] sm:$0xff]
      %v543 = vld [vmem:[%s329 + $0x81] sm:$0xff]
      %v544 = vld [vmem:[%s329 + $0x91] sm:$0xff]
      %v545 = vld [vmem:[%s329 + $0x99] sm:$0xff]
      %v546 = vld [vmem:[%s329 + $0xa9] sm:$0xff]
      %v547 = vld [vmem:[%s329 + $0xb1] sm:$0xff]
      %v548 = vld [vmem:[%s329 + $0xc1] sm:$0xff]
      %v549 = vld [vmem:[%s329 + $0xc9] sm:$0xff]
      %v550 = vld [vmem:[%s329 + $0xd9] sm:$0xff]
      %v551 = vld [vmem:[%s329 + $0xe1] sm:$0xff]
      %v552 = vld [vmem:[%s329 + $0xf1] sm:$0xff]
      %v553 = vld [vmem:[%s329 + $0xf9] sm:$0xff]
      %v554 = vld [vmem:[%s329 + $0x109] sm:$0xff]
      %v555 = vld [vmem:[%s329 + $0x111] sm:$0xff]
      %v556 = vld [vmem:[%s329 + $0x121] sm:$0xff]
      %v557 = vld [vmem:[%s329 + $0x129] sm:$0xff]
      %v558 = vld [vmem:[%s329 + $0x139] sm:$0xff]
      %v559 = vld [vmem:[%s329 + $0x141] sm:$0xff]
      %v560 = vld [vmem:[%s329 + $0x151] sm:$0xff]
      %v561 = vld [vmem:[%s329 + $0x159] sm:$0xff]
      %v562 = vld [vmem:[%s329 + $0x169] sm:$0xff]
      %v563 = vld [vmem:[%s329 + $0x171] sm:$0xff]
      %s564 = scalar_lea.vmem %s1, 8
      %v565 = vld [vmem:[%s564] sm:$0xff]
      %vm566 = vcmask 64512
      %v568 = vsel %vm566, %v532, 0
      %v571 = vsel %vm566, %v533, 0
      %v574 = vsel %vm566, %v534, 0
      %v577 = vsel %vm566, %v535, 0
      %v580 = vsel %vm566, %v536, 0
      %v583 = vsel %vm566, %v537, 0
      %v586 = vsel %vm566, %v538, 0
      %v589 = vsel %vm566, %v539, 0
      %v592 = vsel %vm566, %v540, 0
      %v595 = vsel %vm566, %v541, 0
      %v598 = vsel %vm566, %v542, 0
      %v601 = vsel %vm566, %v543, 0
      %v604 = vsel %vm566, %v544, 0
      %v607 = vsel %vm566, %v545, 0
      %v610 = vsel %vm566, %v546, 0
      %v613 = vsel %vm566, %v547, 0
      %v616 = vsel %vm566, %v548, 0
      %v619 = vsel %vm566, %v549, 0
      %v622 = vsel %vm566, %v550, 0
      %v625 = vsel %vm566, %v551, 0
      %v628 = vsel %vm566, %v552, 0
      %v631 = vsel %vm566, %v553, 0
      %v634 = vsel %vm566, %v554, 0
      %v637 = vsel %vm566, %v555, 0
      %v640 = vsel %vm566, %v556, 0
      %v643 = vsel %vm566, %v557, 0
      %v646 = vsel %vm566, %v558, 0
      %v649 = vsel %vm566, %v559, 0
      %v652 = vsel %vm566, %v560, 0
      %v655 = vsel %vm566, %v561, 0
      %v658 = vsel %vm566, %v562, 0
      %v661 = vsel %vm566, %v563, 0
      %663 = vmatpush.msra.mxu0 0.0
      %664 = vmatpush.msra.mxu0 0.0
      %665 = vmatpush.msra.mxu0 0.0
      %666 = vmatpush.msra.mxu0 0.0
      %667 = vmatpush.msra.mxu0 0.0
      %668 = vmatpush.msra.mxu0 0.0
      %669 = vmatpush.msra.mxu0 0.0
      %670 = vmatpush.msra.mxu0 0.0
      %671 = vmatpush.msra.mxu0 0.0
      %672 = vmatpush.msra.mxu0 0.0
      %673 = vmatpush.msra.mxu0 0.0
      %674 = vmatpush.msra.mxu0 0.0
      %675 = vmatpush.msra.mxu0 0.0
      %676 = vmatpush.msra.mxu0 0.0
      %677 = vmatpush.msra.mxu0 0.0
      %678 = vmatpush.msra.mxu0 %v565
      %679 = vmatmul.f32.gmra.mxu0 %v568
      %v680 = vpop.f32.mrf.mxu0
      %v681 = vadd.f32 0.0, %v680
      %682 = vmatmul.f32.gmra.mxu0 %v571
      %v683 = vpop.f32.mrf.mxu0
      %v684 = vadd.f32 0.0, %v683
      %685 = vmatmul.f32.gmra.mxu0 %v574
      %v686 = vpop.f32.mrf.mxu0
      %v687 = vadd.f32 0.0, %v686
      %688 = vmatmul.f32.gmra.mxu0 %v577
      %v689 = vpop.f32.mrf.mxu0
      %v690 = vadd.f32 0.0, %v689
      %691 = vmatmul.f32.gmra.mxu0 %v580
      %v692 = vpop.f32.mrf.mxu0
      %v693 = vadd.f32 0.0, %v692
      %694 = vmatmul.f32.gmra.mxu0 %v583
      %v695 = vpop.f32.mrf.mxu0
      %v696 = vadd.f32 0.0, %v695
      %697 = vmatmul.f32.gmra.mxu0 %v586
      %v698 = vpop.f32.mrf.mxu0
      %v699 = vadd.f32 0.0, %v698
      %700 = vmatmul.f32.gmra.mxu0 %v589
      %v701 = vpop.f32.mrf.mxu0
      %v702 = vadd.f32 0.0, %v701
      %703 = vmatmul.f32.gmra.mxu0 %v592
      %v704 = vpop.f32.mrf.mxu0
      %v705 = vadd.f32 0.0, %v704
      %706 = vmatmul.f32.gmra.mxu0 %v595
      %v707 = vpop.f32.mrf.mxu0
      %v708 = vadd.f32 0.0, %v707
      %709 = vmatmul.f32.gmra.mxu0 %v598
      %v710 = vpop.f32.mrf.mxu0
      %v711 = vadd.f32 0.0, %v710
      %712 = vmatmul.f32.gmra.mxu0 %v601
      %v713 = vpop.f32.mrf.mxu0
      %v714 = vadd.f32 0.0, %v713
      %715 = vmatmul.f32.gmra.mxu0 %v604
      %v716 = vpop.f32.mrf.mxu0
      %v717 = vadd.f32 0.0, %v716
      %718 = vmatmul.f32.gmra.mxu0 %v607
      %v719 = vpop.f32.mrf.mxu0
      %v720 = vadd.f32 0.0, %v719
      %721 = vmatmul.f32.gmra.mxu0 %v610
      %v722 = vpop.f32.mrf.mxu0
      %v723 = vadd.f32 0.0, %v722
      %724 = vmatmul.f32.gmra.mxu0 %v613
      %v725 = vpop.f32.mrf.mxu0
      %v726 = vadd.f32 0.0, %v725
      %727 = vmatmul.f32.gmra.mxu0 %v616
      %v728 = vpop.f32.mrf.mxu0
      %v729 = vadd.f32 0.0, %v728
      %730 = vmatmul.f32.gmra.mxu0 %v619
      %v731 = vpop.f32.mrf.mxu0
      %v732 = vadd.f32 0.0, %v731
      %733 = vmatmul.f32.gmra.mxu0 %v622
      %v734 = vpop.f32.mrf.mxu0
      %v735 = vadd.f32 0.0, %v734
      %736 = vmatmul.f32.gmra.mxu0 %v625
      %v737 = vpop.f32.mrf.mxu0
      %v738 = vadd.f32 0.0, %v737
      %739 = vmatmul.f32.gmra.mxu0 %v628
      %v740 = vpop.f32.mrf.mxu0
      %v741 = vadd.f32 0.0, %v740
      %742 = vmatmul.f32.gmra.mxu0 %v631
      %v743 = vpop.f32.mrf.mxu0
      %v744 = vadd.f32 0.0, %v743
      %745 = vmatmul.f32.gmra.mxu0 %v634
      %v746 = vpop.f32.mrf.mxu0
      %v747 = vadd.f32 0.0, %v746
      %748 = vmatmul.f32.gmra.mxu0 %v637
      %v749 = vpop.f32.mrf.mxu0
      %v750 = vadd.f32 0.0, %v749
      %751 = vmatmul.f32.gmra.mxu0 %v640
      %v752 = vpop.f32.mrf.mxu0
      %v753 = vadd.f32 0.0, %v752
      %754 = vmatmul.f32.gmra.mxu0 %v643
      %v755 = vpop.f32.mrf.mxu0
      %v756 = vadd.f32 0.0, %v755
      %757 = vmatmul.f32.gmra.mxu0 %v646
      %v758 = vpop.f32.mrf.mxu0
      %v759 = vadd.f32 0.0, %v758
      %760 = vmatmul.f32.gmra.mxu0 %v649
      %v761 = vpop.f32.mrf.mxu0
      %v762 = vadd.f32 0.0, %v761
      %763 = vmatmul.f32.gmra.mxu0 %v652
      %v764 = vpop.f32.mrf.mxu0
      %v765 = vadd.f32 0.0, %v764
      %766 = vmatmul.f32.gmra.mxu0 %v655
      %v767 = vpop.f32.mrf.mxu0
      %v768 = vadd.f32 0.0, %v767
      %769 = vmatmul.f32.gmra.mxu0 %v658
      %v770 = vpop.f32.mrf.mxu0
      %v771 = vadd.f32 0.0, %v770
      %772 = vmatmul.f32.gmra.mxu0 %v661
      %v773 = vpop.f32.mrf.mxu0
      %v774 = vadd.f32 0.0, %v773
      %775 = vdwg.mxu0
      %v777 = vsel %vm566, %v499, 0
      %v780 = vsel %vm566, %v500, 0
      %v783 = vsel %vm566, %v501, 0
      %v786 = vsel %vm566, %v502, 0
      %v789 = vsel %vm566, %v503, 0
      %v792 = vsel %vm566, %v504, 0
      %v795 = vsel %vm566, %v505, 0
      %v798 = vsel %vm566, %v506, 0
      %v801 = vsel %vm566, %v507, 0
      %v804 = vsel %vm566, %v508, 0
      %v807 = vsel %vm566, %v509, 0
      %v810 = vsel %vm566, %v510, 0
      %v813 = vsel %vm566, %v511, 0
      %v816 = vsel %vm566, %v512, 0
      %v819 = vsel %vm566, %v513, 0
      %v822 = vsel %vm566, %v514, 0
      %v825 = vsel %vm566, %v515, 0
      %v828 = vsel %vm566, %v516, 0
      %v831 = vsel %vm566, %v517, 0
      %v834 = vsel %vm566, %v518, 0
      %v837 = vsel %vm566, %v519, 0
      %v840 = vsel %vm566, %v520, 0
      %v843 = vsel %vm566, %v521, 0
      %v846 = vsel %vm566, %v522, 0
      %v849 = vsel %vm566, %v523, 0
      %v852 = vsel %vm566, %v524, 0
      %v855 = vsel %vm566, %v525, 0
      %v858 = vsel %vm566, %v526, 0
      %v861 = vsel %vm566, %v527, 0
      %v864 = vsel %vm566, %v528, 0
      %v867 = vsel %vm566, %v529, 0
      %v870 = vsel %vm566, %v530, 0
      %872 = vmatpush.msra.mxu0 0.0
      %873 = vmatpush.msra.mxu0 0.0
      %874 = vmatpush.msra.mxu0 0.0
      %875 = vmatpush.msra.mxu0 0.0
      %876 = vmatpush.msra.mxu0 0.0
      %877 = vmatpush.msra.mxu0 0.0
      %878 = vmatpush.msra.mxu0 0.0
      %879 = vmatpush.msra.mxu0 0.0
      %880 = vmatpush.msra.mxu0 0.0
      %881 = vmatpush.msra.mxu0 0.0
      %882 = vmatpush.msra.mxu0 0.0
      %883 = vmatpush.msra.mxu0 0.0
      %884 = vmatpush.msra.mxu0 0.0
      %885 = vmatpush.msra.mxu0 0.0
      %886 = vmatpush.msra.mxu0 0.0
      %887 = vmatpush.msra.mxu0 %v531
      %888 = vmatmul.f32.gmra.mxu0 %v777
      %v889 = vpop.f32.mrf.mxu0
      %v890 = vadd.f32 %v681, %v889
      %891 = vmatmul.f32.gmra.mxu0 %v780
      %v892 = vpop.f32.mrf.mxu0
      %v893 = vadd.f32 %v684, %v892
      %894 = vmatmul.f32.gmra.mxu0 %v783
      %v895 = vpop.f32.mrf.mxu0
      %v896 = vadd.f32 %v687, %v895
      %897 = vmatmul.f32.gmra.mxu0 %v786
      %v898 = vpop.f32.mrf.mxu0
      %v899 = vadd.f32 %v690, %v898
      %900 = vmatmul.f32.gmra.mxu0 %v789
      %v901 = vpop.f32.mrf.mxu0
      %v902 = vadd.f32 %v693, %v901
      %903 = vmatmul.f32.gmra.mxu0 %v792
      %v904 = vpop.f32.mrf.mxu0
      %v905 = vadd.f32 %v696, %v904
      %906 = vmatmul.f32.gmra.mxu0 %v795
      %v907 = vpop.f32.mrf.mxu0
      %v908 = vadd.f32 %v699, %v907
      %909 = vmatmul.f32.gmra.mxu0 %v798
      %v910 = vpop.f32.mrf.mxu0
      %v911 = vadd.f32 %v702, %v910
      %912 = vmatmul.f32.gmra.mxu0 %v801
      %v913 = vpop.f32.mrf.mxu0
      %v914 = vadd.f32 %v705, %v913
      %915 = vmatmul.f32.gmra.mxu0 %v804
      %v916 = vpop.f32.mrf.mxu0
      %v917 = vadd.f32 %v708, %v916
      %918 = vmatmul.f32.gmra.mxu0 %v807
      %v919 = vpop.f32.mrf.mxu0
      %v920 = vadd.f32 %v711, %v919
      %921 = vmatmul.f32.gmra.mxu0 %v810
      %v922 = vpop.f32.mrf.mxu0
      %v923 = vadd.f32 %v714, %v922
      %924 = vmatmul.f32.gmra.mxu0 %v813
      %v925 = vpop.f32.mrf.mxu0
      %v926 = vadd.f32 %v717, %v925
      %927 = vmatmul.f32.gmra.mxu0 %v816
      %v928 = vpop.f32.mrf.mxu0
      %v929 = vadd.f32 %v720, %v928
      %930 = vmatmul.f32.gmra.mxu0 %v819
      %v931 = vpop.f32.mrf.mxu0
      %v932 = vadd.f32 %v723, %v931
      %933 = vmatmul.f32.gmra.mxu0 %v822
      %v934 = vpop.f32.mrf.mxu0
      %v935 = vadd.f32 %v726, %v934
      %936 = vmatmul.f32.gmra.mxu0 %v825
      %v937 = vpop.f32.mrf.mxu0
      %v938 = vadd.f32 %v729, %v937
      %939 = vmatmul.f32.gmra.mxu0 %v828
      %v940 = vpop.f32.mrf.mxu0
      %v941 = vadd.f32 %v732, %v940
      %942 = vmatmul.f32.gmra.mxu0 %v831
      %v943 = vpop.f32.mrf.mxu0
      %v944 = vadd.f32 %v735, %v943
      %945 = vmatmul.f32.gmra.mxu0 %v834
      %v946 = vpop.f32.mrf.mxu0
      %v947 = vadd.f32 %v738, %v946
      %948 = vmatmul.f32.gmra.mxu0 %v837
      %v949 = vpop.f32.mrf.mxu0
      %v950 = vadd.f32 %v741, %v949
      %951 = vmatmul.f32.gmra.mxu0 %v840
      %v952 = vpop.f32.mrf.mxu0
      %v953 = vadd.f32 %v744, %v952
      %954 = vmatmul.f32.gmra.mxu0 %v843
      %v955 = vpop.f32.mrf.mxu0
      %v956 = vadd.f32 %v747, %v955
      %957 = vmatmul.f32.gmra.mxu0 %v846
      %v958 = vpop.f32.mrf.mxu0
      %v959 = vadd.f32 %v750, %v958
      %960 = vmatmul.f32.gmra.mxu0 %v849
      %v961 = vpop.f32.mrf.mxu0
      %v962 = vadd.f32 %v753, %v961
      %963 = vmatmul.f32.gmra.mxu0 %v852
      %v964 = vpop.f32.mrf.mxu0
      %v965 = vadd.f32 %v756, %v964
      %966 = vmatmul.f32.gmra.mxu0 %v855
      %v967 = vpop.f32.mrf.mxu0
      %v968 = vadd.f32 %v759, %v967
      %969 = vmatmul.f32.gmra.mxu0 %v858
      %v970 = vpop.f32.mrf.mxu0
      %v971 = vadd.f32 %v762, %v970
      %972 = vmatmul.f32.gmra.mxu0 %v861
      %v973 = vpop.f32.mrf.mxu0
      %v974 = vadd.f32 %v765, %v973
      %975 = vmatmul.f32.gmra.mxu0 %v864
      %v976 = vpop.f32.mrf.mxu0
      %v977 = vadd.f32 %v768, %v976
      %978 = vmatmul.f32.gmra.mxu0 %v867
      %v979 = vpop.f32.mrf.mxu0
      %v980 = vadd.f32 %v771, %v979
      %981 = vmatmul.f32.gmra.mxu0 %v870
      %v982 = vpop.f32.mrf.mxu0
      %v983 = vadd.f32 %v774, %v982
      %984 = vdwg.mxu0
      %v985 = vld [vmem:[%s329 + $0x2] sm:$0xff]
      %v986 = vld [vmem:[%s329 + $0xa] sm:$0xff]
      %v987 = vld [vmem:[%s329 + $0x1a] sm:$0xff]
      %v988 = vld [vmem:[%s329 + $0x22] sm:$0xff]
      %v989 = vld [vmem:[%s329 + $0x32] sm:$0xff]
      %v990 = vld [vmem:[%s329 + $0x3a] sm:$0xff]
      %v991 = vld [vmem:[%s329 + $0x4a] sm:$0xff]
      %v992 = vld [vmem:[%s329 + $0x52] sm:$0xff]
      %v993 = vld [vmem:[%s329 + $0x62] sm:$0xff]
      %v994 = vld [vmem:[%s329 + $0x6a] sm:$0xff]
      %v995 = vld [vmem:[%s329 + $0x7a] sm:$0xff]
      %v996 = vld [vmem:[%s329 + $0x82] sm:$0xff]
      %v997 = vld [vmem:[%s329 + $0x92] sm:$0xff]
      %v998 = vld [vmem:[%s329 + $0x9a] sm:$0xff]
      %v999 = vld [vmem:[%s329 + $0xaa] sm:$0xff]
      %v1000 = vld [vmem:[%s329 + $0xb2] sm:$0xff]
      %v1001 = vld [vmem:[%s329 + $0xc2] sm:$0xff]
      %v1002 = vld [vmem:[%s329 + $0xca] sm:$0xff]
      %v1003 = vld [vmem:[%s329 + $0xda] sm:$0xff]
      %v1004 = vld [vmem:[%s329 + $0xe2] sm:$0xff]
      %v1005 = vld [vmem:[%s329 + $0xf2] sm:$0xff]
      %v1006 = vld [vmem:[%s329 + $0xfa] sm:$0xff]
      %v1007 = vld [vmem:[%s329 + $0x10a] sm:$0xff]
      %v1008 = vld [vmem:[%s329 + $0x112] sm:$0xff]
      %v1009 = vld [vmem:[%s329 + $0x122] sm:$0xff]
      %v1010 = vld [vmem:[%s329 + $0x12a] sm:$0xff]
      %v1011 = vld [vmem:[%s329 + $0x13a] sm:$0xff]
      %v1012 = vld [vmem:[%s329 + $0x142] sm:$0xff]
      %v1013 = vld [vmem:[%s329 + $0x152] sm:$0xff]
      %v1014 = vld [vmem:[%s329 + $0x15a] sm:$0xff]
      %v1015 = vld [vmem:[%s329 + $0x16a] sm:$0xff]
      %v1016 = vld [vmem:[%s329 + $0x172] sm:$0xff]
      %s1017 = scalar_lea.vmem %s1, 16
      %v1018 = vld [vmem:[%s1017] sm:$0xff]
      %v1020 = vsel %vm566, %v985, 0
      %v1023 = vsel %vm566, %v986, 0
      %v1026 = vsel %vm566, %v987, 0
      %v1029 = vsel %vm566, %v988, 0
      %v1032 = vsel %vm566, %v989, 0
      %v1035 = vsel %vm566, %v990, 0
      %v1038 = vsel %vm566, %v991, 0
      %v1041 = vsel %vm566, %v992, 0
      %v1044 = vsel %vm566, %v993, 0
      %v1047 = vsel %vm566, %v994, 0
      %v1050 = vsel %vm566, %v995, 0
      %v1053 = vsel %vm566, %v996, 0
      %v1056 = vsel %vm566, %v997, 0
      %v1059 = vsel %vm566, %v998, 0
      %v1062 = vsel %vm566, %v999, 0
      %v1065 = vsel %vm566, %v1000, 0
      %v1068 = vsel %vm566, %v1001, 0
      %v1071 = vsel %vm566, %v1002, 0
      %v1074 = vsel %vm566, %v1003, 0
      %v1077 = vsel %vm566, %v1004, 0
      %v1080 = vsel %vm566, %v1005, 0
      %v1083 = vsel %vm566, %v1006, 0
      %v1086 = vsel %vm566, %v1007, 0
      %v1089 = vsel %vm566, %v1008, 0
      %v1092 = vsel %vm566, %v1009, 0
      %v1095 = vsel %vm566, %v1010, 0
      %v1098 = vsel %vm566, %v1011, 0
      %v1101 = vsel %vm566, %v1012, 0
      %v1104 = vsel %vm566, %v1013, 0
      %v1107 = vsel %vm566, %v1014, 0
      %v1110 = vsel %vm566, %v1015, 0
      %v1113 = vsel %vm566, %v1016, 0
      %1115 = vmatpush.msra.mxu0 0.0
      %1116 = vmatpush.msra.mxu0 0.0
      %1117 = vmatpush.msra.mxu0 0.0
      %1118 = vmatpush.msra.mxu0 0.0
      %1119 = vmatpush.msra.mxu0 0.0
      %1120 = vmatpush.msra.mxu0 0.0
      %1121 = vmatpush.msra.mxu0 0.0
      %1122 = vmatpush.msra.mxu0 0.0
      %1123 = vmatpush.msra.mxu0 0.0
      %1124 = vmatpush.msra.mxu0 0.0
      %1125 = vmatpush.msra.mxu0 0.0
      %1126 = vmatpush.msra.mxu0 0.0
      %1127 = vmatpush.msra.mxu0 0.0
      %1128 = vmatpush.msra.mxu0 0.0
      %1129 = vmatpush.msra.mxu0 0.0
      %1130 = vmatpush.msra.mxu0 %v1018
      %1131 = vmatmul.f32.gmra.mxu0 %v1020
      %v1132 = vpop.f32.mrf.mxu0
      %v1133 = vadd.f32 0.0, %v1132
      %1134 = vmatmul.f32.gmra.mxu0 %v1023
      %v1135 = vpop.f32.mrf.mxu0
      %v1136 = vadd.f32 0.0, %v1135
      %1137 = vmatmul.f32.gmra.mxu0 %v1026
      %v1138 = vpop.f32.mrf.mxu0
      %v1139 = vadd.f32 0.0, %v1138
      %1140 = vmatmul.f32.gmra.mxu0 %v1029
      %v1141 = vpop.f32.mrf.mxu0
      %v1142 = vadd.f32 0.0, %v1141
      %1143 = vmatmul.f32.gmra.mxu0 %v1032
      %v1144 = vpop.f32.mrf.mxu0
      %v1145 = vadd.f32 0.0, %v1144
      %1146 = vmatmul.f32.gmra.mxu0 %v1035
      %v1147 = vpop.f32.mrf.mxu0
      %v1148 = vadd.f32 0.0, %v1147
      %1149 = vmatmul.f32.gmra.mxu0 %v1038
      %v1150 = vpop.f32.mrf.mxu0
      %v1151 = vadd.f32 0.0, %v1150
      %1152 = vmatmul.f32.gmra.mxu0 %v1041
      %v1153 = vpop.f32.mrf.mxu0
      %v1154 = vadd.f32 0.0, %v1153
      %1155 = vmatmul.f32.gmra.mxu0 %v1044
      %v1156 = vpop.f32.mrf.mxu0
      %v1157 = vadd.f32 0.0, %v1156
      %1158 = vmatmul.f32.gmra.mxu0 %v1047
      %v1159 = vpop.f32.mrf.mxu0
      %v1160 = vadd.f32 0.0, %v1159
      %1161 = vmatmul.f32.gmra.mxu0 %v1050
      %v1162 = vpop.f32.mrf.mxu0
      %v1163 = vadd.f32 0.0, %v1162
      %1164 = vmatmul.f32.gmra.mxu0 %v1053
      %v1165 = vpop.f32.mrf.mxu0
      %v1166 = vadd.f32 0.0, %v1165
      %1167 = vmatmul.f32.gmra.mxu0 %v1056
      %v1168 = vpop.f32.mrf.mxu0
      %v1169 = vadd.f32 0.0, %v1168
      %1170 = vmatmul.f32.gmra.mxu0 %v1059
      %v1171 = vpop.f32.mrf.mxu0
      %v1172 = vadd.f32 0.0, %v1171
      %1173 = vmatmul.f32.gmra.mxu0 %v1062
      %v1174 = vpop.f32.mrf.mxu0
      %v1175 = vadd.f32 0.0, %v1174
      %1176 = vmatmul.f32.gmra.mxu0 %v1065
      %v1177 = vpop.f32.mrf.mxu0
      %v1178 = vadd.f32 0.0, %v1177
      %1179 = vmatmul.f32.gmra.mxu0 %v1068
      %v1180 = vpop.f32.mrf.mxu0
      %v1181 = vadd.f32 0.0, %v1180
      %1182 = vmatmul.f32.gmra.mxu0 %v1071
      %v1183 = vpop.f32.mrf.mxu0
      %v1184 = vadd.f32 0.0, %v1183
      %1185 = vmatmul.f32.gmra.mxu0 %v1074
      %v1186 = vpop.f32.mrf.mxu0
      %v1187 = vadd.f32 0.0, %v1186
      %1188 = vmatmul.f32.gmra.mxu0 %v1077
      %v1189 = vpop.f32.mrf.mxu0
      %v1190 = vadd.f32 0.0, %v1189
      %1191 = vmatmul.f32.gmra.mxu0 %v1080
      %v1192 = vpop.f32.mrf.mxu0
      %v1193 = vadd.f32 0.0, %v1192
      %1194 = vmatmul.f32.gmra.mxu0 %v1083
      %v1195 = vpop.f32.mrf.mxu0
      %v1196 = vadd.f32 0.0, %v1195
      %1197 = vmatmul.f32.gmra.mxu0 %v1086
      %v1198 = vpop.f32.mrf.mxu0
      %v1199 = vadd.f32 0.0, %v1198
      %1200 = vmatmul.f32.gmra.mxu0 %v1089
      %v1201 = vpop.f32.mrf.mxu0
      %v1202 = vadd.f32 0.0, %v1201
      %1203 = vmatmul.f32.gmra.mxu0 %v1092
      %v1204 = vpop.f32.mrf.mxu0
      %v1205 = vadd.f32 0.0, %v1204
      %1206 = vmatmul.f32.gmra.mxu0 %v1095
      %v1207 = vpop.f32.mrf.mxu0
      %v1208 = vadd.f32 0.0, %v1207
      %1209 = vmatmul.f32.gmra.mxu0 %v1098
      %v1210 = vpop.f32.mrf.mxu0
      %v1211 = vadd.f32 0.0, %v1210
      %1212 = vmatmul.f32.gmra.mxu0 %v1101
      %v1213 = vpop.f32.mrf.mxu0
      %v1214 = vadd.f32 0.0, %v1213
      %1215 = vmatmul.f32.gmra.mxu0 %v1104
      %v1216 = vpop.f32.mrf.mxu0
      %v1217 = vadd.f32 0.0, %v1216
      %1218 = vmatmul.f32.gmra.mxu0 %v1107
      %v1219 = vpop.f32.mrf.mxu0
      %v1220 = vadd.f32 0.0, %v1219
      %1221 = vmatmul.f32.gmra.mxu0 %v1110
      %v1222 = vpop.f32.mrf.mxu0
      %v1223 = vadd.f32 0.0, %v1222
      %1224 = vmatmul.f32.gmra.mxu0 %v1113
      %v1225 = vpop.f32.mrf.mxu0
      %v1226 = vadd.f32 0.0, %v1225
      %1227 = vdwg.mxu0
      %v1228 = vadd.f32 %v890, %v1133
      %v1229 = vadd.f32 %v893, %v1136
      %v1230 = vadd.f32 %v896, %v1139
      %v1231 = vadd.f32 %v899, %v1142
      %v1232 = vadd.f32 %v902, %v1145
      %v1233 = vadd.f32 %v905, %v1148
      %v1234 = vadd.f32 %v908, %v1151
      %v1235 = vadd.f32 %v911, %v1154
      %v1236 = vadd.f32 %v914, %v1157
      %v1237 = vadd.f32 %v917, %v1160
      %v1238 = vadd.f32 %v920, %v1163
      %v1239 = vadd.f32 %v923, %v1166
      %v1240 = vadd.f32 %v926, %v1169
      %v1241 = vadd.f32 %v929, %v1172
      %v1242 = vadd.f32 %v932, %v1175
      %v1243 = vadd.f32 %v935, %v1178
      %v1244 = vadd.f32 %v938, %v1181
      %v1245 = vadd.f32 %v941, %v1184
      %v1246 = vadd.f32 %v944, %v1187
      %v1247 = vadd.f32 %v947, %v1190
      %v1248 = vadd.f32 %v950, %v1193
      %v1249 = vadd.f32 %v953, %v1196
      %v1250 = vadd.f32 %v956, %v1199
      %v1251 = vadd.f32 %v959, %v1202
      %v1252 = vadd.f32 %v962, %v1205
      %v1253 = vadd.f32 %v965, %v1208
      %v1254 = vadd.f32 %v968, %v1211
      %v1255 = vadd.f32 %v971, %v1214
      %v1256 = vadd.f32 %v974, %v1217
      %v1257 = vadd.f32 %v977, %v1220
      %v1258 = vadd.f32 %v980, %v1223
      %v1259 = vadd.f32 %v983, %v1226
      %s1260 = scalar_lea.vmem %s329, 24
      %v1261 = vld [vmem:[%s1260] sm:$0xff]
      %v1262 = vld [vmem:[%s1260 + $0x8] sm:$0xff]
      %v1263 = vld [vmem:[%s1260 + $0x18] sm:$0xff]
      %v1264 = vld [vmem:[%s1260 + $0x20] sm:$0xff]
      %v1265 = vld [vmem:[%s1260 + $0x30] sm:$0xff]
      %v1266 = vld [vmem:[%s1260 + $0x38] sm:$0xff]
      %v1267 = vld [vmem:[%s1260 + $0x48] sm:$0xff]
      %v1268 = vld [vmem:[%s1260 + $0x50] sm:$0xff]
      %v1269 = vld [vmem:[%s1260 + $0x60] sm:$0xff]
      %v1270 = vld [vmem:[%s1260 + $0x68] sm:$0xff]
      %v1271 = vld [vmem:[%s1260 + $0x78] sm:$0xff]
      %v1272 = vld [vmem:[%s1260 + $0x80] sm:$0xff]
      %v1273 = vld [vmem:[%s1260 + $0x90] sm:$0xff]
      %v1274 = vld [vmem:[%s1260 + $0x98] sm:$0xff]
      %v1275 = vld [vmem:[%s1260 + $0xa8] sm:$0xff]
      %v1276 = vld [vmem:[%s1260 + $0xb0] sm:$0xff]
      %v1277 = vld [vmem:[%s1260 + $0xc0] sm:$0xff]
      %v1278 = vld [vmem:[%s1260 + $0xc8] sm:$0xff]
      %v1279 = vld [vmem:[%s1260 + $0xd8] sm:$0xff]
      %v1280 = vld [vmem:[%s1260 + $0xe0] sm:$0xff]
      %v1281 = vld [vmem:[%s1260 + $0xf0] sm:$0xff]
      %v1282 = vld [vmem:[%s1260 + $0xf8] sm:$0xff]
      %v1283 = vld [vmem:[%s1260 + $0x108] sm:$0xff]
      %v1284 = vld [vmem:[%s1260 + $0x110] sm:$0xff]
      %v1285 = vld [vmem:[%s1260 + $0x120] sm:$0xff]
      %v1286 = vld [vmem:[%s1260 + $0x128] sm:$0xff]
      %v1287 = vld [vmem:[%s1260 + $0x138] sm:$0xff]
      %v1288 = vld [vmem:[%s1260 + $0x140] sm:$0xff]
      %v1289 = vld [vmem:[%s1260 + $0x150] sm:$0xff]
      %v1290 = vld [vmem:[%s1260 + $0x158] sm:$0xff]
      %v1291 = vld [vmem:[%s1260 + $0x168] sm:$0xff]
      %v1292 = vld [vmem:[%s1260 + $0x170] sm:$0xff]
      %s1293 = scalar_lea.vmem %s1, 24
      %v1294 = vld [vmem:[%s1293] sm:$0xff]
      %v1296 = vsel %vm566, %v1261, 0
      %v1299 = vsel %vm566, %v1262, 0
      %v1302 = vsel %vm566, %v1263, 0
      %v1305 = vsel %vm566, %v1264, 0
      %v1308 = vsel %vm566, %v1265, 0
      %v1311 = vsel %vm566, %v1266, 0
      %v1314 = vsel %vm566, %v1267, 0
      %v1317 = vsel %vm566, %v1268, 0
      %v1320 = vsel %vm566, %v1269, 0
      %v1323 = vsel %vm566, %v1270, 0
      %v1326 = vsel %vm566, %v1271, 0
      %v1329 = vsel %vm566, %v1272, 0
      %v1332 = vsel %vm566, %v1273, 0
      %v1335 = vsel %vm566, %v1274, 0
      %v1338 = vsel %vm566, %v1275, 0
      %v1341 = vsel %vm566, %v1276, 0
      %v1344 = vsel %vm566, %v1277, 0
      %v1347 = vsel %vm566, %v1278, 0
      %v1350 = vsel %vm566, %v1279, 0
      %v1353 = vsel %vm566, %v1280, 0
      %v1356 = vsel %vm566, %v1281, 0
      %v1359 = vsel %vm566, %v1282, 0
      %v1362 = vsel %vm566, %v1283, 0
      %v1365 = vsel %vm566, %v1284, 0
      %v1368 = vsel %vm566, %v1285, 0
      %v1371 = vsel %vm566, %v1286, 0
      %v1374 = vsel %vm566, %v1287, 0
      %v1377 = vsel %vm566, %v1288, 0
      %v1380 = vsel %vm566, %v1289, 0
      %v1383 = vsel %vm566, %v1290, 0
      %v1386 = vsel %vm566, %v1291, 0
      %v1389 = vsel %vm566, %v1292, 0
      %1391 = vmatpush.msra.mxu0 0.0
      %1392 = vmatpush.msra.mxu0 0.0
      %1393 = vmatpush.msra.mxu0 0.0
      %1394 = vmatpush.msra.mxu0 0.0
      %1395 = vmatpush.msra.mxu0 0.0
      %1396 = vmatpush.msra.mxu0 0.0
      %1397 = vmatpush.msra.mxu0 0.0
      %1398 = vmatpush.msra.mxu0 0.0
      %1399 = vmatpush.msra.mxu0 0.0
      %1400 = vmatpush.msra.mxu0 0.0
      %1401 = vmatpush.msra.mxu0 0.0
      %1402 = vmatpush.msra.mxu0 0.0
      %1403 = vmatpush.msra.mxu0 0.0
      %1404 = vmatpush.msra.mxu0 0.0
      %1405 = vmatpush.msra.mxu0 0.0
      %1406 = vmatpush.msra.mxu0 %v1294
      %1407 = vmatmul.f32.gmra.mxu0 %v1296
      %v1408 = vpop.f32.mrf.mxu0
      %v1409 = vadd.f32 0.0, %v1408
      %1410 = vmatmul.f32.gmra.mxu0 %v1299
      %v1411 = vpop.f32.mrf.mxu0
      %v1412 = vadd.f32 0.0, %v1411
      %1413 = vmatmul.f32.gmra.mxu0 %v1302
      %v1414 = vpop.f32.mrf.mxu0
      %v1415 = vadd.f32 0.0, %v1414
      %1416 = vmatmul.f32.gmra.mxu0 %v1305
      %v1417 = vpop.f32.mrf.mxu0
      %v1418 = vadd.f32 0.0, %v1417
      %1419 = vmatmul.f32.gmra.mxu0 %v1308
      %v1420 = vpop.f32.mrf.mxu0
      %v1421 = vadd.f32 0.0, %v1420
      %1422 = vmatmul.f32.gmra.mxu0 %v1311
      %v1423 = vpop.f32.mrf.mxu0
      %v1424 = vadd.f32 0.0, %v1423
      %1425 = vmatmul.f32.gmra.mxu0 %v1314
      %v1426 = vpop.f32.mrf.mxu0
      %v1427 = vadd.f32 0.0, %v1426
      %1428 = vmatmul.f32.gmra.mxu0 %v1317
      %v1429 = vpop.f32.mrf.mxu0
      %v1430 = vadd.f32 0.0, %v1429
      %1431 = vmatmul.f32.gmra.mxu0 %v1320
      %v1432 = vpop.f32.mrf.mxu0
      %v1433 = vadd.f32 0.0, %v1432
      %1434 = vmatmul.f32.gmra.mxu0 %v1323
      %v1435 = vpop.f32.mrf.mxu0
      %v1436 = vadd.f32 0.0, %v1435
      %1437 = vmatmul.f32.gmra.mxu0 %v1326
      %v1438 = vpop.f32.mrf.mxu0
      %v1439 = vadd.f32 0.0, %v1438
      %1440 = vmatmul.f32.gmra.mxu0 %v1329
      %v1441 = vpop.f32.mrf.mxu0
      %v1442 = vadd.f32 0.0, %v1441
      %1443 = vmatmul.f32.gmra.mxu0 %v1332
      %v1444 = vpop.f32.mrf.mxu0
      %v1445 = vadd.f32 0.0, %v1444
      %1446 = vmatmul.f32.gmra.mxu0 %v1335
      %v1447 = vpop.f32.mrf.mxu0
      %v1448 = vadd.f32 0.0, %v1447
      %1449 = vmatmul.f32.gmra.mxu0 %v1338
      %v1450 = vpop.f32.mrf.mxu0
      %v1451 = vadd.f32 0.0, %v1450
      %1452 = vmatmul.f32.gmra.mxu0 %v1341
      %v1453 = vpop.f32.mrf.mxu0
      %v1454 = vadd.f32 0.0, %v1453
      %1455 = vmatmul.f32.gmra.mxu0 %v1344
      %v1456 = vpop.f32.mrf.mxu0
      %v1457 = vadd.f32 0.0, %v1456
      %1458 = vmatmul.f32.gmra.mxu0 %v1347
      %v1459 = vpop.f32.mrf.mxu0
      %v1460 = vadd.f32 0.0, %v1459
      %1461 = vmatmul.f32.gmra.mxu0 %v1350
      %v1462 = vpop.f32.mrf.mxu0
      %v1463 = vadd.f32 0.0, %v1462
      %1464 = vmatmul.f32.gmra.mxu0 %v1353
      %v1465 = vpop.f32.mrf.mxu0
      %v1466 = vadd.f32 0.0, %v1465
      %1467 = vmatmul.f32.gmra.mxu0 %v1356
      %v1468 = vpop.f32.mrf.mxu0
      %v1469 = vadd.f32 0.0, %v1468
      %1470 = vmatmul.f32.gmra.mxu0 %v1359
      %v1471 = vpop.f32.mrf.mxu0
      %v1472 = vadd.f32 0.0, %v1471
      %1473 = vmatmul.f32.gmra.mxu0 %v1362
      %v1474 = vpop.f32.mrf.mxu0
      %v1475 = vadd.f32 0.0, %v1474
      %1476 = vmatmul.f32.gmra.mxu0 %v1365
      %v1477 = vpop.f32.mrf.mxu0
      %v1478 = vadd.f32 0.0, %v1477
      %1479 = vmatmul.f32.gmra.mxu0 %v1368
      %v1480 = vpop.f32.mrf.mxu0
      %v1481 = vadd.f32 0.0, %v1480
      %1482 = vmatmul.f32.gmra.mxu0 %v1371
      %v1483 = vpop.f32.mrf.mxu0
      %v1484 = vadd.f32 0.0, %v1483
      %1485 = vmatmul.f32.gmra.mxu0 %v1374
      %v1486 = vpop.f32.mrf.mxu0
      %v1487 = vadd.f32 0.0, %v1486
      %1488 = vmatmul.f32.gmra.mxu0 %v1377
      %v1489 = vpop.f32.mrf.mxu0
      %v1490 = vadd.f32 0.0, %v1489
      %1491 = vmatmul.f32.gmra.mxu0 %v1380
      %v1492 = vpop.f32.mrf.mxu0
      %v1493 = vadd.f32 0.0, %v1492
      %1494 = vmatmul.f32.gmra.mxu0 %v1383
      %v1495 = vpop.f32.mrf.mxu0
      %v1496 = vadd.f32 0.0, %v1495
      %1497 = vmatmul.f32.gmra.mxu0 %v1386
      %v1498 = vpop.f32.mrf.mxu0
      %v1499 = vadd.f32 0.0, %v1498
      %1500 = vmatmul.f32.gmra.mxu0 %v1389
      %v1501 = vpop.f32.mrf.mxu0
      %v1502 = vadd.f32 0.0, %v1501
      %1503 = vdwg.mxu0
      %v1504 = vadd.f32 %v1228, %v1409
      %v1505 = vadd.f32 %v1229, %v1412
      %v1506 = vadd.f32 %v1230, %v1415
      %v1507 = vadd.f32 %v1231, %v1418
      %v1508 = vadd.f32 %v1232, %v1421
      %v1509 = vadd.f32 %v1233, %v1424
      %v1510 = vadd.f32 %v1234, %v1427
      %v1511 = vadd.f32 %v1235, %v1430
      %v1512 = vadd.f32 %v1236, %v1433
      %v1513 = vadd.f32 %v1237, %v1436
      %v1514 = vadd.f32 %v1238, %v1439
      %v1515 = vadd.f32 %v1239, %v1442
      %v1516 = vadd.f32 %v1240, %v1445
      %v1517 = vadd.f32 %v1241, %v1448
      %v1518 = vadd.f32 %v1242, %v1451
      %v1519 = vadd.f32 %v1243, %v1454
      %v1520 = vadd.f32 %v1244, %v1457
      %v1521 = vadd.f32 %v1245, %v1460
      %v1522 = vadd.f32 %v1246, %v1463
      %v1523 = vadd.f32 %v1247, %v1466
      %v1524 = vadd.f32 %v1248, %v1469
      %v1525 = vadd.f32 %v1249, %v1472
      %v1526 = vadd.f32 %v1250, %v1475
      %v1527 = vadd.f32 %v1251, %v1478
      %v1528 = vadd.f32 %v1252, %v1481
      %v1529 = vadd.f32 %v1253, %v1484
      %v1530 = vadd.f32 %v1254, %v1487
      %v1531 = vadd.f32 %v1255, %v1490
      %v1532 = vadd.f32 %v1256, %v1493
      %v1533 = vadd.f32 %v1257, %v1496
      %v1534 = vadd.f32 %v1258, %v1499
      %v1535 = vadd.f32 %v1259, %v1502
      %v1536 = vld [vmem:[%s1260 + $0x1] sm:$0xff]
      %v1537 = vld [vmem:[%s1260 + $0x9] sm:$0xff]
      %v1538 = vld [vmem:[%s1260 + $0x19] sm:$0xff]
      %v1539 = vld [vmem:[%s1260 + $0x21] sm:$0xff]
      %v1540 = vld [vmem:[%s1260 + $0x31] sm:$0xff]
      %v1541 = vld [vmem:[%s1260 + $0x39] sm:$0xff]
      %v1542 = vld [vmem:[%s1260 + $0x49] sm:$0xff]
      %v1543 = vld [vmem:[%s1260 + $0x51] sm:$0xff]
      %v1544 = vld [vmem:[%s1260 + $0x61] sm:$0xff]
      %v1545 = vld [vmem:[%s1260 + $0x69] sm:$0xff]
      %v1546 = vld [vmem:[%s1260 + $0x79] sm:$0xff]
      %v1547 = vld [vmem:[%s1260 + $0x81] sm:$0xff]
      %v1548 = vld [vmem:[%s1260 + $0x91] sm:$0xff]
      %v1549 = vld [vmem:[%s1260 + $0x99] sm:$0xff]
      %v1550 = vld [vmem:[%s1260 + $0xa9] sm:$0xff]
      %v1551 = vld [vmem:[%s1260 + $0xb1] sm:$0xff]
      %v1552 = vld [vmem:[%s1260 + $0xc1] sm:$0xff]
      %v1553 = vld [vmem:[%s1260 + $0xc9] sm:$0xff]
      %v1554 = vld [vmem:[%s1260 + $0xd9] sm:$0xff]
      %v1555 = vld [vmem:[%s1260 + $0xe1] sm:$0xff]
      %v1556 = vld [vmem:[%s1260 + $0xf1] sm:$0xff]
      %v1557 = vld [vmem:[%s1260 + $0xf9] sm:$0xff]
      %v1558 = vld [vmem:[%s1260 + $0x109] sm:$0xff]
      %v1559 = vld [vmem:[%s1260 + $0x111] sm:$0xff]
      %v1560 = vld [vmem:[%s1260 + $0x121] sm:$0xff]
      %v1561 = vld [vmem:[%s1260 + $0x129] sm:$0xff]
      %v1562 = vld [vmem:[%s1260 + $0x139] sm:$0xff]
      %v1563 = vld [vmem:[%s1260 + $0x141] sm:$0xff]
      %v1564 = vld [vmem:[%s1260 + $0x151] sm:$0xff]
      %v1565 = vld [vmem:[%s1260 + $0x159] sm:$0xff]
      %v1566 = vld [vmem:[%s1260 + $0x169] sm:$0xff]
      %v1567 = vld [vmem:[%s1260 + $0x171] sm:$0xff]
      %s1568 = scalar_lea.vmem %s1, 32
      %v1569 = vld [vmem:[%s1568] sm:$0xff]
      %v1571 = vsel %vm566, %v1536, 0
      %v1574 = vsel %vm566, %v1537, 0
      %v1577 = vsel %vm566, %v1538, 0
      %v1580 = vsel %vm566, %v1539, 0
      %v1583 = vsel %vm566, %v1540, 0
      %v1586 = vsel %vm566, %v1541, 0
      %v1589 = vsel %vm566, %v1542, 0
      %v1592 = vsel %vm566, %v1543, 0
      %v1595 = vsel %vm566, %v1544, 0
      %v1598 = vsel %vm566, %v1545, 0
      %v1601 = vsel %vm566, %v1546, 0
      %v1604 = vsel %vm566, %v1547, 0
      %v1607 = vsel %vm566, %v1548, 0
      %v1610 = vsel %vm566, %v1549, 0
      %v1613 = vsel %vm566, %v1550, 0
      %v1616 = vsel %vm566, %v1551, 0
      %v1619 = vsel %vm566, %v1552, 0
      %v1622 = vsel %vm566, %v1553, 0
      %v1625 = vsel %vm566, %v1554, 0
      %v1628 = vsel %vm566, %v1555, 0
      %v1631 = vsel %vm566, %v1556, 0
      %v1634 = vsel %vm566, %v1557, 0
      %v1637 = vsel %vm566, %v1558, 0
      %v1640 = vsel %vm566, %v1559, 0
      %v1643 = vsel %vm566, %v1560, 0
      %v1646 = vsel %vm566, %v1561, 0
      %v1649 = vsel %vm566, %v1562, 0
      %v1652 = vsel %vm566, %v1563, 0
      %v1655 = vsel %vm566, %v1564, 0
      %v1658 = vsel %vm566, %v1565, 0
      %v1661 = vsel %vm566, %v1566, 0
      %v1664 = vsel %vm566, %v1567, 0
      %1666 = vmatpush.msra.mxu0 0.0
      %1667 = vmatpush.msra.mxu0 0.0
      %1668 = vmatpush.msra.mxu0 0.0
      %1669 = vmatpush.msra.mxu0 0.0
      %1670 = vmatpush.msra.mxu0 0.0
      %1671 = vmatpush.msra.mxu0 0.0
      %1672 = vmatpush.msra.mxu0 0.0
      %1673 = vmatpush.msra.mxu0 0.0
      %1674 = vmatpush.msra.mxu0 0.0
      %1675 = vmatpush.msra.mxu0 0.0
      %1676 = vmatpush.msra.mxu0 0.0
      %1677 = vmatpush.msra.mxu0 0.0
      %1678 = vmatpush.msra.mxu0 0.0
      %1679 = vmatpush.msra.mxu0 0.0
      %1680 = vmatpush.msra.mxu0 0.0
      %1681 = vmatpush.msra.mxu0 %v1569
      %1682 = vmatmul.f32.gmra.mxu0 %v1571
      %v1683 = vpop.f32.mrf.mxu0
      %v1684 = vadd.f32 0.0, %v1683
      %1685 = vmatmul.f32.gmra.mxu0 %v1574
      %v1686 = vpop.f32.mrf.mxu0
      %v1687 = vadd.f32 0.0, %v1686
      %1688 = vmatmul.f32.gmra.mxu0 %v1577
      %v1689 = vpop.f32.mrf.mxu0
      %v1690 = vadd.f32 0.0, %v1689
      %1691 = vmatmul.f32.gmra.mxu0 %v1580
      %v1692 = vpop.f32.mrf.mxu0
      %v1693 = vadd.f32 0.0, %v1692
      %1694 = vmatmul.f32.gmra.mxu0 %v1583
      %v1695 = vpop.f32.mrf.mxu0
      %v1696 = vadd.f32 0.0, %v1695
      %1697 = vmatmul.f32.gmra.mxu0 %v1586
      %v1698 = vpop.f32.mrf.mxu0
      %v1699 = vadd.f32 0.0, %v1698
      %1700 = vmatmul.f32.gmra.mxu0 %v1589
      %v1701 = vpop.f32.mrf.mxu0
      %v1702 = vadd.f32 0.0, %v1701
      %1703 = vmatmul.f32.gmra.mxu0 %v1592
      %v1704 = vpop.f32.mrf.mxu0
      %v1705 = vadd.f32 0.0, %v1704
      %1706 = vmatmul.f32.gmra.mxu0 %v1595
      %v1707 = vpop.f32.mrf.mxu0
      %v1708 = vadd.f32 0.0, %v1707
      %1709 = vmatmul.f32.gmra.mxu0 %v1598
      %v1710 = vpop.f32.mrf.mxu0
      %v1711 = vadd.f32 0.0, %v1710
      %1712 = vmatmul.f32.gmra.mxu0 %v1601
      %v1713 = vpop.f32.mrf.mxu0
      %v1714 = vadd.f32 0.0, %v1713
      %1715 = vmatmul.f32.gmra.mxu0 %v1604
      %v1716 = vpop.f32.mrf.mxu0
      %v1717 = vadd.f32 0.0, %v1716
      %1718 = vmatmul.f32.gmra.mxu0 %v1607
      %v1719 = vpop.f32.mrf.mxu0
      %v1720 = vadd.f32 0.0, %v1719
      %1721 = vmatmul.f32.gmra.mxu0 %v1610
      %v1722 = vpop.f32.mrf.mxu0
      %v1723 = vadd.f32 0.0, %v1722
      %1724 = vmatmul.f32.gmra.mxu0 %v1613
      %v1725 = vpop.f32.mrf.mxu0
      %v1726 = vadd.f32 0.0, %v1725
      %1727 = vmatmul.f32.gmra.mxu0 %v1616
      %v1728 = vpop.f32.mrf.mxu0
      %v1729 = vadd.f32 0.0, %v1728
      %1730 = vmatmul.f32.gmra.mxu0 %v1619
      %v1731 = vpop.f32.mrf.mxu0
      %v1732 = vadd.f32 0.0, %v1731
      %1733 = vmatmul.f32.gmra.mxu0 %v1622
      %v1734 = vpop.f32.mrf.mxu0
      %v1735 = vadd.f32 0.0, %v1734
      %1736 = vmatmul.f32.gmra.mxu0 %v1625
      %v1737 = vpop.f32.mrf.mxu0
      %v1738 = vadd.f32 0.0, %v1737
      %1739 = vmatmul.f32.gmra.mxu0 %v1628
      %v1740 = vpop.f32.mrf.mxu0
      %v1741 = vadd.f32 0.0, %v1740
      %1742 = vmatmul.f32.gmra.mxu0 %v1631
      %v1743 = vpop.f32.mrf.mxu0
      %v1744 = vadd.f32 0.0, %v1743
      %1745 = vmatmul.f32.gmra.mxu0 %v1634
      %v1746 = vpop.f32.mrf.mxu0
      %v1747 = vadd.f32 0.0, %v1746
      %1748 = vmatmul.f32.gmra.mxu0 %v1637
      %v1749 = vpop.f32.mrf.mxu0
      %v1750 = vadd.f32 0.0, %v1749
      %1751 = vmatmul.f32.gmra.mxu0 %v1640
      %v1752 = vpop.f32.mrf.mxu0
      %v1753 = vadd.f32 0.0, %v1752
      %1754 = vmatmul.f32.gmra.mxu0 %v1643
      %v1755 = vpop.f32.mrf.mxu0
      %v1756 = vadd.f32 0.0, %v1755
      %1757 = vmatmul.f32.gmra.mxu0 %v1646
      %v1758 = vpop.f32.mrf.mxu0
      %v1759 = vadd.f32 0.0, %v1758
      %1760 = vmatmul.f32.gmra.mxu0 %v1649
      %v1761 = vpop.f32.mrf.mxu0
      %v1762 = vadd.f32 0.0, %v1761
      %1763 = vmatmul.f32.gmra.mxu0 %v1652
      %v1764 = vpop.f32.mrf.mxu0
      %v1765 = vadd.f32 0.0, %v1764
      %1766 = vmatmul.f32.gmra.mxu0 %v1655
      %v1767 = vpop.f32.mrf.mxu0
      %v1768 = vadd.f32 0.0, %v1767
      %1769 = vmatmul.f32.gmra.mxu0 %v1658
      %v1770 = vpop.f32.mrf.mxu0
      %v1771 = vadd.f32 0.0, %v1770
      %1772 = vmatmul.f32.gmra.mxu0 %v1661
      %v1773 = vpop.f32.mrf.mxu0
      %v1774 = vadd.f32 0.0, %v1773
      %1775 = vmatmul.f32.gmra.mxu0 %v1664
      %v1776 = vpop.f32.mrf.mxu0
      %v1777 = vadd.f32 0.0, %v1776
      %1778 = vdwg.mxu0
      %v1779 = vadd.f32 %v1504, %v1684
      %v1780 = vadd.f32 %v1505, %v1687
      %v1781 = vadd.f32 %v1506, %v1690
      %v1782 = vadd.f32 %v1507, %v1693
      %v1783 = vadd.f32 %v1508, %v1696
      %v1784 = vadd.f32 %v1509, %v1699
      %v1785 = vadd.f32 %v1510, %v1702
      %v1786 = vadd.f32 %v1511, %v1705
      %v1787 = vadd.f32 %v1512, %v1708
      %v1788 = vadd.f32 %v1513, %v1711
      %v1789 = vadd.f32 %v1514, %v1714
      %v1790 = vadd.f32 %v1515, %v1717
      %v1791 = vadd.f32 %v1516, %v1720
      %v1792 = vadd.f32 %v1517, %v1723
      %v1793 = vadd.f32 %v1518, %v1726
      %v1794 = vadd.f32 %v1519, %v1729
      %v1795 = vadd.f32 %v1520, %v1732
      %v1796 = vadd.f32 %v1521, %v1735
      %v1797 = vadd.f32 %v1522, %v1738
      %v1798 = vadd.f32 %v1523, %v1741
      %v1799 = vadd.f32 %v1524, %v1744
      %v1800 = vadd.f32 %v1525, %v1747
      %v1801 = vadd.f32 %v1526, %v1750
      %v1802 = vadd.f32 %v1527, %v1753
      %v1803 = vadd.f32 %v1528, %v1756
      %v1804 = vadd.f32 %v1529, %v1759
      %v1805 = vadd.f32 %v1530, %v1762
      %v1806 = vadd.f32 %v1531, %v1765
      %v1807 = vadd.f32 %v1532, %v1768
      %v1808 = vadd.f32 %v1533, %v1771
      %v1809 = vadd.f32 %v1534, %v1774
      %v1810 = vadd.f32 %v1535, %v1777
      %v1811 = vld [vmem:[%s1260 + $0x2] sm:$0xff]
      %v1812 = vld [vmem:[%s1260 + $0xa] sm:$0xff]
      %v1813 = vld [vmem:[%s1260 + $0x1a] sm:$0xff]
      %v1814 = vld [vmem:[%s1260 + $0x22] sm:$0xff]
      %v1815 = vld [vmem:[%s1260 + $0x32] sm:$0xff]
      %v1816 = vld [vmem:[%s1260 + $0x3a] sm:$0xff]
      %v1817 = vld [vmem:[%s1260 + $0x4a] sm:$0xff]
      %v1818 = vld [vmem:[%s1260 + $0x52] sm:$0xff]
      %v1819 = vld [vmem:[%s1260 + $0x62] sm:$0xff]
      %v1820 = vld [vmem:[%s1260 + $0x6a] sm:$0xff]
      %v1821 = vld [vmem:[%s1260 + $0x7a] sm:$0xff]
      %v1822 = vld [vmem:[%s1260 + $0x82] sm:$0xff]
      %v1823 = vld [vmem:[%s1260 + $0x92] sm:$0xff]
      %v1824 = vld [vmem:[%s1260 + $0x9a] sm:$0xff]
      %v1825 = vld [vmem:[%s1260 + $0xaa] sm:$0xff]
      %v1826 = vld [vmem:[%s1260 + $0xb2] sm:$0xff]
      %v1827 = vld [vmem:[%s1260 + $0xc2] sm:$0xff]
      %v1828 = vld [vmem:[%s1260 + $0xca] sm:$0xff]
      %v1829 = vld [vmem:[%s1260 + $0xda] sm:$0xff]
      %v1830 = vld [vmem:[%s1260 + $0xe2] sm:$0xff]
      %v1831 = vld [vmem:[%s1260 + $0xf2] sm:$0xff]
      %v1832 = vld [vmem:[%s1260 + $0xfa] sm:$0xff]
      %v1833 = vld [vmem:[%s1260 + $0x10a] sm:$0xff]
      %v1834 = vld [vmem:[%s1260 + $0x112] sm:$0xff]
      %v1835 = vld [vmem:[%s1260 + $0x122] sm:$0xff]
      %v1836 = vld [vmem:[%s1260 + $0x12a] sm:$0xff]
      %v1837 = vld [vmem:[%s1260 + $0x13a] sm:$0xff]
      %v1838 = vld [vmem:[%s1260 + $0x142] sm:$0xff]
      %v1839 = vld [vmem:[%s1260 + $0x152] sm:$0xff]
      %v1840 = vld [vmem:[%s1260 + $0x15a] sm:$0xff]
      %v1841 = vld [vmem:[%s1260 + $0x16a] sm:$0xff]
      %v1842 = vld [vmem:[%s1260 + $0x172] sm:$0xff]
      %s1843 = scalar_lea.vmem %s1, 40
      %v1844 = vld [vmem:[%s1843] sm:$0xff]
      %v1846 = vsel %vm566, %v1811, 0
      %v1849 = vsel %vm566, %v1812, 0
      %v1852 = vsel %vm566, %v1813, 0
      %v1855 = vsel %vm566, %v1814, 0
      %v1858 = vsel %vm566, %v1815, 0
      %v1861 = vsel %vm566, %v1816, 0
      %v1864 = vsel %vm566, %v1817, 0
      %v1867 = vsel %vm566, %v1818, 0
      %v1870 = vsel %vm566, %v1819, 0
      %v1873 = vsel %vm566, %v1820, 0
      %v1876 = vsel %vm566, %v1821, 0
      %v1879 = vsel %vm566, %v1822, 0
      %v1882 = vsel %vm566, %v1823, 0
      %v1885 = vsel %vm566, %v1824, 0
      %v1888 = vsel %vm566, %v1825, 0
      %v1891 = vsel %vm566, %v1826, 0
      %v1894 = vsel %vm566, %v1827, 0
      %v1897 = vsel %vm566, %v1828, 0
      %v1900 = vsel %vm566, %v1829, 0
      %v1903 = vsel %vm566, %v1830, 0
      %v1906 = vsel %vm566, %v1831, 0
      %v1909 = vsel %vm566, %v1832, 0
      %v1912 = vsel %vm566, %v1833, 0
      %v1915 = vsel %vm566, %v1834, 0
      %v1918 = vsel %vm566, %v1835, 0
      %v1921 = vsel %vm566, %v1836, 0
      %v1924 = vsel %vm566, %v1837, 0
      %v1927 = vsel %vm566, %v1838, 0
      %v1930 = vsel %vm566, %v1839, 0
      %v1933 = vsel %vm566, %v1840, 0
      %v1936 = vsel %vm566, %v1841, 0
      %v1939 = vsel %vm566, %v1842, 0
      %1941 = vmatpush.msra.mxu0 0.0
      %1942 = vmatpush.msra.mxu0 0.0
      %1943 = vmatpush.msra.mxu0 0.0
      %1944 = vmatpush.msra.mxu0 0.0
      %1945 = vmatpush.msra.mxu0 0.0
      %1946 = vmatpush.msra.mxu0 0.0
      %1947 = vmatpush.msra.mxu0 0.0
      %1948 = vmatpush.msra.mxu0 0.0
      %1949 = vmatpush.msra.mxu0 0.0
      %1950 = vmatpush.msra.mxu0 0.0
      %1951 = vmatpush.msra.mxu0 0.0
      %1952 = vmatpush.msra.mxu0 0.0
      %1953 = vmatpush.msra.mxu0 0.0
      %1954 = vmatpush.msra.mxu0 0.0
      %1955 = vmatpush.msra.mxu0 0.0
      %1956 = vmatpush.msra.mxu0 %v1844
      %1957 = vmatmul.f32.gmra.mxu0 %v1846
      %v1958 = vpop.f32.mrf.mxu0
      %v1959 = vadd.f32 0.0, %v1958
      %1960 = vmatmul.f32.gmra.mxu0 %v1849
      %v1961 = vpop.f32.mrf.mxu0
      %v1962 = vadd.f32 0.0, %v1961
      %1963 = vmatmul.f32.gmra.mxu0 %v1852
      %v1964 = vpop.f32.mrf.mxu0
      %v1965 = vadd.f32 0.0, %v1964
      %1966 = vmatmul.f32.gmra.mxu0 %v1855
      %v1967 = vpop.f32.mrf.mxu0
      %v1968 = vadd.f32 0.0, %v1967
      %1969 = vmatmul.f32.gmra.mxu0 %v1858
      %v1970 = vpop.f32.mrf.mxu0
      %v1971 = vadd.f32 0.0, %v1970
      %1972 = vmatmul.f32.gmra.mxu0 %v1861
      %v1973 = vpop.f32.mrf.mxu0
      %v1974 = vadd.f32 0.0, %v1973
      %1975 = vmatmul.f32.gmra.mxu0 %v1864
      %v1976 = vpop.f32.mrf.mxu0
      %v1977 = vadd.f32 0.0, %v1976
      %1978 = vmatmul.f32.gmra.mxu0 %v1867
      %v1979 = vpop.f32.mrf.mxu0
      %v1980 = vadd.f32 0.0, %v1979
      %1981 = vmatmul.f32.gmra.mxu0 %v1870
      %v1982 = vpop.f32.mrf.mxu0
      %v1983 = vadd.f32 0.0, %v1982
      %1984 = vmatmul.f32.gmra.mxu0 %v1873
      %v1985 = vpop.f32.mrf.mxu0
      %v1986 = vadd.f32 0.0, %v1985
      %1987 = vmatmul.f32.gmra.mxu0 %v1876
      %v1988 = vpop.f32.mrf.mxu0
      %v1989 = vadd.f32 0.0, %v1988
      %1990 = vmatmul.f32.gmra.mxu0 %v1879
      %v1991 = vpop.f32.mrf.mxu0
      %v1992 = vadd.f32 0.0, %v1991
      %1993 = vmatmul.f32.gmra.mxu0 %v1882
      %v1994 = vpop.f32.mrf.mxu0
      %v1995 = vadd.f32 0.0, %v1994
      %1996 = vmatmul.f32.gmra.mxu0 %v1885
      %v1997 = vpop.f32.mrf.mxu0
      %v1998 = vadd.f32 0.0, %v1997
      %1999 = vmatmul.f32.gmra.mxu0 %v1888
      %v2000 = vpop.f32.mrf.mxu0
      %v2001 = vadd.f32 0.0, %v2000
      %2002 = vmatmul.f32.gmra.mxu0 %v1891
      %v2003 = vpop.f32.mrf.mxu0
      %v2004 = vadd.f32 0.0, %v2003
      %2005 = vmatmul.f32.gmra.mxu0 %v1894
      %v2006 = vpop.f32.mrf.mxu0
      %v2007 = vadd.f32 0.0, %v2006
      %2008 = vmatmul.f32.gmra.mxu0 %v1897
      %v2009 = vpop.f32.mrf.mxu0
      %v2010 = vadd.f32 0.0, %v2009
      %2011 = vmatmul.f32.gmra.mxu0 %v1900
      %v2012 = vpop.f32.mrf.mxu0
      %v2013 = vadd.f32 0.0, %v2012
      %2014 = vmatmul.f32.gmra.mxu0 %v1903
      %v2015 = vpop.f32.mrf.mxu0
      %v2016 = vadd.f32 0.0, %v2015
      %2017 = vmatmul.f32.gmra.mxu0 %v1906
      %v2018 = vpop.f32.mrf.mxu0
      %v2019 = vadd.f32 0.0, %v2018
      %2020 = vmatmul.f32.gmra.mxu0 %v1909
      %v2021 = vpop.f32.mrf.mxu0
      %v2022 = vadd.f32 0.0, %v2021
      %2023 = vmatmul.f32.gmra.mxu0 %v1912
      %v2024 = vpop.f32.mrf.mxu0
      %v2025 = vadd.f32 0.0, %v2024
      %2026 = vmatmul.f32.gmra.mxu0 %v1915
      %v2027 = vpop.f32.mrf.mxu0
      %v2028 = vadd.f32 0.0, %v2027
      %2029 = vmatmul.f32.gmra.mxu0 %v1918
      %v2030 = vpop.f32.mrf.mxu0
      %v2031 = vadd.f32 0.0, %v2030
      %2032 = vmatmul.f32.gmra.mxu0 %v1921
      %v2033 = vpop.f32.mrf.mxu0
      %v2034 = vadd.f32 0.0, %v2033
      %2035 = vmatmul.f32.gmra.mxu0 %v1924
      %v2036 = vpop.f32.mrf.mxu0
      %v2037 = vadd.f32 0.0, %v2036
      %2038 = vmatmul.f32.gmra.mxu0 %v1927
      %v2039 = vpop.f32.mrf.mxu0
      %v2040 = vadd.f32 0.0, %v2039
      %2041 = vmatmul.f32.gmra.mxu0 %v1930
      %v2042 = vpop.f32.mrf.mxu0
      %v2043 = vadd.f32 0.0, %v2042
      %2044 = vmatmul.f32.gmra.mxu0 %v1933
      %v2045 = vpop.f32.mrf.mxu0
      %v2046 = vadd.f32 0.0, %v2045
      %2047 = vmatmul.f32.gmra.mxu0 %v1936
      %v2048 = vpop.f32.mrf.mxu0
      %v2049 = vadd.f32 0.0, %v2048
      %2050 = vmatmul.f32.gmra.mxu0 %v1939
      %v2051 = vpop.f32.mrf.mxu0
      %v2052 = vadd.f32 0.0, %v2051
      %2053 = vdwg.mxu0
      %v2054 = vadd.f32 %v1779, %v1959
      %v2055 = vadd.f32 %v1780, %v1962
      %v2056 = vadd.f32 %v1781, %v1965
      %v2057 = vadd.f32 %v1782, %v1968
      %v2058 = vadd.f32 %v1783, %v1971
      %v2059 = vadd.f32 %v1784, %v1974
      %v2060 = vadd.f32 %v1785, %v1977
      %v2061 = vadd.f32 %v1786, %v1980
      %v2062 = vadd.f32 %v1787, %v1983
      %v2063 = vadd.f32 %v1788, %v1986
      %v2064 = vadd.f32 %v1789, %v1989
      %v2065 = vadd.f32 %v1790, %v1992
      %v2066 = vadd.f32 %v1791, %v1995
      %v2067 = vadd.f32 %v1792, %v1998
      %v2068 = vadd.f32 %v1793, %v2001
      %v2069 = vadd.f32 %v1794, %v2004
      %v2070 = vadd.f32 %v1795, %v2007
      %v2071 = vadd.f32 %v1796, %v2010
      %v2072 = vadd.f32 %v1797, %v2013
      %v2073 = vadd.f32 %v1798, %v2016
      %v2074 = vadd.f32 %v1799, %v2019
      %v2075 = vadd.f32 %v1800, %v2022
      %v2076 = vadd.f32 %v1801, %v2025
      %v2077 = vadd.f32 %v1802, %v2028
      %v2078 = vadd.f32 %v1803, %v2031
      %v2079 = vadd.f32 %v1804, %v2034
      %v2080 = vadd.f32 %v1805, %v2037
      %v2081 = vadd.f32 %v1806, %v2040
      %v2082 = vadd.f32 %v1807, %v2043
      %v2083 = vadd.f32 %v1808, %v2046
      %v2084 = vadd.f32 %v1809, %v2049
      %v2085 = vadd.f32 %v1810, %v2052
      %s2086 = scalar_lea.vmem %s329, 48
      %v2087 = vld [vmem:[%s2086] sm:$0xff]
      %v2088 = vld [vmem:[%s2086 + $0x8] sm:$0xff]
      %v2089 = vld [vmem:[%s2086 + $0x18] sm:$0xff]
      %v2090 = vld [vmem:[%s2086 + $0x20] sm:$0xff]
      %v2091 = vld [vmem:[%s2086 + $0x30] sm:$0xff]
      %v2092 = vld [vmem:[%s2086 + $0x38] sm:$0xff]
      %v2093 = vld [vmem:[%s2086 + $0x48] sm:$0xff]
      %v2094 = vld [vmem:[%s2086 + $0x50] sm:$0xff]
      %v2095 = vld [vmem:[%s2086 + $0x60] sm:$0xff]
      %v2096 = vld [vmem:[%s2086 + $0x68] sm:$0xff]
      %v2097 = vld [vmem:[%s2086 + $0x78] sm:$0xff]
      %v2098 = vld [vmem:[%s2086 + $0x80] sm:$0xff]
      %v2099 = vld [vmem:[%s2086 + $0x90] sm:$0xff]
      %v2100 = vld [vmem:[%s2086 + $0x98] sm:$0xff]
      %v2101 = vld [vmem:[%s2086 + $0xa8] sm:$0xff]
      %v2102 = vld [vmem:[%s2086 + $0xb0] sm:$0xff]
      %v2103 = vld [vmem:[%s2086 + $0xc0] sm:$0xff]
      %v2104 = vld [vmem:[%s2086 + $0xc8] sm:$0xff]
      %v2105 = vld [vmem:[%s2086 + $0xd8] sm:$0xff]
      %v2106 = vld [vmem:[%s2086 + $0xe0] sm:$0xff]
      %v2107 = vld [vmem:[%s2086 + $0xf0] sm:$0xff]
      %v2108 = vld [vmem:[%s2086 + $0xf8] sm:$0xff]
      %v2109 = vld [vmem:[%s2086 + $0x108] sm:$0xff]
      %v2110 = vld [vmem:[%s2086 + $0x110] sm:$0xff]
      %v2111 = vld [vmem:[%s2086 + $0x120] sm:$0xff]
      %v2112 = vld [vmem:[%s2086 + $0x128] sm:$0xff]
      %v2113 = vld [vmem:[%s2086 + $0x138] sm:$0xff]
      %v2114 = vld [vmem:[%s2086 + $0x140] sm:$0xff]
      %v2115 = vld [vmem:[%s2086 + $0x150] sm:$0xff]
      %v2116 = vld [vmem:[%s2086 + $0x158] sm:$0xff]
      %v2117 = vld [vmem:[%s2086 + $0x168] sm:$0xff]
      %v2118 = vld [vmem:[%s2086 + $0x170] sm:$0xff]
      %s2119 = scalar_lea.vmem %s1, 48
      %v2120 = vld [vmem:[%s2119] sm:$0xff]
      %v2122 = vsel %vm566, %v2087, 0
      %v2125 = vsel %vm566, %v2088, 0
      %v2128 = vsel %vm566, %v2089, 0
      %v2131 = vsel %vm566, %v2090, 0
      %v2134 = vsel %vm566, %v2091, 0
      %v2137 = vsel %vm566, %v2092, 0
      %v2140 = vsel %vm566, %v2093, 0
      %v2143 = vsel %vm566, %v2094, 0
      %v2146 = vsel %vm566, %v2095, 0
      %v2149 = vsel %vm566, %v2096, 0
      %v2152 = vsel %vm566, %v2097, 0
      %v2155 = vsel %vm566, %v2098, 0
      %v2158 = vsel %vm566, %v2099, 0
      %v2161 = vsel %vm566, %v2100, 0
      %v2164 = vsel %vm566, %v2101, 0
      %v2167 = vsel %vm566, %v2102, 0
      %v2170 = vsel %vm566, %v2103, 0
      %v2173 = vsel %vm566, %v2104, 0
      %v2176 = vsel %vm566, %v2105, 0
      %v2179 = vsel %vm566, %v2106, 0
      %v2182 = vsel %vm566, %v2107, 0
      %v2185 = vsel %vm566, %v2108, 0
      %v2188 = vsel %vm566, %v2109, 0
      %v2191 = vsel %vm566, %v2110, 0
      %v2194 = vsel %vm566, %v2111, 0
      %v2197 = vsel %vm566, %v2112, 0
      %v2200 = vsel %vm566, %v2113, 0
      %v2203 = vsel %vm566, %v2114, 0
      %v2206 = vsel %vm566, %v2115, 0
      %v2209 = vsel %vm566, %v2116, 0
      %v2212 = vsel %vm566, %v2117, 0
      %v2215 = vsel %vm566, %v2118, 0
      %2217 = vmatpush.msra.mxu0 0.0
      %2218 = vmatpush.msra.mxu0 0.0
      %2219 = vmatpush.msra.mxu0 0.0
      %2220 = vmatpush.msra.mxu0 0.0
      %2221 = vmatpush.msra.mxu0 0.0
      %2222 = vmatpush.msra.mxu0 0.0
      %2223 = vmatpush.msra.mxu0 0.0
      %2224 = vmatpush.msra.mxu0 0.0
      %2225 = vmatpush.msra.mxu0 0.0
      %2226 = vmatpush.msra.mxu0 0.0
      %2227 = vmatpush.msra.mxu0 0.0
      %2228 = vmatpush.msra.mxu0 0.0
      %2229 = vmatpush.msra.mxu0 0.0
      %2230 = vmatpush.msra.mxu0 0.0
      %2231 = vmatpush.msra.mxu0 0.0
      %2232 = vmatpush.msra.mxu0 %v2120
      %2233 = vmatmul.f32.gmra.mxu0 %v2122
      %v2234 = vpop.f32.mrf.mxu0
      %v2235 = vadd.f32 0.0, %v2234
      %2236 = vmatmul.f32.gmra.mxu0 %v2125
      %v2237 = vpop.f32.mrf.mxu0
      %v2238 = vadd.f32 0.0, %v2237
      %2239 = vmatmul.f32.gmra.mxu0 %v2128
      %v2240 = vpop.f32.mrf.mxu0
      %v2241 = vadd.f32 0.0, %v2240
      %2242 = vmatmul.f32.gmra.mxu0 %v2131
      %v2243 = vpop.f32.mrf.mxu0
      %v2244 = vadd.f32 0.0, %v2243
      %2245 = vmatmul.f32.gmra.mxu0 %v2134
      %v2246 = vpop.f32.mrf.mxu0
      %v2247 = vadd.f32 0.0, %v2246
      %2248 = vmatmul.f32.gmra.mxu0 %v2137
      %v2249 = vpop.f32.mrf.mxu0
      %v2250 = vadd.f32 0.0, %v2249
      %2251 = vmatmul.f32.gmra.mxu0 %v2140
      %v2252 = vpop.f32.mrf.mxu0
      %v2253 = vadd.f32 0.0, %v2252
      %2254 = vmatmul.f32.gmra.mxu0 %v2143
      %v2255 = vpop.f32.mrf.mxu0
      %v2256 = vadd.f32 0.0, %v2255
      %2257 = vmatmul.f32.gmra.mxu0 %v2146
      %v2258 = vpop.f32.mrf.mxu0
      %v2259 = vadd.f32 0.0, %v2258
      %2260 = vmatmul.f32.gmra.mxu0 %v2149
      %v2261 = vpop.f32.mrf.mxu0
      %v2262 = vadd.f32 0.0, %v2261
      %2263 = vmatmul.f32.gmra.mxu0 %v2152
      %v2264 = vpop.f32.mrf.mxu0
      %v2265 = vadd.f32 0.0, %v2264
      %2266 = vmatmul.f32.gmra.mxu0 %v2155
      %v2267 = vpop.f32.mrf.mxu0
      %v2268 = vadd.f32 0.0, %v2267
      %2269 = vmatmul.f32.gmra.mxu0 %v2158
      %v2270 = vpop.f32.mrf.mxu0
      %v2271 = vadd.f32 0.0, %v2270
      %2272 = vmatmul.f32.gmra.mxu0 %v2161
      %v2273 = vpop.f32.mrf.mxu0
      %v2274 = vadd.f32 0.0, %v2273
      %2275 = vmatmul.f32.gmra.mxu0 %v2164
      %v2276 = vpop.f32.mrf.mxu0
      %v2277 = vadd.f32 0.0, %v2276
      %2278 = vmatmul.f32.gmra.mxu0 %v2167
      %v2279 = vpop.f32.mrf.mxu0
      %v2280 = vadd.f32 0.0, %v2279
      %2281 = vmatmul.f32.gmra.mxu0 %v2170
      %v2282 = vpop.f32.mrf.mxu0
      %v2283 = vadd.f32 0.0, %v2282
      %2284 = vmatmul.f32.gmra.mxu0 %v2173
      %v2285 = vpop.f32.mrf.mxu0
      %v2286 = vadd.f32 0.0, %v2285
      %2287 = vmatmul.f32.gmra.mxu0 %v2176
      %v2288 = vpop.f32.mrf.mxu0
      %v2289 = vadd.f32 0.0, %v2288
      %2290 = vmatmul.f32.gmra.mxu0 %v2179
      %v2291 = vpop.f32.mrf.mxu0
      %v2292 = vadd.f32 0.0, %v2291
      %2293 = vmatmul.f32.gmra.mxu0 %v2182
      %v2294 = vpop.f32.mrf.mxu0
      %v2295 = vadd.f32 0.0, %v2294
      %2296 = vmatmul.f32.gmra.mxu0 %v2185
      %v2297 = vpop.f32.mrf.mxu0
      %v2298 = vadd.f32 0.0, %v2297
      %2299 = vmatmul.f32.gmra.mxu0 %v2188
      %v2300 = vpop.f32.mrf.mxu0
      %v2301 = vadd.f32 0.0, %v2300
      %2302 = vmatmul.f32.gmra.mxu0 %v2191
      %v2303 = vpop.f32.mrf.mxu0
      %v2304 = vadd.f32 0.0, %v2303
      %2305 = vmatmul.f32.gmra.mxu0 %v2194
      %v2306 = vpop.f32.mrf.mxu0
      %v2307 = vadd.f32 0.0, %v2306
      %2308 = vmatmul.f32.gmra.mxu0 %v2197
      %v2309 = vpop.f32.mrf.mxu0
      %v2310 = vadd.f32 0.0, %v2309
      %2311 = vmatmul.f32.gmra.mxu0 %v2200
      %v2312 = vpop.f32.mrf.mxu0
      %v2313 = vadd.f32 0.0, %v2312
      %2314 = vmatmul.f32.gmra.mxu0 %v2203
      %v2315 = vpop.f32.mrf.mxu0
      %v2316 = vadd.f32 0.0, %v2315
      %2317 = vmatmul.f32.gmra.mxu0 %v2206
      %v2318 = vpop.f32.mrf.mxu0
      %v2319 = vadd.f32 0.0, %v2318
      %2320 = vmatmul.f32.gmra.mxu0 %v2209
      %v2321 = vpop.f32.mrf.mxu0
      %v2322 = vadd.f32 0.0, %v2321
      %2323 = vmatmul.f32.gmra.mxu0 %v2212
      %v2324 = vpop.f32.mrf.mxu0
      %v2325 = vadd.f32 0.0, %v2324
      %2326 = vmatmul.f32.gmra.mxu0 %v2215
      %v2327 = vpop.f32.mrf.mxu0
      %v2328 = vadd.f32 0.0, %v2327
      %2329 = vdwg.mxu0
      %v2330 = vadd.f32 %v2054, %v2235
      %v2331 = vadd.f32 %v2055, %v2238
      %v2332 = vadd.f32 %v2056, %v2241
      %v2333 = vadd.f32 %v2057, %v2244
      %v2334 = vadd.f32 %v2058, %v2247
      %v2335 = vadd.f32 %v2059, %v2250
      %v2336 = vadd.f32 %v2060, %v2253
      %v2337 = vadd.f32 %v2061, %v2256
      %v2338 = vadd.f32 %v2062, %v2259
      %v2339 = vadd.f32 %v2063, %v2262
      %v2340 = vadd.f32 %v2064, %v2265
      %v2341 = vadd.f32 %v2065, %v2268
      %v2342 = vadd.f32 %v2066, %v2271
      %v2343 = vadd.f32 %v2067, %v2274
      %v2344 = vadd.f32 %v2068, %v2277
      %v2345 = vadd.f32 %v2069, %v2280
      %v2346 = vadd.f32 %v2070, %v2283
      %v2347 = vadd.f32 %v2071, %v2286
      %v2348 = vadd.f32 %v2072, %v2289
      %v2349 = vadd.f32 %v2073, %v2292
      %v2350 = vadd.f32 %v2074, %v2295
      %v2351 = vadd.f32 %v2075, %v2298
      %v2352 = vadd.f32 %v2076, %v2301
      %v2353 = vadd.f32 %v2077, %v2304
      %v2354 = vadd.f32 %v2078, %v2307
      %v2355 = vadd.f32 %v2079, %v2310
      %v2356 = vadd.f32 %v2080, %v2313
      %v2357 = vadd.f32 %v2081, %v2316
      %v2358 = vadd.f32 %v2082, %v2319
      %v2359 = vadd.f32 %v2083, %v2322
      %v2360 = vadd.f32 %v2084, %v2325
      %v2361 = vadd.f32 %v2085, %v2328
      %v2362 = vld [vmem:[%s2086 + $0x1] sm:$0xff]
      %v2363 = vld [vmem:[%s2086 + $0x9] sm:$0xff]
      %v2364 = vld [vmem:[%s2086 + $0x19] sm:$0xff]
      %v2365 = vld [vmem:[%s2086 + $0x21] sm:$0xff]
      %v2366 = vld [vmem:[%s2086 + $0x31] sm:$0xff]
      %v2367 = vld [vmem:[%s2086 + $0x39] sm:$0xff]
      %v2368 = vld [vmem:[%s2086 + $0x49] sm:$0xff]
      %v2369 = vld [vmem:[%s2086 + $0x51] sm:$0xff]
      %v2370 = vld [vmem:[%s2086 + $0x61] sm:$0xff]
      %v2371 = vld [vmem:[%s2086 + $0x69] sm:$0xff]
      %v2372 = vld [vmem:[%s2086 + $0x79] sm:$0xff]
      %v2373 = vld [vmem:[%s2086 + $0x81] sm:$0xff]
      %v2374 = vld [vmem:[%s2086 + $0x91] sm:$0xff]
      %v2375 = vld [vmem:[%s2086 + $0x99] sm:$0xff]
      %v2376 = vld [vmem:[%s2086 + $0xa9] sm:$0xff]
      %v2377 = vld [vmem:[%s2086 + $0xb1] sm:$0xff]
      %v2378 = vld [vmem:[%s2086 + $0xc1] sm:$0xff]
      %v2379 = vld [vmem:[%s2086 + $0xc9] sm:$0xff]
      %v2380 = vld [vmem:[%s2086 + $0xd9] sm:$0xff]
      %v2381 = vld [vmem:[%s2086 + $0xe1] sm:$0xff]
      %v2382 = vld [vmem:[%s2086 + $0xf1] sm:$0xff]
      %v2383 = vld [vmem:[%s2086 + $0xf9] sm:$0xff]
      %v2384 = vld [vmem:[%s2086 + $0x109] sm:$0xff]
      %v2385 = vld [vmem:[%s2086 + $0x111] sm:$0xff]
      %v2386 = vld [vmem:[%s2086 + $0x121] sm:$0xff]
      %v2387 = vld [vmem:[%s2086 + $0x129] sm:$0xff]
      %v2388 = vld [vmem:[%s2086 + $0x139] sm:$0xff]
      %v2389 = vld [vmem:[%s2086 + $0x141] sm:$0xff]
      %v2390 = vld [vmem:[%s2086 + $0x151] sm:$0xff]
      %v2391 = vld [vmem:[%s2086 + $0x159] sm:$0xff]
      %v2392 = vld [vmem:[%s2086 + $0x169] sm:$0xff]
      %v2393 = vld [vmem:[%s2086 + $0x171] sm:$0xff]
      %s2394 = scalar_lea.vmem %s1, 56
      %v2395 = vld [vmem:[%s2394] sm:$0xff]
      %v2397 = vsel %vm566, %v2362, 0
      %v2400 = vsel %vm566, %v2363, 0
      %v2403 = vsel %vm566, %v2364, 0
      %v2406 = vsel %vm566, %v2365, 0
      %v2409 = vsel %vm566, %v2366, 0
      %v2412 = vsel %vm566, %v2367, 0
      %v2415 = vsel %vm566, %v2368, 0
      %v2418 = vsel %vm566, %v2369, 0
      %v2421 = vsel %vm566, %v2370, 0
      %v2424 = vsel %vm566, %v2371, 0
      %v2427 = vsel %vm566, %v2372, 0
      %v2430 = vsel %vm566, %v2373, 0
      %v2433 = vsel %vm566, %v2374, 0
      %v2436 = vsel %vm566, %v2375, 0
      %v2439 = vsel %vm566, %v2376, 0
      %v2442 = vsel %vm566, %v2377, 0
      %v2445 = vsel %vm566, %v2378, 0
      %v2448 = vsel %vm566, %v2379, 0
      %v2451 = vsel %vm566, %v2380, 0
      %v2454 = vsel %vm566, %v2381, 0
      %v2457 = vsel %vm566, %v2382, 0
      %v2460 = vsel %vm566, %v2383, 0
      %v2463 = vsel %vm566, %v2384, 0
      %v2466 = vsel %vm566, %v2385, 0
      %v2469 = vsel %vm566, %v2386, 0
      %v2472 = vsel %vm566, %v2387, 0
      %v2475 = vsel %vm566, %v2388, 0
      %v2478 = vsel %vm566, %v2389, 0
      %v2481 = vsel %vm566, %v2390, 0
      %v2484 = vsel %vm566, %v2391, 0
      %v2487 = vsel %vm566, %v2392, 0
      %v2490 = vsel %vm566, %v2393, 0
      %2492 = vmatpush.msra.mxu0 0.0
      %2493 = vmatpush.msra.mxu0 0.0
      %2494 = vmatpush.msra.mxu0 0.0
      %2495 = vmatpush.msra.mxu0 0.0
      %2496 = vmatpush.msra.mxu0 0.0
      %2497 = vmatpush.msra.mxu0 0.0
      %2498 = vmatpush.msra.mxu0 0.0
      %2499 = vmatpush.msra.mxu0 0.0
      %2500 = vmatpush.msra.mxu0 0.0
      %2501 = vmatpush.msra.mxu0 0.0
      %2502 = vmatpush.msra.mxu0 0.0
      %2503 = vmatpush.msra.mxu0 0.0
      %2504 = vmatpush.msra.mxu0 0.0
      %2505 = vmatpush.msra.mxu0 0.0
      %2506 = vmatpush.msra.mxu0 0.0
      %2507 = vmatpush.msra.mxu0 %v2395
      %2508 = vmatmul.f32.gmra.mxu0 %v2397
      %v2509 = vpop.f32.mrf.mxu0
      %v2510 = vadd.f32 0.0, %v2509
      %2511 = vmatmul.f32.gmra.mxu0 %v2400
      %v2512 = vpop.f32.mrf.mxu0
      %v2513 = vadd.f32 0.0, %v2512
      %2514 = vmatmul.f32.gmra.mxu0 %v2403
      %v2515 = vpop.f32.mrf.mxu0
      %v2516 = vadd.f32 0.0, %v2515
      %2517 = vmatmul.f32.gmra.mxu0 %v2406
      %v2518 = vpop.f32.mrf.mxu0
      %v2519 = vadd.f32 0.0, %v2518
      %2520 = vmatmul.f32.gmra.mxu0 %v2409
      %v2521 = vpop.f32.mrf.mxu0
      %v2522 = vadd.f32 0.0, %v2521
      %2523 = vmatmul.f32.gmra.mxu0 %v2412
      %v2524 = vpop.f32.mrf.mxu0
      %v2525 = vadd.f32 0.0, %v2524
      %2526 = vmatmul.f32.gmra.mxu0 %v2415
      %v2527 = vpop.f32.mrf.mxu0
      %v2528 = vadd.f32 0.0, %v2527
      %2529 = vmatmul.f32.gmra.mxu0 %v2418
      %v2530 = vpop.f32.mrf.mxu0
      %v2531 = vadd.f32 0.0, %v2530
      %2532 = vmatmul.f32.gmra.mxu0 %v2421
      %v2533 = vpop.f32.mrf.mxu0
      %v2534 = vadd.f32 0.0, %v2533
      %2535 = vmatmul.f32.gmra.mxu0 %v2424
      %v2536 = vpop.f32.mrf.mxu0
      %v2537 = vadd.f32 0.0, %v2536
      %2538 = vmatmul.f32.gmra.mxu0 %v2427
      %v2539 = vpop.f32.mrf.mxu0
      %v2540 = vadd.f32 0.0, %v2539
      %2541 = vmatmul.f32.gmra.mxu0 %v2430
      %v2542 = vpop.f32.mrf.mxu0
      %v2543 = vadd.f32 0.0, %v2542
      %2544 = vmatmul.f32.gmra.mxu0 %v2433
      %v2545 = vpop.f32.mrf.mxu0
      %v2546 = vadd.f32 0.0, %v2545
      %2547 = vmatmul.f32.gmra.mxu0 %v2436
      %v2548 = vpop.f32.mrf.mxu0
      %v2549 = vadd.f32 0.0, %v2548
      %2550 = vmatmul.f32.gmra.mxu0 %v2439
      %v2551 = vpop.f32.mrf.mxu0
      %v2552 = vadd.f32 0.0, %v2551
      %2553 = vmatmul.f32.gmra.mxu0 %v2442
      %v2554 = vpop.f32.mrf.mxu0
      %v2555 = vadd.f32 0.0, %v2554
      %2556 = vmatmul.f32.gmra.mxu0 %v2445
      %v2557 = vpop.f32.mrf.mxu0
      %v2558 = vadd.f32 0.0, %v2557
      %2559 = vmatmul.f32.gmra.mxu0 %v2448
      %v2560 = vpop.f32.mrf.mxu0
      %v2561 = vadd.f32 0.0, %v2560
      %2562 = vmatmul.f32.gmra.mxu0 %v2451
      %v2563 = vpop.f32.mrf.mxu0
      %v2564 = vadd.f32 0.0, %v2563
      %2565 = vmatmul.f32.gmra.mxu0 %v2454
      %v2566 = vpop.f32.mrf.mxu0
      %v2567 = vadd.f32 0.0, %v2566
      %2568 = vmatmul.f32.gmra.mxu0 %v2457
      %v2569 = vpop.f32.mrf.mxu0
      %v2570 = vadd.f32 0.0, %v2569
      %2571 = vmatmul.f32.gmra.mxu0 %v2460
      %v2572 = vpop.f32.mrf.mxu0
      %v2573 = vadd.f32 0.0, %v2572
      %2574 = vmatmul.f32.gmra.mxu0 %v2463
      %v2575 = vpop.f32.mrf.mxu0
      %v2576 = vadd.f32 0.0, %v2575
      %2577 = vmatmul.f32.gmra.mxu0 %v2466
      %v2578 = vpop.f32.mrf.mxu0
      %v2579 = vadd.f32 0.0, %v2578
      %2580 = vmatmul.f32.gmra.mxu0 %v2469
      %v2581 = vpop.f32.mrf.mxu0
      %v2582 = vadd.f32 0.0, %v2581
      %2583 = vmatmul.f32.gmra.mxu0 %v2472
      %v2584 = vpop.f32.mrf.mxu0
      %v2585 = vadd.f32 0.0, %v2584
      %2586 = vmatmul.f32.gmra.mxu0 %v2475
      %v2587 = vpop.f32.mrf.mxu0
      %v2588 = vadd.f32 0.0, %v2587
      %2589 = vmatmul.f32.gmra.mxu0 %v2478
      %v2590 = vpop.f32.mrf.mxu0
      %v2591 = vadd.f32 0.0, %v2590
      %2592 = vmatmul.f32.gmra.mxu0 %v2481
      %v2593 = vpop.f32.mrf.mxu0
      %v2594 = vadd.f32 0.0, %v2593
      %2595 = vmatmul.f32.gmra.mxu0 %v2484
      %v2596 = vpop.f32.mrf.mxu0
      %v2597 = vadd.f32 0.0, %v2596
      %2598 = vmatmul.f32.gmra.mxu0 %v2487
      %v2599 = vpop.f32.mrf.mxu0
      %v2600 = vadd.f32 0.0, %v2599
      %2601 = vmatmul.f32.gmra.mxu0 %v2490
      %v2602 = vpop.f32.mrf.mxu0
      %v2603 = vadd.f32 0.0, %v2602
      %2604 = vdwg.mxu0
      %v2605 = vadd.f32 %v2330, %v2510
      %v2606 = vadd.f32 %v2331, %v2513
      %v2607 = vadd.f32 %v2332, %v2516
      %v2608 = vadd.f32 %v2333, %v2519
      %v2609 = vadd.f32 %v2334, %v2522
      %v2610 = vadd.f32 %v2335, %v2525
      %v2611 = vadd.f32 %v2336, %v2528
      %v2612 = vadd.f32 %v2337, %v2531
      %v2613 = vadd.f32 %v2338, %v2534
      %v2614 = vadd.f32 %v2339, %v2537
      %v2615 = vadd.f32 %v2340, %v2540
      %v2616 = vadd.f32 %v2341, %v2543
      %v2617 = vadd.f32 %v2342, %v2546
      %v2618 = vadd.f32 %v2343, %v2549
      %v2619 = vadd.f32 %v2344, %v2552
      %v2620 = vadd.f32 %v2345, %v2555
      %v2621 = vadd.f32 %v2346, %v2558
      %v2622 = vadd.f32 %v2347, %v2561
      %v2623 = vadd.f32 %v2348, %v2564
      %v2624 = vadd.f32 %v2349, %v2567
      %v2625 = vadd.f32 %v2350, %v2570
      %v2626 = vadd.f32 %v2351, %v2573
      %v2627 = vadd.f32 %v2352, %v2576
      %v2628 = vadd.f32 %v2353, %v2579
      %v2629 = vadd.f32 %v2354, %v2582
      %v2630 = vadd.f32 %v2355, %v2585
      %v2631 = vadd.f32 %v2356, %v2588
      %v2632 = vadd.f32 %v2357, %v2591
      %v2633 = vadd.f32 %v2358, %v2594
      %v2634 = vadd.f32 %v2359, %v2597
      %v2635 = vadd.f32 %v2360, %v2600
      %v2636 = vadd.f32 %v2361, %v2603
      %v2637 = vld [vmem:[%s2086 + $0x2] sm:$0xff]
      %v2638 = vld [vmem:[%s2086 + $0xa] sm:$0xff]
      %v2639 = vld [vmem:[%s2086 + $0x1a] sm:$0xff]
      %v2640 = vld [vmem:[%s2086 + $0x22] sm:$0xff]
      %v2641 = vld [vmem:[%s2086 + $0x32] sm:$0xff]
      %v2642 = vld [vmem:[%s2086 + $0x3a] sm:$0xff]
      %v2643 = vld [vmem:[%s2086 + $0x4a] sm:$0xff]
      %v2644 = vld [vmem:[%s2086 + $0x52] sm:$0xff]
      %v2645 = vld [vmem:[%s2086 + $0x62] sm:$0xff]
      %v2646 = vld [vmem:[%s2086 + $0x6a] sm:$0xff]
      %v2647 = vld [vmem:[%s2086 + $0x7a] sm:$0xff]
      %v2648 = vld [vmem:[%s2086 + $0x82] sm:$0xff]
      %v2649 = vld [vmem:[%s2086 + $0x92] sm:$0xff]
      %v2650 = vld [vmem:[%s2086 + $0x9a] sm:$0xff]
      %v2651 = vld [vmem:[%s2086 + $0xaa] sm:$0xff]
      %v2652 = vld [vmem:[%s2086 + $0xb2] sm:$0xff]
      %v2653 = vld [vmem:[%s2086 + $0xc2] sm:$0xff]
      %v2654 = vld [vmem:[%s2086 + $0xca] sm:$0xff]
      %v2655 = vld [vmem:[%s2086 + $0xda] sm:$0xff]
      %v2656 = vld [vmem:[%s2086 + $0xe2] sm:$0xff]
      %v2657 = vld [vmem:[%s2086 + $0xf2] sm:$0xff]
      %v2658 = vld [vmem:[%s2086 + $0xfa] sm:$0xff]
      %v2659 = vld [vmem:[%s2086 + $0x10a] sm:$0xff]
      %v2660 = vld [vmem:[%s2086 + $0x112] sm:$0xff]
      %v2661 = vld [vmem:[%s2086 + $0x122] sm:$0xff]
      %v2662 = vld [vmem:[%s2086 + $0x12a] sm:$0xff]
      %v2663 = vld [vmem:[%s2086 + $0x13a] sm:$0xff]
      %v2664 = vld [vmem:[%s2086 + $0x142] sm:$0xff]
      %v2665 = vld [vmem:[%s2086 + $0x152] sm:$0xff]
      %v2666 = vld [vmem:[%s2086 + $0x15a] sm:$0xff]
      %v2667 = vld [vmem:[%s2086 + $0x16a] sm:$0xff]
      %v2668 = vld [vmem:[%s2086 + $0x172] sm:$0xff]
      %s2669 = scalar_lea.vmem %s1, 64
      %v2670 = vld [vmem:[%s2669] sm:$0xff]
      %v2672 = vsel %vm566, %v2637, 0
      %v2675 = vsel %vm566, %v2638, 0
      %v2678 = vsel %vm566, %v2639, 0
      %v2681 = vsel %vm566, %v2640, 0
      %v2684 = vsel %vm566, %v2641, 0
      %v2687 = vsel %vm566, %v2642, 0
      %v2690 = vsel %vm566, %v2643, 0
      %v2693 = vsel %vm566, %v2644, 0
      %v2696 = vsel %vm566, %v2645, 0
      %v2699 = vsel %vm566, %v2646, 0
      %v2702 = vsel %vm566, %v2647, 0
      %v2705 = vsel %vm566, %v2648, 0
      %v2708 = vsel %vm566, %v2649, 0
      %v2711 = vsel %vm566, %v2650, 0
      %v2714 = vsel %vm566, %v2651, 0
      %v2717 = vsel %vm566, %v2652, 0
      %v2720 = vsel %vm566, %v2653, 0
      %v2723 = vsel %vm566, %v2654, 0
      %v2726 = vsel %vm566, %v2655, 0
      %v2729 = vsel %vm566, %v2656, 0
      %v2732 = vsel %vm566, %v2657, 0
      %v2735 = vsel %vm566, %v2658, 0
      %v2738 = vsel %vm566, %v2659, 0
      %v2741 = vsel %vm566, %v2660, 0
      %v2744 = vsel %vm566, %v2661, 0
      %v2747 = vsel %vm566, %v2662, 0
      %v2750 = vsel %vm566, %v2663, 0
      %v2753 = vsel %vm566, %v2664, 0
      %v2756 = vsel %vm566, %v2665, 0
      %v2759 = vsel %vm566, %v2666, 0
      %v2762 = vsel %vm566, %v2667, 0
      %v2765 = vsel %vm566, %v2668, 0
      %2767 = vmatpush.msra.mxu0 0.0
      %2768 = vmatpush.msra.mxu0 0.0
      %2769 = vmatpush.msra.mxu0 0.0
      %2770 = vmatpush.msra.mxu0 0.0
      %2771 = vmatpush.msra.mxu0 0.0
      %2772 = vmatpush.msra.mxu0 0.0
      %2773 = vmatpush.msra.mxu0 0.0
      %2774 = vmatpush.msra.mxu0 0.0
      %2775 = vmatpush.msra.mxu0 0.0
      %2776 = vmatpush.msra.mxu0 0.0
      %2777 = vmatpush.msra.mxu0 0.0
      %2778 = vmatpush.msra.mxu0 0.0
      %2779 = vmatpush.msra.mxu0 0.0
      %2780 = vmatpush.msra.mxu0 0.0
      %2781 = vmatpush.msra.mxu0 0.0
      %2782 = vmatpush.msra.mxu0 %v2670
      %2783 = vmatmul.f32.gmra.mxu0 %v2672
      %v2784 = vpop.f32.mrf.mxu0
      %v2785 = vadd.f32 0.0, %v2784
      %2786 = vmatmul.f32.gmra.mxu0 %v2675
      %v2787 = vpop.f32.mrf.mxu0
      %v2788 = vadd.f32 0.0, %v2787
      %2789 = vmatmul.f32.gmra.mxu0 %v2678
      %v2790 = vpop.f32.mrf.mxu0
      %v2791 = vadd.f32 0.0, %v2790
      %2792 = vmatmul.f32.gmra.mxu0 %v2681
      %v2793 = vpop.f32.mrf.mxu0
      %v2794 = vadd.f32 0.0, %v2793
      %2795 = vmatmul.f32.gmra.mxu0 %v2684
      %v2796 = vpop.f32.mrf.mxu0
      %v2797 = vadd.f32 0.0, %v2796
      %2798 = vmatmul.f32.gmra.mxu0 %v2687
      %v2799 = vpop.f32.mrf.mxu0
      %v2800 = vadd.f32 0.0, %v2799
      %2801 = vmatmul.f32.gmra.mxu0 %v2690
      %v2802 = vpop.f32.mrf.mxu0
      %v2803 = vadd.f32 0.0, %v2802
      %2804 = vmatmul.f32.gmra.mxu0 %v2693
      %v2805 = vpop.f32.mrf.mxu0
      %v2806 = vadd.f32 0.0, %v2805
      %2807 = vmatmul.f32.gmra.mxu0 %v2696
      %v2808 = vpop.f32.mrf.mxu0
      %v2809 = vadd.f32 0.0, %v2808
      %2810 = vmatmul.f32.gmra.mxu0 %v2699
      %v2811 = vpop.f32.mrf.mxu0
      %v2812 = vadd.f32 0.0, %v2811
      %2813 = vmatmul.f32.gmra.mxu0 %v2702
      %v2814 = vpop.f32.mrf.mxu0
      %v2815 = vadd.f32 0.0, %v2814
      %2816 = vmatmul.f32.gmra.mxu0 %v2705
      %v2817 = vpop.f32.mrf.mxu0
      %v2818 = vadd.f32 0.0, %v2817
      %2819 = vmatmul.f32.gmra.mxu0 %v2708
      %v2820 = vpop.f32.mrf.mxu0
      %v2821 = vadd.f32 0.0, %v2820
      %2822 = vmatmul.f32.gmra.mxu0 %v2711
      %v2823 = vpop.f32.mrf.mxu0
      %v2824 = vadd.f32 0.0, %v2823
      %2825 = vmatmul.f32.gmra.mxu0 %v2714
      %v2826 = vpop.f32.mrf.mxu0
      %v2827 = vadd.f32 0.0, %v2826
      %2828 = vmatmul.f32.gmra.mxu0 %v2717
      %v2829 = vpop.f32.mrf.mxu0
      %v2830 = vadd.f32 0.0, %v2829
      %2831 = vmatmul.f32.gmra.mxu0 %v2720
      %v2832 = vpop.f32.mrf.mxu0
      %v2833 = vadd.f32 0.0, %v2832
      %2834 = vmatmul.f32.gmra.mxu0 %v2723
      %v2835 = vpop.f32.mrf.mxu0
      %v2836 = vadd.f32 0.0, %v2835
      %2837 = vmatmul.f32.gmra.mxu0 %v2726
      %v2838 = vpop.f32.mrf.mxu0
      %v2839 = vadd.f32 0.0, %v2838
      %2840 = vmatmul.f32.gmra.mxu0 %v2729
      %v2841 = vpop.f32.mrf.mxu0
      %v2842 = vadd.f32 0.0, %v2841
      %2843 = vmatmul.f32.gmra.mxu0 %v2732
      %v2844 = vpop.f32.mrf.mxu0
      %v2845 = vadd.f32 0.0, %v2844
      %2846 = vmatmul.f32.gmra.mxu0 %v2735
      %v2847 = vpop.f32.mrf.mxu0
      %v2848 = vadd.f32 0.0, %v2847
      %2849 = vmatmul.f32.gmra.mxu0 %v2738
      %v2850 = vpop.f32.mrf.mxu0
      %v2851 = vadd.f32 0.0, %v2850
      %2852 = vmatmul.f32.gmra.mxu0 %v2741
      %v2853 = vpop.f32.mrf.mxu0
      %v2854 = vadd.f32 0.0, %v2853
      %2855 = vmatmul.f32.gmra.mxu0 %v2744
      %v2856 = vpop.f32.mrf.mxu0
      %v2857 = vadd.f32 0.0, %v2856
      %2858 = vmatmul.f32.gmra.mxu0 %v2747
      %v2859 = vpop.f32.mrf.mxu0
      %v2860 = vadd.f32 0.0, %v2859
      %2861 = vmatmul.f32.gmra.mxu0 %v2750
      %v2862 = vpop.f32.mrf.mxu0
      %v2863 = vadd.f32 0.0, %v2862
      %2864 = vmatmul.f32.gmra.mxu0 %v2753
      %v2865 = vpop.f32.mrf.mxu0
      %v2866 = vadd.f32 0.0, %v2865
      %2867 = vmatmul.f32.gmra.mxu0 %v2756
      %v2868 = vpop.f32.mrf.mxu0
      %v2869 = vadd.f32 0.0, %v2868
      %2870 = vmatmul.f32.gmra.mxu0 %v2759
      %v2871 = vpop.f32.mrf.mxu0
      %v2872 = vadd.f32 0.0, %v2871
      %2873 = vmatmul.f32.gmra.mxu0 %v2762
      %v2874 = vpop.f32.mrf.mxu0
      %v2875 = vadd.f32 0.0, %v2874
      %2876 = vmatmul.f32.gmra.mxu0 %v2765
      %v2877 = vpop.f32.mrf.mxu0
      %v2878 = vadd.f32 0.0, %v2877
      %2879 = vdwg.mxu0
      %v2880 = vadd.f32 %v2605, %v2785
      %v2881 = vadd.f32 %v2606, %v2788
      %v2882 = vadd.f32 %v2607, %v2791
      %v2883 = vadd.f32 %v2608, %v2794
      %v2884 = vadd.f32 %v2609, %v2797
      %v2885 = vadd.f32 %v2610, %v2800
      %v2886 = vadd.f32 %v2611, %v2803
      %v2887 = vadd.f32 %v2612, %v2806
      %v2888 = vadd.f32 %v2613, %v2809
      %v2889 = vadd.f32 %v2614, %v2812
      %v2890 = vadd.f32 %v2615, %v2815
      %v2891 = vadd.f32 %v2616, %v2818
      %v2892 = vadd.f32 %v2617, %v2821
      %v2893 = vadd.f32 %v2618, %v2824
      %v2894 = vadd.f32 %v2619, %v2827
      %v2895 = vadd.f32 %v2620, %v2830
      %v2896 = vadd.f32 %v2621, %v2833
      %v2897 = vadd.f32 %v2622, %v2836
      %v2898 = vadd.f32 %v2623, %v2839
      %v2899 = vadd.f32 %v2624, %v2842
      %v2900 = vadd.f32 %v2625, %v2845
      %v2901 = vadd.f32 %v2626, %v2848
      %v2902 = vadd.f32 %v2627, %v2851
      %v2903 = vadd.f32 %v2628, %v2854
      %v2904 = vadd.f32 %v2629, %v2857
      %v2905 = vadd.f32 %v2630, %v2860
      %v2906 = vadd.f32 %v2631, %v2863
      %v2907 = vadd.f32 %v2632, %v2866
      %v2908 = vadd.f32 %v2633, %v2869
      %v2909 = vadd.f32 %v2634, %v2872
      %v2910 = vadd.f32 %v2635, %v2875
      %v2911 = vadd.f32 %v2636, %v2878
      %v2912 = vld [vmem:[%s2] sm:$0x1]
      %v2914 = vperm.slane %v2912, 0
      %v2916 = vadd.f32 %v2880, %v2914
      %v2917 = vadd.f32 %v2881, %v2914
      %v2918 = vadd.f32 %v2882, %v2914
      %v2919 = vadd.f32 %v2883, %v2914
      %v2920 = vadd.f32 %v2884, %v2914
      %v2921 = vadd.f32 %v2885, %v2914
      %v2922 = vadd.f32 %v2886, %v2914
      %v2923 = vadd.f32 %v2887, %v2914
      %v2924 = vadd.f32 %v2888, %v2914
      %v2925 = vadd.f32 %v2889, %v2914
      %v2926 = vadd.f32 %v2890, %v2914
      %v2927 = vadd.f32 %v2891, %v2914
      %v2928 = vadd.f32 %v2892, %v2914
      %v2929 = vadd.f32 %v2893, %v2914
      %v2930 = vadd.f32 %v2894, %v2914
      %v2931 = vadd.f32 %v2895, %v2914
      %v2932 = vadd.f32 %v2896, %v2914
      %v2933 = vadd.f32 %v2897, %v2914
      %v2934 = vadd.f32 %v2898, %v2914
      %v2935 = vadd.f32 %v2899, %v2914
      %v2936 = vadd.f32 %v2900, %v2914
      %v2937 = vadd.f32 %v2901, %v2914
      %v2938 = vadd.f32 %v2902, %v2914
      %v2939 = vadd.f32 %v2903, %v2914
      %v2940 = vadd.f32 %v2904, %v2914
      %v2941 = vadd.f32 %v2905, %v2914
      %v2942 = vadd.f32 %v2906, %v2914
      %v2943 = vadd.f32 %v2907, %v2914
      %v2944 = vadd.f32 %v2908, %v2914
      %v2945 = vadd.f32 %v2909, %v2914
      %v2946 = vadd.f32 %v2910, %v2914
      %v2947 = vadd.f32 %v2911, %v2914
      %v2948 = vmax.f32 %v2916, 0.0
      %v2949 = vmax.f32 %v2917, 0.0
      %v2950 = vmax.f32 %v2918, 0.0
      %v2951 = vmax.f32 %v2919, 0.0
      %v2952 = vmax.f32 %v2920, 0.0
      %v2953 = vmax.f32 %v2921, 0.0
      %v2954 = vmax.f32 %v2922, 0.0
      %v2955 = vmax.f32 %v2923, 0.0
      %v2956 = vmax.f32 %v2924, 0.0
      %v2957 = vmax.f32 %v2925, 0.0
      %v2958 = vmax.f32 %v2926, 0.0
      %v2959 = vmax.f32 %v2927, 0.0
      %v2960 = vmax.f32 %v2928, 0.0
      %v2961 = vmax.f32 %v2929, 0.0
      %v2962 = vmax.f32 %v2930, 0.0
      %v2963 = vmax.f32 %v2931, 0.0
      %v2964 = vmax.f32 %v2932, 0.0
      %v2965 = vmax.f32 %v2933, 0.0
      %v2966 = vmax.f32 %v2934, 0.0
      %v2967 = vmax.f32 %v2935, 0.0
      %v2968 = vmax.f32 %v2936, 0.0
      %v2969 = vmax.f32 %v2937, 0.0
      %v2970 = vmax.f32 %v2938, 0.0
      %v2971 = vmax.f32 %v2939, 0.0
      %v2972 = vmax.f32 %v2940, 0.0
      %v2973 = vmax.f32 %v2941, 0.0
      %v2974 = vmax.f32 %v2942, 0.0
      %v2975 = vmax.f32 %v2943, 0.0
      %v2976 = vmax.f32 %v2944, 0.0
      %v2977 = vmax.f32 %v2945, 0.0
      %v2978 = vmax.f32 %v2946, 0.0
      %v2979 = vmax.f32 %v2947, 0.0
      %s2980 = scalar_lea.vmem [#allocation2], 24
      %2981 = vst.msk [vmem:[%s2980 + $0x1] sm:$0xff] %vm335, %v2948
      %2982 = vst.msk [vmem:[%s2980 + $0x9] sm:$0xff] %vm335, %v2949
      %2983 = vst.msk [vmem:[%s2980 + $0x19] sm:$0xff] %vm335, %v2950
      %2984 = vst.msk [vmem:[%s2980 + $0x21] sm:$0xff] %vm335, %v2951
      %2985 = vst.msk [vmem:[%s2980 + $0x31] sm:$0xff] %vm335, %v2952
      %2986 = vst.msk [vmem:[%s2980 + $0x39] sm:$0xff] %vm335, %v2953
      %2987 = vst.msk [vmem:[%s2980 + $0x49] sm:$0xff] %vm335, %v2954
      %2988 = vst.msk [vmem:[%s2980 + $0x51] sm:$0xff] %vm335, %v2955
      %2989 = vst.msk [vmem:[%s2980 + $0x61] sm:$0xff] %vm335, %v2956
      %2990 = vst.msk [vmem:[%s2980 + $0x69] sm:$0xff] %vm335, %v2957
      %2991 = vst.msk [vmem:[%s2980 + $0x79] sm:$0xff] %vm335, %v2958
      %2992 = vst.msk [vmem:[%s2980 + $0x81] sm:$0xff] %vm335, %v2959
      %2993 = vst.msk [vmem:[%s2980 + $0x91] sm:$0xff] %vm335, %v2960
      %2994 = vst.msk [vmem:[%s2980 + $0x99] sm:$0xff] %vm335, %v2961
      %2995 = vst.msk [vmem:[%s2980 + $0xa9] sm:$0xff] %vm335, %v2962
      %2996 = vst.msk [vmem:[%s2980 + $0xb1] sm:$0xff] %vm335, %v2963
      %2997 = vst.msk [vmem:[%s2980 + $0xc1] sm:$0xff] %vm335, %v2964
      %2998 = vst.msk [vmem:[%s2980 + $0xc9] sm:$0xff] %vm335, %v2965
      %2999 = vst.msk [vmem:[%s2980 + $0xd9] sm:$0xff] %vm335, %v2966
      %3000 = vst.msk [vmem:[%s2980 + $0xe1] sm:$0xff] %vm335, %v2967
      %3001 = vst.msk [vmem:[%s2980 + $0xf1] sm:$0xff] %vm335, %v2968
      %3002 = vst.msk [vmem:[%s2980 + $0xf9] sm:$0xff] %vm335, %v2969
      %3003 = vst.msk [vmem:[%s2980 + $0x109] sm:$0xff] %vm335, %v2970
      %3004 = vst.msk [vmem:[%s2980 + $0x111] sm:$0xff] %vm335, %v2971
      %3005 = vst.msk [vmem:[%s2980 + $0x121] sm:$0xff] %vm335, %v2972
      %3006 = vst.msk [vmem:[%s2980 + $0x129] sm:$0xff] %vm335, %v2973
      %3007 = vst.msk [vmem:[%s2980 + $0x139] sm:$0xff] %vm335, %v2974
      %3008 = vst.msk [vmem:[%s2980 + $0x141] sm:$0xff] %vm335, %v2975
      %3009 = vst.msk [vmem:[%s2980 + $0x151] sm:$0xff] %vm335, %v2976
      %3010 = vst.msk [vmem:[%s2980 + $0x159] sm:$0xff] %vm335, %v2977
      %3011 = vst.msk [vmem:[%s2980 + $0x169] sm:$0xff] %vm335, %v2978
      %3012 = vst.msk [vmem:[%s2980 + $0x171] sm:$0xff] %vm335, %v2979
      %v3013 = vld [vmem:[#allocation2] sm:$0xff]
      %v3014 = vld [vmem:[#allocation2 + $0x8] sm:$0xff]
      %v3015 = vld [vmem:[#allocation2 + $0x18] sm:$0xff]
      %v3016 = vld [vmem:[#allocation2 + $0x20] sm:$0xff]
      %v3017 = vld [vmem:[#allocation2 + $0x30] sm:$0xff]
      %v3018 = vld [vmem:[#allocation2 + $0x38] sm:$0xff]
      %v3019 = vld [vmem:[#allocation2 + $0x48] sm:$0xff]
      %v3020 = vld [vmem:[#allocation2 + $0x50] sm:$0xff]
      %v3021 = vld [vmem:[#allocation2 + $0x60] sm:$0xff]
      %v3022 = vld [vmem:[#allocation2 + $0x68] sm:$0xff]
      %v3023 = vld [vmem:[#allocation2 + $0x78] sm:$0xff]
      %v3024 = vld [vmem:[#allocation2 + $0x80] sm:$0xff]
      %v3025 = vld [vmem:[#allocation2 + $0x90] sm:$0xff]
      %v3026 = vld [vmem:[#allocation2 + $0x98] sm:$0xff]
      %v3027 = vld [vmem:[#allocation2 + $0xa8] sm:$0xff]
      %v3028 = vld [vmem:[#allocation2 + $0xb0] sm:$0xff]
      %v3029 = vld [vmem:[#allocation2 + $0xc0] sm:$0xff]
      %v3030 = vld [vmem:[#allocation2 + $0xc8] sm:$0xff]
      %v3031 = vld [vmem:[#allocation2 + $0xd8] sm:$0xff]
      %v3032 = vld [vmem:[#allocation2 + $0xe0] sm:$0xff]
      %v3033 = vld [vmem:[#allocation2 + $0xf0] sm:$0xff]
      %v3034 = vld [vmem:[#allocation2 + $0xf8] sm:$0xff]
      %v3035 = vld [vmem:[#allocation2 + $0x108] sm:$0xff]
      %v3036 = vld [vmem:[#allocation2 + $0x110] sm:$0xff]
      %v3037 = vld [vmem:[#allocation2 + $0x120] sm:$0xff]
      %v3038 = vld [vmem:[#allocation2 + $0x128] sm:$0xff]
      %v3039 = vld [vmem:[#allocation2 + $0x138] sm:$0xff]
      %v3040 = vld [vmem:[#allocation2 + $0x140] sm:$0xff]
      %v3041 = vld [vmem:[#allocation2 + $0x150] sm:$0xff]
      %v3042 = vld [vmem:[#allocation2 + $0x158] sm:$0xff]
      %v3043 = vld [vmem:[#allocation2 + $0x168] sm:$0xff]
      %v3044 = vld [vmem:[#allocation2 + $0x170] sm:$0xff]
      %v3045 = vld [vmem:[%s3] sm:$0xff]
      %v3046 = vld [vmem:[%s3 + $0x8] sm:$0xff]
      %v3047 = vld [vmem:[%s3 + $0x10] sm:$0xff]
      %v3048 = vld [vmem:[%s3 + $0x18] sm:$0xff]
      %v3049 = vld [vmem:[%s3 + $0x20] sm:$0xff]
      %v3050 = vld [vmem:[%s3 + $0x28] sm:$0xff]
      %v3051 = vld [vmem:[%s3 + $0x30] sm:$0xff]
      %v3052 = vld [vmem:[%s3 + $0x38] sm:$0xff]
      %v3053 = vld [vmem:[#allocation2 + $0x1] sm:$0xff]
      %v3054 = vld [vmem:[#allocation2 + $0x9] sm:$0xff]
      %v3055 = vld [vmem:[#allocation2 + $0x19] sm:$0xff]
      %v3056 = vld [vmem:[#allocation2 + $0x21] sm:$0xff]
      %v3057 = vld [vmem:[#allocation2 + $0x31] sm:$0xff]
      %v3058 = vld [vmem:[#allocation2 + $0x39] sm:$0xff]
      %v3059 = vld [vmem:[#allocation2 + $0x49] sm:$0xff]
      %v3060 = vld [vmem:[#allocation2 + $0x51] sm:$0xff]
      %v3061 = vld [vmem:[#allocation2 + $0x61] sm:$0xff]
      %v3062 = vld [vmem:[#allocation2 + $0x69] sm:$0xff]
      %v3063 = vld [vmem:[#allocation2 + $0x79] sm:$0xff]
      %v3064 = vld [vmem:[#allocation2 + $0x81] sm:$0xff]
      %v3065 = vld [vmem:[#allocation2 + $0x91] sm:$0xff]
      %v3066 = vld [vmem:[#allocation2 + $0x99] sm:$0xff]
      %v3067 = vld [vmem:[#allocation2 + $0xa9] sm:$0xff]
      %v3068 = vld [vmem:[#allocation2 + $0xb1] sm:$0xff]
      %v3069 = vld [vmem:[#allocation2 + $0xc1] sm:$0xff]
      %v3070 = vld [vmem:[#allocation2 + $0xc9] sm:$0xff]
      %v3071 = vld [vmem:[#allocation2 + $0xd9] sm:$0xff]
      %v3072 = vld [vmem:[#allocation2 + $0xe1] sm:$0xff]
      %v3073 = vld [vmem:[#allocation2 + $0xf1] sm:$0xff]
      %v3074 = vld [vmem:[#allocation2 + $0xf9] sm:$0xff]
      %v3075 = vld [vmem:[#allocation2 + $0x109] sm:$0xff]
      %v3076 = vld [vmem:[#allocation2 + $0x111] sm:$0xff]
      %v3077 = vld [vmem:[#allocation2 + $0x121] sm:$0xff]
      %v3078 = vld [vmem:[#allocation2 + $0x129] sm:$0xff]
      %v3079 = vld [vmem:[#allocation2 + $0x139] sm:$0xff]
      %v3080 = vld [vmem:[#allocation2 + $0x141] sm:$0xff]
      %v3081 = vld [vmem:[#allocation2 + $0x151] sm:$0xff]
      %v3082 = vld [vmem:[#allocation2 + $0x159] sm:$0xff]
      %v3083 = vld [vmem:[#allocation2 + $0x169] sm:$0xff]
      %v3084 = vld [vmem:[#allocation2 + $0x171] sm:$0xff]
      %s3085 = scalar_lea.vmem %s3, 64
      %v3086 = vld [vmem:[%s3085] sm:$0xff]
      %v3087 = vld [vmem:[%s3085 + $0x8] sm:$0xff]
      %v3088 = vld [vmem:[%s3085 + $0x10] sm:$0xff]
      %v3089 = vld [vmem:[%s3085 + $0x18] sm:$0xff]
      %v3090 = vld [vmem:[%s3085 + $0x20] sm:$0xff]
      %v3091 = vld [vmem:[%s3085 + $0x28] sm:$0xff]
      %v3092 = vld [vmem:[%s3085 + $0x30] sm:$0xff]
      %v3093 = vld [vmem:[%s3085 + $0x38] sm:$0xff]
      %v3095 = vsel %vm335, %v3053, 0
      %v3098 = vsel %vm335, %v3054, 0
      %v3101 = vsel %vm335, %v3055, 0
      %v3104 = vsel %vm335, %v3056, 0
      %v3107 = vsel %vm335, %v3057, 0
      %v3110 = vsel %vm335, %v3058, 0
      %v3113 = vsel %vm335, %v3059, 0
      %v3116 = vsel %vm335, %v3060, 0
      %v3119 = vsel %vm335, %v3061, 0
      %v3122 = vsel %vm335, %v3062, 0
      %v3125 = vsel %vm335, %v3063, 0
      %v3128 = vsel %vm335, %v3064, 0
      %v3131 = vsel %vm335, %v3065, 0
      %v3134 = vsel %vm335, %v3066, 0
      %v3137 = vsel %vm335, %v3067, 0
      %v3140 = vsel %vm335, %v3068, 0
      %v3143 = vsel %vm335, %v3069, 0
      %v3146 = vsel %vm335, %v3070, 0
      %v3149 = vsel %vm335, %v3071, 0
      %v3152 = vsel %vm335, %v3072, 0
      %v3155 = vsel %vm335, %v3073, 0
      %v3158 = vsel %vm335, %v3074, 0
      %v3161 = vsel %vm335, %v3075, 0
      %v3164 = vsel %vm335, %v3076, 0
      %v3167 = vsel %vm335, %v3077, 0
      %v3170 = vsel %vm335, %v3078, 0
      %v3173 = vsel %vm335, %v3079, 0
      %v3176 = vsel %vm335, %v3080, 0
      %v3179 = vsel %vm335, %v3081, 0
      %v3182 = vsel %vm335, %v3082, 0
      %v3185 = vsel %vm335, %v3083, 0
      %v3188 = vsel %vm335, %v3084, 0
      %3190 = vmatpush.msra.mxu0 0.0
      %3191 = vmatpush.msra.mxu0 0.0
      %3192 = vmatpush.msra.mxu0 0.0
      %3193 = vmatpush.msra.mxu0 0.0
      %3194 = vmatpush.msra.mxu0 0.0
      %3195 = vmatpush.msra.mxu0 0.0
      %3196 = vmatpush.msra.mxu0 0.0
      %3197 = vmatpush.msra.mxu0 0.0
      %3198 = vmatpush.msra.mxu0 %v3093
      %3199 = vmatpush.msra.mxu0 %v3092
      %3200 = vmatpush.msra.mxu0 %v3091
      %3201 = vmatpush.msra.mxu0 %v3090
      %3202 = vmatpush.msra.mxu0 %v3089
      %3203 = vmatpush.msra.mxu0 %v3088
      %3204 = vmatpush.msra.mxu0 %v3087
      %3205 = vmatpush.msra.mxu0 %v3086
      %3206 = vmatmul.f32.gmra.mxu0 %v3095
      %v3207 = vpop.f32.mrf.mxu0
      %v3208 = vadd.f32 0.0, %v3207
      %3209 = vmatmul.f32.gmra.mxu0 %v3098
      %v3210 = vpop.f32.mrf.mxu0
      %v3211 = vadd.f32 0.0, %v3210
      %3212 = vmatmul.f32.gmra.mxu0 %v3101
      %v3213 = vpop.f32.mrf.mxu0
      %v3214 = vadd.f32 0.0, %v3213
      %3215 = vmatmul.f32.gmra.mxu0 %v3104
      %v3216 = vpop.f32.mrf.mxu0
      %v3217 = vadd.f32 0.0, %v3216
      %3218 = vmatmul.f32.gmra.mxu0 %v3107
      %v3219 = vpop.f32.mrf.mxu0
      %v3220 = vadd.f32 0.0, %v3219
      %3221 = vmatmul.f32.gmra.mxu0 %v3110
      %v3222 = vpop.f32.mrf.mxu0
      %v3223 = vadd.f32 0.0, %v3222
      %3224 = vmatmul.f32.gmra.mxu0 %v3113
      %v3225 = vpop.f32.mrf.mxu0
      %v3226 = vadd.f32 0.0, %v3225
      %3227 = vmatmul.f32.gmra.mxu0 %v3116
      %v3228 = vpop.f32.mrf.mxu0
      %v3229 = vadd.f32 0.0, %v3228
      %3230 = vmatmul.f32.gmra.mxu0 %v3119
      %v3231 = vpop.f32.mrf.mxu0
      %v3232 = vadd.f32 0.0, %v3231
      %3233 = vmatmul.f32.gmra.mxu0 %v3122
      %v3234 = vpop.f32.mrf.mxu0
      %v3235 = vadd.f32 0.0, %v3234
      %3236 = vmatmul.f32.gmra.mxu0 %v3125
      %v3237 = vpop.f32.mrf.mxu0
      %v3238 = vadd.f32 0.0, %v3237
      %3239 = vmatmul.f32.gmra.mxu0 %v3128
      %v3240 = vpop.f32.mrf.mxu0
      %v3241 = vadd.f32 0.0, %v3240
      %3242 = vmatmul.f32.gmra.mxu0 %v3131
      %v3243 = vpop.f32.mrf.mxu0
      %v3244 = vadd.f32 0.0, %v3243
      %3245 = vmatmul.f32.gmra.mxu0 %v3134
      %v3246 = vpop.f32.mrf.mxu0
      %v3247 = vadd.f32 0.0, %v3246
      %3248 = vmatmul.f32.gmra.mxu0 %v3137
      %v3249 = vpop.f32.mrf.mxu0
      %v3250 = vadd.f32 0.0, %v3249
      %3251 = vmatmul.f32.gmra.mxu0 %v3140
      %v3252 = vpop.f32.mrf.mxu0
      %v3253 = vadd.f32 0.0, %v3252
      %3254 = vmatmul.f32.gmra.mxu0 %v3143
      %v3255 = vpop.f32.mrf.mxu0
      %v3256 = vadd.f32 0.0, %v3255
      %3257 = vmatmul.f32.gmra.mxu0 %v3146
      %v3258 = vpop.f32.mrf.mxu0
      %v3259 = vadd.f32 0.0, %v3258
      %3260 = vmatmul.f32.gmra.mxu0 %v3149
      %v3261 = vpop.f32.mrf.mxu0
      %v3262 = vadd.f32 0.0, %v3261
      %3263 = vmatmul.f32.gmra.mxu0 %v3152
      %v3264 = vpop.f32.mrf.mxu0
      %v3265 = vadd.f32 0.0, %v3264
      %3266 = vmatmul.f32.gmra.mxu0 %v3155
      %v3267 = vpop.f32.mrf.mxu0
      %v3268 = vadd.f32 0.0, %v3267
      %3269 = vmatmul.f32.gmra.mxu0 %v3158
      %v3270 = vpop.f32.mrf.mxu0
      %v3271 = vadd.f32 0.0, %v3270
      %3272 = vmatmul.f32.gmra.mxu0 %v3161
      %v3273 = vpop.f32.mrf.mxu0
      %v3274 = vadd.f32 0.0, %v3273
      %3275 = vmatmul.f32.gmra.mxu0 %v3164
      %v3276 = vpop.f32.mrf.mxu0
      %v3277 = vadd.f32 0.0, %v3276
      %3278 = vmatmul.f32.gmra.mxu0 %v3167
      %v3279 = vpop.f32.mrf.mxu0
      %v3280 = vadd.f32 0.0, %v3279
      %3281 = vmatmul.f32.gmra.mxu0 %v3170
      %v3282 = vpop.f32.mrf.mxu0
      %v3283 = vadd.f32 0.0, %v3282
      %3284 = vmatmul.f32.gmra.mxu0 %v3173
      %v3285 = vpop.f32.mrf.mxu0
      %v3286 = vadd.f32 0.0, %v3285
      %3287 = vmatmul.f32.gmra.mxu0 %v3176
      %v3288 = vpop.f32.mrf.mxu0
      %v3289 = vadd.f32 0.0, %v3288
      %3290 = vmatmul.f32.gmra.mxu0 %v3179
      %v3291 = vpop.f32.mrf.mxu0
      %v3292 = vadd.f32 0.0, %v3291
      %3293 = vmatmul.f32.gmra.mxu0 %v3182
      %v3294 = vpop.f32.mrf.mxu0
      %v3295 = vadd.f32 0.0, %v3294
      %3296 = vmatmul.f32.gmra.mxu0 %v3185
      %v3297 = vpop.f32.mrf.mxu0
      %v3298 = vadd.f32 0.0, %v3297
      %3299 = vmatmul.f32.gmra.mxu0 %v3188
      %v3300 = vpop.f32.mrf.mxu0
      %v3301 = vadd.f32 0.0, %v3300
      %3302 = vdwg.mxu0
      %v3304 = vsel %vm335, %v3013, 0
      %v3307 = vsel %vm335, %v3014, 0
      %v3310 = vsel %vm335, %v3015, 0
      %v3313 = vsel %vm335, %v3016, 0
      %v3316 = vsel %vm335, %v3017, 0
      %v3319 = vsel %vm335, %v3018, 0
      %v3322 = vsel %vm335, %v3019, 0
      %v3325 = vsel %vm335, %v3020, 0
      %v3328 = vsel %vm335, %v3021, 0
      %v3331 = vsel %vm335, %v3022, 0
      %v3334 = vsel %vm335, %v3023, 0
      %v3337 = vsel %vm335, %v3024, 0
      %v3340 = vsel %vm335, %v3025, 0
      %v3343 = vsel %vm335, %v3026, 0
      %v3346 = vsel %vm335, %v3027, 0
      %v3349 = vsel %vm335, %v3028, 0
      %v3352 = vsel %vm335, %v3029, 0
      %v3355 = vsel %vm335, %v3030, 0
      %v3358 = vsel %vm335, %v3031, 0
      %v3361 = vsel %vm335, %v3032, 0
      %v3364 = vsel %vm335, %v3033, 0
      %v3367 = vsel %vm335, %v3034, 0
      %v3370 = vsel %vm335, %v3035, 0
      %v3373 = vsel %vm335, %v3036, 0
      %v3376 = vsel %vm335, %v3037, 0
      %v3379 = vsel %vm335, %v3038, 0
      %v3382 = vsel %vm335, %v3039, 0
      %v3385 = vsel %vm335, %v3040, 0
      %v3388 = vsel %vm335, %v3041, 0
      %v3391 = vsel %vm335, %v3042, 0
      %v3394 = vsel %vm335, %v3043, 0
      %v3397 = vsel %vm335, %v3044, 0
      %3399 = vmatpush.msra.mxu0 0.0
      %3400 = vmatpush.msra.mxu0 0.0
      %3401 = vmatpush.msra.mxu0 0.0
      %3402 = vmatpush.msra.mxu0 0.0
      %3403 = vmatpush.msra.mxu0 0.0
      %3404 = vmatpush.msra.mxu0 0.0
      %3405 = vmatpush.msra.mxu0 0.0
      %3406 = vmatpush.msra.mxu0 0.0
      %3407 = vmatpush.msra.mxu0 %v3052
      %3408 = vmatpush.msra.mxu0 %v3051
      %3409 = vmatpush.msra.mxu0 %v3050
      %3410 = vmatpush.msra.mxu0 %v3049
      %3411 = vmatpush.msra.mxu0 %v3048
      %3412 = vmatpush.msra.mxu0 %v3047
      %3413 = vmatpush.msra.mxu0 %v3046
      %3414 = vmatpush.msra.mxu0 %v3045
      %3415 = vmatmul.f32.gmra.mxu0 %v3304
      %v3416 = vpop.f32.mrf.mxu0
      %v3417 = vadd.f32 %v3208, %v3416
      %3418 = vmatmul.f32.gmra.mxu0 %v3307
      %v3419 = vpop.f32.mrf.mxu0
      %v3420 = vadd.f32 %v3211, %v3419
      %3421 = vmatmul.f32.gmra.mxu0 %v3310
      %v3422 = vpop.f32.mrf.mxu0
      %v3423 = vadd.f32 %v3214, %v3422
      %3424 = vmatmul.f32.gmra.mxu0 %v3313
      %v3425 = vpop.f32.mrf.mxu0
      %v3426 = vadd.f32 %v3217, %v3425
      %3427 = vmatmul.f32.gmra.mxu0 %v3316
      %v3428 = vpop.f32.mrf.mxu0
      %v3429 = vadd.f32 %v3220, %v3428
      %3430 = vmatmul.f32.gmra.mxu0 %v3319
      %v3431 = vpop.f32.mrf.mxu0
      %v3432 = vadd.f32 %v3223, %v3431
      %3433 = vmatmul.f32.gmra.mxu0 %v3322
      %v3434 = vpop.f32.mrf.mxu0
      %v3435 = vadd.f32 %v3226, %v3434
      %3436 = vmatmul.f32.gmra.mxu0 %v3325
      %v3437 = vpop.f32.mrf.mxu0
      %v3438 = vadd.f32 %v3229, %v3437
      %3439 = vmatmul.f32.gmra.mxu0 %v3328
      %v3440 = vpop.f32.mrf.mxu0
      %v3441 = vadd.f32 %v3232, %v3440
      %3442 = vmatmul.f32.gmra.mxu0 %v3331
      %v3443 = vpop.f32.mrf.mxu0
      %v3444 = vadd.f32 %v3235, %v3443
      %3445 = vmatmul.f32.gmra.mxu0 %v3334
      %v3446 = vpop.f32.mrf.mxu0
      %v3447 = vadd.f32 %v3238, %v3446
      %3448 = vmatmul.f32.gmra.mxu0 %v3337
      %v3449 = vpop.f32.mrf.mxu0
      %v3450 = vadd.f32 %v3241, %v3449
      %3451 = vmatmul.f32.gmra.mxu0 %v3340
      %v3452 = vpop.f32.mrf.mxu0
      %v3453 = vadd.f32 %v3244, %v3452
      %3454 = vmatmul.f32.gmra.mxu0 %v3343
      %v3455 = vpop.f32.mrf.mxu0
      %v3456 = vadd.f32 %v3247, %v3455
      %3457 = vmatmul.f32.gmra.mxu0 %v3346
      %v3458 = vpop.f32.mrf.mxu0
      %v3459 = vadd.f32 %v3250, %v3458
      %3460 = vmatmul.f32.gmra.mxu0 %v3349
      %v3461 = vpop.f32.mrf.mxu0
      %v3462 = vadd.f32 %v3253, %v3461
      %3463 = vmatmul.f32.gmra.mxu0 %v3352
      %v3464 = vpop.f32.mrf.mxu0
      %v3465 = vadd.f32 %v3256, %v3464
      %3466 = vmatmul.f32.gmra.mxu0 %v3355
      %v3467 = vpop.f32.mrf.mxu0
      %v3468 = vadd.f32 %v3259, %v3467
      %3469 = vmatmul.f32.gmra.mxu0 %v3358
      %v3470 = vpop.f32.mrf.mxu0
      %v3471 = vadd.f32 %v3262, %v3470
      %3472 = vmatmul.f32.gmra.mxu0 %v3361
      %v3473 = vpop.f32.mrf.mxu0
      %v3474 = vadd.f32 %v3265, %v3473
      %3475 = vmatmul.f32.gmra.mxu0 %v3364
      %v3476 = vpop.f32.mrf.mxu0
      %v3477 = vadd.f32 %v3268, %v3476
      %3478 = vmatmul.f32.gmra.mxu0 %v3367
      %v3479 = vpop.f32.mrf.mxu0
      %v3480 = vadd.f32 %v3271, %v3479
      %3481 = vmatmul.f32.gmra.mxu0 %v3370
      %v3482 = vpop.f32.mrf.mxu0
      %v3483 = vadd.f32 %v3274, %v3482
      %3484 = vmatmul.f32.gmra.mxu0 %v3373
      %v3485 = vpop.f32.mrf.mxu0
      %v3486 = vadd.f32 %v3277, %v3485
      %3487 = vmatmul.f32.gmra.mxu0 %v3376
      %v3488 = vpop.f32.mrf.mxu0
      %v3489 = vadd.f32 %v3280, %v3488
      %3490 = vmatmul.f32.gmra.mxu0 %v3379
      %v3491 = vpop.f32.mrf.mxu0
      %v3492 = vadd.f32 %v3283, %v3491
      %3493 = vmatmul.f32.gmra.mxu0 %v3382
      %v3494 = vpop.f32.mrf.mxu0
      %v3495 = vadd.f32 %v3286, %v3494
      %3496 = vmatmul.f32.gmra.mxu0 %v3385
      %v3497 = vpop.f32.mrf.mxu0
      %v3498 = vadd.f32 %v3289, %v3497
      %3499 = vmatmul.f32.gmra.mxu0 %v3388
      %v3500 = vpop.f32.mrf.mxu0
      %v3501 = vadd.f32 %v3292, %v3500
      %3502 = vmatmul.f32.gmra.mxu0 %v3391
      %v3503 = vpop.f32.mrf.mxu0
      %v3504 = vadd.f32 %v3295, %v3503
      %3505 = vmatmul.f32.gmra.mxu0 %v3394
      %v3506 = vpop.f32.mrf.mxu0
      %v3507 = vadd.f32 %v3298, %v3506
      %3508 = vmatmul.f32.gmra.mxu0 %v3397
      %v3509 = vpop.f32.mrf.mxu0
      %v3510 = vadd.f32 %v3301, %v3509
      %3511 = vdwg.mxu0
      %v3512 = vld [vmem:[#allocation2 + $0x2] sm:$0xff]
      %v3513 = vld [vmem:[#allocation2 + $0xa] sm:$0xff]
      %v3514 = vld [vmem:[#allocation2 + $0x1a] sm:$0xff]
      %v3515 = vld [vmem:[#allocation2 + $0x22] sm:$0xff]
      %v3516 = vld [vmem:[#allocation2 + $0x32] sm:$0xff]
      %v3517 = vld [vmem:[#allocation2 + $0x3a] sm:$0xff]
      %v3518 = vld [vmem:[#allocation2 + $0x4a] sm:$0xff]
      %v3519 = vld [vmem:[#allocation2 + $0x52] sm:$0xff]
      %v3520 = vld [vmem:[#allocation2 + $0x62] sm:$0xff]
      %v3521 = vld [vmem:[#allocation2 + $0x6a] sm:$0xff]
      %v3522 = vld [vmem:[#allocation2 + $0x7a] sm:$0xff]
      %v3523 = vld [vmem:[#allocation2 + $0x82] sm:$0xff]
      %v3524 = vld [vmem:[#allocation2 + $0x92] sm:$0xff]
      %v3525 = vld [vmem:[#allocation2 + $0x9a] sm:$0xff]
      %v3526 = vld [vmem:[#allocation2 + $0xaa] sm:$0xff]
      %v3527 = vld [vmem:[#allocation2 + $0xb2] sm:$0xff]
      %v3528 = vld [vmem:[#allocation2 + $0xc2] sm:$0xff]
      %v3529 = vld [vmem:[#allocation2 + $0xca] sm:$0xff]
      %v3530 = vld [vmem:[#allocation2 + $0xda] sm:$0xff]
      %v3531 = vld [vmem:[#allocation2 + $0xe2] sm:$0xff]
      %v3532 = vld [vmem:[#allocation2 + $0xf2] sm:$0xff]
      %v3533 = vld [vmem:[#allocation2 + $0xfa] sm:$0xff]
      %v3534 = vld [vmem:[#allocation2 + $0x10a] sm:$0xff]
      %v3535 = vld [vmem:[#allocation2 + $0x112] sm:$0xff]
      %v3536 = vld [vmem:[#allocation2 + $0x122] sm:$0xff]
      %v3537 = vld [vmem:[#allocation2 + $0x12a] sm:$0xff]
      %v3538 = vld [vmem:[#allocation2 + $0x13a] sm:$0xff]
      %v3539 = vld [vmem:[#allocation2 + $0x142] sm:$0xff]
      %v3540 = vld [vmem:[#allocation2 + $0x152] sm:$0xff]
      %v3541 = vld [vmem:[#allocation2 + $0x15a] sm:$0xff]
      %v3542 = vld [vmem:[#allocation2 + $0x16a] sm:$0xff]
      %v3543 = vld [vmem:[#allocation2 + $0x172] sm:$0xff]
      %s3544 = scalar_lea.vmem %s3, 128
      %v3545 = vld [vmem:[%s3544] sm:$0xff]
      %v3546 = vld [vmem:[%s3544 + $0x8] sm:$0xff]
      %v3547 = vld [vmem:[%s3544 + $0x10] sm:$0xff]
      %v3548 = vld [vmem:[%s3544 + $0x18] sm:$0xff]
      %v3549 = vld [vmem:[%s3544 + $0x20] sm:$0xff]
      %v3550 = vld [vmem:[%s3544 + $0x28] sm:$0xff]
      %v3551 = vld [vmem:[%s3544 + $0x30] sm:$0xff]
      %v3552 = vld [vmem:[%s3544 + $0x38] sm:$0xff]
      %v3554 = vsel %vm335, %v3512, 0
      %v3557 = vsel %vm335, %v3513, 0
      %v3560 = vsel %vm335, %v3514, 0
      %v3563 = vsel %vm335, %v3515, 0
      %v3566 = vsel %vm335, %v3516, 0
      %v3569 = vsel %vm335, %v3517, 0
      %v3572 = vsel %vm335, %v3518, 0
      %v3575 = vsel %vm335, %v3519, 0
      %v3578 = vsel %vm335, %v3520, 0
      %v3581 = vsel %vm335, %v3521, 0
      %v3584 = vsel %vm335, %v3522, 0
      %v3587 = vsel %vm335, %v3523, 0
      %v3590 = vsel %vm335, %v3524, 0
      %v3593 = vsel %vm335, %v3525, 0
      %v3596 = vsel %vm335, %v3526, 0
      %v3599 = vsel %vm335, %v3527, 0
      %v3602 = vsel %vm335, %v3528, 0
      %v3605 = vsel %vm335, %v3529, 0
      %v3608 = vsel %vm335, %v3530, 0
      %v3611 = vsel %vm335, %v3531, 0
      %v3614 = vsel %vm335, %v3532, 0
      %v3617 = vsel %vm335, %v3533, 0
      %v3620 = vsel %vm335, %v3534, 0
      %v3623 = vsel %vm335, %v3535, 0
      %v3626 = vsel %vm335, %v3536, 0
      %v3629 = vsel %vm335, %v3537, 0
      %v3632 = vsel %vm335, %v3538, 0
      %v3635 = vsel %vm335, %v3539, 0
      %v3638 = vsel %vm335, %v3540, 0
      %v3641 = vsel %vm335, %v3541, 0
      %v3644 = vsel %vm335, %v3542, 0
      %v3647 = vsel %vm335, %v3543, 0
      %3649 = vmatpush.msra.mxu0 0.0
      %3650 = vmatpush.msra.mxu0 0.0
      %3651 = vmatpush.msra.mxu0 0.0
      %3652 = vmatpush.msra.mxu0 0.0
      %3653 = vmatpush.msra.mxu0 0.0
      %3654 = vmatpush.msra.mxu0 0.0
      %3655 = vmatpush.msra.mxu0 0.0
      %3656 = vmatpush.msra.mxu0 0.0
      %3657 = vmatpush.msra.mxu0 %v3552
      %3658 = vmatpush.msra.mxu0 %v3551
      %3659 = vmatpush.msra.mxu0 %v3550
      %3660 = vmatpush.msra.mxu0 %v3549
      %3661 = vmatpush.msra.mxu0 %v3548
      %3662 = vmatpush.msra.mxu0 %v3547
      %3663 = vmatpush.msra.mxu0 %v3546
      %3664 = vmatpush.msra.mxu0 %v3545
      %3665 = vmatmul.f32.gmra.mxu0 %v3554
      %v3666 = vpop.f32.mrf.mxu0
      %v3667 = vadd.f32 0.0, %v3666
      %3668 = vmatmul.f32.gmra.mxu0 %v3557
      %v3669 = vpop.f32.mrf.mxu0
      %v3670 = vadd.f32 0.0, %v3669
      %3671 = vmatmul.f32.gmra.mxu0 %v3560
      %v3672 = vpop.f32.mrf.mxu0
      %v3673 = vadd.f32 0.0, %v3672
      %3674 = vmatmul.f32.gmra.mxu0 %v3563
      %v3675 = vpop.f32.mrf.mxu0
      %v3676 = vadd.f32 0.0, %v3675
      %3677 = vmatmul.f32.gmra.mxu0 %v3566
      %v3678 = vpop.f32.mrf.mxu0
      %v3679 = vadd.f32 0.0, %v3678
      %3680 = vmatmul.f32.gmra.mxu0 %v3569
      %v3681 = vpop.f32.mrf.mxu0
      %v3682 = vadd.f32 0.0, %v3681
      %3683 = vmatmul.f32.gmra.mxu0 %v3572
      %v3684 = vpop.f32.mrf.mxu0
      %v3685 = vadd.f32 0.0, %v3684
      %3686 = vmatmul.f32.gmra.mxu0 %v3575
      %v3687 = vpop.f32.mrf.mxu0
      %v3688 = vadd.f32 0.0, %v3687
      %3689 = vmatmul.f32.gmra.mxu0 %v3578
      %v3690 = vpop.f32.mrf.mxu0
      %v3691 = vadd.f32 0.0, %v3690
      %3692 = vmatmul.f32.gmra.mxu0 %v3581
      %v3693 = vpop.f32.mrf.mxu0
      %v3694 = vadd.f32 0.0, %v3693
      %3695 = vmatmul.f32.gmra.mxu0 %v3584
      %v3696 = vpop.f32.mrf.mxu0
      %v3697 = vadd.f32 0.0, %v3696
      %3698 = vmatmul.f32.gmra.mxu0 %v3587
      %v3699 = vpop.f32.mrf.mxu0
      %v3700 = vadd.f32 0.0, %v3699
      %3701 = vmatmul.f32.gmra.mxu0 %v3590
      %v3702 = vpop.f32.mrf.mxu0
      %v3703 = vadd.f32 0.0, %v3702
      %3704 = vmatmul.f32.gmra.mxu0 %v3593
      %v3705 = vpop.f32.mrf.mxu0
      %v3706 = vadd.f32 0.0, %v3705
      %3707 = vmatmul.f32.gmra.mxu0 %v3596
      %v3708 = vpop.f32.mrf.mxu0
      %v3709 = vadd.f32 0.0, %v3708
      %3710 = vmatmul.f32.gmra.mxu0 %v3599
      %v3711 = vpop.f32.mrf.mxu0
      %v3712 = vadd.f32 0.0, %v3711
      %3713 = vmatmul.f32.gmra.mxu0 %v3602
      %v3714 = vpop.f32.mrf.mxu0
      %v3715 = vadd.f32 0.0, %v3714
      %3716 = vmatmul.f32.gmra.mxu0 %v3605
      %v3717 = vpop.f32.mrf.mxu0
      %v3718 = vadd.f32 0.0, %v3717
      %3719 = vmatmul.f32.gmra.mxu0 %v3608
      %v3720 = vpop.f32.mrf.mxu0
      %v3721 = vadd.f32 0.0, %v3720
      %3722 = vmatmul.f32.gmra.mxu0 %v3611
      %v3723 = vpop.f32.mrf.mxu0
      %v3724 = vadd.f32 0.0, %v3723
      %3725 = vmatmul.f32.gmra.mxu0 %v3614
      %v3726 = vpop.f32.mrf.mxu0
      %v3727 = vadd.f32 0.0, %v3726
      %3728 = vmatmul.f32.gmra.mxu0 %v3617
      %v3729 = vpop.f32.mrf.mxu0
      %v3730 = vadd.f32 0.0, %v3729
      %3731 = vmatmul.f32.gmra.mxu0 %v3620
      %v3732 = vpop.f32.mrf.mxu0
      %v3733 = vadd.f32 0.0, %v3732
      %3734 = vmatmul.f32.gmra.mxu0 %v3623
      %v3735 = vpop.f32.mrf.mxu0
      %v3736 = vadd.f32 0.0, %v3735
      %3737 = vmatmul.f32.gmra.mxu0 %v3626
      %v3738 = vpop.f32.mrf.mxu0
      %v3739 = vadd.f32 0.0, %v3738
      %3740 = vmatmul.f32.gmra.mxu0 %v3629
      %v3741 = vpop.f32.mrf.mxu0
      %v3742 = vadd.f32 0.0, %v3741
      %3743 = vmatmul.f32.gmra.mxu0 %v3632
      %v3744 = vpop.f32.mrf.mxu0
      %v3745 = vadd.f32 0.0, %v3744
      %3746 = vmatmul.f32.gmra.mxu0 %v3635
      %v3747 = vpop.f32.mrf.mxu0
      %v3748 = vadd.f32 0.0, %v3747
      %3749 = vmatmul.f32.gmra.mxu0 %v3638
      %v3750 = vpop.f32.mrf.mxu0
      %v3751 = vadd.f32 0.0, %v3750
      %3752 = vmatmul.f32.gmra.mxu0 %v3641
      %v3753 = vpop.f32.mrf.mxu0
      %v3754 = vadd.f32 0.0, %v3753
      %3755 = vmatmul.f32.gmra.mxu0 %v3644
      %v3756 = vpop.f32.mrf.mxu0
      %v3757 = vadd.f32 0.0, %v3756
      %3758 = vmatmul.f32.gmra.mxu0 %v3647
      %v3759 = vpop.f32.mrf.mxu0
      %v3760 = vadd.f32 0.0, %v3759
      %3761 = vdwg.mxu0
      %v3762 = vadd.f32 %v3417, %v3667
      %v3763 = vadd.f32 %v3420, %v3670
      %v3764 = vadd.f32 %v3423, %v3673
      %v3765 = vadd.f32 %v3426, %v3676
      %v3766 = vadd.f32 %v3429, %v3679
      %v3767 = vadd.f32 %v3432, %v3682
      %v3768 = vadd.f32 %v3435, %v3685
      %v3769 = vadd.f32 %v3438, %v3688
      %v3770 = vadd.f32 %v3441, %v3691
      %v3771 = vadd.f32 %v3444, %v3694
      %v3772 = vadd.f32 %v3447, %v3697
      %v3773 = vadd.f32 %v3450, %v3700
      %v3774 = vadd.f32 %v3453, %v3703
      %v3775 = vadd.f32 %v3456, %v3706
      %v3776 = vadd.f32 %v3459, %v3709
      %v3777 = vadd.f32 %v3462, %v3712
      %v3778 = vadd.f32 %v3465, %v3715
      %v3779 = vadd.f32 %v3468, %v3718
      %v3780 = vadd.f32 %v3471, %v3721
      %v3781 = vadd.f32 %v3474, %v3724
      %v3782 = vadd.f32 %v3477, %v3727
      %v3783 = vadd.f32 %v3480, %v3730
      %v3784 = vadd.f32 %v3483, %v3733
      %v3785 = vadd.f32 %v3486, %v3736
      %v3786 = vadd.f32 %v3489, %v3739
      %v3787 = vadd.f32 %v3492, %v3742
      %v3788 = vadd.f32 %v3495, %v3745
      %v3789 = vadd.f32 %v3498, %v3748
      %v3790 = vadd.f32 %v3501, %v3751
      %v3791 = vadd.f32 %v3504, %v3754
      %v3792 = vadd.f32 %v3507, %v3757
      %v3793 = vadd.f32 %v3510, %v3760
      %v3794 = vld [vmem:[%s2980] sm:$0xff]
      %v3795 = vld [vmem:[%s2980 + $0x8] sm:$0xff]
      %v3796 = vld [vmem:[%s2980 + $0x18] sm:$0xff]
      %v3797 = vld [vmem:[%s2980 + $0x20] sm:$0xff]
      %v3798 = vld [vmem:[%s2980 + $0x30] sm:$0xff]
      %v3799 = vld [vmem:[%s2980 + $0x38] sm:$0xff]
      %v3800 = vld [vmem:[%s2980 + $0x48] sm:$0xff]
      %v3801 = vld [vmem:[%s2980 + $0x50] sm:$0xff]
      %v3802 = vld [vmem:[%s2980 + $0x60] sm:$0xff]
      %v3803 = vld [vmem:[%s2980 + $0x68] sm:$0xff]
      %v3804 = vld [vmem:[%s2980 + $0x78] sm:$0xff]
      %v3805 = vld [vmem:[%s2980 + $0x80] sm:$0xff]
      %v3806 = vld [vmem:[%s2980 + $0x90] sm:$0xff]
      %v3807 = vld [vmem:[%s2980 + $0x98] sm:$0xff]
      %v3808 = vld [vmem:[%s2980 + $0xa8] sm:$0xff]
      %v3809 = vld [vmem:[%s2980 + $0xb0] sm:$0xff]
      %v3810 = vld [vmem:[%s2980 + $0xc0] sm:$0xff]
      %v3811 = vld [vmem:[%s2980 + $0xc8] sm:$0xff]
      %v3812 = vld [vmem:[%s2980 + $0xd8] sm:$0xff]
      %v3813 = vld [vmem:[%s2980 + $0xe0] sm:$0xff]
      %v3814 = vld [vmem:[%s2980 + $0xf0] sm:$0xff]
      %v3815 = vld [vmem:[%s2980 + $0xf8] sm:$0xff]
      %v3816 = vld [vmem:[%s2980 + $0x108] sm:$0xff]
      %v3817 = vld [vmem:[%s2980 + $0x110] sm:$0xff]
      %v3818 = vld [vmem:[%s2980 + $0x120] sm:$0xff]
      %v3819 = vld [vmem:[%s2980 + $0x128] sm:$0xff]
      %v3820 = vld [vmem:[%s2980 + $0x138] sm:$0xff]
      %v3821 = vld [vmem:[%s2980 + $0x140] sm:$0xff]
      %v3822 = vld [vmem:[%s2980 + $0x150] sm:$0xff]
      %v3823 = vld [vmem:[%s2980 + $0x158] sm:$0xff]
      %v3824 = vld [vmem:[%s2980 + $0x168] sm:$0xff]
      %v3825 = vld [vmem:[%s2980 + $0x170] sm:$0xff]
      %s3826 = scalar_lea.vmem %s3, 192
      %v3827 = vld [vmem:[%s3826] sm:$0xff]
      %v3828 = vld [vmem:[%s3826 + $0x8] sm:$0xff]
      %v3829 = vld [vmem:[%s3826 + $0x10] sm:$0xff]
      %v3830 = vld [vmem:[%s3826 + $0x18] sm:$0xff]
      %v3831 = vld [vmem:[%s3826 + $0x20] sm:$0xff]
      %v3832 = vld [vmem:[%s3826 + $0x28] sm:$0xff]
      %v3833 = vld [vmem:[%s3826 + $0x30] sm:$0xff]
      %v3834 = vld [vmem:[%s3826 + $0x38] sm:$0xff]
      %v3836 = vsel %vm335, %v3794, 0
      %v3839 = vsel %vm335, %v3795, 0
      %v3842 = vsel %vm335, %v3796, 0
      %v3845 = vsel %vm335, %v3797, 0
      %v3848 = vsel %vm335, %v3798, 0
      %v3851 = vsel %vm335, %v3799, 0
      %v3854 = vsel %vm335, %v3800, 0
      %v3857 = vsel %vm335, %v3801, 0
      %v3860 = vsel %vm335, %v3802, 0
      %v3863 = vsel %vm335, %v3803, 0
      %v3866 = vsel %vm335, %v3804, 0
      %v3869 = vsel %vm335, %v3805, 0
      %v3872 = vsel %vm335, %v3806, 0
      %v3875 = vsel %vm335, %v3807, 0
      %v3878 = vsel %vm335, %v3808, 0
      %v3881 = vsel %vm335, %v3809, 0
      %v3884 = vsel %vm335, %v3810, 0
      %v3887 = vsel %vm335, %v3811, 0
      %v3890 = vsel %vm335, %v3812, 0
      %v3893 = vsel %vm335, %v3813, 0
      %v3896 = vsel %vm335, %v3814, 0
      %v3899 = vsel %vm335, %v3815, 0
      %v3902 = vsel %vm335, %v3816, 0
      %v3905 = vsel %vm335, %v3817, 0
      %v3908 = vsel %vm335, %v3818, 0
      %v3911 = vsel %vm335, %v3819, 0
      %v3914 = vsel %vm335, %v3820, 0
      %v3917 = vsel %vm335, %v3821, 0
      %v3920 = vsel %vm335, %v3822, 0
      %v3923 = vsel %vm335, %v3823, 0
      %v3926 = vsel %vm335, %v3824, 0
      %v3929 = vsel %vm335, %v3825, 0
      %3931 = vmatpush.msra.mxu0 0.0
      %3932 = vmatpush.msra.mxu0 0.0
      %3933 = vmatpush.msra.mxu0 0.0
      %3934 = vmatpush.msra.mxu0 0.0
      %3935 = vmatpush.msra.mxu0 0.0
      %3936 = vmatpush.msra.mxu0 0.0
      %3937 = vmatpush.msra.mxu0 0.0
      %3938 = vmatpush.msra.mxu0 0.0
      %3939 = vmatpush.msra.mxu0 %v3834
      %3940 = vmatpush.msra.mxu0 %v3833
      %3941 = vmatpush.msra.mxu0 %v3832
      %3942 = vmatpush.msra.mxu0 %v3831
      %3943 = vmatpush.msra.mxu0 %v3830
      %3944 = vmatpush.msra.mxu0 %v3829
      %3945 = vmatpush.msra.mxu0 %v3828
      %3946 = vmatpush.msra.mxu0 %v3827
      %3947 = vmatmul.f32.gmra.mxu0 %v3836
      %v3948 = vpop.f32.mrf.mxu0
      %v3949 = vadd.f32 0.0, %v3948
      %3950 = vmatmul.f32.gmra.mxu0 %v3839
      %v3951 = vpop.f32.mrf.mxu0
      %v3952 = vadd.f32 0.0, %v3951
      %3953 = vmatmul.f32.gmra.mxu0 %v3842
      %v3954 = vpop.f32.mrf.mxu0
      %v3955 = vadd.f32 0.0, %v3954
      %3956 = vmatmul.f32.gmra.mxu0 %v3845
      %v3957 = vpop.f32.mrf.mxu0
      %v3958 = vadd.f32 0.0, %v3957
      %3959 = vmatmul.f32.gmra.mxu0 %v3848
      %v3960 = vpop.f32.mrf.mxu0
      %v3961 = vadd.f32 0.0, %v3960
      %3962 = vmatmul.f32.gmra.mxu0 %v3851
      %v3963 = vpop.f32.mrf.mxu0
      %v3964 = vadd.f32 0.0, %v3963
      %3965 = vmatmul.f32.gmra.mxu0 %v3854
      %v3966 = vpop.f32.mrf.mxu0
      %v3967 = vadd.f32 0.0, %v3966
      %3968 = vmatmul.f32.gmra.mxu0 %v3857
      %v3969 = vpop.f32.mrf.mxu0
      %v3970 = vadd.f32 0.0, %v3969
      %3971 = vmatmul.f32.gmra.mxu0 %v3860
      %v3972 = vpop.f32.mrf.mxu0
      %v3973 = vadd.f32 0.0, %v3972
      %3974 = vmatmul.f32.gmra.mxu0 %v3863
      %v3975 = vpop.f32.mrf.mxu0
      %v3976 = vadd.f32 0.0, %v3975
      %3977 = vmatmul.f32.gmra.mxu0 %v3866
      %v3978 = vpop.f32.mrf.mxu0
      %v3979 = vadd.f32 0.0, %v3978
      %3980 = vmatmul.f32.gmra.mxu0 %v3869
      %v3981 = vpop.f32.mrf.mxu0
      %v3982 = vadd.f32 0.0, %v3981
      %3983 = vmatmul.f32.gmra.mxu0 %v3872
      %v3984 = vpop.f32.mrf.mxu0
      %v3985 = vadd.f32 0.0, %v3984
      %3986 = vmatmul.f32.gmra.mxu0 %v3875
      %v3987 = vpop.f32.mrf.mxu0
      %v3988 = vadd.f32 0.0, %v3987
      %3989 = vmatmul.f32.gmra.mxu0 %v3878
      %v3990 = vpop.f32.mrf.mxu0
      %v3991 = vadd.f32 0.0, %v3990
      %3992 = vmatmul.f32.gmra.mxu0 %v3881
      %v3993 = vpop.f32.mrf.mxu0
      %v3994 = vadd.f32 0.0, %v3993
      %3995 = vmatmul.f32.gmra.mxu0 %v3884
      %v3996 = vpop.f32.mrf.mxu0
      %v3997 = vadd.f32 0.0, %v3996
      %3998 = vmatmul.f32.gmra.mxu0 %v3887
      %v3999 = vpop.f32.mrf.mxu0
      %v4000 = vadd.f32 0.0, %v3999
      %4001 = vmatmul.f32.gmra.mxu0 %v3890
      %v4002 = vpop.f32.mrf.mxu0
      %v4003 = vadd.f32 0.0, %v4002
      %4004 = vmatmul.f32.gmra.mxu0 %v3893
      %v4005 = vpop.f32.mrf.mxu0
      %v4006 = vadd.f32 0.0, %v4005
      %4007 = vmatmul.f32.gmra.mxu0 %v3896
      %v4008 = vpop.f32.mrf.mxu0
      %v4009 = vadd.f32 0.0, %v4008
      %4010 = vmatmul.f32.gmra.mxu0 %v3899
      %v4011 = vpop.f32.mrf.mxu0
      %v4012 = vadd.f32 0.0, %v4011
      %4013 = vmatmul.f32.gmra.mxu0 %v3902
      %v4014 = vpop.f32.mrf.mxu0
      %v4015 = vadd.f32 0.0, %v4014
      %4016 = vmatmul.f32.gmra.mxu0 %v3905
      %v4017 = vpop.f32.mrf.mxu0
      %v4018 = vadd.f32 0.0, %v4017
      %4019 = vmatmul.f32.gmra.mxu0 %v3908
      %v4020 = vpop.f32.mrf.mxu0
      %v4021 = vadd.f32 0.0, %v4020
      %4022 = vmatmul.f32.gmra.mxu0 %v3911
      %v4023 = vpop.f32.mrf.mxu0
      %v4024 = vadd.f32 0.0, %v4023
      %4025 = vmatmul.f32.gmra.mxu0 %v3914
      %v4026 = vpop.f32.mrf.mxu0
      %v4027 = vadd.f32 0.0, %v4026
      %4028 = vmatmul.f32.gmra.mxu0 %v3917
      %v4029 = vpop.f32.mrf.mxu0
      %v4030 = vadd.f32 0.0, %v4029
      %4031 = vmatmul.f32.gmra.mxu0 %v3920
      %v4032 = vpop.f32.mrf.mxu0
      %v4033 = vadd.f32 0.0, %v4032
      %4034 = vmatmul.f32.gmra.mxu0 %v3923
      %v4035 = vpop.f32.mrf.mxu0
      %v4036 = vadd.f32 0.0, %v4035
      %4037 = vmatmul.f32.gmra.mxu0 %v3926
      %v4038 = vpop.f32.mrf.mxu0
      %v4039 = vadd.f32 0.0, %v4038
      %4040 = vmatmul.f32.gmra.mxu0 %v3929
      %v4041 = vpop.f32.mrf.mxu0
      %v4042 = vadd.f32 0.0, %v4041
      %4043 = vdwg.mxu0
      %v4044 = vadd.f32 %v3762, %v3949
      %v4045 = vadd.f32 %v3763, %v3952
      %v4046 = vadd.f32 %v3764, %v3955
      %v4047 = vadd.f32 %v3765, %v3958
      %v4048 = vadd.f32 %v3766, %v3961
      %v4049 = vadd.f32 %v3767, %v3964
      %v4050 = vadd.f32 %v3768, %v3967
      %v4051 = vadd.f32 %v3769, %v3970
      %v4052 = vadd.f32 %v3770, %v3973
      %v4053 = vadd.f32 %v3771, %v3976
      %v4054 = vadd.f32 %v3772, %v3979
      %v4055 = vadd.f32 %v3773, %v3982
      %v4056 = vadd.f32 %v3774, %v3985
      %v4057 = vadd.f32 %v3775, %v3988
      %v4058 = vadd.f32 %v3776, %v3991
      %v4059 = vadd.f32 %v3777, %v3994
      %v4060 = vadd.f32 %v3778, %v3997
      %v4061 = vadd.f32 %v3779, %v4000
      %v4062 = vadd.f32 %v3780, %v4003
      %v4063 = vadd.f32 %v3781, %v4006
      %v4064 = vadd.f32 %v3782, %v4009
      %v4065 = vadd.f32 %v3783, %v4012
      %v4066 = vadd.f32 %v3784, %v4015
      %v4067 = vadd.f32 %v3785, %v4018
      %v4068 = vadd.f32 %v3786, %v4021
      %v4069 = vadd.f32 %v3787, %v4024
      %v4070 = vadd.f32 %v3788, %v4027
      %v4071 = vadd.f32 %v3789, %v4030
      %v4072 = vadd.f32 %v3790, %v4033
      %v4073 = vadd.f32 %v3791, %v4036
      %v4074 = vadd.f32 %v3792, %v4039
      %v4075 = vadd.f32 %v3793, %v4042
      %v4076 = vld [vmem:[%s2980 + $0x1] sm:$0xff]
      %v4077 = vld [vmem:[%s2980 + $0x9] sm:$0xff]
      %v4078 = vld [vmem:[%s2980 + $0x19] sm:$0xff]
      %v4079 = vld [vmem:[%s2980 + $0x21] sm:$0xff]
      %v4080 = vld [vmem:[%s2980 + $0x31] sm:$0xff]
      %v4081 = vld [vmem:[%s2980 + $0x39] sm:$0xff]
      %v4082 = vld [vmem:[%s2980 + $0x49] sm:$0xff]
      %v4083 = vld [vmem:[%s2980 + $0x51] sm:$0xff]
      %v4084 = vld [vmem:[%s2980 + $0x61] sm:$0xff]
      %v4085 = vld [vmem:[%s2980 + $0x69] sm:$0xff]
      %v4086 = vld [vmem:[%s2980 + $0x79] sm:$0xff]
      %v4087 = vld [vmem:[%s2980 + $0x81] sm:$0xff]
      %v4088 = vld [vmem:[%s2980 + $0x91] sm:$0xff]
      %v4089 = vld [vmem:[%s2980 + $0x99] sm:$0xff]
      %v4090 = vld [vmem:[%s2980 + $0xa9] sm:$0xff]
      %v4091 = vld [vmem:[%s2980 + $0xb1] sm:$0xff]
      %v4092 = vld [vmem:[%s2980 + $0xc1] sm:$0xff]
      %v4093 = vld [vmem:[%s2980 + $0xc9] sm:$0xff]
      %v4094 = vld [vmem:[%s2980 + $0xd9] sm:$0xff]
      %v4095 = vld [vmem:[%s2980 + $0xe1] sm:$0xff]
      %v4096 = vld [vmem:[%s2980 + $0xf1] sm:$0xff]
      %v4097 = vld [vmem:[%s2980 + $0xf9] sm:$0xff]
      %v4098 = vld [vmem:[%s2980 + $0x109] sm:$0xff]
      %v4099 = vld [vmem:[%s2980 + $0x111] sm:$0xff]
      %v4100 = vld [vmem:[%s2980 + $0x121] sm:$0xff]
      %v4101 = vld [vmem:[%s2980 + $0x129] sm:$0xff]
      %v4102 = vld [vmem:[%s2980 + $0x139] sm:$0xff]
      %v4103 = vld [vmem:[%s2980 + $0x141] sm:$0xff]
      %v4104 = vld [vmem:[%s2980 + $0x151] sm:$0xff]
      %v4105 = vld [vmem:[%s2980 + $0x159] sm:$0xff]
      %v4106 = vld [vmem:[%s2980 + $0x169] sm:$0xff]
      %v4107 = vld [vmem:[%s2980 + $0x171] sm:$0xff]
      %s4108 = scalar_lea.vmem %s3, 256
      %v4109 = vld [vmem:[%s4108] sm:$0xff]
      %v4110 = vld [vmem:[%s4108 + $0x8] sm:$0xff]
      %v4111 = vld [vmem:[%s4108 + $0x10] sm:$0xff]
      %v4112 = vld [vmem:[%s4108 + $0x18] sm:$0xff]
      %v4113 = vld [vmem:[%s4108 + $0x20] sm:$0xff]
      %v4114 = vld [vmem:[%s4108 + $0x28] sm:$0xff]
      %v4115 = vld [vmem:[%s4108 + $0x30] sm:$0xff]
      %v4116 = vld [vmem:[%s4108 + $0x38] sm:$0xff]
      %v4118 = vsel %vm335, %v4076, 0
      %v4121 = vsel %vm335, %v4077, 0
      %v4124 = vsel %vm335, %v4078, 0
      %v4127 = vsel %vm335, %v4079, 0
      %v4130 = vsel %vm335, %v4080, 0
      %v4133 = vsel %vm335, %v4081, 0
      %v4136 = vsel %vm335, %v4082, 0
      %v4139 = vsel %vm335, %v4083, 0
      %v4142 = vsel %vm335, %v4084, 0
      %v4145 = vsel %vm335, %v4085, 0
      %v4148 = vsel %vm335, %v4086, 0
      %v4151 = vsel %vm335, %v4087, 0
      %v4154 = vsel %vm335, %v4088, 0
      %v4157 = vsel %vm335, %v4089, 0
      %v4160 = vsel %vm335, %v4090, 0
      %v4163 = vsel %vm335, %v4091, 0
      %v4166 = vsel %vm335, %v4092, 0
      %v4169 = vsel %vm335, %v4093, 0
      %v4172 = vsel %vm335, %v4094, 0
      %v4175 = vsel %vm335, %v4095, 0
      %v4178 = vsel %vm335, %v4096, 0
      %v4181 = vsel %vm335, %v4097, 0
      %v4184 = vsel %vm335, %v4098, 0
      %v4187 = vsel %vm335, %v4099, 0
      %v4190 = vsel %vm335, %v4100, 0
      %v4193 = vsel %vm335, %v4101, 0
      %v4196 = vsel %vm335, %v4102, 0
      %v4199 = vsel %vm335, %v4103, 0
      %v4202 = vsel %vm335, %v4104, 0
      %v4205 = vsel %vm335, %v4105, 0
      %v4208 = vsel %vm335, %v4106, 0
      %v4211 = vsel %vm335, %v4107, 0
      %4213 = vmatpush.msra.mxu0 0.0
      %4214 = vmatpush.msra.mxu0 0.0
      %4215 = vmatpush.msra.mxu0 0.0
      %4216 = vmatpush.msra.mxu0 0.0
      %4217 = vmatpush.msra.mxu0 0.0
      %4218 = vmatpush.msra.mxu0 0.0
      %4219 = vmatpush.msra.mxu0 0.0
      %4220 = vmatpush.msra.mxu0 0.0
      %4221 = vmatpush.msra.mxu0 %v4116
      %4222 = vmatpush.msra.mxu0 %v4115
      %4223 = vmatpush.msra.mxu0 %v4114
      %4224 = vmatpush.msra.mxu0 %v4113
      %4225 = vmatpush.msra.mxu0 %v4112
      %4226 = vmatpush.msra.mxu0 %v4111
      %4227 = vmatpush.msra.mxu0 %v4110
      %4228 = vmatpush.msra.mxu0 %v4109
      %4229 = vmatmul.f32.gmra.mxu0 %v4118
      %v4230 = vpop.f32.mrf.mxu0
      %v4231 = vadd.f32 0.0, %v4230
      %4232 = vmatmul.f32.gmra.mxu0 %v4121
      %v4233 = vpop.f32.mrf.mxu0
      %v4234 = vadd.f32 0.0, %v4233
      %4235 = vmatmul.f32.gmra.mxu0 %v4124
      %v4236 = vpop.f32.mrf.mxu0
      %v4237 = vadd.f32 0.0, %v4236
      %4238 = vmatmul.f32.gmra.mxu0 %v4127
      %v4239 = vpop.f32.mrf.mxu0
      %v4240 = vadd.f32 0.0, %v4239
      %4241 = vmatmul.f32.gmra.mxu0 %v4130
      %v4242 = vpop.f32.mrf.mxu0
      %v4243 = vadd.f32 0.0, %v4242
      %4244 = vmatmul.f32.gmra.mxu0 %v4133
      %v4245 = vpop.f32.mrf.mxu0
      %v4246 = vadd.f32 0.0, %v4245
      %4247 = vmatmul.f32.gmra.mxu0 %v4136
      %v4248 = vpop.f32.mrf.mxu0
      %v4249 = vadd.f32 0.0, %v4248
      %4250 = vmatmul.f32.gmra.mxu0 %v4139
      %v4251 = vpop.f32.mrf.mxu0
      %v4252 = vadd.f32 0.0, %v4251
      %4253 = vmatmul.f32.gmra.mxu0 %v4142
      %v4254 = vpop.f32.mrf.mxu0
      %v4255 = vadd.f32 0.0, %v4254
      %4256 = vmatmul.f32.gmra.mxu0 %v4145
      %v4257 = vpop.f32.mrf.mxu0
      %v4258 = vadd.f32 0.0, %v4257
      %4259 = vmatmul.f32.gmra.mxu0 %v4148
      %v4260 = vpop.f32.mrf.mxu0
      %v4261 = vadd.f32 0.0, %v4260
      %4262 = vmatmul.f32.gmra.mxu0 %v4151
      %v4263 = vpop.f32.mrf.mxu0
      %v4264 = vadd.f32 0.0, %v4263
      %4265 = vmatmul.f32.gmra.mxu0 %v4154
      %v4266 = vpop.f32.mrf.mxu0
      %v4267 = vadd.f32 0.0, %v4266
      %4268 = vmatmul.f32.gmra.mxu0 %v4157
      %v4269 = vpop.f32.mrf.mxu0
      %v4270 = vadd.f32 0.0, %v4269
      %4271 = vmatmul.f32.gmra.mxu0 %v4160
      %v4272 = vpop.f32.mrf.mxu0
      %v4273 = vadd.f32 0.0, %v4272
      %4274 = vmatmul.f32.gmra.mxu0 %v4163
      %v4275 = vpop.f32.mrf.mxu0
      %v4276 = vadd.f32 0.0, %v4275
      %4277 = vmatmul.f32.gmra.mxu0 %v4166
      %v4278 = vpop.f32.mrf.mxu0
      %v4279 = vadd.f32 0.0, %v4278
      %4280 = vmatmul.f32.gmra.mxu0 %v4169
      %v4281 = vpop.f32.mrf.mxu0
      %v4282 = vadd.f32 0.0, %v4281
      %4283 = vmatmul.f32.gmra.mxu0 %v4172
      %v4284 = vpop.f32.mrf.mxu0
      %v4285 = vadd.f32 0.0, %v4284
      %4286 = vmatmul.f32.gmra.mxu0 %v4175
      %v4287 = vpop.f32.mrf.mxu0
      %v4288 = vadd.f32 0.0, %v4287
      %4289 = vmatmul.f32.gmra.mxu0 %v4178
      %v4290 = vpop.f32.mrf.mxu0
      %v4291 = vadd.f32 0.0, %v4290
      %4292 = vmatmul.f32.gmra.mxu0 %v4181
      %v4293 = vpop.f32.mrf.mxu0
      %v4294 = vadd.f32 0.0, %v4293
      %4295 = vmatmul.f32.gmra.mxu0 %v4184
      %v4296 = vpop.f32.mrf.mxu0
      %v4297 = vadd.f32 0.0, %v4296
      %4298 = vmatmul.f32.gmra.mxu0 %v4187
      %v4299 = vpop.f32.mrf.mxu0
      %v4300 = vadd.f32 0.0, %v4299
      %4301 = vmatmul.f32.gmra.mxu0 %v4190
      %v4302 = vpop.f32.mrf.mxu0
      %v4303 = vadd.f32 0.0, %v4302
      %4304 = vmatmul.f32.gmra.mxu0 %v4193
      %v4305 = vpop.f32.mrf.mxu0
      %v4306 = vadd.f32 0.0, %v4305
      %4307 = vmatmul.f32.gmra.mxu0 %v4196
      %v4308 = vpop.f32.mrf.mxu0
      %v4309 = vadd.f32 0.0, %v4308
      %4310 = vmatmul.f32.gmra.mxu0 %v4199
      %v4311 = vpop.f32.mrf.mxu0
      %v4312 = vadd.f32 0.0, %v4311
      %4313 = vmatmul.f32.gmra.mxu0 %v4202
      %v4314 = vpop.f32.mrf.mxu0
      %v4315 = vadd.f32 0.0, %v4314
      %4316 = vmatmul.f32.gmra.mxu0 %v4205
      %v4317 = vpop.f32.mrf.mxu0
      %v4318 = vadd.f32 0.0, %v4317
      %4319 = vmatmul.f32.gmra.mxu0 %v4208
      %v4320 = vpop.f32.mrf.mxu0
      %v4321 = vadd.f32 0.0, %v4320
      %4322 = vmatmul.f32.gmra.mxu0 %v4211
      %v4323 = vpop.f32.mrf.mxu0
      %v4324 = vadd.f32 0.0, %v4323
      %4325 = vdwg.mxu0
      %v4326 = vadd.f32 %v4044, %v4231
      %v4327 = vadd.f32 %v4045, %v4234
      %v4328 = vadd.f32 %v4046, %v4237
      %v4329 = vadd.f32 %v4047, %v4240
      %v4330 = vadd.f32 %v4048, %v4243
      %v4331 = vadd.f32 %v4049, %v4246
      %v4332 = vadd.f32 %v4050, %v4249
      %v4333 = vadd.f32 %v4051, %v4252
      %v4334 = vadd.f32 %v4052, %v4255
      %v4335 = vadd.f32 %v4053, %v4258
      %v4336 = vadd.f32 %v4054, %v4261
      %v4337 = vadd.f32 %v4055, %v4264
      %v4338 = vadd.f32 %v4056, %v4267
      %v4339 = vadd.f32 %v4057, %v4270
      %v4340 = vadd.f32 %v4058, %v4273
      %v4341 = vadd.f32 %v4059, %v4276
      %v4342 = vadd.f32 %v4060, %v4279
      %v4343 = vadd.f32 %v4061, %v4282
      %v4344 = vadd.f32 %v4062, %v4285
      %v4345 = vadd.f32 %v4063, %v4288
      %v4346 = vadd.f32 %v4064, %v4291
      %v4347 = vadd.f32 %v4065, %v4294
      %v4348 = vadd.f32 %v4066, %v4297
      %v4349 = vadd.f32 %v4067, %v4300
      %v4350 = vadd.f32 %v4068, %v4303
      %v4351 = vadd.f32 %v4069, %v4306
      %v4352 = vadd.f32 %v4070, %v4309
      %v4353 = vadd.f32 %v4071, %v4312
      %v4354 = vadd.f32 %v4072, %v4315
      %v4355 = vadd.f32 %v4073, %v4318
      %v4356 = vadd.f32 %v4074, %v4321
      %v4357 = vadd.f32 %v4075, %v4324
      %v4358 = vld [vmem:[%s2980 + $0x2] sm:$0xff]
      %v4359 = vld [vmem:[%s2980 + $0xa] sm:$0xff]
      %v4360 = vld [vmem:[%s2980 + $0x1a] sm:$0xff]
      %v4361 = vld [vmem:[%s2980 + $0x22] sm:$0xff]
      %v4362 = vld [vmem:[%s2980 + $0x32] sm:$0xff]
      %v4363 = vld [vmem:[%s2980 + $0x3a] sm:$0xff]
      %v4364 = vld [vmem:[%s2980 + $0x4a] sm:$0xff]
      %v4365 = vld [vmem:[%s2980 + $0x52] sm:$0xff]
      %v4366 = vld [vmem:[%s2980 + $0x62] sm:$0xff]
      %v4367 = vld [vmem:[%s2980 + $0x6a] sm:$0xff]
      %v4368 = vld [vmem:[%s2980 + $0x7a] sm:$0xff]
      %v4369 = vld [vmem:[%s2980 + $0x82] sm:$0xff]
      %v4370 = vld [vmem:[%s2980 + $0x92] sm:$0xff]
      %v4371 = vld [vmem:[%s2980 + $0x9a] sm:$0xff]
      %v4372 = vld [vmem:[%s2980 + $0xaa] sm:$0xff]
      %v4373 = vld [vmem:[%s2980 + $0xb2] sm:$0xff]
      %v4374 = vld [vmem:[%s2980 + $0xc2] sm:$0xff]
      %v4375 = vld [vmem:[%s2980 + $0xca] sm:$0xff]
      %v4376 = vld [vmem:[%s2980 + $0xda] sm:$0xff]
      %v4377 = vld [vmem:[%s2980 + $0xe2] sm:$0xff]
      %v4378 = vld [vmem:[%s2980 + $0xf2] sm:$0xff]
      %v4379 = vld [vmem:[%s2980 + $0xfa] sm:$0xff]
      %v4380 = vld [vmem:[%s2980 + $0x10a] sm:$0xff]
      %v4381 = vld [vmem:[%s2980 + $0x112] sm:$0xff]
      %v4382 = vld [vmem:[%s2980 + $0x122] sm:$0xff]
      %v4383 = vld [vmem:[%s2980 + $0x12a] sm:$0xff]
      %v4384 = vld [vmem:[%s2980 + $0x13a] sm:$0xff]
      %v4385 = vld [vmem:[%s2980 + $0x142] sm:$0xff]
      %v4386 = vld [vmem:[%s2980 + $0x152] sm:$0xff]
      %v4387 = vld [vmem:[%s2980 + $0x15a] sm:$0xff]
      %v4388 = vld [vmem:[%s2980 + $0x16a] sm:$0xff]
      %v4389 = vld [vmem:[%s2980 + $0x172] sm:$0xff]
      %s4390 = scalar_lea.vmem %s3, 320
      %v4391 = vld [vmem:[%s4390] sm:$0xff]
      %v4392 = vld [vmem:[%s4390 + $0x8] sm:$0xff]
      %v4393 = vld [vmem:[%s4390 + $0x10] sm:$0xff]
      %v4394 = vld [vmem:[%s4390 + $0x18] sm:$0xff]
      %v4395 = vld [vmem:[%s4390 + $0x20] sm:$0xff]
      %v4396 = vld [vmem:[%s4390 + $0x28] sm:$0xff]
      %v4397 = vld [vmem:[%s4390 + $0x30] sm:$0xff]
      %v4398 = vld [vmem:[%s4390 + $0x38] sm:$0xff]
      %v4400 = vsel %vm335, %v4358, 0
      %v4403 = vsel %vm335, %v4359, 0
      %v4406 = vsel %vm335, %v4360, 0
      %v4409 = vsel %vm335, %v4361, 0
      %v4412 = vsel %vm335, %v4362, 0
      %v4415 = vsel %vm335, %v4363, 0
      %v4418 = vsel %vm335, %v4364, 0
      %v4421 = vsel %vm335, %v4365, 0
      %v4424 = vsel %vm335, %v4366, 0
      %v4427 = vsel %vm335, %v4367, 0
      %v4430 = vsel %vm335, %v4368, 0
      %v4433 = vsel %vm335, %v4369, 0
      %v4436 = vsel %vm335, %v4370, 0
      %v4439 = vsel %vm335, %v4371, 0
      %v4442 = vsel %vm335, %v4372, 0
      %v4445 = vsel %vm335, %v4373, 0
      %v4448 = vsel %vm335, %v4374, 0
      %v4451 = vsel %vm335, %v4375, 0
      %v4454 = vsel %vm335, %v4376, 0
      %v4457 = vsel %vm335, %v4377, 0
      %v4460 = vsel %vm335, %v4378, 0
      %v4463 = vsel %vm335, %v4379, 0
      %v4466 = vsel %vm335, %v4380, 0
      %v4469 = vsel %vm335, %v4381, 0
      %v4472 = vsel %vm335, %v4382, 0
      %v4475 = vsel %vm335, %v4383, 0
      %v4478 = vsel %vm335, %v4384, 0
      %v4481 = vsel %vm335, %v4385, 0
      %v4484 = vsel %vm335, %v4386, 0
      %v4487 = vsel %vm335, %v4387, 0
      %v4490 = vsel %vm335, %v4388, 0
      %v4493 = vsel %vm335, %v4389, 0
      %4495 = vmatpush.msra.mxu0 0.0
      %4496 = vmatpush.msra.mxu0 0.0
      %4497 = vmatpush.msra.mxu0 0.0
      %4498 = vmatpush.msra.mxu0 0.0
      %4499 = vmatpush.msra.mxu0 0.0
      %4500 = vmatpush.msra.mxu0 0.0
      %4501 = vmatpush.msra.mxu0 0.0
      %4502 = vmatpush.msra.mxu0 0.0
      %4503 = vmatpush.msra.mxu0 %v4398
      %4504 = vmatpush.msra.mxu0 %v4397
      %4505 = vmatpush.msra.mxu0 %v4396
      %4506 = vmatpush.msra.mxu0 %v4395
      %4507 = vmatpush.msra.mxu0 %v4394
      %4508 = vmatpush.msra.mxu0 %v4393
      %4509 = vmatpush.msra.mxu0 %v4392
      %4510 = vmatpush.msra.mxu0 %v4391
      %4511 = vmatmul.f32.gmra.mxu0 %v4400
      %v4512 = vpop.f32.mrf.mxu0
      %v4513 = vadd.f32 0.0, %v4512
      %4514 = vmatmul.f32.gmra.mxu0 %v4403
      %v4515 = vpop.f32.mrf.mxu0
      %v4516 = vadd.f32 0.0, %v4515
      %4517 = vmatmul.f32.gmra.mxu0 %v4406
      %v4518 = vpop.f32.mrf.mxu0
      %v4519 = vadd.f32 0.0, %v4518
      %4520 = vmatmul.f32.gmra.mxu0 %v4409
      %v4521 = vpop.f32.mrf.mxu0
      %v4522 = vadd.f32 0.0, %v4521
      %4523 = vmatmul.f32.gmra.mxu0 %v4412
      %v4524 = vpop.f32.mrf.mxu0
      %v4525 = vadd.f32 0.0, %v4524
      %4526 = vmatmul.f32.gmra.mxu0 %v4415
      %v4527 = vpop.f32.mrf.mxu0
      %v4528 = vadd.f32 0.0, %v4527
      %4529 = vmatmul.f32.gmra.mxu0 %v4418
      %v4530 = vpop.f32.mrf.mxu0
      %v4531 = vadd.f32 0.0, %v4530
      %4532 = vmatmul.f32.gmra.mxu0 %v4421
      %v4533 = vpop.f32.mrf.mxu0
      %v4534 = vadd.f32 0.0, %v4533
      %4535 = vmatmul.f32.gmra.mxu0 %v4424
      %v4536 = vpop.f32.mrf.mxu0
      %v4537 = vadd.f32 0.0, %v4536
      %4538 = vmatmul.f32.gmra.mxu0 %v4427
      %v4539 = vpop.f32.mrf.mxu0
      %v4540 = vadd.f32 0.0, %v4539
      %4541 = vmatmul.f32.gmra.mxu0 %v4430
      %v4542 = vpop.f32.mrf.mxu0
      %v4543 = vadd.f32 0.0, %v4542
      %4544 = vmatmul.f32.gmra.mxu0 %v4433
      %v4545 = vpop.f32.mrf.mxu0
      %v4546 = vadd.f32 0.0, %v4545
      %4547 = vmatmul.f32.gmra.mxu0 %v4436
      %v4548 = vpop.f32.mrf.mxu0
      %v4549 = vadd.f32 0.0, %v4548
      %4550 = vmatmul.f32.gmra.mxu0 %v4439
      %v4551 = vpop.f32.mrf.mxu0
      %v4552 = vadd.f32 0.0, %v4551
      %4553 = vmatmul.f32.gmra.mxu0 %v4442
      %v4554 = vpop.f32.mrf.mxu0
      %v4555 = vadd.f32 0.0, %v4554
      %4556 = vmatmul.f32.gmra.mxu0 %v4445
      %v4557 = vpop.f32.mrf.mxu0
      %v4558 = vadd.f32 0.0, %v4557
      %4559 = vmatmul.f32.gmra.mxu0 %v4448
      %v4560 = vpop.f32.mrf.mxu0
      %v4561 = vadd.f32 0.0, %v4560
      %4562 = vmatmul.f32.gmra.mxu0 %v4451
      %v4563 = vpop.f32.mrf.mxu0
      %v4564 = vadd.f32 0.0, %v4563
      %4565 = vmatmul.f32.gmra.mxu0 %v4454
      %v4566 = vpop.f32.mrf.mxu0
      %v4567 = vadd.f32 0.0, %v4566
      %4568 = vmatmul.f32.gmra.mxu0 %v4457
      %v4569 = vpop.f32.mrf.mxu0
      %v4570 = vadd.f32 0.0, %v4569
      %4571 = vmatmul.f32.gmra.mxu0 %v4460
      %v4572 = vpop.f32.mrf.mxu0
      %v4573 = vadd.f32 0.0, %v4572
      %4574 = vmatmul.f32.gmra.mxu0 %v4463
      %v4575 = vpop.f32.mrf.mxu0
      %v4576 = vadd.f32 0.0, %v4575
      %4577 = vmatmul.f32.gmra.mxu0 %v4466
      %v4578 = vpop.f32.mrf.mxu0
      %v4579 = vadd.f32 0.0, %v4578
      %4580 = vmatmul.f32.gmra.mxu0 %v4469
      %v4581 = vpop.f32.mrf.mxu0
      %v4582 = vadd.f32 0.0, %v4581
      %4583 = vmatmul.f32.gmra.mxu0 %v4472
      %v4584 = vpop.f32.mrf.mxu0
      %v4585 = vadd.f32 0.0, %v4584
      %4586 = vmatmul.f32.gmra.mxu0 %v4475
      %v4587 = vpop.f32.mrf.mxu0
      %v4588 = vadd.f32 0.0, %v4587
      %4589 = vmatmul.f32.gmra.mxu0 %v4478
      %v4590 = vpop.f32.mrf.mxu0
      %v4591 = vadd.f32 0.0, %v4590
      %4592 = vmatmul.f32.gmra.mxu0 %v4481
      %v4593 = vpop.f32.mrf.mxu0
      %v4594 = vadd.f32 0.0, %v4593
      %4595 = vmatmul.f32.gmra.mxu0 %v4484
      %v4596 = vpop.f32.mrf.mxu0
      %v4597 = vadd.f32 0.0, %v4596
      %4598 = vmatmul.f32.gmra.mxu0 %v4487
      %v4599 = vpop.f32.mrf.mxu0
      %v4600 = vadd.f32 0.0, %v4599
      %4601 = vmatmul.f32.gmra.mxu0 %v4490
      %v4602 = vpop.f32.mrf.mxu0
      %v4603 = vadd.f32 0.0, %v4602
      %4604 = vmatmul.f32.gmra.mxu0 %v4493
      %v4605 = vpop.f32.mrf.mxu0
      %v4606 = vadd.f32 0.0, %v4605
      %4607 = vdwg.mxu0
      %v4608 = vadd.f32 %v4326, %v4513
      %v4609 = vadd.f32 %v4327, %v4516
      %v4610 = vadd.f32 %v4328, %v4519
      %v4611 = vadd.f32 %v4329, %v4522
      %v4612 = vadd.f32 %v4330, %v4525
      %v4613 = vadd.f32 %v4331, %v4528
      %v4614 = vadd.f32 %v4332, %v4531
      %v4615 = vadd.f32 %v4333, %v4534
      %v4616 = vadd.f32 %v4334, %v4537
      %v4617 = vadd.f32 %v4335, %v4540
      %v4618 = vadd.f32 %v4336, %v4543
      %v4619 = vadd.f32 %v4337, %v4546
      %v4620 = vadd.f32 %v4338, %v4549
      %v4621 = vadd.f32 %v4339, %v4552
      %v4622 = vadd.f32 %v4340, %v4555
      %v4623 = vadd.f32 %v4341, %v4558
      %v4624 = vadd.f32 %v4342, %v4561
      %v4625 = vadd.f32 %v4343, %v4564
      %v4626 = vadd.f32 %v4344, %v4567
      %v4627 = vadd.f32 %v4345, %v4570
      %v4628 = vadd.f32 %v4346, %v4573
      %v4629 = vadd.f32 %v4347, %v4576
      %v4630 = vadd.f32 %v4348, %v4579
      %v4631 = vadd.f32 %v4349, %v4582
      %v4632 = vadd.f32 %v4350, %v4585
      %v4633 = vadd.f32 %v4351, %v4588
      %v4634 = vadd.f32 %v4352, %v4591
      %v4635 = vadd.f32 %v4353, %v4594
      %v4636 = vadd.f32 %v4354, %v4597
      %v4637 = vadd.f32 %v4355, %v4600
      %v4638 = vadd.f32 %v4356, %v4603
      %v4639 = vadd.f32 %v4357, %v4606
      %s4640 = scalar_lea.vmem [#allocation2], 48
      %v4641 = vld [vmem:[%s4640] sm:$0xff]
      %v4642 = vld [vmem:[%s4640 + $0x8] sm:$0xff]
      %v4643 = vld [vmem:[%s4640 + $0x18] sm:$0xff]
      %v4644 = vld [vmem:[%s4640 + $0x20] sm:$0xff]
      %v4645 = vld [vmem:[%s4640 + $0x30] sm:$0xff]
      %v4646 = vld [vmem:[%s4640 + $0x38] sm:$0xff]
      %v4647 = vld [vmem:[%s4640 + $0x48] sm:$0xff]
      %v4648 = vld [vmem:[%s4640 + $0x50] sm:$0xff]
      %v4649 = vld [vmem:[%s4640 + $0x60] sm:$0xff]
      %v4650 = vld [vmem:[%s4640 + $0x68] sm:$0xff]
      %v4651 = vld [vmem:[%s4640 + $0x78] sm:$0xff]
      %v4652 = vld [vmem:[%s4640 + $0x80] sm:$0xff]
      %v4653 = vld [vmem:[%s4640 + $0x90] sm:$0xff]
      %v4654 = vld [vmem:[%s4640 + $0x98] sm:$0xff]
      %v4655 = vld [vmem:[%s4640 + $0xa8] sm:$0xff]
      %v4656 = vld [vmem:[%s4640 + $0xb0] sm:$0xff]
      %v4657 = vld [vmem:[%s4640 + $0xc0] sm:$0xff]
      %v4658 = vld [vmem:[%s4640 + $0xc8] sm:$0xff]
      %v4659 = vld [vmem:[%s4640 + $0xd8] sm:$0xff]
      %v4660 = vld [vmem:[%s4640 + $0xe0] sm:$0xff]
      %v4661 = vld [vmem:[%s4640 + $0xf0] sm:$0xff]
      %v4662 = vld [vmem:[%s4640 + $0xf8] sm:$0xff]
      %v4663 = vld [vmem:[%s4640 + $0x108] sm:$0xff]
      %v4664 = vld [vmem:[%s4640 + $0x110] sm:$0xff]
      %v4665 = vld [vmem:[%s4640 + $0x120] sm:$0xff]
      %v4666 = vld [vmem:[%s4640 + $0x128] sm:$0xff]
      %v4667 = vld [vmem:[%s4640 + $0x138] sm:$0xff]
      %v4668 = vld [vmem:[%s4640 + $0x140] sm:$0xff]
      %v4669 = vld [vmem:[%s4640 + $0x150] sm:$0xff]
      %v4670 = vld [vmem:[%s4640 + $0x158] sm:$0xff]
      %v4671 = vld [vmem:[%s4640 + $0x168] sm:$0xff]
      %v4672 = vld [vmem:[%s4640 + $0x170] sm:$0xff]
      %s4673 = scalar_lea.vmem %s3, 384
      %v4674 = vld [vmem:[%s4673] sm:$0xff]
      %v4675 = vld [vmem:[%s4673 + $0x8] sm:$0xff]
      %v4676 = vld [vmem:[%s4673 + $0x10] sm:$0xff]
      %v4677 = vld [vmem:[%s4673 + $0x18] sm:$0xff]
      %v4678 = vld [vmem:[%s4673 + $0x20] sm:$0xff]
      %v4679 = vld [vmem:[%s4673 + $0x28] sm:$0xff]
      %v4680 = vld [vmem:[%s4673 + $0x30] sm:$0xff]
      %v4681 = vld [vmem:[%s4673 + $0x38] sm:$0xff]
      %v4683 = vsel %vm335, %v4641, 0
      %v4686 = vsel %vm335, %v4642, 0
      %v4689 = vsel %vm335, %v4643, 0
      %v4692 = vsel %vm335, %v4644, 0
      %v4695 = vsel %vm335, %v4645, 0
      %v4698 = vsel %vm335, %v4646, 0
      %v4701 = vsel %vm335, %v4647, 0
      %v4704 = vsel %vm335, %v4648, 0
      %v4707 = vsel %vm335, %v4649, 0
      %v4710 = vsel %vm335, %v4650, 0
      %v4713 = vsel %vm335, %v4651, 0
      %v4716 = vsel %vm335, %v4652, 0
      %v4719 = vsel %vm335, %v4653, 0
      %v4722 = vsel %vm335, %v4654, 0
      %v4725 = vsel %vm335, %v4655, 0
      %v4728 = vsel %vm335, %v4656, 0
      %v4731 = vsel %vm335, %v4657, 0
      %v4734 = vsel %vm335, %v4658, 0
      %v4737 = vsel %vm335, %v4659, 0
      %v4740 = vsel %vm335, %v4660, 0
      %v4743 = vsel %vm335, %v4661, 0
      %v4746 = vsel %vm335, %v4662, 0
      %v4749 = vsel %vm335, %v4663, 0
      %v4752 = vsel %vm335, %v4664, 0
      %v4755 = vsel %vm335, %v4665, 0
      %v4758 = vsel %vm335, %v4666, 0
      %v4761 = vsel %vm335, %v4667, 0
      %v4764 = vsel %vm335, %v4668, 0
      %v4767 = vsel %vm335, %v4669, 0
      %v4770 = vsel %vm335, %v4670, 0
      %v4773 = vsel %vm335, %v4671, 0
      %v4776 = vsel %vm335, %v4672, 0
      %4778 = vmatpush.msra.mxu0 0.0
      %4779 = vmatpush.msra.mxu0 0.0
      %4780 = vmatpush.msra.mxu0 0.0
      %4781 = vmatpush.msra.mxu0 0.0
      %4782 = vmatpush.msra.mxu0 0.0
      %4783 = vmatpush.msra.mxu0 0.0
      %4784 = vmatpush.msra.mxu0 0.0
      %4785 = vmatpush.msra.mxu0 0.0
      %4786 = vmatpush.msra.mxu0 %v4681
      %4787 = vmatpush.msra.mxu0 %v4680
      %4788 = vmatpush.msra.mxu0 %v4679
      %4789 = vmatpush.msra.mxu0 %v4678
      %4790 = vmatpush.msra.mxu0 %v4677
      %4791 = vmatpush.msra.mxu0 %v4676
      %4792 = vmatpush.msra.mxu0 %v4675
      %4793 = vmatpush.msra.mxu0 %v4674
      %4794 = vmatmul.f32.gmra.mxu0 %v4683
      %v4795 = vpop.f32.mrf.mxu0
      %v4796 = vadd.f32 0.0, %v4795
      %4797 = vmatmul.f32.gmra.mxu0 %v4686
      %v4798 = vpop.f32.mrf.mxu0
      %v4799 = vadd.f32 0.0, %v4798
      %4800 = vmatmul.f32.gmra.mxu0 %v4689
      %v4801 = vpop.f32.mrf.mxu0
      %v4802 = vadd.f32 0.0, %v4801
      %4803 = vmatmul.f32.gmra.mxu0 %v4692
      %v4804 = vpop.f32.mrf.mxu0
      %v4805 = vadd.f32 0.0, %v4804
      %4806 = vmatmul.f32.gmra.mxu0 %v4695
      %v4807 = vpop.f32.mrf.mxu0
      %v4808 = vadd.f32 0.0, %v4807
      %4809 = vmatmul.f32.gmra.mxu0 %v4698
      %v4810 = vpop.f32.mrf.mxu0
      %v4811 = vadd.f32 0.0, %v4810
      %4812 = vmatmul.f32.gmra.mxu0 %v4701
      %v4813 = vpop.f32.mrf.mxu0
      %v4814 = vadd.f32 0.0, %v4813
      %4815 = vmatmul.f32.gmra.mxu0 %v4704
      %v4816 = vpop.f32.mrf.mxu0
      %v4817 = vadd.f32 0.0, %v4816
      %4818 = vmatmul.f32.gmra.mxu0 %v4707
      %v4819 = vpop.f32.mrf.mxu0
      %v4820 = vadd.f32 0.0, %v4819
      %4821 = vmatmul.f32.gmra.mxu0 %v4710
      %v4822 = vpop.f32.mrf.mxu0
      %v4823 = vadd.f32 0.0, %v4822
      %4824 = vmatmul.f32.gmra.mxu0 %v4713
      %v4825 = vpop.f32.mrf.mxu0
      %v4826 = vadd.f32 0.0, %v4825
      %4827 = vmatmul.f32.gmra.mxu0 %v4716
      %v4828 = vpop.f32.mrf.mxu0
      %v4829 = vadd.f32 0.0, %v4828
      %4830 = vmatmul.f32.gmra.mxu0 %v4719
      %v4831 = vpop.f32.mrf.mxu0
      %v4832 = vadd.f32 0.0, %v4831
      %4833 = vmatmul.f32.gmra.mxu0 %v4722
      %v4834 = vpop.f32.mrf.mxu0
      %v4835 = vadd.f32 0.0, %v4834
      %4836 = vmatmul.f32.gmra.mxu0 %v4725
      %v4837 = vpop.f32.mrf.mxu0
      %v4838 = vadd.f32 0.0, %v4837
      %4839 = vmatmul.f32.gmra.mxu0 %v4728
      %v4840 = vpop.f32.mrf.mxu0
      %v4841 = vadd.f32 0.0, %v4840
      %4842 = vmatmul.f32.gmra.mxu0 %v4731
      %v4843 = vpop.f32.mrf.mxu0
      %v4844 = vadd.f32 0.0, %v4843
      %4845 = vmatmul.f32.gmra.mxu0 %v4734
      %v4846 = vpop.f32.mrf.mxu0
      %v4847 = vadd.f32 0.0, %v4846
      %4848 = vmatmul.f32.gmra.mxu0 %v4737
      %v4849 = vpop.f32.mrf.mxu0
      %v4850 = vadd.f32 0.0, %v4849
      %4851 = vmatmul.f32.gmra.mxu0 %v4740
      %v4852 = vpop.f32.mrf.mxu0
      %v4853 = vadd.f32 0.0, %v4852
      %4854 = vmatmul.f32.gmra.mxu0 %v4743
      %v4855 = vpop.f32.mrf.mxu0
      %v4856 = vadd.f32 0.0, %v4855
      %4857 = vmatmul.f32.gmra.mxu0 %v4746
      %v4858 = vpop.f32.mrf.mxu0
      %v4859 = vadd.f32 0.0, %v4858
      %4860 = vmatmul.f32.gmra.mxu0 %v4749
      %v4861 = vpop.f32.mrf.mxu0
      %v4862 = vadd.f32 0.0, %v4861
      %4863 = vmatmul.f32.gmra.mxu0 %v4752
      %v4864 = vpop.f32.mrf.mxu0
      %v4865 = vadd.f32 0.0, %v4864
      %4866 = vmatmul.f32.gmra.mxu0 %v4755
      %v4867 = vpop.f32.mrf.mxu0
      %v4868 = vadd.f32 0.0, %v4867
      %4869 = vmatmul.f32.gmra.mxu0 %v4758
      %v4870 = vpop.f32.mrf.mxu0
      %v4871 = vadd.f32 0.0, %v4870
      %4872 = vmatmul.f32.gmra.mxu0 %v4761
      %v4873 = vpop.f32.mrf.mxu0
      %v4874 = vadd.f32 0.0, %v4873
      %4875 = vmatmul.f32.gmra.mxu0 %v4764
      %v4876 = vpop.f32.mrf.mxu0
      %v4877 = vadd.f32 0.0, %v4876
      %4878 = vmatmul.f32.gmra.mxu0 %v4767
      %v4879 = vpop.f32.mrf.mxu0
      %v4880 = vadd.f32 0.0, %v4879
      %4881 = vmatmul.f32.gmra.mxu0 %v4770
      %v4882 = vpop.f32.mrf.mxu0
      %v4883 = vadd.f32 0.0, %v4882
      %4884 = vmatmul.f32.gmra.mxu0 %v4773
      %v4885 = vpop.f32.mrf.mxu0
      %v4886 = vadd.f32 0.0, %v4885
      %4887 = vmatmul.f32.gmra.mxu0 %v4776
      %v4888 = vpop.f32.mrf.mxu0
      %v4889 = vadd.f32 0.0, %v4888
      %4890 = vdwg.mxu0
      %v4891 = vadd.f32 %v4608, %v4796
      %v4892 = vadd.f32 %v4609, %v4799
      %v4893 = vadd.f32 %v4610, %v4802
      %v4894 = vadd.f32 %v4611, %v4805
      %v4895 = vadd.f32 %v4612, %v4808
      %v4896 = vadd.f32 %v4613, %v4811
      %v4897 = vadd.f32 %v4614, %v4814
      %v4898 = vadd.f32 %v4615, %v4817
      %v4899 = vadd.f32 %v4616, %v4820
      %v4900 = vadd.f32 %v4617, %v4823
      %v4901 = vadd.f32 %v4618, %v4826
      %v4902 = vadd.f32 %v4619, %v4829
      %v4903 = vadd.f32 %v4620, %v4832
      %v4904 = vadd.f32 %v4621, %v4835
      %v4905 = vadd.f32 %v4622, %v4838
      %v4906 = vadd.f32 %v4623, %v4841
      %v4907 = vadd.f32 %v4624, %v4844
      %v4908 = vadd.f32 %v4625, %v4847
      %v4909 = vadd.f32 %v4626, %v4850
      %v4910 = vadd.f32 %v4627, %v4853
      %v4911 = vadd.f32 %v4628, %v4856
      %v4912 = vadd.f32 %v4629, %v4859
      %v4913 = vadd.f32 %v4630, %v4862
      %v4914 = vadd.f32 %v4631, %v4865
      %v4915 = vadd.f32 %v4632, %v4868
      %v4916 = vadd.f32 %v4633, %v4871
      %v4917 = vadd.f32 %v4634, %v4874
      %v4918 = vadd.f32 %v4635, %v4877
      %v4919 = vadd.f32 %v4636, %v4880
      %v4920 = vadd.f32 %v4637, %v4883
      %v4921 = vadd.f32 %v4638, %v4886
      %v4922 = vadd.f32 %v4639, %v4889
      %v4923 = vld [vmem:[%s4640 + $0x1] sm:$0xff]
      %v4924 = vld [vmem:[%s4640 + $0x9] sm:$0xff]
      %v4925 = vld [vmem:[%s4640 + $0x19] sm:$0xff]
      %v4926 = vld [vmem:[%s4640 + $0x21] sm:$0xff]
      %v4927 = vld [vmem:[%s4640 + $0x31] sm:$0xff]
      %v4928 = vld [vmem:[%s4640 + $0x39] sm:$0xff]
      %v4929 = vld [vmem:[%s4640 + $0x49] sm:$0xff]
      %v4930 = vld [vmem:[%s4640 + $0x51] sm:$0xff]
      %v4931 = vld [vmem:[%s4640 + $0x61] sm:$0xff]
      %v4932 = vld [vmem:[%s4640 + $0x69] sm:$0xff]
      %v4933 = vld [vmem:[%s4640 + $0x79] sm:$0xff]
      %v4934 = vld [vmem:[%s4640 + $0x81] sm:$0xff]
      %v4935 = vld [vmem:[%s4640 + $0x91] sm:$0xff]
      %v4936 = vld [vmem:[%s4640 + $0x99] sm:$0xff]
      %v4937 = vld [vmem:[%s4640 + $0xa9] sm:$0xff]
      %v4938 = vld [vmem:[%s4640 + $0xb1] sm:$0xff]
      %v4939 = vld [vmem:[%s4640 + $0xc1] sm:$0xff]
      %v4940 = vld [vmem:[%s4640 + $0xc9] sm:$0xff]
      %v4941 = vld [vmem:[%s4640 + $0xd9] sm:$0xff]
      %v4942 = vld [vmem:[%s4640 + $0xe1] sm:$0xff]
      %v4943 = vld [vmem:[%s4640 + $0xf1] sm:$0xff]
      %v4944 = vld [vmem:[%s4640 + $0xf9] sm:$0xff]
      %v4945 = vld [vmem:[%s4640 + $0x109] sm:$0xff]
      %v4946 = vld [vmem:[%s4640 + $0x111] sm:$0xff]
      %v4947 = vld [vmem:[%s4640 + $0x121] sm:$0xff]
      %v4948 = vld [vmem:[%s4640 + $0x129] sm:$0xff]
      %v4949 = vld [vmem:[%s4640 + $0x139] sm:$0xff]
      %v4950 = vld [vmem:[%s4640 + $0x141] sm:$0xff]
      %v4951 = vld [vmem:[%s4640 + $0x151] sm:$0xff]
      %v4952 = vld [vmem:[%s4640 + $0x159] sm:$0xff]
      %v4953 = vld [vmem:[%s4640 + $0x169] sm:$0xff]
      %v4954 = vld [vmem:[%s4640 + $0x171] sm:$0xff]
      %s4955 = scalar_lea.vmem %s3, 448
      %v4956 = vld [vmem:[%s4955] sm:$0xff]
      %v4957 = vld [vmem:[%s4955 + $0x8] sm:$0xff]
      %v4958 = vld [vmem:[%s4955 + $0x10] sm:$0xff]
      %v4959 = vld [vmem:[%s4955 + $0x18] sm:$0xff]
      %v4960 = vld [vmem:[%s4955 + $0x20] sm:$0xff]
      %v4961 = vld [vmem:[%s4955 + $0x28] sm:$0xff]
      %v4962 = vld [vmem:[%s4955 + $0x30] sm:$0xff]
      %v4963 = vld [vmem:[%s4955 + $0x38] sm:$0xff]
      %v4965 = vsel %vm335, %v4923, 0
      %v4968 = vsel %vm335, %v4924, 0
      %v4971 = vsel %vm335, %v4925, 0
      %v4974 = vsel %vm335, %v4926, 0
      %v4977 = vsel %vm335, %v4927, 0
      %v4980 = vsel %vm335, %v4928, 0
      %v4983 = vsel %vm335, %v4929, 0
      %v4986 = vsel %vm335, %v4930, 0
      %v4989 = vsel %vm335, %v4931, 0
      %v4992 = vsel %vm335, %v4932, 0
      %v4995 = vsel %vm335, %v4933, 0
      %v4998 = vsel %vm335, %v4934, 0
      %v5001 = vsel %vm335, %v4935, 0
      %v5004 = vsel %vm335, %v4936, 0
      %v5007 = vsel %vm335, %v4937, 0
      %v5010 = vsel %vm335, %v4938, 0
      %v5013 = vsel %vm335, %v4939, 0
      %v5016 = vsel %vm335, %v4940, 0
      %v5019 = vsel %vm335, %v4941, 0
      %v5022 = vsel %vm335, %v4942, 0
      %v5025 = vsel %vm335, %v4943, 0
      %v5028 = vsel %vm335, %v4944, 0
      %v5031 = vsel %vm335, %v4945, 0
      %v5034 = vsel %vm335, %v4946, 0
      %v5037 = vsel %vm335, %v4947, 0
      %v5040 = vsel %vm335, %v4948, 0
      %v5043 = vsel %vm335, %v4949, 0
      %v5046 = vsel %vm335, %v4950, 0
      %v5049 = vsel %vm335, %v4951, 0
      %v5052 = vsel %vm335, %v4952, 0
      %v5055 = vsel %vm335, %v4953, 0
      %v5058 = vsel %vm335, %v4954, 0
      %5060 = vmatpush.msra.mxu0 0.0
      %5061 = vmatpush.msra.mxu0 0.0
      %5062 = vmatpush.msra.mxu0 0.0
      %5063 = vmatpush.msra.mxu0 0.0
      %5064 = vmatpush.msra.mxu0 0.0
      %5065 = vmatpush.msra.mxu0 0.0
      %5066 = vmatpush.msra.mxu0 0.0
      %5067 = vmatpush.msra.mxu0 0.0
      %5068 = vmatpush.msra.mxu0 %v4963
      %5069 = vmatpush.msra.mxu0 %v4962
      %5070 = vmatpush.msra.mxu0 %v4961
      %5071 = vmatpush.msra.mxu0 %v4960
      %5072 = vmatpush.msra.mxu0 %v4959
      %5073 = vmatpush.msra.mxu0 %v4958
      %5074 = vmatpush.msra.mxu0 %v4957
      %5075 = vmatpush.msra.mxu0 %v4956
      %5076 = vmatmul.f32.gmra.mxu0 %v4965
      %v5077 = vpop.f32.mrf.mxu0
      %v5078 = vadd.f32 0.0, %v5077
      %5079 = vmatmul.f32.gmra.mxu0 %v4968
      %v5080 = vpop.f32.mrf.mxu0
      %v5081 = vadd.f32 0.0, %v5080
      %5082 = vmatmul.f32.gmra.mxu0 %v4971
      %v5083 = vpop.f32.mrf.mxu0
      %v5084 = vadd.f32 0.0, %v5083
      %5085 = vmatmul.f32.gmra.mxu0 %v4974
      %v5086 = vpop.f32.mrf.mxu0
      %v5087 = vadd.f32 0.0, %v5086
      %5088 = vmatmul.f32.gmra.mxu0 %v4977
      %v5089 = vpop.f32.mrf.mxu0
      %v5090 = vadd.f32 0.0, %v5089
      %5091 = vmatmul.f32.gmra.mxu0 %v4980
      %v5092 = vpop.f32.mrf.mxu0
      %v5093 = vadd.f32 0.0, %v5092
      %5094 = vmatmul.f32.gmra.mxu0 %v4983
      %v5095 = vpop.f32.mrf.mxu0
      %v5096 = vadd.f32 0.0, %v5095
      %5097 = vmatmul.f32.gmra.mxu0 %v4986
      %v5098 = vpop.f32.mrf.mxu0
      %v5099 = vadd.f32 0.0, %v5098
      %5100 = vmatmul.f32.gmra.mxu0 %v4989
      %v5101 = vpop.f32.mrf.mxu0
      %v5102 = vadd.f32 0.0, %v5101
      %5103 = vmatmul.f32.gmra.mxu0 %v4992
      %v5104 = vpop.f32.mrf.mxu0
      %v5105 = vadd.f32 0.0, %v5104
      %5106 = vmatmul.f32.gmra.mxu0 %v4995
      %v5107 = vpop.f32.mrf.mxu0
      %v5108 = vadd.f32 0.0, %v5107
      %5109 = vmatmul.f32.gmra.mxu0 %v4998
      %v5110 = vpop.f32.mrf.mxu0
      %v5111 = vadd.f32 0.0, %v5110
      %5112 = vmatmul.f32.gmra.mxu0 %v5001
      %v5113 = vpop.f32.mrf.mxu0
      %v5114 = vadd.f32 0.0, %v5113
      %5115 = vmatmul.f32.gmra.mxu0 %v5004
      %v5116 = vpop.f32.mrf.mxu0
      %v5117 = vadd.f32 0.0, %v5116
      %5118 = vmatmul.f32.gmra.mxu0 %v5007
      %v5119 = vpop.f32.mrf.mxu0
      %v5120 = vadd.f32 0.0, %v5119
      %5121 = vmatmul.f32.gmra.mxu0 %v5010
      %v5122 = vpop.f32.mrf.mxu0
      %v5123 = vadd.f32 0.0, %v5122
      %5124 = vmatmul.f32.gmra.mxu0 %v5013
      %v5125 = vpop.f32.mrf.mxu0
      %v5126 = vadd.f32 0.0, %v5125
      %5127 = vmatmul.f32.gmra.mxu0 %v5016
      %v5128 = vpop.f32.mrf.mxu0
      %v5129 = vadd.f32 0.0, %v5128
      %5130 = vmatmul.f32.gmra.mxu0 %v5019
      %v5131 = vpop.f32.mrf.mxu0
      %v5132 = vadd.f32 0.0, %v5131
      %5133 = vmatmul.f32.gmra.mxu0 %v5022
      %v5134 = vpop.f32.mrf.mxu0
      %v5135 = vadd.f32 0.0, %v5134
      %5136 = vmatmul.f32.gmra.mxu0 %v5025
      %v5137 = vpop.f32.mrf.mxu0
      %v5138 = vadd.f32 0.0, %v5137
      %5139 = vmatmul.f32.gmra.mxu0 %v5028
      %v5140 = vpop.f32.mrf.mxu0
      %v5141 = vadd.f32 0.0, %v5140
      %5142 = vmatmul.f32.gmra.mxu0 %v5031
      %v5143 = vpop.f32.mrf.mxu0
      %v5144 = vadd.f32 0.0, %v5143
      %5145 = vmatmul.f32.gmra.mxu0 %v5034
      %v5146 = vpop.f32.mrf.mxu0
      %v5147 = vadd.f32 0.0, %v5146
      %5148 = vmatmul.f32.gmra.mxu0 %v5037
      %v5149 = vpop.f32.mrf.mxu0
      %v5150 = vadd.f32 0.0, %v5149
      %5151 = vmatmul.f32.gmra.mxu0 %v5040
      %v5152 = vpop.f32.mrf.mxu0
      %v5153 = vadd.f32 0.0, %v5152
      %5154 = vmatmul.f32.gmra.mxu0 %v5043
      %v5155 = vpop.f32.mrf.mxu0
      %v5156 = vadd.f32 0.0, %v5155
      %5157 = vmatmul.f32.gmra.mxu0 %v5046
      %v5158 = vpop.f32.mrf.mxu0
      %v5159 = vadd.f32 0.0, %v5158
      %5160 = vmatmul.f32.gmra.mxu0 %v5049
      %v5161 = vpop.f32.mrf.mxu0
      %v5162 = vadd.f32 0.0, %v5161
      %5163 = vmatmul.f32.gmra.mxu0 %v5052
      %v5164 = vpop.f32.mrf.mxu0
      %v5165 = vadd.f32 0.0, %v5164
      %5166 = vmatmul.f32.gmra.mxu0 %v5055
      %v5167 = vpop.f32.mrf.mxu0
      %v5168 = vadd.f32 0.0, %v5167
      %5169 = vmatmul.f32.gmra.mxu0 %v5058
      %v5170 = vpop.f32.mrf.mxu0
      %v5171 = vadd.f32 0.0, %v5170
      %5172 = vdwg.mxu0
      %v5173 = vadd.f32 %v4891, %v5078
      %v5174 = vadd.f32 %v4892, %v5081
      %v5175 = vadd.f32 %v4893, %v5084
      %v5176 = vadd.f32 %v4894, %v5087
      %v5177 = vadd.f32 %v4895, %v5090
      %v5178 = vadd.f32 %v4896, %v5093
      %v5179 = vadd.f32 %v4897, %v5096
      %v5180 = vadd.f32 %v4898, %v5099
      %v5181 = vadd.f32 %v4899, %v5102
      %v5182 = vadd.f32 %v4900, %v5105
      %v5183 = vadd.f32 %v4901, %v5108
      %v5184 = vadd.f32 %v4902, %v5111
      %v5185 = vadd.f32 %v4903, %v5114
      %v5186 = vadd.f32 %v4904, %v5117
      %v5187 = vadd.f32 %v4905, %v5120
      %v5188 = vadd.f32 %v4906, %v5123
      %v5189 = vadd.f32 %v4907, %v5126
      %v5190 = vadd.f32 %v4908, %v5129
      %v5191 = vadd.f32 %v4909, %v5132
      %v5192 = vadd.f32 %v4910, %v5135
      %v5193 = vadd.f32 %v4911, %v5138
      %v5194 = vadd.f32 %v4912, %v5141
      %v5195 = vadd.f32 %v4913, %v5144
      %v5196 = vadd.f32 %v4914, %v5147
      %v5197 = vadd.f32 %v4915, %v5150
      %v5198 = vadd.f32 %v4916, %v5153
      %v5199 = vadd.f32 %v4917, %v5156
      %v5200 = vadd.f32 %v4918, %v5159
      %v5201 = vadd.f32 %v4919, %v5162
      %v5202 = vadd.f32 %v4920, %v5165
      %v5203 = vadd.f32 %v4921, %v5168
      %v5204 = vadd.f32 %v4922, %v5171
      %v5205 = vld [vmem:[%s4640 + $0x2] sm:$0xff]
      %v5206 = vld [vmem:[%s4640 + $0xa] sm:$0xff]
      %v5207 = vld [vmem:[%s4640 + $0x1a] sm:$0xff]
      %v5208 = vld [vmem:[%s4640 + $0x22] sm:$0xff]
      %v5209 = vld [vmem:[%s4640 + $0x32] sm:$0xff]
      %v5210 = vld [vmem:[%s4640 + $0x3a] sm:$0xff]
      %v5211 = vld [vmem:[%s4640 + $0x4a] sm:$0xff]
      %v5212 = vld [vmem:[%s4640 + $0x52] sm:$0xff]
      %v5213 = vld [vmem:[%s4640 + $0x62] sm:$0xff]
      %v5214 = vld [vmem:[%s4640 + $0x6a] sm:$0xff]
      %v5215 = vld [vmem:[%s4640 + $0x7a] sm:$0xff]
      %v5216 = vld [vmem:[%s4640 + $0x82] sm:$0xff]
      %v5217 = vld [vmem:[%s4640 + $0x92] sm:$0xff]
      %v5218 = vld [vmem:[%s4640 + $0x9a] sm:$0xff]
      %v5219 = vld [vmem:[%s4640 + $0xaa] sm:$0xff]
      %v5220 = vld [vmem:[%s4640 + $0xb2] sm:$0xff]
      %v5221 = vld [vmem:[%s4640 + $0xc2] sm:$0xff]
      %v5222 = vld [vmem:[%s4640 + $0xca] sm:$0xff]
      %v5223 = vld [vmem:[%s4640 + $0xda] sm:$0xff]
      %v5224 = vld [vmem:[%s4640 + $0xe2] sm:$0xff]
      %v5225 = vld [vmem:[%s4640 + $0xf2] sm:$0xff]
      %v5226 = vld [vmem:[%s4640 + $0xfa] sm:$0xff]
      %v5227 = vld [vmem:[%s4640 + $0x10a] sm:$0xff]
      %v5228 = vld [vmem:[%s4640 + $0x112] sm:$0xff]
      %v5229 = vld [vmem:[%s4640 + $0x122] sm:$0xff]
      %v5230 = vld [vmem:[%s4640 + $0x12a] sm:$0xff]
      %v5231 = vld [vmem:[%s4640 + $0x13a] sm:$0xff]
      %v5232 = vld [vmem:[%s4640 + $0x142] sm:$0xff]
      %v5233 = vld [vmem:[%s4640 + $0x152] sm:$0xff]
      %v5234 = vld [vmem:[%s4640 + $0x15a] sm:$0xff]
      %v5235 = vld [vmem:[%s4640 + $0x16a] sm:$0xff]
      %v5236 = vld [vmem:[%s4640 + $0x172] sm:$0xff]
      %s5237 = scalar_lea.vmem %s3, 512
      %v5238 = vld [vmem:[%s5237] sm:$0xff]
      %v5239 = vld [vmem:[%s5237 + $0x8] sm:$0xff]
      %v5240 = vld [vmem:[%s5237 + $0x10] sm:$0xff]
      %v5241 = vld [vmem:[%s5237 + $0x18] sm:$0xff]
      %v5242 = vld [vmem:[%s5237 + $0x20] sm:$0xff]
      %v5243 = vld [vmem:[%s5237 + $0x28] sm:$0xff]
      %v5244 = vld [vmem:[%s5237 + $0x30] sm:$0xff]
      %v5245 = vld [vmem:[%s5237 + $0x38] sm:$0xff]
      %v5247 = vsel %vm335, %v5205, 0
      %v5250 = vsel %vm335, %v5206, 0
      %v5253 = vsel %vm335, %v5207, 0
      %v5256 = vsel %vm335, %v5208, 0
      %v5259 = vsel %vm335, %v5209, 0
      %v5262 = vsel %vm335, %v5210, 0
      %v5265 = vsel %vm335, %v5211, 0
      %v5268 = vsel %vm335, %v5212, 0
      %v5271 = vsel %vm335, %v5213, 0
      %v5274 = vsel %vm335, %v5214, 0
      %v5277 = vsel %vm335, %v5215, 0
      %v5280 = vsel %vm335, %v5216, 0
      %v5283 = vsel %vm335, %v5217, 0
      %v5286 = vsel %vm335, %v5218, 0
      %v5289 = vsel %vm335, %v5219, 0
      %v5292 = vsel %vm335, %v5220, 0
      %v5295 = vsel %vm335, %v5221, 0
      %v5298 = vsel %vm335, %v5222, 0
      %v5301 = vsel %vm335, %v5223, 0
      %v5304 = vsel %vm335, %v5224, 0
      %v5307 = vsel %vm335, %v5225, 0
      %v5310 = vsel %vm335, %v5226, 0
      %v5313 = vsel %vm335, %v5227, 0
      %v5316 = vsel %vm335, %v5228, 0
      %v5319 = vsel %vm335, %v5229, 0
      %v5322 = vsel %vm335, %v5230, 0
      %v5325 = vsel %vm335, %v5231, 0
      %v5328 = vsel %vm335, %v5232, 0
      %v5331 = vsel %vm335, %v5233, 0
      %v5334 = vsel %vm335, %v5234, 0
      %v5337 = vsel %vm335, %v5235, 0
      %v5340 = vsel %vm335, %v5236, 0
      %5342 = vmatpush.msra.mxu0 0.0
      %5343 = vmatpush.msra.mxu0 0.0
      %5344 = vmatpush.msra.mxu0 0.0
      %5345 = vmatpush.msra.mxu0 0.0
      %5346 = vmatpush.msra.mxu0 0.0
      %5347 = vmatpush.msra.mxu0 0.0
      %5348 = vmatpush.msra.mxu0 0.0
      %5349 = vmatpush.msra.mxu0 0.0
      %5350 = vmatpush.msra.mxu0 %v5245
      %5351 = vmatpush.msra.mxu0 %v5244
      %5352 = vmatpush.msra.mxu0 %v5243
      %5353 = vmatpush.msra.mxu0 %v5242
      %5354 = vmatpush.msra.mxu0 %v5241
      %5355 = vmatpush.msra.mxu0 %v5240
      %5356 = vmatpush.msra.mxu0 %v5239
      %5357 = vmatpush.msra.mxu0 %v5238
      %5358 = vmatmul.f32.gmra.mxu0 %v5247
      %v5359 = vpop.f32.mrf.mxu0
      %v5360 = vadd.f32 0.0, %v5359
      %5361 = vmatmul.f32.gmra.mxu0 %v5250
      %v5362 = vpop.f32.mrf.mxu0
      %v5363 = vadd.f32 0.0, %v5362
      %5364 = vmatmul.f32.gmra.mxu0 %v5253
      %v5365 = vpop.f32.mrf.mxu0
      %v5366 = vadd.f32 0.0, %v5365
      %5367 = vmatmul.f32.gmra.mxu0 %v5256
      %v5368 = vpop.f32.mrf.mxu0
      %v5369 = vadd.f32 0.0, %v5368
      %5370 = vmatmul.f32.gmra.mxu0 %v5259
      %v5371 = vpop.f32.mrf.mxu0
      %v5372 = vadd.f32 0.0, %v5371
      %5373 = vmatmul.f32.gmra.mxu0 %v5262
      %v5374 = vpop.f32.mrf.mxu0
      %v5375 = vadd.f32 0.0, %v5374
      %5376 = vmatmul.f32.gmra.mxu0 %v5265
      %v5377 = vpop.f32.mrf.mxu0
      %v5378 = vadd.f32 0.0, %v5377
      %5379 = vmatmul.f32.gmra.mxu0 %v5268
      %v5380 = vpop.f32.mrf.mxu0
      %v5381 = vadd.f32 0.0, %v5380
      %5382 = vmatmul.f32.gmra.mxu0 %v5271
      %v5383 = vpop.f32.mrf.mxu0
      %v5384 = vadd.f32 0.0, %v5383
      %5385 = vmatmul.f32.gmra.mxu0 %v5274
      %v5386 = vpop.f32.mrf.mxu0
      %v5387 = vadd.f32 0.0, %v5386
      %5388 = vmatmul.f32.gmra.mxu0 %v5277
      %v5389 = vpop.f32.mrf.mxu0
      %v5390 = vadd.f32 0.0, %v5389
      %5391 = vmatmul.f32.gmra.mxu0 %v5280
      %v5392 = vpop.f32.mrf.mxu0
      %v5393 = vadd.f32 0.0, %v5392
      %5394 = vmatmul.f32.gmra.mxu0 %v5283
      %v5395 = vpop.f32.mrf.mxu0
      %v5396 = vadd.f32 0.0, %v5395
      %5397 = vmatmul.f32.gmra.mxu0 %v5286
      %v5398 = vpop.f32.mrf.mxu0
      %v5399 = vadd.f32 0.0, %v5398
      %5400 = vmatmul.f32.gmra.mxu0 %v5289
      %v5401 = vpop.f32.mrf.mxu0
      %v5402 = vadd.f32 0.0, %v5401
      %5403 = vmatmul.f32.gmra.mxu0 %v5292
      %v5404 = vpop.f32.mrf.mxu0
      %v5405 = vadd.f32 0.0, %v5404
      %5406 = vmatmul.f32.gmra.mxu0 %v5295
      %v5407 = vpop.f32.mrf.mxu0
      %v5408 = vadd.f32 0.0, %v5407
      %5409 = vmatmul.f32.gmra.mxu0 %v5298
      %v5410 = vpop.f32.mrf.mxu0
      %v5411 = vadd.f32 0.0, %v5410
      %5412 = vmatmul.f32.gmra.mxu0 %v5301
      %v5413 = vpop.f32.mrf.mxu0
      %v5414 = vadd.f32 0.0, %v5413
      %5415 = vmatmul.f32.gmra.mxu0 %v5304
      %v5416 = vpop.f32.mrf.mxu0
      %v5417 = vadd.f32 0.0, %v5416
      %5418 = vmatmul.f32.gmra.mxu0 %v5307
      %v5419 = vpop.f32.mrf.mxu0
      %v5420 = vadd.f32 0.0, %v5419
      %5421 = vmatmul.f32.gmra.mxu0 %v5310
      %v5422 = vpop.f32.mrf.mxu0
      %v5423 = vadd.f32 0.0, %v5422
      %5424 = vmatmul.f32.gmra.mxu0 %v5313
      %v5425 = vpop.f32.mrf.mxu0
      %v5426 = vadd.f32 0.0, %v5425
      %5427 = vmatmul.f32.gmra.mxu0 %v5316
      %v5428 = vpop.f32.mrf.mxu0
      %v5429 = vadd.f32 0.0, %v5428
      %5430 = vmatmul.f32.gmra.mxu0 %v5319
      %v5431 = vpop.f32.mrf.mxu0
      %v5432 = vadd.f32 0.0, %v5431
      %5433 = vmatmul.f32.gmra.mxu0 %v5322
      %v5434 = vpop.f32.mrf.mxu0
      %v5435 = vadd.f32 0.0, %v5434
      %5436 = vmatmul.f32.gmra.mxu0 %v5325
      %v5437 = vpop.f32.mrf.mxu0
      %v5438 = vadd.f32 0.0, %v5437
      %5439 = vmatmul.f32.gmra.mxu0 %v5328
      %v5440 = vpop.f32.mrf.mxu0
      %v5441 = vadd.f32 0.0, %v5440
      %5442 = vmatmul.f32.gmra.mxu0 %v5331
      %v5443 = vpop.f32.mrf.mxu0
      %v5444 = vadd.f32 0.0, %v5443
      %5445 = vmatmul.f32.gmra.mxu0 %v5334
      %v5446 = vpop.f32.mrf.mxu0
      %v5447 = vadd.f32 0.0, %v5446
      %5448 = vmatmul.f32.gmra.mxu0 %v5337
      %v5449 = vpop.f32.mrf.mxu0
      %v5450 = vadd.f32 0.0, %v5449
      %5451 = vmatmul.f32.gmra.mxu0 %v5340
      %v5452 = vpop.f32.mrf.mxu0
      %v5453 = vadd.f32 0.0, %v5452
      %5454 = vdwg.mxu0
      %v5455 = vadd.f32 %v5173, %v5360
      %v5456 = vadd.f32 %v5174, %v5363
      %v5457 = vadd.f32 %v5175, %v5366
      %v5458 = vadd.f32 %v5176, %v5369
      %v5459 = vadd.f32 %v5177, %v5372
      %v5460 = vadd.f32 %v5178, %v5375
      %v5461 = vadd.f32 %v5179, %v5378
      %v5462 = vadd.f32 %v5180, %v5381
      %v5463 = vadd.f32 %v5181, %v5384
      %v5464 = vadd.f32 %v5182, %v5387
      %v5465 = vadd.f32 %v5183, %v5390
      %v5466 = vadd.f32 %v5184, %v5393
      %v5467 = vadd.f32 %v5185, %v5396
      %v5468 = vadd.f32 %v5186, %v5399
      %v5469 = vadd.f32 %v5187, %v5402
      %v5470 = vadd.f32 %v5188, %v5405
      %v5471 = vadd.f32 %v5189, %v5408
      %v5472 = vadd.f32 %v5190, %v5411
      %v5473 = vadd.f32 %v5191, %v5414
      %v5474 = vadd.f32 %v5192, %v5417
      %v5475 = vadd.f32 %v5193, %v5420
      %v5476 = vadd.f32 %v5194, %v5423
      %v5477 = vadd.f32 %v5195, %v5426
      %v5478 = vadd.f32 %v5196, %v5429
      %v5479 = vadd.f32 %v5197, %v5432
      %v5480 = vadd.f32 %v5198, %v5435
      %v5481 = vadd.f32 %v5199, %v5438
      %v5482 = vadd.f32 %v5200, %v5441
      %v5483 = vadd.f32 %v5201, %v5444
      %v5484 = vadd.f32 %v5202, %v5447
      %v5485 = vadd.f32 %v5203, %v5450
      %v5486 = vadd.f32 %v5204, %v5453
      %v5487 = vld [vmem:[%s4] sm:$0x1]
      %v5489 = vperm.slane %v5487, 0
      %v5491 = vadd.f32 %v5455, %v5489
      %v5492 = vadd.f32 %v5456, %v5489
      %v5493 = vadd.f32 %v5457, %v5489
      %v5494 = vadd.f32 %v5458, %v5489
      %v5495 = vadd.f32 %v5459, %v5489
      %v5496 = vadd.f32 %v5460, %v5489
      %v5497 = vadd.f32 %v5461, %v5489
      %v5498 = vadd.f32 %v5462, %v5489
      %v5499 = vadd.f32 %v5463, %v5489
      %v5500 = vadd.f32 %v5464, %v5489
      %v5501 = vadd.f32 %v5465, %v5489
      %v5502 = vadd.f32 %v5466, %v5489
      %v5503 = vadd.f32 %v5467, %v5489
      %v5504 = vadd.f32 %v5468, %v5489
      %v5505 = vadd.f32 %v5469, %v5489
      %v5506 = vadd.f32 %v5470, %v5489
      %v5507 = vadd.f32 %v5471, %v5489
      %v5508 = vadd.f32 %v5472, %v5489
      %v5509 = vadd.f32 %v5473, %v5489
      %v5510 = vadd.f32 %v5474, %v5489
      %v5511 = vadd.f32 %v5475, %v5489
      %v5512 = vadd.f32 %v5476, %v5489
      %v5513 = vadd.f32 %v5477, %v5489
      %v5514 = vadd.f32 %v5478, %v5489
      %v5515 = vadd.f32 %v5479, %v5489
      %v5516 = vadd.f32 %v5480, %v5489
      %v5517 = vadd.f32 %v5481, %v5489
      %v5518 = vadd.f32 %v5482, %v5489
      %v5519 = vadd.f32 %v5483, %v5489
      %v5520 = vadd.f32 %v5484, %v5489
      %v5521 = vadd.f32 %v5485, %v5489
      %v5522 = vadd.f32 %v5486, %v5489
      %v5523 = vmax.f32 %v5491, 0.0
      %v5524 = vmax.f32 %v5492, 0.0
      %v5525 = vmax.f32 %v5493, 0.0
      %v5526 = vmax.f32 %v5494, 0.0
      %v5527 = vmax.f32 %v5495, 0.0
      %v5528 = vmax.f32 %v5496, 0.0
      %v5529 = vmax.f32 %v5497, 0.0
      %v5530 = vmax.f32 %v5498, 0.0
      %v5531 = vmax.f32 %v5499, 0.0
      %v5532 = vmax.f32 %v5500, 0.0
      %v5533 = vmax.f32 %v5501, 0.0
      %v5534 = vmax.f32 %v5502, 0.0
      %v5535 = vmax.f32 %v5503, 0.0
      %v5536 = vmax.f32 %v5504, 0.0
      %v5537 = vmax.f32 %v5505, 0.0
      %v5538 = vmax.f32 %v5506, 0.0
      %v5539 = vmax.f32 %v5507, 0.0
      %v5540 = vmax.f32 %v5508, 0.0
      %v5541 = vmax.f32 %v5509, 0.0
      %v5542 = vmax.f32 %v5510, 0.0
      %v5543 = vmax.f32 %v5511, 0.0
      %v5544 = vmax.f32 %v5512, 0.0
      %v5545 = vmax.f32 %v5513, 0.0
      %v5546 = vmax.f32 %v5514, 0.0
      %v5547 = vmax.f32 %v5515, 0.0
      %v5548 = vmax.f32 %v5516, 0.0
      %v5549 = vmax.f32 %v5517, 0.0
      %v5550 = vmax.f32 %v5518, 0.0
      %v5551 = vmax.f32 %v5519, 0.0
      %v5552 = vmax.f32 %v5520, 0.0
      %v5553 = vmax.f32 %v5521, 0.0
      %v5554 = vmax.f32 %v5522, 0.0
      %s5555 = scalar_lea.vmem [#allocation3], 24
      %5556 = vst [vmem:[%s5555 + $0x1] sm:$0xff] %v5523
      %5557 = vst [vmem:[%s5555 + $0x9] sm:$0xff] %v5524
      %5558 = vst [vmem:[%s5555 + $0x19] sm:$0xff] %v5525
      %5559 = vst [vmem:[%s5555 + $0x21] sm:$0xff] %v5526
      %5560 = vst [vmem:[%s5555 + $0x31] sm:$0xff] %v5527
      %5561 = vst [vmem:[%s5555 + $0x39] sm:$0xff] %v5528
      %5562 = vst [vmem:[%s5555 + $0x49] sm:$0xff] %v5529
      %5563 = vst [vmem:[%s5555 + $0x51] sm:$0xff] %v5530
      %5564 = vst [vmem:[%s5555 + $0x61] sm:$0xff] %v5531
      %5565 = vst [vmem:[%s5555 + $0x69] sm:$0xff] %v5532
      %5566 = vst [vmem:[%s5555 + $0x79] sm:$0xff] %v5533
      %5567 = vst [vmem:[%s5555 + $0x81] sm:$0xff] %v5534
      %5568 = vst [vmem:[%s5555 + $0x91] sm:$0xff] %v5535
      %5569 = vst [vmem:[%s5555 + $0x99] sm:$0xff] %v5536
      %5570 = vst [vmem:[%s5555 + $0xa9] sm:$0xff] %v5537
      %5571 = vst [vmem:[%s5555 + $0xb1] sm:$0xff] %v5538
      %5572 = vst [vmem:[%s5555 + $0xc1] sm:$0xff] %v5539
      %5573 = vst [vmem:[%s5555 + $0xc9] sm:$0xff] %v5540
      %5574 = vst [vmem:[%s5555 + $0xd9] sm:$0xff] %v5541
      %5575 = vst [vmem:[%s5555 + $0xe1] sm:$0xff] %v5542
      %5576 = vst [vmem:[%s5555 + $0xf1] sm:$0xff] %v5543
      %5577 = vst [vmem:[%s5555 + $0xf9] sm:$0xff] %v5544
      %5578 = vst [vmem:[%s5555 + $0x109] sm:$0xff] %v5545
      %5579 = vst [vmem:[%s5555 + $0x111] sm:$0xff] %v5546
      %5580 = vst [vmem:[%s5555 + $0x121] sm:$0xff] %v5547
      %5581 = vst [vmem:[%s5555 + $0x129] sm:$0xff] %v5548
      %5582 = vst [vmem:[%s5555 + $0x139] sm:$0xff] %v5549
      %5583 = vst [vmem:[%s5555 + $0x141] sm:$0xff] %v5550
      %5584 = vst [vmem:[%s5555 + $0x151] sm:$0xff] %v5551
      %5585 = vst [vmem:[%s5555 + $0x159] sm:$0xff] %v5552
      %5586 = vst [vmem:[%s5555 + $0x169] sm:$0xff] %v5553
      %5587 = vst [vmem:[%s5555 + $0x171] sm:$0xff] %v5554
      %v5588 = vld [vmem:[#allocation3] sm:$0xff]
      %v5589 = vld [vmem:[#allocation3 + $0x8] sm:$0xff]
      %v5590 = vld [vmem:[#allocation3 + $0x18] sm:$0xff]
      %v5591 = vld [vmem:[#allocation3 + $0x20] sm:$0xff]
      %v5592 = vld [vmem:[#allocation3 + $0x30] sm:$0xff]
      %v5593 = vld [vmem:[#allocation3 + $0x38] sm:$0xff]
      %v5594 = vld [vmem:[#allocation3 + $0x48] sm:$0xff]
      %v5595 = vld [vmem:[#allocation3 + $0x50] sm:$0xff]
      %v5596 = vld [vmem:[#allocation3 + $0x60] sm:$0xff]
      %v5597 = vld [vmem:[#allocation3 + $0x68] sm:$0xff]
      %v5598 = vld [vmem:[#allocation3 + $0x78] sm:$0xff]
      %v5599 = vld [vmem:[#allocation3 + $0x80] sm:$0xff]
      %v5600 = vld [vmem:[#allocation3 + $0x90] sm:$0xff]
      %v5601 = vld [vmem:[#allocation3 + $0x98] sm:$0xff]
      %v5602 = vld [vmem:[#allocation3 + $0xa8] sm:$0xff]
      %v5603 = vld [vmem:[#allocation3 + $0xb0] sm:$0xff]
      %v5604 = vld [vmem:[#allocation3 + $0xc0] sm:$0xff]
      %v5605 = vld [vmem:[#allocation3 + $0xc8] sm:$0xff]
      %v5606 = vld [vmem:[#allocation3 + $0xd8] sm:$0xff]
      %v5607 = vld [vmem:[#allocation3 + $0xe0] sm:$0xff]
      %v5608 = vld [vmem:[#allocation3 + $0xf0] sm:$0xff]
      %v5609 = vld [vmem:[#allocation3 + $0xf8] sm:$0xff]
      %v5610 = vld [vmem:[#allocation3 + $0x108] sm:$0xff]
      %v5611 = vld [vmem:[#allocation3 + $0x110] sm:$0xff]
      %v5612 = vld [vmem:[#allocation3 + $0x120] sm:$0xff]
      %v5613 = vld [vmem:[#allocation3 + $0x128] sm:$0xff]
      %v5614 = vld [vmem:[#allocation3 + $0x138] sm:$0xff]
      %v5615 = vld [vmem:[#allocation3 + $0x140] sm:$0xff]
      %v5616 = vld [vmem:[#allocation3 + $0x150] sm:$0xff]
      %v5617 = vld [vmem:[#allocation3 + $0x158] sm:$0xff]
      %v5618 = vld [vmem:[#allocation3 + $0x168] sm:$0xff]
      %v5619 = vld [vmem:[#allocation3 + $0x170] sm:$0xff]
      %v5620 = vld [vmem:[%s5] sm:$0xff]
      %v5621 = vld [vmem:[%s5 + $0x8] sm:$0xff]
      %v5622 = vld [vmem:[%s5 + $0x10] sm:$0xff]
      %v5623 = vld [vmem:[%s5 + $0x18] sm:$0xff]
      %v5624 = vld [vmem:[%s5 + $0x20] sm:$0xff]
      %v5625 = vld [vmem:[%s5 + $0x28] sm:$0xff]
      %v5626 = vld [vmem:[%s5 + $0x30] sm:$0xff]
      %v5627 = vld [vmem:[%s5 + $0x38] sm:$0xff]
      %v5628 = vld [vmem:[%s5 + $0x40] sm:$0xff]
      %v5629 = vld [vmem:[%s5 + $0x48] sm:$0xff]
      %v5630 = vld [vmem:[%s5 + $0x50] sm:$0xff]
      %v5631 = vld [vmem:[%s5 + $0x58] sm:$0xff]
      %v5632 = vld [vmem:[%s5 + $0x60] sm:$0xff]
      %v5633 = vld [vmem:[%s5 + $0x68] sm:$0xff]
      %v5634 = vld [vmem:[%s5 + $0x70] sm:$0xff]
      %v5635 = vld [vmem:[%s5 + $0x78] sm:$0xff]
      %v5636 = vld [vmem:[#allocation3 + $0x1] sm:$0xff]
      %v5637 = vld [vmem:[#allocation3 + $0x9] sm:$0xff]
      %v5638 = vld [vmem:[#allocation3 + $0x19] sm:$0xff]
      %v5639 = vld [vmem:[#allocation3 + $0x21] sm:$0xff]
      %v5640 = vld [vmem:[#allocation3 + $0x31] sm:$0xff]
      %v5641 = vld [vmem:[#allocation3 + $0x39] sm:$0xff]
      %v5642 = vld [vmem:[#allocation3 + $0x49] sm:$0xff]
      %v5643 = vld [vmem:[#allocation3 + $0x51] sm:$0xff]
      %v5644 = vld [vmem:[#allocation3 + $0x61] sm:$0xff]
      %v5645 = vld [vmem:[#allocation3 + $0x69] sm:$0xff]
      %v5646 = vld [vmem:[#allocation3 + $0x79] sm:$0xff]
      %v5647 = vld [vmem:[#allocation3 + $0x81] sm:$0xff]
      %v5648 = vld [vmem:[#allocation3 + $0x91] sm:$0xff]
      %v5649 = vld [vmem:[#allocation3 + $0x99] sm:$0xff]
      %v5650 = vld [vmem:[#allocation3 + $0xa9] sm:$0xff]
      %v5651 = vld [vmem:[#allocation3 + $0xb1] sm:$0xff]
      %v5652 = vld [vmem:[#allocation3 + $0xc1] sm:$0xff]
      %v5653 = vld [vmem:[#allocation3 + $0xc9] sm:$0xff]
      %v5654 = vld [vmem:[#allocation3 + $0xd9] sm:$0xff]
      %v5655 = vld [vmem:[#allocation3 + $0xe1] sm:$0xff]
      %v5656 = vld [vmem:[#allocation3 + $0xf1] sm:$0xff]
      %v5657 = vld [vmem:[#allocation3 + $0xf9] sm:$0xff]
      %v5658 = vld [vmem:[#allocation3 + $0x109] sm:$0xff]
      %v5659 = vld [vmem:[#allocation3 + $0x111] sm:$0xff]
      %v5660 = vld [vmem:[#allocation3 + $0x121] sm:$0xff]
      %v5661 = vld [vmem:[#allocation3 + $0x129] sm:$0xff]
      %v5662 = vld [vmem:[#allocation3 + $0x139] sm:$0xff]
      %v5663 = vld [vmem:[#allocation3 + $0x141] sm:$0xff]
      %v5664 = vld [vmem:[#allocation3 + $0x151] sm:$0xff]
      %v5665 = vld [vmem:[#allocation3 + $0x159] sm:$0xff]
      %v5666 = vld [vmem:[#allocation3 + $0x169] sm:$0xff]
      %v5667 = vld [vmem:[#allocation3 + $0x171] sm:$0xff]
      %s5668 = scalar_lea.vmem %s5, 128
      %v5669 = vld [vmem:[%s5668] sm:$0xff]
      %v5670 = vld [vmem:[%s5668 + $0x8] sm:$0xff]
      %v5671 = vld [vmem:[%s5668 + $0x10] sm:$0xff]
      %v5672 = vld [vmem:[%s5668 + $0x18] sm:$0xff]
      %v5673 = vld [vmem:[%s5668 + $0x20] sm:$0xff]
      %v5674 = vld [vmem:[%s5668 + $0x28] sm:$0xff]
      %v5675 = vld [vmem:[%s5668 + $0x30] sm:$0xff]
      %v5676 = vld [vmem:[%s5668 + $0x38] sm:$0xff]
      %v5677 = vld [vmem:[%s5668 + $0x40] sm:$0xff]
      %v5678 = vld [vmem:[%s5668 + $0x48] sm:$0xff]
      %v5679 = vld [vmem:[%s5668 + $0x50] sm:$0xff]
      %v5680 = vld [vmem:[%s5668 + $0x58] sm:$0xff]
      %v5681 = vld [vmem:[%s5668 + $0x60] sm:$0xff]
      %v5682 = vld [vmem:[%s5668 + $0x68] sm:$0xff]
      %v5683 = vld [vmem:[%s5668 + $0x70] sm:$0xff]
      %v5684 = vld [vmem:[%s5668 + $0x78] sm:$0xff]
      %5685 = vmatpush.msra.mxu0 %v5684
      %5686 = vmatpush.msra.mxu0 %v5683
      %5687 = vmatpush.msra.mxu0 %v5682
      %5688 = vmatpush.msra.mxu0 %v5681
      %5689 = vmatpush.msra.mxu0 %v5680
      %5690 = vmatpush.msra.mxu0 %v5679
      %5691 = vmatpush.msra.mxu0 %v5678
      %5692 = vmatpush.msra.mxu0 %v5677
      %5693 = vmatpush.msra.mxu0 %v5676
      %5694 = vmatpush.msra.mxu0 %v5675
      %5695 = vmatpush.msra.mxu0 %v5674
      %5696 = vmatpush.msra.mxu0 %v5673
      %5697 = vmatpush.msra.mxu0 %v5672
      %5698 = vmatpush.msra.mxu0 %v5671
      %5699 = vmatpush.msra.mxu0 %v5670
      %5700 = vmatpush.msra.mxu0 %v5669
      %5701 = vmatmul.f32.gmra.mxu0 %v5636
      %v5702 = vpop.f32.mrf.mxu0
      %v5703 = vadd.f32 0.0, %v5702
      %5704 = vmatmul.f32.gmra.mxu0 %v5637
      %v5705 = vpop.f32.mrf.mxu0
      %v5706 = vadd.f32 0.0, %v5705
      %5707 = vmatmul.f32.gmra.mxu0 %v5638
      %v5708 = vpop.f32.mrf.mxu0
      %v5709 = vadd.f32 0.0, %v5708
      %5710 = vmatmul.f32.gmra.mxu0 %v5639
      %v5711 = vpop.f32.mrf.mxu0
      %v5712 = vadd.f32 0.0, %v5711
      %5713 = vmatmul.f32.gmra.mxu0 %v5640
      %v5714 = vpop.f32.mrf.mxu0
      %v5715 = vadd.f32 0.0, %v5714
      %5716 = vmatmul.f32.gmra.mxu0 %v5641
      %v5717 = vpop.f32.mrf.mxu0
      %v5718 = vadd.f32 0.0, %v5717
      %5719 = vmatmul.f32.gmra.mxu0 %v5642
      %v5720 = vpop.f32.mrf.mxu0
      %v5721 = vadd.f32 0.0, %v5720
      %5722 = vmatmul.f32.gmra.mxu0 %v5643
      %v5723 = vpop.f32.mrf.mxu0
      %v5724 = vadd.f32 0.0, %v5723
      %5725 = vmatmul.f32.gmra.mxu0 %v5644
      %v5726 = vpop.f32.mrf.mxu0
      %v5727 = vadd.f32 0.0, %v5726
      %5728 = vmatmul.f32.gmra.mxu0 %v5645
      %v5729 = vpop.f32.mrf.mxu0
      %v5730 = vadd.f32 0.0, %v5729
      %5731 = vmatmul.f32.gmra.mxu0 %v5646
      %v5732 = vpop.f32.mrf.mxu0
      %v5733 = vadd.f32 0.0, %v5732
      %5734 = vmatmul.f32.gmra.mxu0 %v5647
      %v5735 = vpop.f32.mrf.mxu0
      %v5736 = vadd.f32 0.0, %v5735
      %5737 = vmatmul.f32.gmra.mxu0 %v5648
      %v5738 = vpop.f32.mrf.mxu0
      %v5739 = vadd.f32 0.0, %v5738
      %5740 = vmatmul.f32.gmra.mxu0 %v5649
      %v5741 = vpop.f32.mrf.mxu0
      %v5742 = vadd.f32 0.0, %v5741
      %5743 = vmatmul.f32.gmra.mxu0 %v5650
      %v5744 = vpop.f32.mrf.mxu0
      %v5745 = vadd.f32 0.0, %v5744
      %5746 = vmatmul.f32.gmra.mxu0 %v5651
      %v5747 = vpop.f32.mrf.mxu0
      %v5748 = vadd.f32 0.0, %v5747
      %5749 = vmatmul.f32.gmra.mxu0 %v5652
      %v5750 = vpop.f32.mrf.mxu0
      %v5751 = vadd.f32 0.0, %v5750
      %5752 = vmatmul.f32.gmra.mxu0 %v5653
      %v5753 = vpop.f32.mrf.mxu0
      %v5754 = vadd.f32 0.0, %v5753
      %5755 = vmatmul.f32.gmra.mxu0 %v5654
      %v5756 = vpop.f32.mrf.mxu0
      %v5757 = vadd.f32 0.0, %v5756
      %5758 = vmatmul.f32.gmra.mxu0 %v5655
      %v5759 = vpop.f32.mrf.mxu0
      %v5760 = vadd.f32 0.0, %v5759
      %5761 = vmatmul.f32.gmra.mxu0 %v5656
      %v5762 = vpop.f32.mrf.mxu0
      %v5763 = vadd.f32 0.0, %v5762
      %5764 = vmatmul.f32.gmra.mxu0 %v5657
      %v5765 = vpop.f32.mrf.mxu0
      %v5766 = vadd.f32 0.0, %v5765
      %5767 = vmatmul.f32.gmra.mxu0 %v5658
      %v5768 = vpop.f32.mrf.mxu0
      %v5769 = vadd.f32 0.0, %v5768
      %5770 = vmatmul.f32.gmra.mxu0 %v5659
      %v5771 = vpop.f32.mrf.mxu0
      %v5772 = vadd.f32 0.0, %v5771
      %5773 = vmatmul.f32.gmra.mxu0 %v5660
      %v5774 = vpop.f32.mrf.mxu0
      %v5775 = vadd.f32 0.0, %v5774
      %5776 = vmatmul.f32.gmra.mxu0 %v5661
      %v5777 = vpop.f32.mrf.mxu0
      %v5778 = vadd.f32 0.0, %v5777
      %5779 = vmatmul.f32.gmra.mxu0 %v5662
      %v5780 = vpop.f32.mrf.mxu0
      %v5781 = vadd.f32 0.0, %v5780
      %5782 = vmatmul.f32.gmra.mxu0 %v5663
      %v5783 = vpop.f32.mrf.mxu0
      %v5784 = vadd.f32 0.0, %v5783
      %5785 = vmatmul.f32.gmra.mxu0 %v5664
      %v5786 = vpop.f32.mrf.mxu0
      %v5787 = vadd.f32 0.0, %v5786
      %5788 = vmatmul.f32.gmra.mxu0 %v5665
      %v5789 = vpop.f32.mrf.mxu0
      %v5790 = vadd.f32 0.0, %v5789
      %5791 = vmatmul.f32.gmra.mxu0 %v5666
      %v5792 = vpop.f32.mrf.mxu0
      %v5793 = vadd.f32 0.0, %v5792
      %5794 = vmatmul.f32.gmra.mxu0 %v5667
      %v5795 = vpop.f32.mrf.mxu0
      %v5796 = vadd.f32 0.0, %v5795
      %5797 = vdwg.mxu0
      %5798 = vmatpush.msra.mxu0 %v5635
      %5799 = vmatpush.msra.mxu0 %v5634
      %5800 = vmatpush.msra.mxu0 %v5633
      %5801 = vmatpush.msra.mxu0 %v5632
      %5802 = vmatpush.msra.mxu0 %v5631
      %5803 = vmatpush.msra.mxu0 %v5630
      %5804 = vmatpush.msra.mxu0 %v5629
      %5805 = vmatpush.msra.mxu0 %v5628
      %5806 = vmatpush.msra.mxu0 %v5627
      %5807 = vmatpush.msra.mxu0 %v5626
      %5808 = vmatpush.msra.mxu0 %v5625
      %5809 = vmatpush.msra.mxu0 %v5624
      %5810 = vmatpush.msra.mxu0 %v5623
      %5811 = vmatpush.msra.mxu0 %v5622
      %5812 = vmatpush.msra.mxu0 %v5621
      %5813 = vmatpush.msra.mxu0 %v5620
      %5814 = vmatmul.f32.gmra.mxu0 %v5588
      %v5815 = vpop.f32.mrf.mxu0
      %v5816 = vadd.f32 %v5703, %v5815
      %5817 = vmatmul.f32.gmra.mxu0 %v5589
      %v5818 = vpop.f32.mrf.mxu0
      %v5819 = vadd.f32 %v5706, %v5818
      %5820 = vmatmul.f32.gmra.mxu0 %v5590
      %v5821 = vpop.f32.mrf.mxu0
      %v5822 = vadd.f32 %v5709, %v5821
      %5823 = vmatmul.f32.gmra.mxu0 %v5591
      %v5824 = vpop.f32.mrf.mxu0
      %v5825 = vadd.f32 %v5712, %v5824
      %5826 = vmatmul.f32.gmra.mxu0 %v5592
      %v5827 = vpop.f32.mrf.mxu0
      %v5828 = vadd.f32 %v5715, %v5827
      %5829 = vmatmul.f32.gmra.mxu0 %v5593
      %v5830 = vpop.f32.mrf.mxu0
      %v5831 = vadd.f32 %v5718, %v5830
      %5832 = vmatmul.f32.gmra.mxu0 %v5594
      %v5833 = vpop.f32.mrf.mxu0
      %v5834 = vadd.f32 %v5721, %v5833
      %5835 = vmatmul.f32.gmra.mxu0 %v5595
      %v5836 = vpop.f32.mrf.mxu0
      %v5837 = vadd.f32 %v5724, %v5836
      %5838 = vmatmul.f32.gmra.mxu0 %v5596
      %v5839 = vpop.f32.mrf.mxu0
      %v5840 = vadd.f32 %v5727, %v5839
      %5841 = vmatmul.f32.gmra.mxu0 %v5597
      %v5842 = vpop.f32.mrf.mxu0
      %v5843 = vadd.f32 %v5730, %v5842
      %5844 = vmatmul.f32.gmra.mxu0 %v5598
      %v5845 = vpop.f32.mrf.mxu0
      %v5846 = vadd.f32 %v5733, %v5845
      %5847 = vmatmul.f32.gmra.mxu0 %v5599
      %v5848 = vpop.f32.mrf.mxu0
      %v5849 = vadd.f32 %v5736, %v5848
      %5850 = vmatmul.f32.gmra.mxu0 %v5600
      %v5851 = vpop.f32.mrf.mxu0
      %v5852 = vadd.f32 %v5739, %v5851
      %5853 = vmatmul.f32.gmra.mxu0 %v5601
      %v5854 = vpop.f32.mrf.mxu0
      %v5855 = vadd.f32 %v5742, %v5854
      %5856 = vmatmul.f32.gmra.mxu0 %v5602
      %v5857 = vpop.f32.mrf.mxu0
      %v5858 = vadd.f32 %v5745, %v5857
      %5859 = vmatmul.f32.gmra.mxu0 %v5603
      %v5860 = vpop.f32.mrf.mxu0
      %v5861 = vadd.f32 %v5748, %v5860
      %5862 = vmatmul.f32.gmra.mxu0 %v5604
      %v5863 = vpop.f32.mrf.mxu0
      %v5864 = vadd.f32 %v5751, %v5863
      %5865 = vmatmul.f32.gmra.mxu0 %v5605
      %v5866 = vpop.f32.mrf.mxu0
      %v5867 = vadd.f32 %v5754, %v5866
      %5868 = vmatmul.f32.gmra.mxu0 %v5606
      %v5869 = vpop.f32.mrf.mxu0
      %v5870 = vadd.f32 %v5757, %v5869
      %5871 = vmatmul.f32.gmra.mxu0 %v5607
      %v5872 = vpop.f32.mrf.mxu0
      %v5873 = vadd.f32 %v5760, %v5872
      %5874 = vmatmul.f32.gmra.mxu0 %v5608
      %v5875 = vpop.f32.mrf.mxu0
      %v5876 = vadd.f32 %v5763, %v5875
      %5877 = vmatmul.f32.gmra.mxu0 %v5609
      %v5878 = vpop.f32.mrf.mxu0
      %v5879 = vadd.f32 %v5766, %v5878
      %5880 = vmatmul.f32.gmra.mxu0 %v5610
      %v5881 = vpop.f32.mrf.mxu0
      %v5882 = vadd.f32 %v5769, %v5881
      %5883 = vmatmul.f32.gmra.mxu0 %v5611
      %v5884 = vpop.f32.mrf.mxu0
      %v5885 = vadd.f32 %v5772, %v5884
      %5886 = vmatmul.f32.gmra.mxu0 %v5612
      %v5887 = vpop.f32.mrf.mxu0
      %v5888 = vadd.f32 %v5775, %v5887
      %5889 = vmatmul.f32.gmra.mxu0 %v5613
      %v5890 = vpop.f32.mrf.mxu0
      %v5891 = vadd.f32 %v5778, %v5890
      %5892 = vmatmul.f32.gmra.mxu0 %v5614
      %v5893 = vpop.f32.mrf.mxu0
      %v5894 = vadd.f32 %v5781, %v5893
      %5895 = vmatmul.f32.gmra.mxu0 %v5615
      %v5896 = vpop.f32.mrf.mxu0
      %v5897 = vadd.f32 %v5784, %v5896
      %5898 = vmatmul.f32.gmra.mxu0 %v5616
      %v5899 = vpop.f32.mrf.mxu0
      %v5900 = vadd.f32 %v5787, %v5899
      %5901 = vmatmul.f32.gmra.mxu0 %v5617
      %v5902 = vpop.f32.mrf.mxu0
      %v5903 = vadd.f32 %v5790, %v5902
      %5904 = vmatmul.f32.gmra.mxu0 %v5618
      %v5905 = vpop.f32.mrf.mxu0
      %v5906 = vadd.f32 %v5793, %v5905
      %5907 = vmatmul.f32.gmra.mxu0 %v5619
      %v5908 = vpop.f32.mrf.mxu0
      %v5909 = vadd.f32 %v5796, %v5908
      %5910 = vdwg.mxu0
      %v5911 = vld [vmem:[#allocation3 + $0x2] sm:$0xff]
      %v5912 = vld [vmem:[#allocation3 + $0xa] sm:$0xff]
      %v5913 = vld [vmem:[#allocation3 + $0x1a] sm:$0xff]
      %v5914 = vld [vmem:[#allocation3 + $0x22] sm:$0xff]
      %v5915 = vld [vmem:[#allocation3 + $0x32] sm:$0xff]
      %v5916 = vld [vmem:[#allocation3 + $0x3a] sm:$0xff]
      %v5917 = vld [vmem:[#allocation3 + $0x4a] sm:$0xff]
      %v5918 = vld [vmem:[#allocation3 + $0x52] sm:$0xff]
      %v5919 = vld [vmem:[#allocation3 + $0x62] sm:$0xff]
      %v5920 = vld [vmem:[#allocation3 + $0x6a] sm:$0xff]
      %v5921 = vld [vmem:[#allocation3 + $0x7a] sm:$0xff]
      %v5922 = vld [vmem:[#allocation3 + $0x82] sm:$0xff]
      %v5923 = vld [vmem:[#allocation3 + $0x92] sm:$0xff]
      %v5924 = vld [vmem:[#allocation3 + $0x9a] sm:$0xff]
      %v5925 = vld [vmem:[#allocation3 + $0xaa] sm:$0xff]
      %v5926 = vld [vmem:[#allocation3 + $0xb2] sm:$0xff]
      %v5927 = vld [vmem:[#allocation3 + $0xc2] sm:$0xff]
      %v5928 = vld [vmem:[#allocation3 + $0xca] sm:$0xff]
      %v5929 = vld [vmem:[#allocation3 + $0xda] sm:$0xff]
      %v5930 = vld [vmem:[#allocation3 + $0xe2] sm:$0xff]
      %v5931 = vld [vmem:[#allocation3 + $0xf2] sm:$0xff]
      %v5932 = vld [vmem:[#allocation3 + $0xfa] sm:$0xff]
      %v5933 = vld [vmem:[#allocation3 + $0x10a] sm:$0xff]
      %v5934 = vld [vmem:[#allocation3 + $0x112] sm:$0xff]
      %v5935 = vld [vmem:[#allocation3 + $0x122] sm:$0xff]
      %v5936 = vld [vmem:[#allocation3 + $0x12a] sm:$0xff]
      %v5937 = vld [vmem:[#allocation3 + $0x13a] sm:$0xff]
      %v5938 = vld [vmem:[#allocation3 + $0x142] sm:$0xff]
      %v5939 = vld [vmem:[#allocation3 + $0x152] sm:$0xff]
      %v5940 = vld [vmem:[#allocation3 + $0x15a] sm:$0xff]
      %v5941 = vld [vmem:[#allocation3 + $0x16a] sm:$0xff]
      %v5942 = vld [vmem:[#allocation3 + $0x172] sm:$0xff]
      %s5943 = scalar_lea.vmem %s5, 256
      %v5944 = vld [vmem:[%s5943] sm:$0xff]
      %v5945 = vld [vmem:[%s5943 + $0x8] sm:$0xff]
      %v5946 = vld [vmem:[%s5943 + $0x10] sm:$0xff]
      %v5947 = vld [vmem:[%s5943 + $0x18] sm:$0xff]
      %v5948 = vld [vmem:[%s5943 + $0x20] sm:$0xff]
      %v5949 = vld [vmem:[%s5943 + $0x28] sm:$0xff]
      %v5950 = vld [vmem:[%s5943 + $0x30] sm:$0xff]
      %v5951 = vld [vmem:[%s5943 + $0x38] sm:$0xff]
      %v5952 = vld [vmem:[%s5943 + $0x40] sm:$0xff]
      %v5953 = vld [vmem:[%s5943 + $0x48] sm:$0xff]
      %v5954 = vld [vmem:[%s5943 + $0x50] sm:$0xff]
      %v5955 = vld [vmem:[%s5943 + $0x58] sm:$0xff]
      %v5956 = vld [vmem:[%s5943 + $0x60] sm:$0xff]
      %v5957 = vld [vmem:[%s5943 + $0x68] sm:$0xff]
      %v5958 = vld [vmem:[%s5943 + $0x70] sm:$0xff]
      %v5959 = vld [vmem:[%s5943 + $0x78] sm:$0xff]
      %5960 = vmatpush.msra.mxu0 %v5959
      %5961 = vmatpush.msra.mxu0 %v5958
      %5962 = vmatpush.msra.mxu0 %v5957
      %5963 = vmatpush.msra.mxu0 %v5956
      %5964 = vmatpush.msra.mxu0 %v5955
      %5965 = vmatpush.msra.mxu0 %v5954
      %5966 = vmatpush.msra.mxu0 %v5953
      %5967 = vmatpush.msra.mxu0 %v5952
      %5968 = vmatpush.msra.mxu0 %v5951
      %5969 = vmatpush.msra.mxu0 %v5950
      %5970 = vmatpush.msra.mxu0 %v5949
      %5971 = vmatpush.msra.mxu0 %v5948
      %5972 = vmatpush.msra.mxu0 %v5947
      %5973 = vmatpush.msra.mxu0 %v5946
      %5974 = vmatpush.msra.mxu0 %v5945
      %5975 = vmatpush.msra.mxu0 %v5944
      %5976 = vmatmul.f32.gmra.mxu0 %v5911
      %v5977 = vpop.f32.mrf.mxu0
      %v5978 = vadd.f32 0.0, %v5977
      %5979 = vmatmul.f32.gmra.mxu0 %v5912
      %v5980 = vpop.f32.mrf.mxu0
      %v5981 = vadd.f32 0.0, %v5980
      %5982 = vmatmul.f32.gmra.mxu0 %v5913
      %v5983 = vpop.f32.mrf.mxu0
      %v5984 = vadd.f32 0.0, %v5983
      %5985 = vmatmul.f32.gmra.mxu0 %v5914
      %v5986 = vpop.f32.mrf.mxu0
      %v5987 = vadd.f32 0.0, %v5986
      %5988 = vmatmul.f32.gmra.mxu0 %v5915
      %v5989 = vpop.f32.mrf.mxu0
      %v5990 = vadd.f32 0.0, %v5989
      %5991 = vmatmul.f32.gmra.mxu0 %v5916
      %v5992 = vpop.f32.mrf.mxu0
      %v5993 = vadd.f32 0.0, %v5992
      %5994 = vmatmul.f32.gmra.mxu0 %v5917
      %v5995 = vpop.f32.mrf.mxu0
      %v5996 = vadd.f32 0.0, %v5995
      %5997 = vmatmul.f32.gmra.mxu0 %v5918
      %v5998 = vpop.f32.mrf.mxu0
      %v5999 = vadd.f32 0.0, %v5998
      %6000 = vmatmul.f32.gmra.mxu0 %v5919
      %v6001 = vpop.f32.mrf.mxu0
      %v6002 = vadd.f32 0.0, %v6001
      %6003 = vmatmul.f32.gmra.mxu0 %v5920
      %v6004 = vpop.f32.mrf.mxu0
      %v6005 = vadd.f32 0.0, %v6004
      %6006 = vmatmul.f32.gmra.mxu0 %v5921
      %v6007 = vpop.f32.mrf.mxu0
      %v6008 = vadd.f32 0.0, %v6007
      %6009 = vmatmul.f32.gmra.mxu0 %v5922
      %v6010 = vpop.f32.mrf.mxu0
      %v6011 = vadd.f32 0.0, %v6010
      %6012 = vmatmul.f32.gmra.mxu0 %v5923
      %v6013 = vpop.f32.mrf.mxu0
      %v6014 = vadd.f32 0.0, %v6013
      %6015 = vmatmul.f32.gmra.mxu0 %v5924
      %v6016 = vpop.f32.mrf.mxu0
      %v6017 = vadd.f32 0.0, %v6016
      %6018 = vmatmul.f32.gmra.mxu0 %v5925
      %v6019 = vpop.f32.mrf.mxu0
      %v6020 = vadd.f32 0.0, %v6019
      %6021 = vmatmul.f32.gmra.mxu0 %v5926
      %v6022 = vpop.f32.mrf.mxu0
      %v6023 = vadd.f32 0.0, %v6022
      %6024 = vmatmul.f32.gmra.mxu0 %v5927
      %v6025 = vpop.f32.mrf.mxu0
      %v6026 = vadd.f32 0.0, %v6025
      %6027 = vmatmul.f32.gmra.mxu0 %v5928
      %v6028 = vpop.f32.mrf.mxu0
      %v6029 = vadd.f32 0.0, %v6028
      %6030 = vmatmul.f32.gmra.mxu0 %v5929
      %v6031 = vpop.f32.mrf.mxu0
      %v6032 = vadd.f32 0.0, %v6031
      %6033 = vmatmul.f32.gmra.mxu0 %v5930
      %v6034 = vpop.f32.mrf.mxu0
      %v6035 = vadd.f32 0.0, %v6034
      %6036 = vmatmul.f32.gmra.mxu0 %v5931
      %v6037 = vpop.f32.mrf.mxu0
      %v6038 = vadd.f32 0.0, %v6037
      %6039 = vmatmul.f32.gmra.mxu0 %v5932
      %v6040 = vpop.f32.mrf.mxu0
      %v6041 = vadd.f32 0.0, %v6040
      %6042 = vmatmul.f32.gmra.mxu0 %v5933
      %v6043 = vpop.f32.mrf.mxu0
      %v6044 = vadd.f32 0.0, %v6043
      %6045 = vmatmul.f32.gmra.mxu0 %v5934
      %v6046 = vpop.f32.mrf.mxu0
      %v6047 = vadd.f32 0.0, %v6046
      %6048 = vmatmul.f32.gmra.mxu0 %v5935
      %v6049 = vpop.f32.mrf.mxu0
      %v6050 = vadd.f32 0.0, %v6049
      %6051 = vmatmul.f32.gmra.mxu0 %v5936
      %v6052 = vpop.f32.mrf.mxu0
      %v6053 = vadd.f32 0.0, %v6052
      %6054 = vmatmul.f32.gmra.mxu0 %v5937
      %v6055 = vpop.f32.mrf.mxu0
      %v6056 = vadd.f32 0.0, %v6055
      %6057 = vmatmul.f32.gmra.mxu0 %v5938
      %v6058 = vpop.f32.mrf.mxu0
      %v6059 = vadd.f32 0.0, %v6058
      %6060 = vmatmul.f32.gmra.mxu0 %v5939
      %v6061 = vpop.f32.mrf.mxu0
      %v6062 = vadd.f32 0.0, %v6061
      %6063 = vmatmul.f32.gmra.mxu0 %v5940
      %v6064 = vpop.f32.mrf.mxu0
      %v6065 = vadd.f32 0.0, %v6064
      %6066 = vmatmul.f32.gmra.mxu0 %v5941
      %v6067 = vpop.f32.mrf.mxu0
      %v6068 = vadd.f32 0.0, %v6067
      %6069 = vmatmul.f32.gmra.mxu0 %v5942
      %v6070 = vpop.f32.mrf.mxu0
      %v6071 = vadd.f32 0.0, %v6070
      %6072 = vdwg.mxu0
      %v6073 = vadd.f32 %v5816, %v5978
      %v6074 = vadd.f32 %v5819, %v5981
      %v6075 = vadd.f32 %v5822, %v5984
      %v6076 = vadd.f32 %v5825, %v5987
      %v6077 = vadd.f32 %v5828, %v5990
      %v6078 = vadd.f32 %v5831, %v5993
      %v6079 = vadd.f32 %v5834, %v5996
      %v6080 = vadd.f32 %v5837, %v5999
      %v6081 = vadd.f32 %v5840, %v6002
      %v6082 = vadd.f32 %v5843, %v6005
      %v6083 = vadd.f32 %v5846, %v6008
      %v6084 = vadd.f32 %v5849, %v6011
      %v6085 = vadd.f32 %v5852, %v6014
      %v6086 = vadd.f32 %v5855, %v6017
      %v6087 = vadd.f32 %v5858, %v6020
      %v6088 = vadd.f32 %v5861, %v6023
      %v6089 = vadd.f32 %v5864, %v6026
      %v6090 = vadd.f32 %v5867, %v6029
      %v6091 = vadd.f32 %v5870, %v6032
      %v6092 = vadd.f32 %v5873, %v6035
      %v6093 = vadd.f32 %v5876, %v6038
      %v6094 = vadd.f32 %v5879, %v6041
      %v6095 = vadd.f32 %v5882, %v6044
      %v6096 = vadd.f32 %v5885, %v6047
      %v6097 = vadd.f32 %v5888, %v6050
      %v6098 = vadd.f32 %v5891, %v6053
      %v6099 = vadd.f32 %v5894, %v6056
      %v6100 = vadd.f32 %v5897, %v6059
      %v6101 = vadd.f32 %v5900, %v6062
      %v6102 = vadd.f32 %v5903, %v6065
      %v6103 = vadd.f32 %v5906, %v6068
      %v6104 = vadd.f32 %v5909, %v6071
      %v6105 = vld [vmem:[%s5555] sm:$0xff]
      %v6106 = vld [vmem:[%s5555 + $0x8] sm:$0xff]
      %v6107 = vld [vmem:[%s5555 + $0x18] sm:$0xff]
      %v6108 = vld [vmem:[%s5555 + $0x20] sm:$0xff]
      %v6109 = vld [vmem:[%s5555 + $0x30] sm:$0xff]
      %v6110 = vld [vmem:[%s5555 + $0x38] sm:$0xff]
      %v6111 = vld [vmem:[%s5555 + $0x48] sm:$0xff]
      %v6112 = vld [vmem:[%s5555 + $0x50] sm:$0xff]
      %v6113 = vld [vmem:[%s5555 + $0x60] sm:$0xff]
      %v6114 = vld [vmem:[%s5555 + $0x68] sm:$0xff]
      %v6115 = vld [vmem:[%s5555 + $0x78] sm:$0xff]
      %v6116 = vld [vmem:[%s5555 + $0x80] sm:$0xff]
      %v6117 = vld [vmem:[%s5555 + $0x90] sm:$0xff]
      %v6118 = vld [vmem:[%s5555 + $0x98] sm:$0xff]
      %v6119 = vld [vmem:[%s5555 + $0xa8] sm:$0xff]
      %v6120 = vld [vmem:[%s5555 + $0xb0] sm:$0xff]
      %v6121 = vld [vmem:[%s5555 + $0xc0] sm:$0xff]
      %v6122 = vld [vmem:[%s5555 + $0xc8] sm:$0xff]
      %v6123 = vld [vmem:[%s5555 + $0xd8] sm:$0xff]
      %v6124 = vld [vmem:[%s5555 + $0xe0] sm:$0xff]
      %v6125 = vld [vmem:[%s5555 + $0xf0] sm:$0xff]
      %v6126 = vld [vmem:[%s5555 + $0xf8] sm:$0xff]
      %v6127 = vld [vmem:[%s5555 + $0x108] sm:$0xff]
      %v6128 = vld [vmem:[%s5555 + $0x110] sm:$0xff]
      %v6129 = vld [vmem:[%s5555 + $0x120] sm:$0xff]
      %v6130 = vld [vmem:[%s5555 + $0x128] sm:$0xff]
      %v6131 = vld [vmem:[%s5555 + $0x138] sm:$0xff]
      %v6132 = vld [vmem:[%s5555 + $0x140] sm:$0xff]
      %v6133 = vld [vmem:[%s5555 + $0x150] sm:$0xff]
      %v6134 = vld [vmem:[%s5555 + $0x158] sm:$0xff]
      %v6135 = vld [vmem:[%s5555 + $0x168] sm:$0xff]
      %v6136 = vld [vmem:[%s5555 + $0x170] sm:$0xff]
      %s6137 = scalar_lea.vmem %s5, 384
      %v6138 = vld [vmem:[%s6137] sm:$0xff]
      %v6139 = vld [vmem:[%s6137 + $0x8] sm:$0xff]
      %v6140 = vld [vmem:[%s6137 + $0x10] sm:$0xff]
      %v6141 = vld [vmem:[%s6137 + $0x18] sm:$0xff]
      %v6142 = vld [vmem:[%s6137 + $0x20] sm:$0xff]
      %v6143 = vld [vmem:[%s6137 + $0x28] sm:$0xff]
      %v6144 = vld [vmem:[%s6137 + $0x30] sm:$0xff]
      %v6145 = vld [vmem:[%s6137 + $0x38] sm:$0xff]
      %v6146 = vld [vmem:[%s6137 + $0x40] sm:$0xff]
      %v6147 = vld [vmem:[%s6137 + $0x48] sm:$0xff]
      %v6148 = vld [vmem:[%s6137 + $0x50] sm:$0xff]
      %v6149 = vld [vmem:[%s6137 + $0x58] sm:$0xff]
      %v6150 = vld [vmem:[%s6137 + $0x60] sm:$0xff]
      %v6151 = vld [vmem:[%s6137 + $0x68] sm:$0xff]
      %v6152 = vld [vmem:[%s6137 + $0x70] sm:$0xff]
      %v6153 = vld [vmem:[%s6137 + $0x78] sm:$0xff]
      %6154 = vmatpush.msra.mxu0 %v6153
      %6155 = vmatpush.msra.mxu0 %v6152
      %6156 = vmatpush.msra.mxu0 %v6151
      %6157 = vmatpush.msra.mxu0 %v6150
      %6158 = vmatpush.msra.mxu0 %v6149
      %6159 = vmatpush.msra.mxu0 %v6148
      %6160 = vmatpush.msra.mxu0 %v6147
      %6161 = vmatpush.msra.mxu0 %v6146
      %6162 = vmatpush.msra.mxu0 %v6145
      %6163 = vmatpush.msra.mxu0 %v6144
      %6164 = vmatpush.msra.mxu0 %v6143
      %6165 = vmatpush.msra.mxu0 %v6142
      %6166 = vmatpush.msra.mxu0 %v6141
      %6167 = vmatpush.msra.mxu0 %v6140
      %6168 = vmatpush.msra.mxu0 %v6139
      %6169 = vmatpush.msra.mxu0 %v6138
      %6170 = vmatmul.f32.gmra.mxu0 %v6105
      %v6171 = vpop.f32.mrf.mxu0
      %v6172 = vadd.f32 0.0, %v6171
      %6173 = vmatmul.f32.gmra.mxu0 %v6106
      %v6174 = vpop.f32.mrf.mxu0
      %v6175 = vadd.f32 0.0, %v6174
      %6176 = vmatmul.f32.gmra.mxu0 %v6107
      %v6177 = vpop.f32.mrf.mxu0
      %v6178 = vadd.f32 0.0, %v6177
      %6179 = vmatmul.f32.gmra.mxu0 %v6108
      %v6180 = vpop.f32.mrf.mxu0
      %v6181 = vadd.f32 0.0, %v6180
      %6182 = vmatmul.f32.gmra.mxu0 %v6109
      %v6183 = vpop.f32.mrf.mxu0
      %v6184 = vadd.f32 0.0, %v6183
      %6185 = vmatmul.f32.gmra.mxu0 %v6110
      %v6186 = vpop.f32.mrf.mxu0
      %v6187 = vadd.f32 0.0, %v6186
      %6188 = vmatmul.f32.gmra.mxu0 %v6111
      %v6189 = vpop.f32.mrf.mxu0
      %v6190 = vadd.f32 0.0, %v6189
      %6191 = vmatmul.f32.gmra.mxu0 %v6112
      %v6192 = vpop.f32.mrf.mxu0
      %v6193 = vadd.f32 0.0, %v6192
      %6194 = vmatmul.f32.gmra.mxu0 %v6113
      %v6195 = vpop.f32.mrf.mxu0
      %v6196 = vadd.f32 0.0, %v6195
      %6197 = vmatmul.f32.gmra.mxu0 %v6114
      %v6198 = vpop.f32.mrf.mxu0
      %v6199 = vadd.f32 0.0, %v6198
      %6200 = vmatmul.f32.gmra.mxu0 %v6115
      %v6201 = vpop.f32.mrf.mxu0
      %v6202 = vadd.f32 0.0, %v6201
      %6203 = vmatmul.f32.gmra.mxu0 %v6116
      %v6204 = vpop.f32.mrf.mxu0
      %v6205 = vadd.f32 0.0, %v6204
      %6206 = vmatmul.f32.gmra.mxu0 %v6117
      %v6207 = vpop.f32.mrf.mxu0
      %v6208 = vadd.f32 0.0, %v6207
      %6209 = vmatmul.f32.gmra.mxu0 %v6118
      %v6210 = vpop.f32.mrf.mxu0
      %v6211 = vadd.f32 0.0, %v6210
      %6212 = vmatmul.f32.gmra.mxu0 %v6119
      %v6213 = vpop.f32.mrf.mxu0
      %v6214 = vadd.f32 0.0, %v6213
      %6215 = vmatmul.f32.gmra.mxu0 %v6120
      %v6216 = vpop.f32.mrf.mxu0
      %v6217 = vadd.f32 0.0, %v6216
      %6218 = vmatmul.f32.gmra.mxu0 %v6121
      %v6219 = vpop.f32.mrf.mxu0
      %v6220 = vadd.f32 0.0, %v6219
      %6221 = vmatmul.f32.gmra.mxu0 %v6122
      %v6222 = vpop.f32.mrf.mxu0
      %v6223 = vadd.f32 0.0, %v6222
      %6224 = vmatmul.f32.gmra.mxu0 %v6123
      %v6225 = vpop.f32.mrf.mxu0
      %v6226 = vadd.f32 0.0, %v6225
      %6227 = vmatmul.f32.gmra.mxu0 %v6124
      %v6228 = vpop.f32.mrf.mxu0
      %v6229 = vadd.f32 0.0, %v6228
      %6230 = vmatmul.f32.gmra.mxu0 %v6125
      %v6231 = vpop.f32.mrf.mxu0
      %v6232 = vadd.f32 0.0, %v6231
      %6233 = vmatmul.f32.gmra.mxu0 %v6126
      %v6234 = vpop.f32.mrf.mxu0
      %v6235 = vadd.f32 0.0, %v6234
      %6236 = vmatmul.f32.gmra.mxu0 %v6127
      %v6237 = vpop.f32.mrf.mxu0
      %v6238 = vadd.f32 0.0, %v6237
      %6239 = vmatmul.f32.gmra.mxu0 %v6128
      %v6240 = vpop.f32.mrf.mxu0
      %v6241 = vadd.f32 0.0, %v6240
      %6242 = vmatmul.f32.gmra.mxu0 %v6129
      %v6243 = vpop.f32.mrf.mxu0
      %v6244 = vadd.f32 0.0, %v6243
      %6245 = vmatmul.f32.gmra.mxu0 %v6130
      %v6246 = vpop.f32.mrf.mxu0
      %v6247 = vadd.f32 0.0, %v6246
      %6248 = vmatmul.f32.gmra.mxu0 %v6131
      %v6249 = vpop.f32.mrf.mxu0
      %v6250 = vadd.f32 0.0, %v6249
      %6251 = vmatmul.f32.gmra.mxu0 %v6132
      %v6252 = vpop.f32.mrf.mxu0
      %v6253 = vadd.f32 0.0, %v6252
      %6254 = vmatmul.f32.gmra.mxu0 %v6133
      %v6255 = vpop.f32.mrf.mxu0
      %v6256 = vadd.f32 0.0, %v6255
      %6257 = vmatmul.f32.gmra.mxu0 %v6134
      %v6258 = vpop.f32.mrf.mxu0
      %v6259 = vadd.f32 0.0, %v6258
      %6260 = vmatmul.f32.gmra.mxu0 %v6135
      %v6261 = vpop.f32.mrf.mxu0
      %v6262 = vadd.f32 0.0, %v6261
      %6263 = vmatmul.f32.gmra.mxu0 %v6136
      %v6264 = vpop.f32.mrf.mxu0
      %v6265 = vadd.f32 0.0, %v6264
      %6266 = vdwg.mxu0
      %v6267 = vadd.f32 %v6073, %v6172
      %v6268 = vadd.f32 %v6074, %v6175
      %v6269 = vadd.f32 %v6075, %v6178
      %v6270 = vadd.f32 %v6076, %v6181
      %v6271 = vadd.f32 %v6077, %v6184
      %v6272 = vadd.f32 %v6078, %v6187
      %v6273 = vadd.f32 %v6079, %v6190
      %v6274 = vadd.f32 %v6080, %v6193
      %v6275 = vadd.f32 %v6081, %v6196
      %v6276 = vadd.f32 %v6082, %v6199
      %v6277 = vadd.f32 %v6083, %v6202
      %v6278 = vadd.f32 %v6084, %v6205
      %v6279 = vadd.f32 %v6085, %v6208
      %v6280 = vadd.f32 %v6086, %v6211
      %v6281 = vadd.f32 %v6087, %v6214
      %v6282 = vadd.f32 %v6088, %v6217
      %v6283 = vadd.f32 %v6089, %v6220
      %v6284 = vadd.f32 %v6090, %v6223
      %v6285 = vadd.f32 %v6091, %v6226
      %v6286 = vadd.f32 %v6092, %v6229
      %v6287 = vadd.f32 %v6093, %v6232
      %v6288 = vadd.f32 %v6094, %v6235
      %v6289 = vadd.f32 %v6095, %v6238
      %v6290 = vadd.f32 %v6096, %v6241
      %v6291 = vadd.f32 %v6097, %v6244
      %v6292 = vadd.f32 %v6098, %v6247
      %v6293 = vadd.f32 %v6099, %v6250
      %v6294 = vadd.f32 %v6100, %v6253
      %v6295 = vadd.f32 %v6101, %v6256
      %v6296 = vadd.f32 %v6102, %v6259
      %v6297 = vadd.f32 %v6103, %v6262
      %v6298 = vadd.f32 %v6104, %v6265
      %v6299 = vld [vmem:[%s5555 + $0x1] sm:$0xff]
      %v6300 = vld [vmem:[%s5555 + $0x9] sm:$0xff]
      %v6301 = vld [vmem:[%s5555 + $0x19] sm:$0xff]
      %v6302 = vld [vmem:[%s5555 + $0x21] sm:$0xff]
      %v6303 = vld [vmem:[%s5555 + $0x31] sm:$0xff]
      %v6304 = vld [vmem:[%s5555 + $0x39] sm:$0xff]
      %v6305 = vld [vmem:[%s5555 + $0x49] sm:$0xff]
      %v6306 = vld [vmem:[%s5555 + $0x51] sm:$0xff]
      %v6307 = vld [vmem:[%s5555 + $0x61] sm:$0xff]
      %v6308 = vld [vmem:[%s5555 + $0x69] sm:$0xff]
      %v6309 = vld [vmem:[%s5555 + $0x79] sm:$0xff]
      %v6310 = vld [vmem:[%s5555 + $0x81] sm:$0xff]
      %v6311 = vld [vmem:[%s5555 + $0x91] sm:$0xff]
      %v6312 = vld [vmem:[%s5555 + $0x99] sm:$0xff]
      %v6313 = vld [vmem:[%s5555 + $0xa9] sm:$0xff]
      %v6314 = vld [vmem:[%s5555 + $0xb1] sm:$0xff]
      %v6315 = vld [vmem:[%s5555 + $0xc1] sm:$0xff]
      %v6316 = vld [vmem:[%s5555 + $0xc9] sm:$0xff]
      %v6317 = vld [vmem:[%s5555 + $0xd9] sm:$0xff]
      %v6318 = vld [vmem:[%s5555 + $0xe1] sm:$0xff]
      %v6319 = vld [vmem:[%s5555 + $0xf1] sm:$0xff]
      %v6320 = vld [vmem:[%s5555 + $0xf9] sm:$0xff]
      %v6321 = vld [vmem:[%s5555 + $0x109] sm:$0xff]
      %v6322 = vld [vmem:[%s5555 + $0x111] sm:$0xff]
      %v6323 = vld [vmem:[%s5555 + $0x121] sm:$0xff]
      %v6324 = vld [vmem:[%s5555 + $0x129] sm:$0xff]
      %v6325 = vld [vmem:[%s5555 + $0x139] sm:$0xff]
      %v6326 = vld [vmem:[%s5555 + $0x141] sm:$0xff]
      %v6327 = vld [vmem:[%s5555 + $0x151] sm:$0xff]
      %v6328 = vld [vmem:[%s5555 + $0x159] sm:$0xff]
      %v6329 = vld [vmem:[%s5555 + $0x169] sm:$0xff]
      %v6330 = vld [vmem:[%s5555 + $0x171] sm:$0xff]
      %s6331 = scalar_lea.vmem %s5, 512
      %v6332 = vld [vmem:[%s6331] sm:$0xff]
      %v6333 = vld [vmem:[%s6331 + $0x8] sm:$0xff]
      %v6334 = vld [vmem:[%s6331 + $0x10] sm:$0xff]
      %v6335 = vld [vmem:[%s6331 + $0x18] sm:$0xff]
      %v6336 = vld [vmem:[%s6331 + $0x20] sm:$0xff]
      %v6337 = vld [vmem:[%s6331 + $0x28] sm:$0xff]
      %v6338 = vld [vmem:[%s6331 + $0x30] sm:$0xff]
      %v6339 = vld [vmem:[%s6331 + $0x38] sm:$0xff]
      %v6340 = vld [vmem:[%s6331 + $0x40] sm:$0xff]
      %v6341 = vld [vmem:[%s6331 + $0x48] sm:$0xff]
      %v6342 = vld [vmem:[%s6331 + $0x50] sm:$0xff]
      %v6343 = vld [vmem:[%s6331 + $0x58] sm:$0xff]
      %v6344 = vld [vmem:[%s6331 + $0x60] sm:$0xff]
      %v6345 = vld [vmem:[%s6331 + $0x68] sm:$0xff]
      %v6346 = vld [vmem:[%s6331 + $0x70] sm:$0xff]
      %v6347 = vld [vmem:[%s6331 + $0x78] sm:$0xff]
      %6348 = vmatpush.msra.mxu0 %v6347
      %6349 = vmatpush.msra.mxu0 %v6346
      %6350 = vmatpush.msra.mxu0 %v6345
      %6351 = vmatpush.msra.mxu0 %v6344
      %6352 = vmatpush.msra.mxu0 %v6343
      %6353 = vmatpush.msra.mxu0 %v6342
      %6354 = vmatpush.msra.mxu0 %v6341
      %6355 = vmatpush.msra.mxu0 %v6340
      %6356 = vmatpush.msra.mxu0 %v6339
      %6357 = vmatpush.msra.mxu0 %v6338
      %6358 = vmatpush.msra.mxu0 %v6337
      %6359 = vmatpush.msra.mxu0 %v6336
      %6360 = vmatpush.msra.mxu0 %v6335
      %6361 = vmatpush.msra.mxu0 %v6334
      %6362 = vmatpush.msra.mxu0 %v6333
      %6363 = vmatpush.msra.mxu0 %v6332
      %6364 = vmatmul.f32.gmra.mxu0 %v6299
      %v6365 = vpop.f32.mrf.mxu0
      %v6366 = vadd.f32 0.0, %v6365
      %6367 = vmatmul.f32.gmra.mxu0 %v6300
      %v6368 = vpop.f32.mrf.mxu0
      %v6369 = vadd.f32 0.0, %v6368
      %6370 = vmatmul.f32.gmra.mxu0 %v6301
      %v6371 = vpop.f32.mrf.mxu0
      %v6372 = vadd.f32 0.0, %v6371
      %6373 = vmatmul.f32.gmra.mxu0 %v6302
      %v6374 = vpop.f32.mrf.mxu0
      %v6375 = vadd.f32 0.0, %v6374
      %6376 = vmatmul.f32.gmra.mxu0 %v6303
      %v6377 = vpop.f32.mrf.mxu0
      %v6378 = vadd.f32 0.0, %v6377
      %6379 = vmatmul.f32.gmra.mxu0 %v6304
      %v6380 = vpop.f32.mrf.mxu0
      %v6381 = vadd.f32 0.0, %v6380
      %6382 = vmatmul.f32.gmra.mxu0 %v6305
      %v6383 = vpop.f32.mrf.mxu0
      %v6384 = vadd.f32 0.0, %v6383
      %6385 = vmatmul.f32.gmra.mxu0 %v6306
      %v6386 = vpop.f32.mrf.mxu0
      %v6387 = vadd.f32 0.0, %v6386
      %6388 = vmatmul.f32.gmra.mxu0 %v6307
      %v6389 = vpop.f32.mrf.mxu0
      %v6390 = vadd.f32 0.0, %v6389
      %6391 = vmatmul.f32.gmra.mxu0 %v6308
      %v6392 = vpop.f32.mrf.mxu0
      %v6393 = vadd.f32 0.0, %v6392
      %6394 = vmatmul.f32.gmra.mxu0 %v6309
      %v6395 = vpop.f32.mrf.mxu0
      %v6396 = vadd.f32 0.0, %v6395
      %6397 = vmatmul.f32.gmra.mxu0 %v6310
      %v6398 = vpop.f32.mrf.mxu0
      %v6399 = vadd.f32 0.0, %v6398
      %6400 = vmatmul.f32.gmra.mxu0 %v6311
      %v6401 = vpop.f32.mrf.mxu0
      %v6402 = vadd.f32 0.0, %v6401
      %6403 = vmatmul.f32.gmra.mxu0 %v6312
      %v6404 = vpop.f32.mrf.mxu0
      %v6405 = vadd.f32 0.0, %v6404
      %6406 = vmatmul.f32.gmra.mxu0 %v6313
      %v6407 = vpop.f32.mrf.mxu0
      %v6408 = vadd.f32 0.0, %v6407
      %6409 = vmatmul.f32.gmra.mxu0 %v6314
      %v6410 = vpop.f32.mrf.mxu0
      %v6411 = vadd.f32 0.0, %v6410
      %6412 = vmatmul.f32.gmra.mxu0 %v6315
      %v6413 = vpop.f32.mrf.mxu0
      %v6414 = vadd.f32 0.0, %v6413
      %6415 = vmatmul.f32.gmra.mxu0 %v6316
      %v6416 = vpop.f32.mrf.mxu0
      %v6417 = vadd.f32 0.0, %v6416
      %6418 = vmatmul.f32.gmra.mxu0 %v6317
      %v6419 = vpop.f32.mrf.mxu0
      %v6420 = vadd.f32 0.0, %v6419
      %6421 = vmatmul.f32.gmra.mxu0 %v6318
      %v6422 = vpop.f32.mrf.mxu0
      %v6423 = vadd.f32 0.0, %v6422
      %6424 = vmatmul.f32.gmra.mxu0 %v6319
      %v6425 = vpop.f32.mrf.mxu0
      %v6426 = vadd.f32 0.0, %v6425
      %6427 = vmatmul.f32.gmra.mxu0 %v6320
      %v6428 = vpop.f32.mrf.mxu0
      %v6429 = vadd.f32 0.0, %v6428
      %6430 = vmatmul.f32.gmra.mxu0 %v6321
      %v6431 = vpop.f32.mrf.mxu0
      %v6432 = vadd.f32 0.0, %v6431
      %6433 = vmatmul.f32.gmra.mxu0 %v6322
      %v6434 = vpop.f32.mrf.mxu0
      %v6435 = vadd.f32 0.0, %v6434
      %6436 = vmatmul.f32.gmra.mxu0 %v6323
      %v6437 = vpop.f32.mrf.mxu0
      %v6438 = vadd.f32 0.0, %v6437
      %6439 = vmatmul.f32.gmra.mxu0 %v6324
      %v6440 = vpop.f32.mrf.mxu0
      %v6441 = vadd.f32 0.0, %v6440
      %6442 = vmatmul.f32.gmra.mxu0 %v6325
      %v6443 = vpop.f32.mrf.mxu0
      %v6444 = vadd.f32 0.0, %v6443
      %6445 = vmatmul.f32.gmra.mxu0 %v6326
      %v6446 = vpop.f32.mrf.mxu0
      %v6447 = vadd.f32 0.0, %v6446
      %6448 = vmatmul.f32.gmra.mxu0 %v6327
      %v6449 = vpop.f32.mrf.mxu0
      %v6450 = vadd.f32 0.0, %v6449
      %6451 = vmatmul.f32.gmra.mxu0 %v6328
      %v6452 = vpop.f32.mrf.mxu0
      %v6453 = vadd.f32 0.0, %v6452
      %6454 = vmatmul.f32.gmra.mxu0 %v6329
      %v6455 = vpop.f32.mrf.mxu0
      %v6456 = vadd.f32 0.0, %v6455
      %6457 = vmatmul.f32.gmra.mxu0 %v6330
      %v6458 = vpop.f32.mrf.mxu0
      %v6459 = vadd.f32 0.0, %v6458
      %6460 = vdwg.mxu0
      %v6461 = vadd.f32 %v6267, %v6366
      %v6462 = vadd.f32 %v6268, %v6369
      %v6463 = vadd.f32 %v6269, %v6372
      %v6464 = vadd.f32 %v6270, %v6375
      %v6465 = vadd.f32 %v6271, %v6378
      %v6466 = vadd.f32 %v6272, %v6381
      %v6467 = vadd.f32 %v6273, %v6384
      %v6468 = vadd.f32 %v6274, %v6387
      %v6469 = vadd.f32 %v6275, %v6390
      %v6470 = vadd.f32 %v6276, %v6393
      %v6471 = vadd.f32 %v6277, %v6396
      %v6472 = vadd.f32 %v6278, %v6399
      %v6473 = vadd.f32 %v6279, %v6402
      %v6474 = vadd.f32 %v6280, %v6405
      %v6475 = vadd.f32 %v6281, %v6408
      %v6476 = vadd.f32 %v6282, %v6411
      %v6477 = vadd.f32 %v6283, %v6414
      %v6478 = vadd.f32 %v6284, %v6417
      %v6479 = vadd.f32 %v6285, %v6420
      %v6480 = vadd.f32 %v6286, %v6423
      %v6481 = vadd.f32 %v6287, %v6426
      %v6482 = vadd.f32 %v6288, %v6429
      %v6483 = vadd.f32 %v6289, %v6432
      %v6484 = vadd.f32 %v6290, %v6435
      %v6485 = vadd.f32 %v6291, %v6438
      %v6486 = vadd.f32 %v6292, %v6441
      %v6487 = vadd.f32 %v6293, %v6444
      %v6488 = vadd.f32 %v6294, %v6447
      %v6489 = vadd.f32 %v6295, %v6450
      %v6490 = vadd.f32 %v6296, %v6453
      %v6491 = vadd.f32 %v6297, %v6456
      %v6492 = vadd.f32 %v6298, %v6459
      %v6493 = vld [vmem:[%s5555 + $0x2] sm:$0xff]
      %v6494 = vld [vmem:[%s5555 + $0xa] sm:$0xff]
      %v6495 = vld [vmem:[%s5555 + $0x1a] sm:$0xff]
      %v6496 = vld [vmem:[%s5555 + $0x22] sm:$0xff]
      %v6497 = vld [vmem:[%s5555 + $0x32] sm:$0xff]
      %v6498 = vld [vmem:[%s5555 + $0x3a] sm:$0xff]
      %v6499 = vld [vmem:[%s5555 + $0x4a] sm:$0xff]
      %v6500 = vld [vmem:[%s5555 + $0x52] sm:$0xff]
      %v6501 = vld [vmem:[%s5555 + $0x62] sm:$0xff]
      %v6502 = vld [vmem:[%s5555 + $0x6a] sm:$0xff]
      %v6503 = vld [vmem:[%s5555 + $0x7a] sm:$0xff]
      %v6504 = vld [vmem:[%s5555 + $0x82] sm:$0xff]
      %v6505 = vld [vmem:[%s5555 + $0x92] sm:$0xff]
      %v6506 = vld [vmem:[%s5555 + $0x9a] sm:$0xff]
      %v6507 = vld [vmem:[%s5555 + $0xaa] sm:$0xff]
      %v6508 = vld [vmem:[%s5555 + $0xb2] sm:$0xff]
      %v6509 = vld [vmem:[%s5555 + $0xc2] sm:$0xff]
      %v6510 = vld [vmem:[%s5555 + $0xca] sm:$0xff]
      %v6511 = vld [vmem:[%s5555 + $0xda] sm:$0xff]
      %v6512 = vld [vmem:[%s5555 + $0xe2] sm:$0xff]
      %v6513 = vld [vmem:[%s5555 + $0xf2] sm:$0xff]
      %v6514 = vld [vmem:[%s5555 + $0xfa] sm:$0xff]
      %v6515 = vld [vmem:[%s5555 + $0x10a] sm:$0xff]
      %v6516 = vld [vmem:[%s5555 + $0x112] sm:$0xff]
      %v6517 = vld [vmem:[%s5555 + $0x122] sm:$0xff]
      %v6518 = vld [vmem:[%s5555 + $0x12a] sm:$0xff]
      %v6519 = vld [vmem:[%s5555 + $0x13a] sm:$0xff]
      %v6520 = vld [vmem:[%s5555 + $0x142] sm:$0xff]
      %v6521 = vld [vmem:[%s5555 + $0x152] sm:$0xff]
      %v6522 = vld [vmem:[%s5555 + $0x15a] sm:$0xff]
      %v6523 = vld [vmem:[%s5555 + $0x16a] sm:$0xff]
      %v6524 = vld [vmem:[%s5555 + $0x172] sm:$0xff]
      %s6525 = scalar_lea.vmem %s5, 640
      %v6526 = vld [vmem:[%s6525] sm:$0xff]
      %v6527 = vld [vmem:[%s6525 + $0x8] sm:$0xff]
      %v6528 = vld [vmem:[%s6525 + $0x10] sm:$0xff]
      %v6529 = vld [vmem:[%s6525 + $0x18] sm:$0xff]
      %v6530 = vld [vmem:[%s6525 + $0x20] sm:$0xff]
      %v6531 = vld [vmem:[%s6525 + $0x28] sm:$0xff]
      %v6532 = vld [vmem:[%s6525 + $0x30] sm:$0xff]
      %v6533 = vld [vmem:[%s6525 + $0x38] sm:$0xff]
      %v6534 = vld [vmem:[%s6525 + $0x40] sm:$0xff]
      %v6535 = vld [vmem:[%s6525 + $0x48] sm:$0xff]
      %v6536 = vld [vmem:[%s6525 + $0x50] sm:$0xff]
      %v6537 = vld [vmem:[%s6525 + $0x58] sm:$0xff]
      %v6538 = vld [vmem:[%s6525 + $0x60] sm:$0xff]
      %v6539 = vld [vmem:[%s6525 + $0x68] sm:$0xff]
      %v6540 = vld [vmem:[%s6525 + $0x70] sm:$0xff]
      %v6541 = vld [vmem:[%s6525 + $0x78] sm:$0xff]
      %6542 = vmatpush.msra.mxu0 %v6541
      %6543 = vmatpush.msra.mxu0 %v6540
      %6544 = vmatpush.msra.mxu0 %v6539
      %6545 = vmatpush.msra.mxu0 %v6538
      %6546 = vmatpush.msra.mxu0 %v6537
      %6547 = vmatpush.msra.mxu0 %v6536
      %6548 = vmatpush.msra.mxu0 %v6535
      %6549 = vmatpush.msra.mxu0 %v6534
      %6550 = vmatpush.msra.mxu0 %v6533
      %6551 = vmatpush.msra.mxu0 %v6532
      %6552 = vmatpush.msra.mxu0 %v6531
      %6553 = vmatpush.msra.mxu0 %v6530
      %6554 = vmatpush.msra.mxu0 %v6529
      %6555 = vmatpush.msra.mxu0 %v6528
      %6556 = vmatpush.msra.mxu0 %v6527
      %6557 = vmatpush.msra.mxu0 %v6526
      %6558 = vmatmul.f32.gmra.mxu0 %v6493
      %v6559 = vpop.f32.mrf.mxu0
      %v6560 = vadd.f32 0.0, %v6559
      %6561 = vmatmul.f32.gmra.mxu0 %v6494
      %v6562 = vpop.f32.mrf.mxu0
      %v6563 = vadd.f32 0.0, %v6562
      %6564 = vmatmul.f32.gmra.mxu0 %v6495
      %v6565 = vpop.f32.mrf.mxu0
      %v6566 = vadd.f32 0.0, %v6565
      %6567 = vmatmul.f32.gmra.mxu0 %v6496
      %v6568 = vpop.f32.mrf.mxu0
      %v6569 = vadd.f32 0.0, %v6568
      %6570 = vmatmul.f32.gmra.mxu0 %v6497
      %v6571 = vpop.f32.mrf.mxu0
      %v6572 = vadd.f32 0.0, %v6571
      %6573 = vmatmul.f32.gmra.mxu0 %v6498
      %v6574 = vpop.f32.mrf.mxu0
      %v6575 = vadd.f32 0.0, %v6574
      %6576 = vmatmul.f32.gmra.mxu0 %v6499
      %v6577 = vpop.f32.mrf.mxu0
      %v6578 = vadd.f32 0.0, %v6577
      %6579 = vmatmul.f32.gmra.mxu0 %v6500
      %v6580 = vpop.f32.mrf.mxu0
      %v6581 = vadd.f32 0.0, %v6580
      %6582 = vmatmul.f32.gmra.mxu0 %v6501
      %v6583 = vpop.f32.mrf.mxu0
      %v6584 = vadd.f32 0.0, %v6583
      %6585 = vmatmul.f32.gmra.mxu0 %v6502
      %v6586 = vpop.f32.mrf.mxu0
      %v6587 = vadd.f32 0.0, %v6586
      %6588 = vmatmul.f32.gmra.mxu0 %v6503
      %v6589 = vpop.f32.mrf.mxu0
      %v6590 = vadd.f32 0.0, %v6589
      %6591 = vmatmul.f32.gmra.mxu0 %v6504
      %v6592 = vpop.f32.mrf.mxu0
      %v6593 = vadd.f32 0.0, %v6592
      %6594 = vmatmul.f32.gmra.mxu0 %v6505
      %v6595 = vpop.f32.mrf.mxu0
      %v6596 = vadd.f32 0.0, %v6595
      %6597 = vmatmul.f32.gmra.mxu0 %v6506
      %v6598 = vpop.f32.mrf.mxu0
      %v6599 = vadd.f32 0.0, %v6598
      %6600 = vmatmul.f32.gmra.mxu0 %v6507
      %v6601 = vpop.f32.mrf.mxu0
      %v6602 = vadd.f32 0.0, %v6601
      %6603 = vmatmul.f32.gmra.mxu0 %v6508
      %v6604 = vpop.f32.mrf.mxu0
      %v6605 = vadd.f32 0.0, %v6604
      %6606 = vmatmul.f32.gmra.mxu0 %v6509
      %v6607 = vpop.f32.mrf.mxu0
      %v6608 = vadd.f32 0.0, %v6607
      %6609 = vmatmul.f32.gmra.mxu0 %v6510
      %v6610 = vpop.f32.mrf.mxu0
      %v6611 = vadd.f32 0.0, %v6610
      %6612 = vmatmul.f32.gmra.mxu0 %v6511
      %v6613 = vpop.f32.mrf.mxu0
      %v6614 = vadd.f32 0.0, %v6613
      %6615 = vmatmul.f32.gmra.mxu0 %v6512
      %v6616 = vpop.f32.mrf.mxu0
      %v6617 = vadd.f32 0.0, %v6616
      %6618 = vmatmul.f32.gmra.mxu0 %v6513
      %v6619 = vpop.f32.mrf.mxu0
      %v6620 = vadd.f32 0.0, %v6619
      %6621 = vmatmul.f32.gmra.mxu0 %v6514
      %v6622 = vpop.f32.mrf.mxu0
      %v6623 = vadd.f32 0.0, %v6622
      %6624 = vmatmul.f32.gmra.mxu0 %v6515
      %v6625 = vpop.f32.mrf.mxu0
      %v6626 = vadd.f32 0.0, %v6625
      %6627 = vmatmul.f32.gmra.mxu0 %v6516
      %v6628 = vpop.f32.mrf.mxu0
      %v6629 = vadd.f32 0.0, %v6628
      %6630 = vmatmul.f32.gmra.mxu0 %v6517
      %v6631 = vpop.f32.mrf.mxu0
      %v6632 = vadd.f32 0.0, %v6631
      %6633 = vmatmul.f32.gmra.mxu0 %v6518
      %v6634 = vpop.f32.mrf.mxu0
      %v6635 = vadd.f32 0.0, %v6634
      %6636 = vmatmul.f32.gmra.mxu0 %v6519
      %v6637 = vpop.f32.mrf.mxu0
      %v6638 = vadd.f32 0.0, %v6637
      %6639 = vmatmul.f32.gmra.mxu0 %v6520
      %v6640 = vpop.f32.mrf.mxu0
      %v6641 = vadd.f32 0.0, %v6640
      %6642 = vmatmul.f32.gmra.mxu0 %v6521
      %v6643 = vpop.f32.mrf.mxu0
      %v6644 = vadd.f32 0.0, %v6643
      %6645 = vmatmul.f32.gmra.mxu0 %v6522
      %v6646 = vpop.f32.mrf.mxu0
      %v6647 = vadd.f32 0.0, %v6646
      %6648 = vmatmul.f32.gmra.mxu0 %v6523
      %v6649 = vpop.f32.mrf.mxu0
      %v6650 = vadd.f32 0.0, %v6649
      %6651 = vmatmul.f32.gmra.mxu0 %v6524
      %v6652 = vpop.f32.mrf.mxu0
      %v6653 = vadd.f32 0.0, %v6652
      %6654 = vdwg.mxu0
      %v6655 = vadd.f32 %v6461, %v6560
      %v6656 = vadd.f32 %v6462, %v6563
      %v6657 = vadd.f32 %v6463, %v6566
      %v6658 = vadd.f32 %v6464, %v6569
      %v6659 = vadd.f32 %v6465, %v6572
      %v6660 = vadd.f32 %v6466, %v6575
      %v6661 = vadd.f32 %v6467, %v6578
      %v6662 = vadd.f32 %v6468, %v6581
      %v6663 = vadd.f32 %v6469, %v6584
      %v6664 = vadd.f32 %v6470, %v6587
      %v6665 = vadd.f32 %v6471, %v6590
      %v6666 = vadd.f32 %v6472, %v6593
      %v6667 = vadd.f32 %v6473, %v6596
      %v6668 = vadd.f32 %v6474, %v6599
      %v6669 = vadd.f32 %v6475, %v6602
      %v6670 = vadd.f32 %v6476, %v6605
      %v6671 = vadd.f32 %v6477, %v6608
      %v6672 = vadd.f32 %v6478, %v6611
      %v6673 = vadd.f32 %v6479, %v6614
      %v6674 = vadd.f32 %v6480, %v6617
      %v6675 = vadd.f32 %v6481, %v6620
      %v6676 = vadd.f32 %v6482, %v6623
      %v6677 = vadd.f32 %v6483, %v6626
      %v6678 = vadd.f32 %v6484, %v6629
      %v6679 = vadd.f32 %v6485, %v6632
      %v6680 = vadd.f32 %v6486, %v6635
      %v6681 = vadd.f32 %v6487, %v6638
      %v6682 = vadd.f32 %v6488, %v6641
      %v6683 = vadd.f32 %v6489, %v6644
      %v6684 = vadd.f32 %v6490, %v6647
      %v6685 = vadd.f32 %v6491, %v6650
      %v6686 = vadd.f32 %v6492, %v6653
      %s6687 = scalar_lea.vmem [#allocation3], 48
      %v6688 = vld [vmem:[%s6687] sm:$0xff]
      %v6689 = vld [vmem:[%s6687 + $0x8] sm:$0xff]
      %v6690 = vld [vmem:[%s6687 + $0x18] sm:$0xff]
      %v6691 = vld [vmem:[%s6687 + $0x20] sm:$0xff]
      %v6692 = vld [vmem:[%s6687 + $0x30] sm:$0xff]
      %v6693 = vld [vmem:[%s6687 + $0x38] sm:$0xff]
      %v6694 = vld [vmem:[%s6687 + $0x48] sm:$0xff]
      %v6695 = vld [vmem:[%s6687 + $0x50] sm:$0xff]
      %v6696 = vld [vmem:[%s6687 + $0x60] sm:$0xff]
      %v6697 = vld [vmem:[%s6687 + $0x68] sm:$0xff]
      %v6698 = vld [vmem:[%s6687 + $0x78] sm:$0xff]
      %v6699 = vld [vmem:[%s6687 + $0x80] sm:$0xff]
      %v6700 = vld [vmem:[%s6687 + $0x90] sm:$0xff]
      %v6701 = vld [vmem:[%s6687 + $0x98] sm:$0xff]
      %v6702 = vld [vmem:[%s6687 + $0xa8] sm:$0xff]
      %v6703 = vld [vmem:[%s6687 + $0xb0] sm:$0xff]
      %v6704 = vld [vmem:[%s6687 + $0xc0] sm:$0xff]
      %v6705 = vld [vmem:[%s6687 + $0xc8] sm:$0xff]
      %v6706 = vld [vmem:[%s6687 + $0xd8] sm:$0xff]
      %v6707 = vld [vmem:[%s6687 + $0xe0] sm:$0xff]
      %v6708 = vld [vmem:[%s6687 + $0xf0] sm:$0xff]
      %v6709 = vld [vmem:[%s6687 + $0xf8] sm:$0xff]
      %v6710 = vld [vmem:[%s6687 + $0x108] sm:$0xff]
      %v6711 = vld [vmem:[%s6687 + $0x110] sm:$0xff]
      %v6712 = vld [vmem:[%s6687 + $0x120] sm:$0xff]
      %v6713 = vld [vmem:[%s6687 + $0x128] sm:$0xff]
      %v6714 = vld [vmem:[%s6687 + $0x138] sm:$0xff]
      %v6715 = vld [vmem:[%s6687 + $0x140] sm:$0xff]
      %v6716 = vld [vmem:[%s6687 + $0x150] sm:$0xff]
      %v6717 = vld [vmem:[%s6687 + $0x158] sm:$0xff]
      %v6718 = vld [vmem:[%s6687 + $0x168] sm:$0xff]
      %v6719 = vld [vmem:[%s6687 + $0x170] sm:$0xff]
      %s6720 = scalar_lea.vmem %s5, 768
      %v6721 = vld [vmem:[%s6720] sm:$0xff]
      %v6722 = vld [vmem:[%s6720 + $0x8] sm:$0xff]
      %v6723 = vld [vmem:[%s6720 + $0x10] sm:$0xff]
      %v6724 = vld [vmem:[%s6720 + $0x18] sm:$0xff]
      %v6725 = vld [vmem:[%s6720 + $0x20] sm:$0xff]
      %v6726 = vld [vmem:[%s6720 + $0x28] sm:$0xff]
      %v6727 = vld [vmem:[%s6720 + $0x30] sm:$0xff]
      %v6728 = vld [vmem:[%s6720 + $0x38] sm:$0xff]
      %v6729 = vld [vmem:[%s6720 + $0x40] sm:$0xff]
      %v6730 = vld [vmem:[%s6720 + $0x48] sm:$0xff]
      %v6731 = vld [vmem:[%s6720 + $0x50] sm:$0xff]
      %v6732 = vld [vmem:[%s6720 + $0x58] sm:$0xff]
      %v6733 = vld [vmem:[%s6720 + $0x60] sm:$0xff]
      %v6734 = vld [vmem:[%s6720 + $0x68] sm:$0xff]
      %v6735 = vld [vmem:[%s6720 + $0x70] sm:$0xff]
      %v6736 = vld [vmem:[%s6720 + $0x78] sm:$0xff]
      %6737 = vmatpush.msra.mxu0 %v6736
      %6738 = vmatpush.msra.mxu0 %v6735
      %6739 = vmatpush.msra.mxu0 %v6734
      %6740 = vmatpush.msra.mxu0 %v6733
      %6741 = vmatpush.msra.mxu0 %v6732
      %6742 = vmatpush.msra.mxu0 %v6731
      %6743 = vmatpush.msra.mxu0 %v6730
      %6744 = vmatpush.msra.mxu0 %v6729
      %6745 = vmatpush.msra.mxu0 %v6728
      %6746 = vmatpush.msra.mxu0 %v6727
      %6747 = vmatpush.msra.mxu0 %v6726
      %6748 = vmatpush.msra.mxu0 %v6725
      %6749 = vmatpush.msra.mxu0 %v6724
      %6750 = vmatpush.msra.mxu0 %v6723
      %6751 = vmatpush.msra.mxu0 %v6722
      %6752 = vmatpush.msra.mxu0 %v6721
      %6753 = vmatmul.f32.gmra.mxu0 %v6688
      %v6754 = vpop.f32.mrf.mxu0
      %v6755 = vadd.f32 0.0, %v6754
      %6756 = vmatmul.f32.gmra.mxu0 %v6689
      %v6757 = vpop.f32.mrf.mxu0
      %v6758 = vadd.f32 0.0, %v6757
      %6759 = vmatmul.f32.gmra.mxu0 %v6690
      %v6760 = vpop.f32.mrf.mxu0
      %v6761 = vadd.f32 0.0, %v6760
      %6762 = vmatmul.f32.gmra.mxu0 %v6691
      %v6763 = vpop.f32.mrf.mxu0
      %v6764 = vadd.f32 0.0, %v6763
      %6765 = vmatmul.f32.gmra.mxu0 %v6692
      %v6766 = vpop.f32.mrf.mxu0
      %v6767 = vadd.f32 0.0, %v6766
      %6768 = vmatmul.f32.gmra.mxu0 %v6693
      %v6769 = vpop.f32.mrf.mxu0
      %v6770 = vadd.f32 0.0, %v6769
      %6771 = vmatmul.f32.gmra.mxu0 %v6694
      %v6772 = vpop.f32.mrf.mxu0
      %v6773 = vadd.f32 0.0, %v6772
      %6774 = vmatmul.f32.gmra.mxu0 %v6695
      %v6775 = vpop.f32.mrf.mxu0
      %v6776 = vadd.f32 0.0, %v6775
      %6777 = vmatmul.f32.gmra.mxu0 %v6696
      %v6778 = vpop.f32.mrf.mxu0
      %v6779 = vadd.f32 0.0, %v6778
      %6780 = vmatmul.f32.gmra.mxu0 %v6697
      %v6781 = vpop.f32.mrf.mxu0
      %v6782 = vadd.f32 0.0, %v6781
      %6783 = vmatmul.f32.gmra.mxu0 %v6698
      %v6784 = vpop.f32.mrf.mxu0
      %v6785 = vadd.f32 0.0, %v6784
      %6786 = vmatmul.f32.gmra.mxu0 %v6699
      %v6787 = vpop.f32.mrf.mxu0
      %v6788 = vadd.f32 0.0, %v6787
      %6789 = vmatmul.f32.gmra.mxu0 %v6700
      %v6790 = vpop.f32.mrf.mxu0
      %v6791 = vadd.f32 0.0, %v6790
      %6792 = vmatmul.f32.gmra.mxu0 %v6701
      %v6793 = vpop.f32.mrf.mxu0
      %v6794 = vadd.f32 0.0, %v6793
      %6795 = vmatmul.f32.gmra.mxu0 %v6702
      %v6796 = vpop.f32.mrf.mxu0
      %v6797 = vadd.f32 0.0, %v6796
      %6798 = vmatmul.f32.gmra.mxu0 %v6703
      %v6799 = vpop.f32.mrf.mxu0
      %v6800 = vadd.f32 0.0, %v6799
      %6801 = vmatmul.f32.gmra.mxu0 %v6704
      %v6802 = vpop.f32.mrf.mxu0
      %v6803 = vadd.f32 0.0, %v6802
      %6804 = vmatmul.f32.gmra.mxu0 %v6705
      %v6805 = vpop.f32.mrf.mxu0
      %v6806 = vadd.f32 0.0, %v6805
      %6807 = vmatmul.f32.gmra.mxu0 %v6706
      %v6808 = vpop.f32.mrf.mxu0
      %v6809 = vadd.f32 0.0, %v6808
      %6810 = vmatmul.f32.gmra.mxu0 %v6707
      %v6811 = vpop.f32.mrf.mxu0
      %v6812 = vadd.f32 0.0, %v6811
      %6813 = vmatmul.f32.gmra.mxu0 %v6708
      %v6814 = vpop.f32.mrf.mxu0
      %v6815 = vadd.f32 0.0, %v6814
      %6816 = vmatmul.f32.gmra.mxu0 %v6709
      %v6817 = vpop.f32.mrf.mxu0
      %v6818 = vadd.f32 0.0, %v6817
      %6819 = vmatmul.f32.gmra.mxu0 %v6710
      %v6820 = vpop.f32.mrf.mxu0
      %v6821 = vadd.f32 0.0, %v6820
      %6822 = vmatmul.f32.gmra.mxu0 %v6711
      %v6823 = vpop.f32.mrf.mxu0
      %v6824 = vadd.f32 0.0, %v6823
      %6825 = vmatmul.f32.gmra.mxu0 %v6712
      %v6826 = vpop.f32.mrf.mxu0
      %v6827 = vadd.f32 0.0, %v6826
      %6828 = vmatmul.f32.gmra.mxu0 %v6713
      %v6829 = vpop.f32.mrf.mxu0
      %v6830 = vadd.f32 0.0, %v6829
      %6831 = vmatmul.f32.gmra.mxu0 %v6714
      %v6832 = vpop.f32.mrf.mxu0
      %v6833 = vadd.f32 0.0, %v6832
      %6834 = vmatmul.f32.gmra.mxu0 %v6715
      %v6835 = vpop.f32.mrf.mxu0
      %v6836 = vadd.f32 0.0, %v6835
      %6837 = vmatmul.f32.gmra.mxu0 %v6716
      %v6838 = vpop.f32.mrf.mxu0
      %v6839 = vadd.f32 0.0, %v6838
      %6840 = vmatmul.f32.gmra.mxu0 %v6717
      %v6841 = vpop.f32.mrf.mxu0
      %v6842 = vadd.f32 0.0, %v6841
      %6843 = vmatmul.f32.gmra.mxu0 %v6718
      %v6844 = vpop.f32.mrf.mxu0
      %v6845 = vadd.f32 0.0, %v6844
      %6846 = vmatmul.f32.gmra.mxu0 %v6719
      %v6847 = vpop.f32.mrf.mxu0
      %v6848 = vadd.f32 0.0, %v6847
      %6849 = vdwg.mxu0
      %v6850 = vadd.f32 %v6655, %v6755
      %v6851 = vadd.f32 %v6656, %v6758
      %v6852 = vadd.f32 %v6657, %v6761
      %v6853 = vadd.f32 %v6658, %v6764
      %v6854 = vadd.f32 %v6659, %v6767
      %v6855 = vadd.f32 %v6660, %v6770
      %v6856 = vadd.f32 %v6661, %v6773
      %v6857 = vadd.f32 %v6662, %v6776
      %v6858 = vadd.f32 %v6663, %v6779
      %v6859 = vadd.f32 %v6664, %v6782
      %v6860 = vadd.f32 %v6665, %v6785
      %v6861 = vadd.f32 %v6666, %v6788
      %v6862 = vadd.f32 %v6667, %v6791
      %v6863 = vadd.f32 %v6668, %v6794
      %v6864 = vadd.f32 %v6669, %v6797
      %v6865 = vadd.f32 %v6670, %v6800
      %v6866 = vadd.f32 %v6671, %v6803
      %v6867 = vadd.f32 %v6672, %v6806
      %v6868 = vadd.f32 %v6673, %v6809
      %v6869 = vadd.f32 %v6674, %v6812
      %v6870 = vadd.f32 %v6675, %v6815
      %v6871 = vadd.f32 %v6676, %v6818
      %v6872 = vadd.f32 %v6677, %v6821
      %v6873 = vadd.f32 %v6678, %v6824
      %v6874 = vadd.f32 %v6679, %v6827
      %v6875 = vadd.f32 %v6680, %v6830
      %v6876 = vadd.f32 %v6681, %v6833
      %v6877 = vadd.f32 %v6682, %v6836
      %v6878 = vadd.f32 %v6683, %v6839
      %v6879 = vadd.f32 %v6684, %v6842
      %v6880 = vadd.f32 %v6685, %v6845
      %v6881 = vadd.f32 %v6686, %v6848
      %v6882 = vld [vmem:[%s6687 + $0x1] sm:$0xff]
      %v6883 = vld [vmem:[%s6687 + $0x9] sm:$0xff]
      %v6884 = vld [vmem:[%s6687 + $0x19] sm:$0xff]
      %v6885 = vld [vmem:[%s6687 + $0x21] sm:$0xff]
      %v6886 = vld [vmem:[%s6687 + $0x31] sm:$0xff]
      %v6887 = vld [vmem:[%s6687 + $0x39] sm:$0xff]
      %v6888 = vld [vmem:[%s6687 + $0x49] sm:$0xff]
      %v6889 = vld [vmem:[%s6687 + $0x51] sm:$0xff]
      %v6890 = vld [vmem:[%s6687 + $0x61] sm:$0xff]
      %v6891 = vld [vmem:[%s6687 + $0x69] sm:$0xff]
      %v6892 = vld [vmem:[%s6687 + $0x79] sm:$0xff]
      %v6893 = vld [vmem:[%s6687 + $0x81] sm:$0xff]
      %v6894 = vld [vmem:[%s6687 + $0x91] sm:$0xff]
      %v6895 = vld [vmem:[%s6687 + $0x99] sm:$0xff]
      %v6896 = vld [vmem:[%s6687 + $0xa9] sm:$0xff]
      %v6897 = vld [vmem:[%s6687 + $0xb1] sm:$0xff]
      %v6898 = vld [vmem:[%s6687 + $0xc1] sm:$0xff]
      %v6899 = vld [vmem:[%s6687 + $0xc9] sm:$0xff]
      %v6900 = vld [vmem:[%s6687 + $0xd9] sm:$0xff]
      %v6901 = vld [vmem:[%s6687 + $0xe1] sm:$0xff]
      %v6902 = vld [vmem:[%s6687 + $0xf1] sm:$0xff]
      %v6903 = vld [vmem:[%s6687 + $0xf9] sm:$0xff]
      %v6904 = vld [vmem:[%s6687 + $0x109] sm:$0xff]
      %v6905 = vld [vmem:[%s6687 + $0x111] sm:$0xff]
      %v6906 = vld [vmem:[%s6687 + $0x121] sm:$0xff]
      %v6907 = vld [vmem:[%s6687 + $0x129] sm:$0xff]
      %v6908 = vld [vmem:[%s6687 + $0x139] sm:$0xff]
      %v6909 = vld [vmem:[%s6687 + $0x141] sm:$0xff]
      %v6910 = vld [vmem:[%s6687 + $0x151] sm:$0xff]
      %v6911 = vld [vmem:[%s6687 + $0x159] sm:$0xff]
      %v6912 = vld [vmem:[%s6687 + $0x169] sm:$0xff]
      %v6913 = vld [vmem:[%s6687 + $0x171] sm:$0xff]
      %s6914 = scalar_lea.vmem %s5, 896
      %v6915 = vld [vmem:[%s6914] sm:$0xff]
      %v6916 = vld [vmem:[%s6914 + $0x8] sm:$0xff]
      %v6917 = vld [vmem:[%s6914 + $0x10] sm:$0xff]
      %v6918 = vld [vmem:[%s6914 + $0x18] sm:$0xff]
      %v6919 = vld [vmem:[%s6914 + $0x20] sm:$0xff]
      %v6920 = vld [vmem:[%s6914 + $0x28] sm:$0xff]
      %v6921 = vld [vmem:[%s6914 + $0x30] sm:$0xff]
      %v6922 = vld [vmem:[%s6914 + $0x38] sm:$0xff]
      %v6923 = vld [vmem:[%s6914 + $0x40] sm:$0xff]
      %v6924 = vld [vmem:[%s6914 + $0x48] sm:$0xff]
      %v6925 = vld [vmem:[%s6914 + $0x50] sm:$0xff]
      %v6926 = vld [vmem:[%s6914 + $0x58] sm:$0xff]
      %v6927 = vld [vmem:[%s6914 + $0x60] sm:$0xff]
      %v6928 = vld [vmem:[%s6914 + $0x68] sm:$0xff]
      %v6929 = vld [vmem:[%s6914 + $0x70] sm:$0xff]
      %v6930 = vld [vmem:[%s6914 + $0x78] sm:$0xff]
      %6931 = vmatpush.msra.mxu0 %v6930
      %6932 = vmatpush.msra.mxu0 %v6929
      %6933 = vmatpush.msra.mxu0 %v6928
      %6934 = vmatpush.msra.mxu0 %v6927
      %6935 = vmatpush.msra.mxu0 %v6926
      %6936 = vmatpush.msra.mxu0 %v6925
      %6937 = vmatpush.msra.mxu0 %v6924
      %6938 = vmatpush.msra.mxu0 %v6923
      %6939 = vmatpush.msra.mxu0 %v6922
      %6940 = vmatpush.msra.mxu0 %v6921
      %6941 = vmatpush.msra.mxu0 %v6920
      %6942 = vmatpush.msra.mxu0 %v6919
      %6943 = vmatpush.msra.mxu0 %v6918
      %6944 = vmatpush.msra.mxu0 %v6917
      %6945 = vmatpush.msra.mxu0 %v6916
      %6946 = vmatpush.msra.mxu0 %v6915
      %6947 = vmatmul.f32.gmra.mxu0 %v6882
      %v6948 = vpop.f32.mrf.mxu0
      %v6949 = vadd.f32 0.0, %v6948
      %6950 = vmatmul.f32.gmra.mxu0 %v6883
      %v6951 = vpop.f32.mrf.mxu0
      %v6952 = vadd.f32 0.0, %v6951
      %6953 = vmatmul.f32.gmra.mxu0 %v6884
      %v6954 = vpop.f32.mrf.mxu0
      %v6955 = vadd.f32 0.0, %v6954
      %6956 = vmatmul.f32.gmra.mxu0 %v6885
      %v6957 = vpop.f32.mrf.mxu0
      %v6958 = vadd.f32 0.0, %v6957
      %6959 = vmatmul.f32.gmra.mxu0 %v6886
      %v6960 = vpop.f32.mrf.mxu0
      %v6961 = vadd.f32 0.0, %v6960
      %6962 = vmatmul.f32.gmra.mxu0 %v6887
      %v6963 = vpop.f32.mrf.mxu0
      %v6964 = vadd.f32 0.0, %v6963
      %6965 = vmatmul.f32.gmra.mxu0 %v6888
      %v6966 = vpop.f32.mrf.mxu0
      %v6967 = vadd.f32 0.0, %v6966
      %6968 = vmatmul.f32.gmra.mxu0 %v6889
      %v6969 = vpop.f32.mrf.mxu0
      %v6970 = vadd.f32 0.0, %v6969
      %6971 = vmatmul.f32.gmra.mxu0 %v6890
      %v6972 = vpop.f32.mrf.mxu0
      %v6973 = vadd.f32 0.0, %v6972
      %6974 = vmatmul.f32.gmra.mxu0 %v6891
      %v6975 = vpop.f32.mrf.mxu0
      %v6976 = vadd.f32 0.0, %v6975
      %6977 = vmatmul.f32.gmra.mxu0 %v6892
      %v6978 = vpop.f32.mrf.mxu0
      %v6979 = vadd.f32 0.0, %v6978
      %6980 = vmatmul.f32.gmra.mxu0 %v6893
      %v6981 = vpop.f32.mrf.mxu0
      %v6982 = vadd.f32 0.0, %v6981
      %6983 = vmatmul.f32.gmra.mxu0 %v6894
      %v6984 = vpop.f32.mrf.mxu0
      %v6985 = vadd.f32 0.0, %v6984
      %6986 = vmatmul.f32.gmra.mxu0 %v6895
      %v6987 = vpop.f32.mrf.mxu0
      %v6988 = vadd.f32 0.0, %v6987
      %6989 = vmatmul.f32.gmra.mxu0 %v6896
      %v6990 = vpop.f32.mrf.mxu0
      %v6991 = vadd.f32 0.0, %v6990
      %6992 = vmatmul.f32.gmra.mxu0 %v6897
      %v6993 = vpop.f32.mrf.mxu0
      %v6994 = vadd.f32 0.0, %v6993
      %6995 = vmatmul.f32.gmra.mxu0 %v6898
      %v6996 = vpop.f32.mrf.mxu0
      %v6997 = vadd.f32 0.0, %v6996
      %6998 = vmatmul.f32.gmra.mxu0 %v6899
      %v6999 = vpop.f32.mrf.mxu0
      %v7000 = vadd.f32 0.0, %v6999
      %7001 = vmatmul.f32.gmra.mxu0 %v6900
      %v7002 = vpop.f32.mrf.mxu0
      %v7003 = vadd.f32 0.0, %v7002
      %7004 = vmatmul.f32.gmra.mxu0 %v6901
      %v7005 = vpop.f32.mrf.mxu0
      %v7006 = vadd.f32 0.0, %v7005
      %7007 = vmatmul.f32.gmra.mxu0 %v6902
      %v7008 = vpop.f32.mrf.mxu0
      %v7009 = vadd.f32 0.0, %v7008
      %7010 = vmatmul.f32.gmra.mxu0 %v6903
      %v7011 = vpop.f32.mrf.mxu0
      %v7012 = vadd.f32 0.0, %v7011
      %7013 = vmatmul.f32.gmra.mxu0 %v6904
      %v7014 = vpop.f32.mrf.mxu0
      %v7015 = vadd.f32 0.0, %v7014
      %7016 = vmatmul.f32.gmra.mxu0 %v6905
      %v7017 = vpop.f32.mrf.mxu0
      %v7018 = vadd.f32 0.0, %v7017
      %7019 = vmatmul.f32.gmra.mxu0 %v6906
      %v7020 = vpop.f32.mrf.mxu0
      %v7021 = vadd.f32 0.0, %v7020
      %7022 = vmatmul.f32.gmra.mxu0 %v6907
      %v7023 = vpop.f32.mrf.mxu0
      %v7024 = vadd.f32 0.0, %v7023
      %7025 = vmatmul.f32.gmra.mxu0 %v6908
      %v7026 = vpop.f32.mrf.mxu0
      %v7027 = vadd.f32 0.0, %v7026
      %7028 = vmatmul.f32.gmra.mxu0 %v6909
      %v7029 = vpop.f32.mrf.mxu0
      %v7030 = vadd.f32 0.0, %v7029
      %7031 = vmatmul.f32.gmra.mxu0 %v6910
      %v7032 = vpop.f32.mrf.mxu0
      %v7033 = vadd.f32 0.0, %v7032
      %7034 = vmatmul.f32.gmra.mxu0 %v6911
      %v7035 = vpop.f32.mrf.mxu0
      %v7036 = vadd.f32 0.0, %v7035
      %7037 = vmatmul.f32.gmra.mxu0 %v6912
      %v7038 = vpop.f32.mrf.mxu0
      %v7039 = vadd.f32 0.0, %v7038
      %7040 = vmatmul.f32.gmra.mxu0 %v6913
      %v7041 = vpop.f32.mrf.mxu0
      %v7042 = vadd.f32 0.0, %v7041
      %7043 = vdwg.mxu0
      %v7044 = vadd.f32 %v6850, %v6949
      %v7045 = vadd.f32 %v6851, %v6952
      %v7046 = vadd.f32 %v6852, %v6955
      %v7047 = vadd.f32 %v6853, %v6958
      %v7048 = vadd.f32 %v6854, %v6961
      %v7049 = vadd.f32 %v6855, %v6964
      %v7050 = vadd.f32 %v6856, %v6967
      %v7051 = vadd.f32 %v6857, %v6970
      %v7052 = vadd.f32 %v6858, %v6973
      %v7053 = vadd.f32 %v6859, %v6976
      %v7054 = vadd.f32 %v6860, %v6979
      %v7055 = vadd.f32 %v6861, %v6982
      %v7056 = vadd.f32 %v6862, %v6985
      %v7057 = vadd.f32 %v6863, %v6988
      %v7058 = vadd.f32 %v6864, %v6991
      %v7059 = vadd.f32 %v6865, %v6994
      %v7060 = vadd.f32 %v6866, %v6997
      %v7061 = vadd.f32 %v6867, %v7000
      %v7062 = vadd.f32 %v6868, %v7003
      %v7063 = vadd.f32 %v6869, %v7006
      %v7064 = vadd.f32 %v6870, %v7009
      %v7065 = vadd.f32 %v6871, %v7012
      %v7066 = vadd.f32 %v6872, %v7015
      %v7067 = vadd.f32 %v6873, %v7018
      %v7068 = vadd.f32 %v6874, %v7021
      %v7069 = vadd.f32 %v6875, %v7024
      %v7070 = vadd.f32 %v6876, %v7027
      %v7071 = vadd.f32 %v6877, %v7030
      %v7072 = vadd.f32 %v6878, %v7033
      %v7073 = vadd.f32 %v6879, %v7036
      %v7074 = vadd.f32 %v6880, %v7039
      %v7075 = vadd.f32 %v6881, %v7042
      %v7076 = vld [vmem:[%s6687 + $0x2] sm:$0xff]
      %v7077 = vld [vmem:[%s6687 + $0xa] sm:$0xff]
      %v7078 = vld [vmem:[%s6687 + $0x1a] sm:$0xff]
      %v7079 = vld [vmem:[%s6687 + $0x22] sm:$0xff]
      %v7080 = vld [vmem:[%s6687 + $0x32] sm:$0xff]
      %v7081 = vld [vmem:[%s6687 + $0x3a] sm:$0xff]
      %v7082 = vld [vmem:[%s6687 + $0x4a] sm:$0xff]
      %v7083 = vld [vmem:[%s6687 + $0x52] sm:$0xff]
      %v7084 = vld [vmem:[%s6687 + $0x62] sm:$0xff]
      %v7085 = vld [vmem:[%s6687 + $0x6a] sm:$0xff]
      %v7086 = vld [vmem:[%s6687 + $0x7a] sm:$0xff]
      %v7087 = vld [vmem:[%s6687 + $0x82] sm:$0xff]
      %v7088 = vld [vmem:[%s6687 + $0x92] sm:$0xff]
      %v7089 = vld [vmem:[%s6687 + $0x9a] sm:$0xff]
      %v7090 = vld [vmem:[%s6687 + $0xaa] sm:$0xff]
      %v7091 = vld [vmem:[%s6687 + $0xb2] sm:$0xff]
      %v7092 = vld [vmem:[%s6687 + $0xc2] sm:$0xff]
      %v7093 = vld [vmem:[%s6687 + $0xca] sm:$0xff]
      %v7094 = vld [vmem:[%s6687 + $0xda] sm:$0xff]
      %v7095 = vld [vmem:[%s6687 + $0xe2] sm:$0xff]
      %v7096 = vld [vmem:[%s6687 + $0xf2] sm:$0xff]
      %v7097 = vld [vmem:[%s6687 + $0xfa] sm:$0xff]
      %v7098 = vld [vmem:[%s6687 + $0x10a] sm:$0xff]
      %v7099 = vld [vmem:[%s6687 + $0x112] sm:$0xff]
      %v7100 = vld [vmem:[%s6687 + $0x122] sm:$0xff]
      %v7101 = vld [vmem:[%s6687 + $0x12a] sm:$0xff]
      %v7102 = vld [vmem:[%s6687 + $0x13a] sm:$0xff]
      %v7103 = vld [vmem:[%s6687 + $0x142] sm:$0xff]
      %v7104 = vld [vmem:[%s6687 + $0x152] sm:$0xff]
      %v7105 = vld [vmem:[%s6687 + $0x15a] sm:$0xff]
      %v7106 = vld [vmem:[%s6687 + $0x16a] sm:$0xff]
      %v7107 = vld [vmem:[%s6687 + $0x172] sm:$0xff]
      %s7108 = scalar_lea.vmem %s5, 1024
      %v7109 = vld [vmem:[%s7108] sm:$0xff]
      %v7110 = vld [vmem:[%s7108 + $0x8] sm:$0xff]
      %v7111 = vld [vmem:[%s7108 + $0x10] sm:$0xff]
      %v7112 = vld [vmem:[%s7108 + $0x18] sm:$0xff]
      %v7113 = vld [vmem:[%s7108 + $0x20] sm:$0xff]
      %v7114 = vld [vmem:[%s7108 + $0x28] sm:$0xff]
      %v7115 = vld [vmem:[%s7108 + $0x30] sm:$0xff]
      %v7116 = vld [vmem:[%s7108 + $0x38] sm:$0xff]
      %v7117 = vld [vmem:[%s7108 + $0x40] sm:$0xff]
      %v7118 = vld [vmem:[%s7108 + $0x48] sm:$0xff]
      %v7119 = vld [vmem:[%s7108 + $0x50] sm:$0xff]
      %v7120 = vld [vmem:[%s7108 + $0x58] sm:$0xff]
      %v7121 = vld [vmem:[%s7108 + $0x60] sm:$0xff]
      %v7122 = vld [vmem:[%s7108 + $0x68] sm:$0xff]
      %v7123 = vld [vmem:[%s7108 + $0x70] sm:$0xff]
      %v7124 = vld [vmem:[%s7108 + $0x78] sm:$0xff]
      %7125 = vmatpush.msra.mxu0 %v7124
      %7126 = vmatpush.msra.mxu0 %v7123
      %7127 = vmatpush.msra.mxu0 %v7122
      %7128 = vmatpush.msra.mxu0 %v7121
      %7129 = vmatpush.msra.mxu0 %v7120
      %7130 = vmatpush.msra.mxu0 %v7119
      %7131 = vmatpush.msra.mxu0 %v7118
      %7132 = vmatpush.msra.mxu0 %v7117
      %7133 = vmatpush.msra.mxu0 %v7116
      %7134 = vmatpush.msra.mxu0 %v7115
      %7135 = vmatpush.msra.mxu0 %v7114
      %7136 = vmatpush.msra.mxu0 %v7113
      %7137 = vmatpush.msra.mxu0 %v7112
      %7138 = vmatpush.msra.mxu0 %v7111
      %7139 = vmatpush.msra.mxu0 %v7110
      %7140 = vmatpush.msra.mxu0 %v7109
      %7141 = vmatmul.f32.gmra.mxu0 %v7076
      %v7142 = vpop.f32.mrf.mxu0
      %v7143 = vadd.f32 0.0, %v7142
      %7144 = vmatmul.f32.gmra.mxu0 %v7077
      %v7145 = vpop.f32.mrf.mxu0
      %v7146 = vadd.f32 0.0, %v7145
      %7147 = vmatmul.f32.gmra.mxu0 %v7078
      %v7148 = vpop.f32.mrf.mxu0
      %v7149 = vadd.f32 0.0, %v7148
      %7150 = vmatmul.f32.gmra.mxu0 %v7079
      %v7151 = vpop.f32.mrf.mxu0
      %v7152 = vadd.f32 0.0, %v7151
      %7153 = vmatmul.f32.gmra.mxu0 %v7080
      %v7154 = vpop.f32.mrf.mxu0
      %v7155 = vadd.f32 0.0, %v7154
      %7156 = vmatmul.f32.gmra.mxu0 %v7081
      %v7157 = vpop.f32.mrf.mxu0
      %v7158 = vadd.f32 0.0, %v7157
      %7159 = vmatmul.f32.gmra.mxu0 %v7082
      %v7160 = vpop.f32.mrf.mxu0
      %v7161 = vadd.f32 0.0, %v7160
      %7162 = vmatmul.f32.gmra.mxu0 %v7083
      %v7163 = vpop.f32.mrf.mxu0
      %v7164 = vadd.f32 0.0, %v7163
      %7165 = vmatmul.f32.gmra.mxu0 %v7084
      %v7166 = vpop.f32.mrf.mxu0
      %v7167 = vadd.f32 0.0, %v7166
      %7168 = vmatmul.f32.gmra.mxu0 %v7085
      %v7169 = vpop.f32.mrf.mxu0
      %v7170 = vadd.f32 0.0, %v7169
      %7171 = vmatmul.f32.gmra.mxu0 %v7086
      %v7172 = vpop.f32.mrf.mxu0
      %v7173 = vadd.f32 0.0, %v7172
      %7174 = vmatmul.f32.gmra.mxu0 %v7087
      %v7175 = vpop.f32.mrf.mxu0
      %v7176 = vadd.f32 0.0, %v7175
      %7177 = vmatmul.f32.gmra.mxu0 %v7088
      %v7178 = vpop.f32.mrf.mxu0
      %v7179 = vadd.f32 0.0, %v7178
      %7180 = vmatmul.f32.gmra.mxu0 %v7089
      %v7181 = vpop.f32.mrf.mxu0
      %v7182 = vadd.f32 0.0, %v7181
      %7183 = vmatmul.f32.gmra.mxu0 %v7090
      %v7184 = vpop.f32.mrf.mxu0
      %v7185 = vadd.f32 0.0, %v7184
      %7186 = vmatmul.f32.gmra.mxu0 %v7091
      %v7187 = vpop.f32.mrf.mxu0
      %v7188 = vadd.f32 0.0, %v7187
      %7189 = vmatmul.f32.gmra.mxu0 %v7092
      %v7190 = vpop.f32.mrf.mxu0
      %v7191 = vadd.f32 0.0, %v7190
      %7192 = vmatmul.f32.gmra.mxu0 %v7093
      %v7193 = vpop.f32.mrf.mxu0
      %v7194 = vadd.f32 0.0, %v7193
      %7195 = vmatmul.f32.gmra.mxu0 %v7094
      %v7196 = vpop.f32.mrf.mxu0
      %v7197 = vadd.f32 0.0, %v7196
      %7198 = vmatmul.f32.gmra.mxu0 %v7095
      %v7199 = vpop.f32.mrf.mxu0
      %v7200 = vadd.f32 0.0, %v7199
      %7201 = vmatmul.f32.gmra.mxu0 %v7096
      %v7202 = vpop.f32.mrf.mxu0
      %v7203 = vadd.f32 0.0, %v7202
      %7204 = vmatmul.f32.gmra.mxu0 %v7097
      %v7205 = vpop.f32.mrf.mxu0
      %v7206 = vadd.f32 0.0, %v7205
      %7207 = vmatmul.f32.gmra.mxu0 %v7098
      %v7208 = vpop.f32.mrf.mxu0
      %v7209 = vadd.f32 0.0, %v7208
      %7210 = vmatmul.f32.gmra.mxu0 %v7099
      %v7211 = vpop.f32.mrf.mxu0
      %v7212 = vadd.f32 0.0, %v7211
      %7213 = vmatmul.f32.gmra.mxu0 %v7100
      %v7214 = vpop.f32.mrf.mxu0
      %v7215 = vadd.f32 0.0, %v7214
      %7216 = vmatmul.f32.gmra.mxu0 %v7101
      %v7217 = vpop.f32.mrf.mxu0
      %v7218 = vadd.f32 0.0, %v7217
      %7219 = vmatmul.f32.gmra.mxu0 %v7102
      %v7220 = vpop.f32.mrf.mxu0
      %v7221 = vadd.f32 0.0, %v7220
      %7222 = vmatmul.f32.gmra.mxu0 %v7103
      %v7223 = vpop.f32.mrf.mxu0
      %v7224 = vadd.f32 0.0, %v7223
      %7225 = vmatmul.f32.gmra.mxu0 %v7104
      %v7226 = vpop.f32.mrf.mxu0
      %v7227 = vadd.f32 0.0, %v7226
      %7228 = vmatmul.f32.gmra.mxu0 %v7105
      %v7229 = vpop.f32.mrf.mxu0
      %v7230 = vadd.f32 0.0, %v7229
      %7231 = vmatmul.f32.gmra.mxu0 %v7106
      %v7232 = vpop.f32.mrf.mxu0
      %v7233 = vadd.f32 0.0, %v7232
      %7234 = vmatmul.f32.gmra.mxu0 %v7107
      %v7235 = vpop.f32.mrf.mxu0
      %v7236 = vadd.f32 0.0, %v7235
      %7237 = vdwg.mxu0
      %v7238 = vadd.f32 %v7044, %v7143
      %v7239 = vadd.f32 %v7045, %v7146
      %v7240 = vadd.f32 %v7046, %v7149
      %v7241 = vadd.f32 %v7047, %v7152
      %v7242 = vadd.f32 %v7048, %v7155
      %v7243 = vadd.f32 %v7049, %v7158
      %v7244 = vadd.f32 %v7050, %v7161
      %v7245 = vadd.f32 %v7051, %v7164
      %v7246 = vadd.f32 %v7052, %v7167
      %v7247 = vadd.f32 %v7053, %v7170
      %v7248 = vadd.f32 %v7054, %v7173
      %v7249 = vadd.f32 %v7055, %v7176
      %v7250 = vadd.f32 %v7056, %v7179
      %v7251 = vadd.f32 %v7057, %v7182
      %v7252 = vadd.f32 %v7058, %v7185
      %v7253 = vadd.f32 %v7059, %v7188
      %v7254 = vadd.f32 %v7060, %v7191
      %v7255 = vadd.f32 %v7061, %v7194
      %v7256 = vadd.f32 %v7062, %v7197
      %v7257 = vadd.f32 %v7063, %v7200
      %v7258 = vadd.f32 %v7064, %v7203
      %v7259 = vadd.f32 %v7065, %v7206
      %v7260 = vadd.f32 %v7066, %v7209
      %v7261 = vadd.f32 %v7067, %v7212
      %v7262 = vadd.f32 %v7068, %v7215
      %v7263 = vadd.f32 %v7069, %v7218
      %v7264 = vadd.f32 %v7070, %v7221
      %v7265 = vadd.f32 %v7071, %v7224
      %v7266 = vadd.f32 %v7072, %v7227
      %v7267 = vadd.f32 %v7073, %v7230
      %v7268 = vadd.f32 %v7074, %v7233
      %v7269 = vadd.f32 %v7075, %v7236
      %v7270 = vld [vmem:[%s6] sm:$0x1]
      %v7272 = vperm.slane %v7270, 0
      %v7274 = vadd.f32 %v7238, %v7272
      %v7275 = vadd.f32 %v7239, %v7272
      %v7276 = vadd.f32 %v7240, %v7272
      %v7277 = vadd.f32 %v7241, %v7272
      %v7278 = vadd.f32 %v7242, %v7272
      %v7279 = vadd.f32 %v7243, %v7272
      %v7280 = vadd.f32 %v7244, %v7272
      %v7281 = vadd.f32 %v7245, %v7272
      %v7282 = vadd.f32 %v7246, %v7272
      %v7283 = vadd.f32 %v7247, %v7272
      %v7284 = vadd.f32 %v7248, %v7272
      %v7285 = vadd.f32 %v7249, %v7272
      %v7286 = vadd.f32 %v7250, %v7272
      %v7287 = vadd.f32 %v7251, %v7272
      %v7288 = vadd.f32 %v7252, %v7272
      %v7289 = vadd.f32 %v7253, %v7272
      %v7290 = vadd.f32 %v7254, %v7272
      %v7291 = vadd.f32 %v7255, %v7272
      %v7292 = vadd.f32 %v7256, %v7272
      %v7293 = vadd.f32 %v7257, %v7272
      %v7294 = vadd.f32 %v7258, %v7272
      %v7295 = vadd.f32 %v7259, %v7272
      %v7296 = vadd.f32 %v7260, %v7272
      %v7297 = vadd.f32 %v7261, %v7272
      %v7298 = vadd.f32 %v7262, %v7272
      %v7299 = vadd.f32 %v7263, %v7272
      %v7300 = vadd.f32 %v7264, %v7272
      %v7301 = vadd.f32 %v7265, %v7272
      %v7302 = vadd.f32 %v7266, %v7272
      %v7303 = vadd.f32 %v7267, %v7272
      %v7304 = vadd.f32 %v7268, %v7272
      %v7305 = vadd.f32 %v7269, %v7272
      %v7306 = vmax.f32 %v7274, 0.0
      %v7307 = vmax.f32 %v7275, 0.0
      %v7308 = vmax.f32 %v7276, 0.0
      %v7309 = vmax.f32 %v7277, 0.0
      %v7310 = vmax.f32 %v7278, 0.0
      %v7311 = vmax.f32 %v7279, 0.0
      %v7312 = vmax.f32 %v7280, 0.0
      %v7313 = vmax.f32 %v7281, 0.0
      %v7314 = vmax.f32 %v7282, 0.0
      %v7315 = vmax.f32 %v7283, 0.0
      %v7316 = vmax.f32 %v7284, 0.0
      %v7317 = vmax.f32 %v7285, 0.0
      %v7318 = vmax.f32 %v7286, 0.0
      %v7319 = vmax.f32 %v7287, 0.0
      %v7320 = vmax.f32 %v7288, 0.0
      %v7321 = vmax.f32 %v7289, 0.0
      %v7322 = vmax.f32 %v7290, 0.0
      %v7323 = vmax.f32 %v7291, 0.0
      %v7324 = vmax.f32 %v7292, 0.0
      %v7325 = vmax.f32 %v7293, 0.0
      %v7326 = vmax.f32 %v7294, 0.0
      %v7327 = vmax.f32 %v7295, 0.0
      %v7328 = vmax.f32 %v7296, 0.0
      %v7329 = vmax.f32 %v7297, 0.0
      %v7330 = vmax.f32 %v7298, 0.0
      %v7331 = vmax.f32 %v7299, 0.0
      %v7332 = vmax.f32 %v7300, 0.0
      %v7333 = vmax.f32 %v7301, 0.0
      %v7334 = vmax.f32 %v7302, 0.0
      %v7335 = vmax.f32 %v7303, 0.0
      %v7336 = vmax.f32 %v7304, 0.0
      %v7337 = vmax.f32 %v7305, 0.0
      %s7338 = scalar_lea.vmem [#allocation4], 24
      %7339 = vst.msk [vmem:[%s7338 + $0x1] sm:$0xff] %vm335, %v7306
      %7340 = vst.msk [vmem:[%s7338 + $0x9] sm:$0xff] %vm335, %v7307
      %7341 = vst.msk [vmem:[%s7338 + $0x19] sm:$0xff] %vm335, %v7308
      %7342 = vst.msk [vmem:[%s7338 + $0x21] sm:$0xff] %vm335, %v7309
      %7343 = vst.msk [vmem:[%s7338 + $0x31] sm:$0xff] %vm335, %v7310
      %7344 = vst.msk [vmem:[%s7338 + $0x39] sm:$0xff] %vm335, %v7311
      %7345 = vst.msk [vmem:[%s7338 + $0x49] sm:$0xff] %vm335, %v7312
      %7346 = vst.msk [vmem:[%s7338 + $0x51] sm:$0xff] %vm335, %v7313
      %7347 = vst.msk [vmem:[%s7338 + $0x61] sm:$0xff] %vm335, %v7314
      %7348 = vst.msk [vmem:[%s7338 + $0x69] sm:$0xff] %vm335, %v7315
      %7349 = vst.msk [vmem:[%s7338 + $0x79] sm:$0xff] %vm335, %v7316
      %7350 = vst.msk [vmem:[%s7338 + $0x81] sm:$0xff] %vm335, %v7317
      %7351 = vst.msk [vmem:[%s7338 + $0x91] sm:$0xff] %vm335, %v7318
      %7352 = vst.msk [vmem:[%s7338 + $0x99] sm:$0xff] %vm335, %v7319
      %7353 = vst.msk [vmem:[%s7338 + $0xa9] sm:$0xff] %vm335, %v7320
      %7354 = vst.msk [vmem:[%s7338 + $0xb1] sm:$0xff] %vm335, %v7321
      %7355 = vst.msk [vmem:[%s7338 + $0xc1] sm:$0xff] %vm335, %v7322
      %7356 = vst.msk [vmem:[%s7338 + $0xc9] sm:$0xff] %vm335, %v7323
      %7357 = vst.msk [vmem:[%s7338 + $0xd9] sm:$0xff] %vm335, %v7324
      %7358 = vst.msk [vmem:[%s7338 + $0xe1] sm:$0xff] %vm335, %v7325
      %7359 = vst.msk [vmem:[%s7338 + $0xf1] sm:$0xff] %vm335, %v7326
      %7360 = vst.msk [vmem:[%s7338 + $0xf9] sm:$0xff] %vm335, %v7327
      %7361 = vst.msk [vmem:[%s7338 + $0x109] sm:$0xff] %vm335, %v7328
      %7362 = vst.msk [vmem:[%s7338 + $0x111] sm:$0xff] %vm335, %v7329
      %7363 = vst.msk [vmem:[%s7338 + $0x121] sm:$0xff] %vm335, %v7330
      %7364 = vst.msk [vmem:[%s7338 + $0x129] sm:$0xff] %vm335, %v7331
      %7365 = vst.msk [vmem:[%s7338 + $0x139] sm:$0xff] %vm335, %v7332
      %7366 = vst.msk [vmem:[%s7338 + $0x141] sm:$0xff] %vm335, %v7333
      %7367 = vst.msk [vmem:[%s7338 + $0x151] sm:$0xff] %vm335, %v7334
      %7368 = vst.msk [vmem:[%s7338 + $0x159] sm:$0xff] %vm335, %v7335
      %7369 = vst.msk [vmem:[%s7338 + $0x169] sm:$0xff] %vm335, %v7336
      %7370 = vst.msk [vmem:[%s7338 + $0x171] sm:$0xff] %vm335, %v7337
      %v7371 = vld [vmem:[#allocation4] sm:$0xff]
      %v7372 = vld [vmem:[#allocation4 + $0x8] sm:$0xff]
      %v7373 = vld [vmem:[#allocation4 + $0x18] sm:$0xff]
      %v7374 = vld [vmem:[#allocation4 + $0x20] sm:$0xff]
      %v7375 = vld [vmem:[#allocation4 + $0x30] sm:$0xff]
      %v7376 = vld [vmem:[#allocation4 + $0x38] sm:$0xff]
      %v7377 = vld [vmem:[#allocation4 + $0x48] sm:$0xff]
      %v7378 = vld [vmem:[#allocation4 + $0x50] sm:$0xff]
      %v7379 = vld [vmem:[#allocation4 + $0x60] sm:$0xff]
      %v7380 = vld [vmem:[#allocation4 + $0x68] sm:$0xff]
      %v7381 = vld [vmem:[#allocation4 + $0x78] sm:$0xff]
      %v7382 = vld [vmem:[#allocation4 + $0x80] sm:$0xff]
      %v7383 = vld [vmem:[#allocation4 + $0x90] sm:$0xff]
      %v7384 = vld [vmem:[#allocation4 + $0x98] sm:$0xff]
      %v7385 = vld [vmem:[#allocation4 + $0xa8] sm:$0xff]
      %v7386 = vld [vmem:[#allocation4 + $0xb0] sm:$0xff]
      %v7387 = vld [vmem:[#allocation4 + $0xc0] sm:$0xff]
      %v7388 = vld [vmem:[#allocation4 + $0xc8] sm:$0xff]
      %v7389 = vld [vmem:[#allocation4 + $0xd8] sm:$0xff]
      %v7390 = vld [vmem:[#allocation4 + $0xe0] sm:$0xff]
      %v7391 = vld [vmem:[#allocation4 + $0xf0] sm:$0xff]
      %v7392 = vld [vmem:[#allocation4 + $0xf8] sm:$0xff]
      %v7393 = vld [vmem:[#allocation4 + $0x108] sm:$0xff]
      %v7394 = vld [vmem:[#allocation4 + $0x110] sm:$0xff]
      %v7395 = vld [vmem:[#allocation4 + $0x120] sm:$0xff]
      %v7396 = vld [vmem:[#allocation4 + $0x128] sm:$0xff]
      %v7397 = vld [vmem:[#allocation4 + $0x138] sm:$0xff]
      %v7398 = vld [vmem:[#allocation4 + $0x140] sm:$0xff]
      %v7399 = vld [vmem:[#allocation4 + $0x150] sm:$0xff]
      %v7400 = vld [vmem:[#allocation4 + $0x158] sm:$0xff]
      %v7401 = vld [vmem:[#allocation4 + $0x168] sm:$0xff]
      %v7402 = vld [vmem:[#allocation4 + $0x170] sm:$0xff]
      %v7403 = vld [vmem:[%s7] sm:$0x1]
      %v7404 = vperm.slane %v7403, 0
      %v7405 = vmul.f32 %v7371, %v7404
      %v7406 = vmul.f32 %v7372, %v7404
      %v7407 = vmul.f32 %v7373, %v7404
      %v7408 = vmul.f32 %v7374, %v7404
      %v7409 = vmul.f32 %v7375, %v7404
      %v7410 = vmul.f32 %v7376, %v7404
      %v7411 = vmul.f32 %v7377, %v7404
      %v7412 = vmul.f32 %v7378, %v7404
      %v7413 = vmul.f32 %v7379, %v7404
      %v7414 = vmul.f32 %v7380, %v7404
      %v7415 = vmul.f32 %v7381, %v7404
      %v7416 = vmul.f32 %v7382, %v7404
      %v7417 = vmul.f32 %v7383, %v7404
      %v7418 = vmul.f32 %v7384, %v7404
      %v7419 = vmul.f32 %v7385, %v7404
      %v7420 = vmul.f32 %v7386, %v7404
      %v7421 = vmul.f32 %v7387, %v7404
      %v7422 = vmul.f32 %v7388, %v7404
      %v7423 = vmul.f32 %v7389, %v7404
      %v7424 = vmul.f32 %v7390, %v7404
      %v7425 = vmul.f32 %v7391, %v7404
      %v7426 = vmul.f32 %v7392, %v7404
      %v7427 = vmul.f32 %v7393, %v7404
      %v7428 = vmul.f32 %v7394, %v7404
      %v7429 = vmul.f32 %v7395, %v7404
      %v7430 = vmul.f32 %v7396, %v7404
      %v7431 = vmul.f32 %v7397, %v7404
      %v7432 = vmul.f32 %v7398, %v7404
      %v7433 = vmul.f32 %v7399, %v7404
      %v7434 = vmul.f32 %v7400, %v7404
      %v7435 = vmul.f32 %v7401, %v7404
      %v7436 = vmul.f32 %v7402, %v7404
      %v7437 = vadd.f32 %v7405, 0.0
      %v7438 = vadd.f32 %v7406, 0.0
      %v7439 = vadd.f32 %v7407, 0.0
      %v7440 = vadd.f32 %v7408, 0.0
      %v7441 = vadd.f32 %v7409, 0.0
      %v7442 = vadd.f32 %v7410, 0.0
      %v7443 = vadd.f32 %v7411, 0.0
      %v7444 = vadd.f32 %v7412, 0.0
      %v7445 = vadd.f32 %v7413, 0.0
      %v7446 = vadd.f32 %v7414, 0.0
      %v7447 = vadd.f32 %v7415, 0.0
      %v7448 = vadd.f32 %v7416, 0.0
      %v7449 = vadd.f32 %v7417, 0.0
      %v7450 = vadd.f32 %v7418, 0.0
      %v7451 = vadd.f32 %v7419, 0.0
      %v7452 = vadd.f32 %v7420, 0.0
      %v7453 = vadd.f32 %v7421, 0.0
      %v7454 = vadd.f32 %v7422, 0.0
      %v7455 = vadd.f32 %v7423, 0.0
      %v7456 = vadd.f32 %v7424, 0.0
      %v7457 = vadd.f32 %v7425, 0.0
      %v7458 = vadd.f32 %v7426, 0.0
      %v7459 = vadd.f32 %v7427, 0.0
      %v7460 = vadd.f32 %v7428, 0.0
      %v7461 = vadd.f32 %v7429, 0.0
      %v7462 = vadd.f32 %v7430, 0.0
      %v7463 = vadd.f32 %v7431, 0.0
      %v7464 = vadd.f32 %v7432, 0.0
      %v7465 = vadd.f32 %v7433, 0.0
      %v7466 = vadd.f32 %v7434, 0.0
      %v7467 = vadd.f32 %v7435, 0.0
      %v7468 = vadd.f32 %v7436, 0.0
      %v7469 = vld [vmem:[#allocation4 + $0x1] sm:$0xff]
      %v7470 = vld [vmem:[#allocation4 + $0x9] sm:$0xff]
      %v7471 = vld [vmem:[#allocation4 + $0x19] sm:$0xff]
      %v7472 = vld [vmem:[#allocation4 + $0x21] sm:$0xff]
      %v7473 = vld [vmem:[#allocation4 + $0x31] sm:$0xff]
      %v7474 = vld [vmem:[#allocation4 + $0x39] sm:$0xff]
      %v7475 = vld [vmem:[#allocation4 + $0x49] sm:$0xff]
      %v7476 = vld [vmem:[#allocation4 + $0x51] sm:$0xff]
      %v7477 = vld [vmem:[#allocation4 + $0x61] sm:$0xff]
      %v7478 = vld [vmem:[#allocation4 + $0x69] sm:$0xff]
      %v7479 = vld [vmem:[#allocation4 + $0x79] sm:$0xff]
      %v7480 = vld [vmem:[#allocation4 + $0x81] sm:$0xff]
      %v7481 = vld [vmem:[#allocation4 + $0x91] sm:$0xff]
      %v7482 = vld [vmem:[#allocation4 + $0x99] sm:$0xff]
      %v7483 = vld [vmem:[#allocation4 + $0xa9] sm:$0xff]
      %v7484 = vld [vmem:[#allocation4 + $0xb1] sm:$0xff]
      %v7485 = vld [vmem:[#allocation4 + $0xc1] sm:$0xff]
      %v7486 = vld [vmem:[#allocation4 + $0xc9] sm:$0xff]
      %v7487 = vld [vmem:[#allocation4 + $0xd9] sm:$0xff]
      %v7488 = vld [vmem:[#allocation4 + $0xe1] sm:$0xff]
      %v7489 = vld [vmem:[#allocation4 + $0xf1] sm:$0xff]
      %v7490 = vld [vmem:[#allocation4 + $0xf9] sm:$0xff]
      %v7491 = vld [vmem:[#allocation4 + $0x109] sm:$0xff]
      %v7492 = vld [vmem:[#allocation4 + $0x111] sm:$0xff]
      %v7493 = vld [vmem:[#allocation4 + $0x121] sm:$0xff]
      %v7494 = vld [vmem:[#allocation4 + $0x129] sm:$0xff]
      %v7495 = vld [vmem:[#allocation4 + $0x139] sm:$0xff]
      %v7496 = vld [vmem:[#allocation4 + $0x141] sm:$0xff]
      %v7497 = vld [vmem:[#allocation4 + $0x151] sm:$0xff]
      %v7498 = vld [vmem:[#allocation4 + $0x159] sm:$0xff]
      %v7499 = vld [vmem:[#allocation4 + $0x169] sm:$0xff]
      %v7500 = vld [vmem:[#allocation4 + $0x171] sm:$0xff]
      %v7501 = vld [vmem:[%s7 + $0x1] sm:$0x1]
      %v7502 = vperm.slane %v7501, 0
      %v7503 = vmul.f32 %v7469, %v7502
      %v7504 = vmul.f32 %v7470, %v7502
      %v7505 = vmul.f32 %v7471, %v7502
      %v7506 = vmul.f32 %v7472, %v7502
      %v7507 = vmul.f32 %v7473, %v7502
      %v7508 = vmul.f32 %v7474, %v7502
      %v7509 = vmul.f32 %v7475, %v7502
      %v7510 = vmul.f32 %v7476, %v7502
      %v7511 = vmul.f32 %v7477, %v7502
      %v7512 = vmul.f32 %v7478, %v7502
      %v7513 = vmul.f32 %v7479, %v7502
      %v7514 = vmul.f32 %v7480, %v7502
      %v7515 = vmul.f32 %v7481, %v7502
      %v7516 = vmul.f32 %v7482, %v7502
      %v7517 = vmul.f32 %v7483, %v7502
      %v7518 = vmul.f32 %v7484, %v7502
      %v7519 = vmul.f32 %v7485, %v7502
      %v7520 = vmul.f32 %v7486, %v7502
      %v7521 = vmul.f32 %v7487, %v7502
      %v7522 = vmul.f32 %v7488, %v7502
      %v7523 = vmul.f32 %v7489, %v7502
      %v7524 = vmul.f32 %v7490, %v7502
      %v7525 = vmul.f32 %v7491, %v7502
      %v7526 = vmul.f32 %v7492, %v7502
      %v7527 = vmul.f32 %v7493, %v7502
      %v7528 = vmul.f32 %v7494, %v7502
      %v7529 = vmul.f32 %v7495, %v7502
      %v7530 = vmul.f32 %v7496, %v7502
      %v7531 = vmul.f32 %v7497, %v7502
      %v7532 = vmul.f32 %v7498, %v7502
      %v7533 = vmul.f32 %v7499, %v7502
      %v7534 = vmul.f32 %v7500, %v7502
      %v7535 = vadd.f32 %v7437, %v7503
      %v7536 = vadd.f32 %v7438, %v7504
      %v7537 = vadd.f32 %v7439, %v7505
      %v7538 = vadd.f32 %v7440, %v7506
      %v7539 = vadd.f32 %v7441, %v7507
      %v7540 = vadd.f32 %v7442, %v7508
      %v7541 = vadd.f32 %v7443, %v7509
      %v7542 = vadd.f32 %v7444, %v7510
      %v7543 = vadd.f32 %v7445, %v7511
      %v7544 = vadd.f32 %v7446, %v7512
      %v7545 = vadd.f32 %v7447, %v7513
      %v7546 = vadd.f32 %v7448, %v7514
      %v7547 = vadd.f32 %v7449, %v7515
      %v7548 = vadd.f32 %v7450, %v7516
      %v7549 = vadd.f32 %v7451, %v7517
      %v7550 = vadd.f32 %v7452, %v7518
      %v7551 = vadd.f32 %v7453, %v7519
      %v7552 = vadd.f32 %v7454, %v7520
      %v7553 = vadd.f32 %v7455, %v7521
      %v7554 = vadd.f32 %v7456, %v7522
      %v7555 = vadd.f32 %v7457, %v7523
      %v7556 = vadd.f32 %v7458, %v7524
      %v7557 = vadd.f32 %v7459, %v7525
      %v7558 = vadd.f32 %v7460, %v7526
      %v7559 = vadd.f32 %v7461, %v7527
      %v7560 = vadd.f32 %v7462, %v7528
      %v7561 = vadd.f32 %v7463, %v7529
      %v7562 = vadd.f32 %v7464, %v7530
      %v7563 = vadd.f32 %v7465, %v7531
      %v7564 = vadd.f32 %v7466, %v7532
      %v7565 = vadd.f32 %v7467, %v7533
      %v7566 = vadd.f32 %v7468, %v7534
      %v7567 = vld [vmem:[#allocation4 + $0x2] sm:$0xff]
      %v7568 = vld [vmem:[#allocation4 + $0xa] sm:$0xff]
      %v7569 = vld [vmem:[#allocation4 + $0x1a] sm:$0xff]
      %v7570 = vld [vmem:[#allocation4 + $0x22] sm:$0xff]
      %v7571 = vld [vmem:[#allocation4 + $0x32] sm:$0xff]
      %v7572 = vld [vmem:[#allocation4 + $0x3a] sm:$0xff]
      %v7573 = vld [vmem:[#allocation4 + $0x4a] sm:$0xff]
      %v7574 = vld [vmem:[#allocation4 + $0x52] sm:$0xff]
      %v7575 = vld [vmem:[#allocation4 + $0x62] sm:$0xff]
      %v7576 = vld [vmem:[#allocation4 + $0x6a] sm:$0xff]
      %v7577 = vld [vmem:[#allocation4 + $0x7a] sm:$0xff]
      %v7578 = vld [vmem:[#allocation4 + $0x82] sm:$0xff]
      %v7579 = vld [vmem:[#allocation4 + $0x92] sm:$0xff]
      %v7580 = vld [vmem:[#allocation4 + $0x9a] sm:$0xff]
      %v7581 = vld [vmem:[#allocation4 + $0xaa] sm:$0xff]
      %v7582 = vld [vmem:[#allocation4 + $0xb2] sm:$0xff]
      %v7583 = vld [vmem:[#allocation4 + $0xc2] sm:$0xff]
      %v7584 = vld [vmem:[#allocation4 + $0xca] sm:$0xff]
      %v7585 = vld [vmem:[#allocation4 + $0xda] sm:$0xff]
      %v7586 = vld [vmem:[#allocation4 + $0xe2] sm:$0xff]
      %v7587 = vld [vmem:[#allocation4 + $0xf2] sm:$0xff]
      %v7588 = vld [vmem:[#allocation4 + $0xfa] sm:$0xff]
      %v7589 = vld [vmem:[#allocation4 + $0x10a] sm:$0xff]
      %v7590 = vld [vmem:[#allocation4 + $0x112] sm:$0xff]
      %v7591 = vld [vmem:[#allocation4 + $0x122] sm:$0xff]
      %v7592 = vld [vmem:[#allocation4 + $0x12a] sm:$0xff]
      %v7593 = vld [vmem:[#allocation4 + $0x13a] sm:$0xff]
      %v7594 = vld [vmem:[#allocation4 + $0x142] sm:$0xff]
      %v7595 = vld [vmem:[#allocation4 + $0x152] sm:$0xff]
      %v7596 = vld [vmem:[#allocation4 + $0x15a] sm:$0xff]
      %v7597 = vld [vmem:[#allocation4 + $0x16a] sm:$0xff]
      %v7598 = vld [vmem:[#allocation4 + $0x172] sm:$0xff]
      %v7599 = vld [vmem:[%s7 + $0x2] sm:$0x1]
      %v7600 = vperm.slane %v7599, 0
      %v7601 = vmul.f32 %v7567, %v7600
      %v7602 = vmul.f32 %v7568, %v7600
      %v7603 = vmul.f32 %v7569, %v7600
      %v7604 = vmul.f32 %v7570, %v7600
      %v7605 = vmul.f32 %v7571, %v7600
      %v7606 = vmul.f32 %v7572, %v7600
      %v7607 = vmul.f32 %v7573, %v7600
      %v7608 = vmul.f32 %v7574, %v7600
      %v7609 = vmul.f32 %v7575, %v7600
      %v7610 = vmul.f32 %v7576, %v7600
      %v7611 = vmul.f32 %v7577, %v7600
      %v7612 = vmul.f32 %v7578, %v7600
      %v7613 = vmul.f32 %v7579, %v7600
      %v7614 = vmul.f32 %v7580, %v7600
      %v7615 = vmul.f32 %v7581, %v7600
      %v7616 = vmul.f32 %v7582, %v7600
      %v7617 = vmul.f32 %v7583, %v7600
      %v7618 = vmul.f32 %v7584, %v7600
      %v7619 = vmul.f32 %v7585, %v7600
      %v7620 = vmul.f32 %v7586, %v7600
      %v7621 = vmul.f32 %v7587, %v7600
      %v7622 = vmul.f32 %v7588, %v7600
      %v7623 = vmul.f32 %v7589, %v7600
      %v7624 = vmul.f32 %v7590, %v7600
      %v7625 = vmul.f32 %v7591, %v7600
      %v7626 = vmul.f32 %v7592, %v7600
      %v7627 = vmul.f32 %v7593, %v7600
      %v7628 = vmul.f32 %v7594, %v7600
      %v7629 = vmul.f32 %v7595, %v7600
      %v7630 = vmul.f32 %v7596, %v7600
      %v7631 = vmul.f32 %v7597, %v7600
      %v7632 = vmul.f32 %v7598, %v7600
      %v7633 = vadd.f32 %v7535, %v7601
      %v7634 = vadd.f32 %v7536, %v7602
      %v7635 = vadd.f32 %v7537, %v7603
      %v7636 = vadd.f32 %v7538, %v7604
      %v7637 = vadd.f32 %v7539, %v7605
      %v7638 = vadd.f32 %v7540, %v7606
      %v7639 = vadd.f32 %v7541, %v7607
      %v7640 = vadd.f32 %v7542, %v7608
      %v7641 = vadd.f32 %v7543, %v7609
      %v7642 = vadd.f32 %v7544, %v7610
      %v7643 = vadd.f32 %v7545, %v7611
      %v7644 = vadd.f32 %v7546, %v7612
      %v7645 = vadd.f32 %v7547, %v7613
      %v7646 = vadd.f32 %v7548, %v7614
      %v7647 = vadd.f32 %v7549, %v7615
      %v7648 = vadd.f32 %v7550, %v7616
      %v7649 = vadd.f32 %v7551, %v7617
      %v7650 = vadd.f32 %v7552, %v7618
      %v7651 = vadd.f32 %v7553, %v7619
      %v7652 = vadd.f32 %v7554, %v7620
      %v7653 = vadd.f32 %v7555, %v7621
      %v7654 = vadd.f32 %v7556, %v7622
      %v7655 = vadd.f32 %v7557, %v7623
      %v7656 = vadd.f32 %v7558, %v7624
      %v7657 = vadd.f32 %v7559, %v7625
      %v7658 = vadd.f32 %v7560, %v7626
      %v7659 = vadd.f32 %v7561, %v7627
      %v7660 = vadd.f32 %v7562, %v7628
      %v7661 = vadd.f32 %v7563, %v7629
      %v7662 = vadd.f32 %v7564, %v7630
      %v7663 = vadd.f32 %v7565, %v7631
      %v7664 = vadd.f32 %v7566, %v7632
      %v7665 = vld [vmem:[%s7338] sm:$0xff]
      %v7666 = vld [vmem:[%s7338 + $0x8] sm:$0xff]
      %v7667 = vld [vmem:[%s7338 + $0x18] sm:$0xff]
      %v7668 = vld [vmem:[%s7338 + $0x20] sm:$0xff]
      %v7669 = vld [vmem:[%s7338 + $0x30] sm:$0xff]
      %v7670 = vld [vmem:[%s7338 + $0x38] sm:$0xff]
      %v7671 = vld [vmem:[%s7338 + $0x48] sm:$0xff]
      %v7672 = vld [vmem:[%s7338 + $0x50] sm:$0xff]
      %v7673 = vld [vmem:[%s7338 + $0x60] sm:$0xff]
      %v7674 = vld [vmem:[%s7338 + $0x68] sm:$0xff]
      %v7675 = vld [vmem:[%s7338 + $0x78] sm:$0xff]
      %v7676 = vld [vmem:[%s7338 + $0x80] sm:$0xff]
      %v7677 = vld [vmem:[%s7338 + $0x90] sm:$0xff]
      %v7678 = vld [vmem:[%s7338 + $0x98] sm:$0xff]
      %v7679 = vld [vmem:[%s7338 + $0xa8] sm:$0xff]
      %v7680 = vld [vmem:[%s7338 + $0xb0] sm:$0xff]
      %v7681 = vld [vmem:[%s7338 + $0xc0] sm:$0xff]
      %v7682 = vld [vmem:[%s7338 + $0xc8] sm:$0xff]
      %v7683 = vld [vmem:[%s7338 + $0xd8] sm:$0xff]
      %v7684 = vld [vmem:[%s7338 + $0xe0] sm:$0xff]
      %v7685 = vld [vmem:[%s7338 + $0xf0] sm:$0xff]
      %v7686 = vld [vmem:[%s7338 + $0xf8] sm:$0xff]
      %v7687 = vld [vmem:[%s7338 + $0x108] sm:$0xff]
      %v7688 = vld [vmem:[%s7338 + $0x110] sm:$0xff]
      %v7689 = vld [vmem:[%s7338 + $0x120] sm:$0xff]
      %v7690 = vld [vmem:[%s7338 + $0x128] sm:$0xff]
      %v7691 = vld [vmem:[%s7338 + $0x138] sm:$0xff]
      %v7692 = vld [vmem:[%s7338 + $0x140] sm:$0xff]
      %v7693 = vld [vmem:[%s7338 + $0x150] sm:$0xff]
      %v7694 = vld [vmem:[%s7338 + $0x158] sm:$0xff]
      %v7695 = vld [vmem:[%s7338 + $0x168] sm:$0xff]
      %v7696 = vld [vmem:[%s7338 + $0x170] sm:$0xff]
      %v7697 = vld [vmem:[%s7 + $0x3] sm:$0x1]
      %v7698 = vperm.slane %v7697, 0
      %v7699 = vmul.f32 %v7665, %v7698
      %v7700 = vmul.f32 %v7666, %v7698
      %v7701 = vmul.f32 %v7667, %v7698
      %v7702 = vmul.f32 %v7668, %v7698
      %v7703 = vmul.f32 %v7669, %v7698
      %v7704 = vmul.f32 %v7670, %v7698
      %v7705 = vmul.f32 %v7671, %v7698
      %v7706 = vmul.f32 %v7672, %v7698
      %v7707 = vmul.f32 %v7673, %v7698
      %v7708 = vmul.f32 %v7674, %v7698
      %v7709 = vmul.f32 %v7675, %v7698
      %v7710 = vmul.f32 %v7676, %v7698
      %v7711 = vmul.f32 %v7677, %v7698
      %v7712 = vmul.f32 %v7678, %v7698
      %v7713 = vmul.f32 %v7679, %v7698
      %v7714 = vmul.f32 %v7680, %v7698
      %v7715 = vmul.f32 %v7681, %v7698
      %v7716 = vmul.f32 %v7682, %v7698
      %v7717 = vmul.f32 %v7683, %v7698
      %v7718 = vmul.f32 %v7684, %v7698
      %v7719 = vmul.f32 %v7685, %v7698
      %v7720 = vmul.f32 %v7686, %v7698
      %v7721 = vmul.f32 %v7687, %v7698
      %v7722 = vmul.f32 %v7688, %v7698
      %v7723 = vmul.f32 %v7689, %v7698
      %v7724 = vmul.f32 %v7690, %v7698
      %v7725 = vmul.f32 %v7691, %v7698
      %v7726 = vmul.f32 %v7692, %v7698
      %v7727 = vmul.f32 %v7693, %v7698
      %v7728 = vmul.f32 %v7694, %v7698
      %v7729 = vmul.f32 %v7695, %v7698
      %v7730 = vmul.f32 %v7696, %v7698
      %v7731 = vadd.f32 %v7633, %v7699
      %v7732 = vadd.f32 %v7634, %v7700
      %v7733 = vadd.f32 %v7635, %v7701
      %v7734 = vadd.f32 %v7636, %v7702
      %v7735 = vadd.f32 %v7637, %v7703
      %v7736 = vadd.f32 %v7638, %v7704
      %v7737 = vadd.f32 %v7639, %v7705
      %v7738 = vadd.f32 %v7640, %v7706
      %v7739 = vadd.f32 %v7641, %v7707
      %v7740 = vadd.f32 %v7642, %v7708
      %v7741 = vadd.f32 %v7643, %v7709
      %v7742 = vadd.f32 %v7644, %v7710
      %v7743 = vadd.f32 %v7645, %v7711
      %v7744 = vadd.f32 %v7646, %v7712
      %v7745 = vadd.f32 %v7647, %v7713
      %v7746 = vadd.f32 %v7648, %v7714
      %v7747 = vadd.f32 %v7649, %v7715
      %v7748 = vadd.f32 %v7650, %v7716
      %v7749 = vadd.f32 %v7651, %v7717
      %v7750 = vadd.f32 %v7652, %v7718
      %v7751 = vadd.f32 %v7653, %v7719
      %v7752 = vadd.f32 %v7654, %v7720
      %v7753 = vadd.f32 %v7655, %v7721
      %v7754 = vadd.f32 %v7656, %v7722
      %v7755 = vadd.f32 %v7657, %v7723
      %v7756 = vadd.f32 %v7658, %v7724
      %v7757 = vadd.f32 %v7659, %v7725
      %v7758 = vadd.f32 %v7660, %v7726
      %v7759 = vadd.f32 %v7661, %v7727
      %v7760 = vadd.f32 %v7662, %v7728
      %v7761 = vadd.f32 %v7663, %v7729
      %v7762 = vadd.f32 %v7664, %v7730
      %v7763 = vld [vmem:[%s7338 + $0x1] sm:$0xff]
      %v7764 = vld [vmem:[%s7338 + $0x9] sm:$0xff]
      %v7765 = vld [vmem:[%s7338 + $0x19] sm:$0xff]
      %v7766 = vld [vmem:[%s7338 + $0x21] sm:$0xff]
      %v7767 = vld [vmem:[%s7338 + $0x31] sm:$0xff]
      %v7768 = vld [vmem:[%s7338 + $0x39] sm:$0xff]
      %v7769 = vld [vmem:[%s7338 + $0x49] sm:$0xff]
      %v7770 = vld [vmem:[%s7338 + $0x51] sm:$0xff]
      %v7771 = vld [vmem:[%s7338 + $0x61] sm:$0xff]
      %v7772 = vld [vmem:[%s7338 + $0x69] sm:$0xff]
      %v7773 = vld [vmem:[%s7338 + $0x79] sm:$0xff]
      %v7774 = vld [vmem:[%s7338 + $0x81] sm:$0xff]
      %v7775 = vld [vmem:[%s7338 + $0x91] sm:$0xff]
      %v7776 = vld [vmem:[%s7338 + $0x99] sm:$0xff]
      %v7777 = vld [vmem:[%s7338 + $0xa9] sm:$0xff]
      %v7778 = vld [vmem:[%s7338 + $0xb1] sm:$0xff]
      %v7779 = vld [vmem:[%s7338 + $0xc1] sm:$0xff]
      %v7780 = vld [vmem:[%s7338 + $0xc9] sm:$0xff]
      %v7781 = vld [vmem:[%s7338 + $0xd9] sm:$0xff]
      %v7782 = vld [vmem:[%s7338 + $0xe1] sm:$0xff]
      %v7783 = vld [vmem:[%s7338 + $0xf1] sm:$0xff]
      %v7784 = vld [vmem:[%s7338 + $0xf9] sm:$0xff]
      %v7785 = vld [vmem:[%s7338 + $0x109] sm:$0xff]
      %v7786 = vld [vmem:[%s7338 + $0x111] sm:$0xff]
      %v7787 = vld [vmem:[%s7338 + $0x121] sm:$0xff]
      %v7788 = vld [vmem:[%s7338 + $0x129] sm:$0xff]
      %v7789 = vld [vmem:[%s7338 + $0x139] sm:$0xff]
      %v7790 = vld [vmem:[%s7338 + $0x141] sm:$0xff]
      %v7791 = vld [vmem:[%s7338 + $0x151] sm:$0xff]
      %v7792 = vld [vmem:[%s7338 + $0x159] sm:$0xff]
      %v7793 = vld [vmem:[%s7338 + $0x169] sm:$0xff]
      %v7794 = vld [vmem:[%s7338 + $0x171] sm:$0xff]
      %v7795 = vld [vmem:[%s7 + $0x4] sm:$0x1]
      %v7796 = vperm.slane %v7795, 0
      %v7797 = vmul.f32 %v7763, %v7796
      %v7798 = vmul.f32 %v7764, %v7796
      %v7799 = vmul.f32 %v7765, %v7796
      %v7800 = vmul.f32 %v7766, %v7796
      %v7801 = vmul.f32 %v7767, %v7796
      %v7802 = vmul.f32 %v7768, %v7796
      %v7803 = vmul.f32 %v7769, %v7796
      %v7804 = vmul.f32 %v7770, %v7796
      %v7805 = vmul.f32 %v7771, %v7796
      %v7806 = vmul.f32 %v7772, %v7796
      %v7807 = vmul.f32 %v7773, %v7796
      %v7808 = vmul.f32 %v7774, %v7796
      %v7809 = vmul.f32 %v7775, %v7796
      %v7810 = vmul.f32 %v7776, %v7796
      %v7811 = vmul.f32 %v7777, %v7796
      %v7812 = vmul.f32 %v7778, %v7796
      %v7813 = vmul.f32 %v7779, %v7796
      %v7814 = vmul.f32 %v7780, %v7796
      %v7815 = vmul.f32 %v7781, %v7796
      %v7816 = vmul.f32 %v7782, %v7796
      %v7817 = vmul.f32 %v7783, %v7796
      %v7818 = vmul.f32 %v7784, %v7796
      %v7819 = vmul.f32 %v7785, %v7796
      %v7820 = vmul.f32 %v7786, %v7796
      %v7821 = vmul.f32 %v7787, %v7796
      %v7822 = vmul.f32 %v7788, %v7796
      %v7823 = vmul.f32 %v7789, %v7796
      %v7824 = vmul.f32 %v7790, %v7796
      %v7825 = vmul.f32 %v7791, %v7796
      %v7826 = vmul.f32 %v7792, %v7796
      %v7827 = vmul.f32 %v7793, %v7796
      %v7828 = vmul.f32 %v7794, %v7796
      %v7829 = vadd.f32 %v7731, %v7797
      %v7830 = vadd.f32 %v7732, %v7798
      %v7831 = vadd.f32 %v7733, %v7799
      %v7832 = vadd.f32 %v7734, %v7800
      %v7833 = vadd.f32 %v7735, %v7801
      %v7834 = vadd.f32 %v7736, %v7802
      %v7835 = vadd.f32 %v7737, %v7803
      %v7836 = vadd.f32 %v7738, %v7804
      %v7837 = vadd.f32 %v7739, %v7805
      %v7838 = vadd.f32 %v7740, %v7806
      %v7839 = vadd.f32 %v7741, %v7807
      %v7840 = vadd.f32 %v7742, %v7808
      %v7841 = vadd.f32 %v7743, %v7809
      %v7842 = vadd.f32 %v7744, %v7810
      %v7843 = vadd.f32 %v7745, %v7811
      %v7844 = vadd.f32 %v7746, %v7812
      %v7845 = vadd.f32 %v7747, %v7813
      %v7846 = vadd.f32 %v7748, %v7814
      %v7847 = vadd.f32 %v7749, %v7815
      %v7848 = vadd.f32 %v7750, %v7816
      %v7849 = vadd.f32 %v7751, %v7817
      %v7850 = vadd.f32 %v7752, %v7818
      %v7851 = vadd.f32 %v7753, %v7819
      %v7852 = vadd.f32 %v7754, %v7820
      %v7853 = vadd.f32 %v7755, %v7821
      %v7854 = vadd.f32 %v7756, %v7822
      %v7855 = vadd.f32 %v7757, %v7823
      %v7856 = vadd.f32 %v7758, %v7824
      %v7857 = vadd.f32 %v7759, %v7825
      %v7858 = vadd.f32 %v7760, %v7826
      %v7859 = vadd.f32 %v7761, %v7827
      %v7860 = vadd.f32 %v7762, %v7828
      %v7861 = vld [vmem:[%s7338 + $0x2] sm:$0xff]
      %v7862 = vld [vmem:[%s7338 + $0xa] sm:$0xff]
      %v7863 = vld [vmem:[%s7338 + $0x1a] sm:$0xff]
      %v7864 = vld [vmem:[%s7338 + $0x22] sm:$0xff]
      %v7865 = vld [vmem:[%s7338 + $0x32] sm:$0xff]
      %v7866 = vld [vmem:[%s7338 + $0x3a] sm:$0xff]
      %v7867 = vld [vmem:[%s7338 + $0x4a] sm:$0xff]
      %v7868 = vld [vmem:[%s7338 + $0x52] sm:$0xff]
      %v7869 = vld [vmem:[%s7338 + $0x62] sm:$0xff]
      %v7870 = vld [vmem:[%s7338 + $0x6a] sm:$0xff]
      %v7871 = vld [vmem:[%s7338 + $0x7a] sm:$0xff]
      %v7872 = vld [vmem:[%s7338 + $0x82] sm:$0xff]
      %v7873 = vld [vmem:[%s7338 + $0x92] sm:$0xff]
      %v7874 = vld [vmem:[%s7338 + $0x9a] sm:$0xff]
      %v7875 = vld [vmem:[%s7338 + $0xaa] sm:$0xff]
      %v7876 = vld [vmem:[%s7338 + $0xb2] sm:$0xff]
      %v7877 = vld [vmem:[%s7338 + $0xc2] sm:$0xff]
      %v7878 = vld [vmem:[%s7338 + $0xca] sm:$0xff]
      %v7879 = vld [vmem:[%s7338 + $0xda] sm:$0xff]
      %v7880 = vld [vmem:[%s7338 + $0xe2] sm:$0xff]
      %v7881 = vld [vmem:[%s7338 + $0xf2] sm:$0xff]
      %v7882 = vld [vmem:[%s7338 + $0xfa] sm:$0xff]
      %v7883 = vld [vmem:[%s7338 + $0x10a] sm:$0xff]
      %v7884 = vld [vmem:[%s7338 + $0x112] sm:$0xff]
      %v7885 = vld [vmem:[%s7338 + $0x122] sm:$0xff]
      %v7886 = vld [vmem:[%s7338 + $0x12a] sm:$0xff]
      %v7887 = vld [vmem:[%s7338 + $0x13a] sm:$0xff]
      %v7888 = vld [vmem:[%s7338 + $0x142] sm:$0xff]
      %v7889 = vld [vmem:[%s7338 + $0x152] sm:$0xff]
      %v7890 = vld [vmem:[%s7338 + $0x15a] sm:$0xff]
      %v7891 = vld [vmem:[%s7338 + $0x16a] sm:$0xff]
      %v7892 = vld [vmem:[%s7338 + $0x172] sm:$0xff]
      %v7893 = vld [vmem:[%s7 + $0x5] sm:$0x1]
      %v7894 = vperm.slane %v7893, 0
      %v7895 = vmul.f32 %v7861, %v7894
      %v7896 = vmul.f32 %v7862, %v7894
      %v7897 = vmul.f32 %v7863, %v7894
      %v7898 = vmul.f32 %v7864, %v7894
      %v7899 = vmul.f32 %v7865, %v7894
      %v7900 = vmul.f32 %v7866, %v7894
      %v7901 = vmul.f32 %v7867, %v7894
      %v7902 = vmul.f32 %v7868, %v7894
      %v7903 = vmul.f32 %v7869, %v7894
      %v7904 = vmul.f32 %v7870, %v7894
      %v7905 = vmul.f32 %v7871, %v7894
      %v7906 = vmul.f32 %v7872, %v7894
      %v7907 = vmul.f32 %v7873, %v7894
      %v7908 = vmul.f32 %v7874, %v7894
      %v7909 = vmul.f32 %v7875, %v7894
      %v7910 = vmul.f32 %v7876, %v7894
      %v7911 = vmul.f32 %v7877, %v7894
      %v7912 = vmul.f32 %v7878, %v7894
      %v7913 = vmul.f32 %v7879, %v7894
      %v7914 = vmul.f32 %v7880, %v7894
      %v7915 = vmul.f32 %v7881, %v7894
      %v7916 = vmul.f32 %v7882, %v7894
      %v7917 = vmul.f32 %v7883, %v7894
      %v7918 = vmul.f32 %v7884, %v7894
      %v7919 = vmul.f32 %v7885, %v7894
      %v7920 = vmul.f32 %v7886, %v7894
      %v7921 = vmul.f32 %v7887, %v7894
      %v7922 = vmul.f32 %v7888, %v7894
      %v7923 = vmul.f32 %v7889, %v7894
      %v7924 = vmul.f32 %v7890, %v7894
      %v7925 = vmul.f32 %v7891, %v7894
      %v7926 = vmul.f32 %v7892, %v7894
      %v7927 = vadd.f32 %v7829, %v7895
      %v7928 = vadd.f32 %v7830, %v7896
      %v7929 = vadd.f32 %v7831, %v7897
      %v7930 = vadd.f32 %v7832, %v7898
      %v7931 = vadd.f32 %v7833, %v7899
      %v7932 = vadd.f32 %v7834, %v7900
      %v7933 = vadd.f32 %v7835, %v7901
      %v7934 = vadd.f32 %v7836, %v7902
      %v7935 = vadd.f32 %v7837, %v7903
      %v7936 = vadd.f32 %v7838, %v7904
      %v7937 = vadd.f32 %v7839, %v7905
      %v7938 = vadd.f32 %v7840, %v7906
      %v7939 = vadd.f32 %v7841, %v7907
      %v7940 = vadd.f32 %v7842, %v7908
      %v7941 = vadd.f32 %v7843, %v7909
      %v7942 = vadd.f32 %v7844, %v7910
      %v7943 = vadd.f32 %v7845, %v7911
      %v7944 = vadd.f32 %v7846, %v7912
      %v7945 = vadd.f32 %v7847, %v7913
      %v7946 = vadd.f32 %v7848, %v7914
      %v7947 = vadd.f32 %v7849, %v7915
      %v7948 = vadd.f32 %v7850, %v7916
      %v7949 = vadd.f32 %v7851, %v7917
      %v7950 = vadd.f32 %v7852, %v7918
      %v7951 = vadd.f32 %v7853, %v7919
      %v7952 = vadd.f32 %v7854, %v7920
      %v7953 = vadd.f32 %v7855, %v7921
      %v7954 = vadd.f32 %v7856, %v7922
      %v7955 = vadd.f32 %v7857, %v7923
      %v7956 = vadd.f32 %v7858, %v7924
      %v7957 = vadd.f32 %v7859, %v7925
      %v7958 = vadd.f32 %v7860, %v7926
      %s7959 = scalar_lea.vmem [#allocation4], 48
      %v7960 = vld [vmem:[%s7959] sm:$0xff]
      %v7961 = vld [vmem:[%s7959 + $0x8] sm:$0xff]
      %v7962 = vld [vmem:[%s7959 + $0x18] sm:$0xff]
      %v7963 = vld [vmem:[%s7959 + $0x20] sm:$0xff]
      %v7964 = vld [vmem:[%s7959 + $0x30] sm:$0xff]
      %v7965 = vld [vmem:[%s7959 + $0x38] sm:$0xff]
      %v7966 = vld [vmem:[%s7959 + $0x48] sm:$0xff]
      %v7967 = vld [vmem:[%s7959 + $0x50] sm:$0xff]
      %v7968 = vld [vmem:[%s7959 + $0x60] sm:$0xff]
      %v7969 = vld [vmem:[%s7959 + $0x68] sm:$0xff]
      %v7970 = vld [vmem:[%s7959 + $0x78] sm:$0xff]
      %v7971 = vld [vmem:[%s7959 + $0x80] sm:$0xff]
      %v7972 = vld [vmem:[%s7959 + $0x90] sm:$0xff]
      %v7973 = vld [vmem:[%s7959 + $0x98] sm:$0xff]
      %v7974 = vld [vmem:[%s7959 + $0xa8] sm:$0xff]
      %v7975 = vld [vmem:[%s7959 + $0xb0] sm:$0xff]
      %v7976 = vld [vmem:[%s7959 + $0xc0] sm:$0xff]
      %v7977 = vld [vmem:[%s7959 + $0xc8] sm:$0xff]
      %v7978 = vld [vmem:[%s7959 + $0xd8] sm:$0xff]
      %v7979 = vld [vmem:[%s7959 + $0xe0] sm:$0xff]
      %v7980 = vld [vmem:[%s7959 + $0xf0] sm:$0xff]
      %v7981 = vld [vmem:[%s7959 + $0xf8] sm:$0xff]
      %v7982 = vld [vmem:[%s7959 + $0x108] sm:$0xff]
      %v7983 = vld [vmem:[%s7959 + $0x110] sm:$0xff]
      %v7984 = vld [vmem:[%s7959 + $0x120] sm:$0xff]
      %v7985 = vld [vmem:[%s7959 + $0x128] sm:$0xff]
      %v7986 = vld [vmem:[%s7959 + $0x138] sm:$0xff]
      %v7987 = vld [vmem:[%s7959 + $0x140] sm:$0xff]
      %v7988 = vld [vmem:[%s7959 + $0x150] sm:$0xff]
      %v7989 = vld [vmem:[%s7959 + $0x158] sm:$0xff]
      %v7990 = vld [vmem:[%s7959 + $0x168] sm:$0xff]
      %v7991 = vld [vmem:[%s7959 + $0x170] sm:$0xff]
      %v7992 = vld [vmem:[%s7 + $0x6] sm:$0x1]
      %v7993 = vperm.slane %v7992, 0
      %v7994 = vmul.f32 %v7960, %v7993
      %v7995 = vmul.f32 %v7961, %v7993
      %v7996 = vmul.f32 %v7962, %v7993
      %v7997 = vmul.f32 %v7963, %v7993
      %v7998 = vmul.f32 %v7964, %v7993
      %v7999 = vmul.f32 %v7965, %v7993
      %v8000 = vmul.f32 %v7966, %v7993
      %v8001 = vmul.f32 %v7967, %v7993
      %v8002 = vmul.f32 %v7968, %v7993
      %v8003 = vmul.f32 %v7969, %v7993
      %v8004 = vmul.f32 %v7970, %v7993
      %v8005 = vmul.f32 %v7971, %v7993
      %v8006 = vmul.f32 %v7972, %v7993
      %v8007 = vmul.f32 %v7973, %v7993
      %v8008 = vmul.f32 %v7974, %v7993
      %v8009 = vmul.f32 %v7975, %v7993
      %v8010 = vmul.f32 %v7976, %v7993
      %v8011 = vmul.f32 %v7977, %v7993
      %v8012 = vmul.f32 %v7978, %v7993
      %v8013 = vmul.f32 %v7979, %v7993
      %v8014 = vmul.f32 %v7980, %v7993
      %v8015 = vmul.f32 %v7981, %v7993
      %v8016 = vmul.f32 %v7982, %v7993
      %v8017 = vmul.f32 %v7983, %v7993
      %v8018 = vmul.f32 %v7984, %v7993
      %v8019 = vmul.f32 %v7985, %v7993
      %v8020 = vmul.f32 %v7986, %v7993
      %v8021 = vmul.f32 %v7987, %v7993
      %v8022 = vmul.f32 %v7988, %v7993
      %v8023 = vmul.f32 %v7989, %v7993
      %v8024 = vmul.f32 %v7990, %v7993
      %v8025 = vmul.f32 %v7991, %v7993
      %v8026 = vadd.f32 %v7927, %v7994
      %v8027 = vadd.f32 %v7928, %v7995
      %v8028 = vadd.f32 %v7929, %v7996
      %v8029 = vadd.f32 %v7930, %v7997
      %v8030 = vadd.f32 %v7931, %v7998
      %v8031 = vadd.f32 %v7932, %v7999
      %v8032 = vadd.f32 %v7933, %v8000
      %v8033 = vadd.f32 %v7934, %v8001
      %v8034 = vadd.f32 %v7935, %v8002
      %v8035 = vadd.f32 %v7936, %v8003
      %v8036 = vadd.f32 %v7937, %v8004
      %v8037 = vadd.f32 %v7938, %v8005
      %v8038 = vadd.f32 %v7939, %v8006
      %v8039 = vadd.f32 %v7940, %v8007
      %v8040 = vadd.f32 %v7941, %v8008
      %v8041 = vadd.f32 %v7942, %v8009
      %v8042 = vadd.f32 %v7943, %v8010
      %v8043 = vadd.f32 %v7944, %v8011
      %v8044 = vadd.f32 %v7945, %v8012
      %v8045 = vadd.f32 %v7946, %v8013
      %v8046 = vadd.f32 %v7947, %v8014
      %v8047 = vadd.f32 %v7948, %v8015
      %v8048 = vadd.f32 %v7949, %v8016
      %v8049 = vadd.f32 %v7950, %v8017
      %v8050 = vadd.f32 %v7951, %v8018
      %v8051 = vadd.f32 %v7952, %v8019
      %v8052 = vadd.f32 %v7953, %v8020
      %v8053 = vadd.f32 %v7954, %v8021
      %v8054 = vadd.f32 %v7955, %v8022
      %v8055 = vadd.f32 %v7956, %v8023
      %v8056 = vadd.f32 %v7957, %v8024
      %v8057 = vadd.f32 %v7958, %v8025
      %v8058 = vld [vmem:[%s7959 + $0x1] sm:$0xff]
      %v8059 = vld [vmem:[%s7959 + $0x9] sm:$0xff]
      %v8060 = vld [vmem:[%s7959 + $0x19] sm:$0xff]
      %v8061 = vld [vmem:[%s7959 + $0x21] sm:$0xff]
      %v8062 = vld [vmem:[%s7959 + $0x31] sm:$0xff]
      %v8063 = vld [vmem:[%s7959 + $0x39] sm:$0xff]
      %v8064 = vld [vmem:[%s7959 + $0x49] sm:$0xff]
      %v8065 = vld [vmem:[%s7959 + $0x51] sm:$0xff]
      %v8066 = vld [vmem:[%s7959 + $0x61] sm:$0xff]
      %v8067 = vld [vmem:[%s7959 + $0x69] sm:$0xff]
      %v8068 = vld [vmem:[%s7959 + $0x79] sm:$0xff]
      %v8069 = vld [vmem:[%s7959 + $0x81] sm:$0xff]
      %v8070 = vld [vmem:[%s7959 + $0x91] sm:$0xff]
      %v8071 = vld [vmem:[%s7959 + $0x99] sm:$0xff]
      %v8072 = vld [vmem:[%s7959 + $0xa9] sm:$0xff]
      %v8073 = vld [vmem:[%s7959 + $0xb1] sm:$0xff]
      %v8074 = vld [vmem:[%s7959 + $0xc1] sm:$0xff]
      %v8075 = vld [vmem:[%s7959 + $0xc9] sm:$0xff]
      %v8076 = vld [vmem:[%s7959 + $0xd9] sm:$0xff]
      %v8077 = vld [vmem:[%s7959 + $0xe1] sm:$0xff]
      %v8078 = vld [vmem:[%s7959 + $0xf1] sm:$0xff]
      %v8079 = vld [vmem:[%s7959 + $0xf9] sm:$0xff]
      %v8080 = vld [vmem:[%s7959 + $0x109] sm:$0xff]
      %v8081 = vld [vmem:[%s7959 + $0x111] sm:$0xff]
      %v8082 = vld [vmem:[%s7959 + $0x121] sm:$0xff]
      %v8083 = vld [vmem:[%s7959 + $0x129] sm:$0xff]
      %v8084 = vld [vmem:[%s7959 + $0x139] sm:$0xff]
      %v8085 = vld [vmem:[%s7959 + $0x141] sm:$0xff]
      %v8086 = vld [vmem:[%s7959 + $0x151] sm:$0xff]
      %v8087 = vld [vmem:[%s7959 + $0x159] sm:$0xff]
      %v8088 = vld [vmem:[%s7959 + $0x169] sm:$0xff]
      %v8089 = vld [vmem:[%s7959 + $0x171] sm:$0xff]
      %v8090 = vld [vmem:[%s7 + $0x7] sm:$0x1]
      %v8091 = vperm.slane %v8090, 0
      %v8092 = vmul.f32 %v8058, %v8091
      %v8093 = vmul.f32 %v8059, %v8091
      %v8094 = vmul.f32 %v8060, %v8091
      %v8095 = vmul.f32 %v8061, %v8091
      %v8096 = vmul.f32 %v8062, %v8091
      %v8097 = vmul.f32 %v8063, %v8091
      %v8098 = vmul.f32 %v8064, %v8091
      %v8099 = vmul.f32 %v8065, %v8091
      %v8100 = vmul.f32 %v8066, %v8091
      %v8101 = vmul.f32 %v8067, %v8091
      %v8102 = vmul.f32 %v8068, %v8091
      %v8103 = vmul.f32 %v8069, %v8091
      %v8104 = vmul.f32 %v8070, %v8091
      %v8105 = vmul.f32 %v8071, %v8091
      %v8106 = vmul.f32 %v8072, %v8091
      %v8107 = vmul.f32 %v8073, %v8091
      %v8108 = vmul.f32 %v8074, %v8091
      %v8109 = vmul.f32 %v8075, %v8091
      %v8110 = vmul.f32 %v8076, %v8091
      %v8111 = vmul.f32 %v8077, %v8091
      %v8112 = vmul.f32 %v8078, %v8091
      %v8113 = vmul.f32 %v8079, %v8091
      %v8114 = vmul.f32 %v8080, %v8091
      %v8115 = vmul.f32 %v8081, %v8091
      %v8116 = vmul.f32 %v8082, %v8091
      %v8117 = vmul.f32 %v8083, %v8091
      %v8118 = vmul.f32 %v8084, %v8091
      %v8119 = vmul.f32 %v8085, %v8091
      %v8120 = vmul.f32 %v8086, %v8091
      %v8121 = vmul.f32 %v8087, %v8091
      %v8122 = vmul.f32 %v8088, %v8091
      %v8123 = vmul.f32 %v8089, %v8091
      %v8124 = vadd.f32 %v8026, %v8092
      %v8125 = vadd.f32 %v8027, %v8093
      %v8126 = vadd.f32 %v8028, %v8094
      %v8127 = vadd.f32 %v8029, %v8095
      %v8128 = vadd.f32 %v8030, %v8096
      %v8129 = vadd.f32 %v8031, %v8097
      %v8130 = vadd.f32 %v8032, %v8098
      %v8131 = vadd.f32 %v8033, %v8099
      %v8132 = vadd.f32 %v8034, %v8100
      %v8133 = vadd.f32 %v8035, %v8101
      %v8134 = vadd.f32 %v8036, %v8102
      %v8135 = vadd.f32 %v8037, %v8103
      %v8136 = vadd.f32 %v8038, %v8104
      %v8137 = vadd.f32 %v8039, %v8105
      %v8138 = vadd.f32 %v8040, %v8106
      %v8139 = vadd.f32 %v8041, %v8107
      %v8140 = vadd.f32 %v8042, %v8108
      %v8141 = vadd.f32 %v8043, %v8109
      %v8142 = vadd.f32 %v8044, %v8110
      %v8143 = vadd.f32 %v8045, %v8111
      %v8144 = vadd.f32 %v8046, %v8112
      %v8145 = vadd.f32 %v8047, %v8113
      %v8146 = vadd.f32 %v8048, %v8114
      %v8147 = vadd.f32 %v8049, %v8115
      %v8148 = vadd.f32 %v8050, %v8116
      %v8149 = vadd.f32 %v8051, %v8117
      %v8150 = vadd.f32 %v8052, %v8118
      %v8151 = vadd.f32 %v8053, %v8119
      %v8152 = vadd.f32 %v8054, %v8120
      %v8153 = vadd.f32 %v8055, %v8121
      %v8154 = vadd.f32 %v8056, %v8122
      %v8155 = vadd.f32 %v8057, %v8123
      %v8156 = vld [vmem:[%s7959 + $0x2] sm:$0xff]
      %v8157 = vld [vmem:[%s7959 + $0xa] sm:$0xff]
      %v8158 = vld [vmem:[%s7959 + $0x1a] sm:$0xff]
      %v8159 = vld [vmem:[%s7959 + $0x22] sm:$0xff]
      %v8160 = vld [vmem:[%s7959 + $0x32] sm:$0xff]
      %v8161 = vld [vmem:[%s7959 + $0x3a] sm:$0xff]
      %v8162 = vld [vmem:[%s7959 + $0x4a] sm:$0xff]
      %v8163 = vld [vmem:[%s7959 + $0x52] sm:$0xff]
      %v8164 = vld [vmem:[%s7959 + $0x62] sm:$0xff]
      %v8165 = vld [vmem:[%s7959 + $0x6a] sm:$0xff]
      %v8166 = vld [vmem:[%s7959 + $0x7a] sm:$0xff]
      %v8167 = vld [vmem:[%s7959 + $0x82] sm:$0xff]
      %v8168 = vld [vmem:[%s7959 + $0x92] sm:$0xff]
      %v8169 = vld [vmem:[%s7959 + $0x9a] sm:$0xff]
      %v8170 = vld [vmem:[%s7959 + $0xaa] sm:$0xff]
      %v8171 = vld [vmem:[%s7959 + $0xb2] sm:$0xff]
      %v8172 = vld [vmem:[%s7959 + $0xc2] sm:$0xff]
      %v8173 = vld [vmem:[%s7959 + $0xca] sm:$0xff]
      %v8174 = vld [vmem:[%s7959 + $0xda] sm:$0xff]
      %v8175 = vld [vmem:[%s7959 + $0xe2] sm:$0xff]
      %v8176 = vld [vmem:[%s7959 + $0xf2] sm:$0xff]
      %v8177 = vld [vmem:[%s7959 + $0xfa] sm:$0xff]
      %v8178 = vld [vmem:[%s7959 + $0x10a] sm:$0xff]
      %v8179 = vld [vmem:[%s7959 + $0x112] sm:$0xff]
      %v8180 = vld [vmem:[%s7959 + $0x122] sm:$0xff]
      %v8181 = vld [vmem:[%s7959 + $0x12a] sm:$0xff]
      %v8182 = vld [vmem:[%s7959 + $0x13a] sm:$0xff]
      %v8183 = vld [vmem:[%s7959 + $0x142] sm:$0xff]
      %v8184 = vld [vmem:[%s7959 + $0x152] sm:$0xff]
      %v8185 = vld [vmem:[%s7959 + $0x15a] sm:$0xff]
      %v8186 = vld [vmem:[%s7959 + $0x16a] sm:$0xff]
      %v8187 = vld [vmem:[%s7959 + $0x172] sm:$0xff]
      %v8188 = vld [vmem:[%s7 + $0x8] sm:$0x1]
      %v8189 = vperm.slane %v8188, 0
      %v8190 = vmul.f32 %v8156, %v8189
      %v8191 = vmul.f32 %v8157, %v8189
      %v8192 = vmul.f32 %v8158, %v8189
      %v8193 = vmul.f32 %v8159, %v8189
      %v8194 = vmul.f32 %v8160, %v8189
      %v8195 = vmul.f32 %v8161, %v8189
      %v8196 = vmul.f32 %v8162, %v8189
      %v8197 = vmul.f32 %v8163, %v8189
      %v8198 = vmul.f32 %v8164, %v8189
      %v8199 = vmul.f32 %v8165, %v8189
      %v8200 = vmul.f32 %v8166, %v8189
      %v8201 = vmul.f32 %v8167, %v8189
      %v8202 = vmul.f32 %v8168, %v8189
      %v8203 = vmul.f32 %v8169, %v8189
      %v8204 = vmul.f32 %v8170, %v8189
      %v8205 = vmul.f32 %v8171, %v8189
      %v8206 = vmul.f32 %v8172, %v8189
      %v8207 = vmul.f32 %v8173, %v8189
      %v8208 = vmul.f32 %v8174, %v8189
      %v8209 = vmul.f32 %v8175, %v8189
      %v8210 = vmul.f32 %v8176, %v8189
      %v8211 = vmul.f32 %v8177, %v8189
      %v8212 = vmul.f32 %v8178, %v8189
      %v8213 = vmul.f32 %v8179, %v8189
      %v8214 = vmul.f32 %v8180, %v8189
      %v8215 = vmul.f32 %v8181, %v8189
      %v8216 = vmul.f32 %v8182, %v8189
      %v8217 = vmul.f32 %v8183, %v8189
      %v8218 = vmul.f32 %v8184, %v8189
      %v8219 = vmul.f32 %v8185, %v8189
      %v8220 = vmul.f32 %v8186, %v8189
      %v8221 = vmul.f32 %v8187, %v8189
      %v8222 = vadd.f32 %v8124, %v8190
      %v8223 = vadd.f32 %v8125, %v8191
      %v8224 = vadd.f32 %v8126, %v8192
      %v8225 = vadd.f32 %v8127, %v8193
      %v8226 = vadd.f32 %v8128, %v8194
      %v8227 = vadd.f32 %v8129, %v8195
      %v8228 = vadd.f32 %v8130, %v8196
      %v8229 = vadd.f32 %v8131, %v8197
      %v8230 = vadd.f32 %v8132, %v8198
      %v8231 = vadd.f32 %v8133, %v8199
      %v8232 = vadd.f32 %v8134, %v8200
      %v8233 = vadd.f32 %v8135, %v8201
      %v8234 = vadd.f32 %v8136, %v8202
      %v8235 = vadd.f32 %v8137, %v8203
      %v8236 = vadd.f32 %v8138, %v8204
      %v8237 = vadd.f32 %v8139, %v8205
      %v8238 = vadd.f32 %v8140, %v8206
      %v8239 = vadd.f32 %v8141, %v8207
      %v8240 = vadd.f32 %v8142, %v8208
      %v8241 = vadd.f32 %v8143, %v8209
      %v8242 = vadd.f32 %v8144, %v8210
      %v8243 = vadd.f32 %v8145, %v8211
      %v8244 = vadd.f32 %v8146, %v8212
      %v8245 = vadd.f32 %v8147, %v8213
      %v8246 = vadd.f32 %v8148, %v8214
      %v8247 = vadd.f32 %v8149, %v8215
      %v8248 = vadd.f32 %v8150, %v8216
      %v8249 = vadd.f32 %v8151, %v8217
      %v8250 = vadd.f32 %v8152, %v8218
      %v8251 = vadd.f32 %v8153, %v8219
      %v8252 = vadd.f32 %v8154, %v8220
      %v8253 = vadd.f32 %v8155, %v8221
      %v8254 = vsel %vm335, %v8222, 0.0
      %8255 = vadd.xlane.f32.xlu0 %v8254
      %v8256 = vpop.xlane.xlu0 %8255
      %v8257 = vsel %vm335, %v8223, 0.0
      %8258 = vadd.xlane.f32.xlu0 %v8257
      %v8259 = vpop.xlane.xlu0 %8258
      %v8260 = vsel %vm335, %v8224, 0.0
      %8261 = vadd.xlane.f32.xlu0 %v8260
      %v8262 = vpop.xlane.xlu0 %8261
      %v8263 = vsel %vm335, %v8225, 0.0
      %8264 = vadd.xlane.f32.xlu0 %v8263
      %v8265 = vpop.xlane.xlu0 %8264
      %v8266 = vsel %vm335, %v8226, 0.0
      %8267 = vadd.xlane.f32.xlu0 %v8266
      %v8268 = vpop.xlane.xlu0 %8267
      %v8269 = vsel %vm335, %v8227, 0.0
      %8270 = vadd.xlane.f32.xlu0 %v8269
      %v8271 = vpop.xlane.xlu0 %8270
      %v8272 = vsel %vm335, %v8228, 0.0
      %8273 = vadd.xlane.f32.xlu0 %v8272
      %v8274 = vpop.xlane.xlu0 %8273
      %v8275 = vsel %vm335, %v8229, 0.0
      %8276 = vadd.xlane.f32.xlu0 %v8275
      %v8277 = vpop.xlane.xlu0 %8276
      %v8278 = vsel %vm335, %v8230, 0.0
      %8279 = vadd.xlane.f32.xlu0 %v8278
      %v8280 = vpop.xlane.xlu0 %8279
      %v8281 = vsel %vm335, %v8231, 0.0
      %8282 = vadd.xlane.f32.xlu0 %v8281
      %v8283 = vpop.xlane.xlu0 %8282
      %v8284 = vsel %vm335, %v8232, 0.0
      %8285 = vadd.xlane.f32.xlu0 %v8284
      %v8286 = vpop.xlane.xlu0 %8285
      %v8287 = vsel %vm335, %v8233, 0.0
      %8288 = vadd.xlane.f32.xlu0 %v8287
      %v8289 = vpop.xlane.xlu0 %8288
      %v8290 = vsel %vm335, %v8234, 0.0
      %8291 = vadd.xlane.f32.xlu0 %v8290
      %v8292 = vpop.xlane.xlu0 %8291
      %v8293 = vsel %vm335, %v8235, 0.0
      %8294 = vadd.xlane.f32.xlu0 %v8293
      %v8295 = vpop.xlane.xlu0 %8294
      %v8296 = vsel %vm335, %v8236, 0.0
      %8297 = vadd.xlane.f32.xlu0 %v8296
      %v8298 = vpop.xlane.xlu0 %8297
      %v8299 = vsel %vm335, %v8237, 0.0
      %8300 = vadd.xlane.f32.xlu0 %v8299
      %v8301 = vpop.xlane.xlu0 %8300
      %v8302 = vsel %vm335, %v8238, 0.0
      %8303 = vadd.xlane.f32.xlu0 %v8302
      %v8304 = vpop.xlane.xlu0 %8303
      %v8305 = vsel %vm335, %v8239, 0.0
      %8306 = vadd.xlane.f32.xlu0 %v8305
      %v8307 = vpop.xlane.xlu0 %8306
      %v8308 = vsel %vm335, %v8240, 0.0
      %8309 = vadd.xlane.f32.xlu0 %v8308
      %v8310 = vpop.xlane.xlu0 %8309
      %v8311 = vsel %vm335, %v8241, 0.0
      %8312 = vadd.xlane.f32.xlu0 %v8311
      %v8313 = vpop.xlane.xlu0 %8312
      %v8314 = vsel %vm335, %v8242, 0.0
      %8315 = vadd.xlane.f32.xlu0 %v8314
      %v8316 = vpop.xlane.xlu0 %8315
      %v8317 = vsel %vm335, %v8243, 0.0
      %8318 = vadd.xlane.f32.xlu0 %v8317
      %v8319 = vpop.xlane.xlu0 %8318
      %v8320 = vsel %vm335, %v8244, 0.0
      %8321 = vadd.xlane.f32.xlu0 %v8320
      %v8322 = vpop.xlane.xlu0 %8321
      %v8323 = vsel %vm335, %v8245, 0.0
      %8324 = vadd.xlane.f32.xlu0 %v8323
      %v8325 = vpop.xlane.xlu0 %8324
      %v8326 = vsel %vm335, %v8246, 0.0
      %8327 = vadd.xlane.f32.xlu0 %v8326
      %v8328 = vpop.xlane.xlu0 %8327
      %v8329 = vsel %vm335, %v8247, 0.0
      %8330 = vadd.xlane.f32.xlu0 %v8329
      %v8331 = vpop.xlane.xlu0 %8330
      %v8332 = vsel %vm335, %v8248, 0.0
      %8333 = vadd.xlane.f32.xlu0 %v8332
      %v8334 = vpop.xlane.xlu0 %8333
      %v8335 = vsel %vm335, %v8249, 0.0
      %8336 = vadd.xlane.f32.xlu0 %v8335
      %v8337 = vpop.xlane.xlu0 %8336
      %v8338 = vsel %vm335, %v8250, 0.0
      %8339 = vadd.xlane.f32.xlu0 %v8338
      %v8340 = vpop.xlane.xlu0 %8339
      %v8341 = vsel %vm335, %v8251, 0.0
      %8342 = vadd.xlane.f32.xlu0 %v8341
      %v8343 = vpop.xlane.xlu0 %8342
      %v8344 = vsel %vm335, %v8252, 0.0
      %8345 = vadd.xlane.f32.xlu0 %v8344
      %v8346 = vpop.xlane.xlu0 %8345
      %v8347 = vsel %vm335, %v8253, 0.0
      %8348 = vadd.xlane.f32.xlu0 %v8347
      %v8349 = vpop.xlane.xlu0 %8348
      %v8350 = vld [vmem:[#allocation5] sm:$0x1]
      %v8352 = vperm.slane %v8350, 0
      %v8354 = vadd.f32 %v8256, %v8352
      %v8355 = vadd.f32 %v8259, %v8352
      %v8356 = vadd.f32 %v8262, %v8352
      %v8357 = vadd.f32 %v8265, %v8352
      %v8358 = vadd.f32 %v8268, %v8352
      %v8359 = vadd.f32 %v8271, %v8352
      %v8360 = vadd.f32 %v8274, %v8352
      %v8361 = vadd.f32 %v8277, %v8352
      %v8362 = vadd.f32 %v8280, %v8352
      %v8363 = vadd.f32 %v8283, %v8352
      %v8364 = vadd.f32 %v8286, %v8352
      %v8365 = vadd.f32 %v8289, %v8352
      %v8366 = vadd.f32 %v8292, %v8352
      %v8367 = vadd.f32 %v8295, %v8352
      %v8368 = vadd.f32 %v8298, %v8352
      %v8369 = vadd.f32 %v8301, %v8352
      %v8370 = vadd.f32 %v8304, %v8352
      %v8371 = vadd.f32 %v8307, %v8352
      %v8372 = vadd.f32 %v8310, %v8352
      %v8373 = vadd.f32 %v8313, %v8352
      %v8374 = vadd.f32 %v8316, %v8352
      %v8375 = vadd.f32 %v8319, %v8352
      %v8376 = vadd.f32 %v8322, %v8352
      %v8377 = vadd.f32 %v8325, %v8352
      %v8378 = vadd.f32 %v8328, %v8352
      %v8379 = vadd.f32 %v8331, %v8352
      %v8380 = vadd.f32 %v8334, %v8352
      %v8381 = vadd.f32 %v8337, %v8352
      %v8382 = vadd.f32 %v8340, %v8352
      %v8383 = vadd.f32 %v8343, %v8352
      %v8384 = vadd.f32 %v8346, %v8352
      %v8385 = vadd.f32 %v8349, %v8352
      %vm8386 = vcmask 7168
      %8387 = vst.msk [vmem:[%s334] sm:$0xff] %vm8386, %v8354
      %8388 = vst.msk [vmem:[%s334 + $0x8] sm:$0xff] %vm8386, %v8355
      %8389 = vst.msk [vmem:[%s334 + $0x10] sm:$0xff] %vm8386, %v8356
      %8390 = vst.msk [vmem:[%s334 + $0x18] sm:$0xff] %vm8386, %v8357
      %8391 = vst.msk [vmem:[%s334 + $0x20] sm:$0xff] %vm8386, %v8358
      %8392 = vst.msk [vmem:[%s334 + $0x28] sm:$0xff] %vm8386, %v8359
      %8393 = vst.msk [vmem:[%s334 + $0x30] sm:$0xff] %vm8386, %v8360
      %8394 = vst.msk [vmem:[%s334 + $0x38] sm:$0xff] %vm8386, %v8361
      %8395 = vst.msk [vmem:[%s334 + $0x40] sm:$0xff] %vm8386, %v8362
      %8396 = vst.msk [vmem:[%s334 + $0x48] sm:$0xff] %vm8386, %v8363
      %8397 = vst.msk [vmem:[%s334 + $0x50] sm:$0xff] %vm8386, %v8364
      %8398 = vst.msk [vmem:[%s334 + $0x58] sm:$0xff] %vm8386, %v8365
      %8399 = vst.msk [vmem:[%s334 + $0x60] sm:$0xff] %vm8386, %v8366
      %8400 = vst.msk [vmem:[%s334 + $0x68] sm:$0xff] %vm8386, %v8367
      %8401 = vst.msk [vmem:[%s334 + $0x70] sm:$0xff] %vm8386, %v8368
      %8402 = vst.msk [vmem:[%s334 + $0x78] sm:$0xff] %vm8386, %v8369
      %8403 = vst.msk [vmem:[%s334 + $0x80] sm:$0xff] %vm8386, %v8370
      %8404 = vst.msk [vmem:[%s334 + $0x88] sm:$0xff] %vm8386, %v8371
      %8405 = vst.msk [vmem:[%s334 + $0x90] sm:$0xff] %vm8386, %v8372
      %8406 = vst.msk [vmem:[%s334 + $0x98] sm:$0xff] %vm8386, %v8373
      %8407 = vst.msk [vmem:[%s334 + $0xa0] sm:$0xff] %vm8386, %v8374
      %8408 = vst.msk [vmem:[%s334 + $0xa8] sm:$0xff] %vm8386, %v8375
      %8409 = vst.msk [vmem:[%s334 + $0xb0] sm:$0xff] %vm8386, %v8376
      %8410 = vst.msk [vmem:[%s334 + $0xb8] sm:$0xff] %vm8386, %v8377
      %8411 = vst.msk [vmem:[%s334 + $0xc0] sm:$0xff] %vm8386, %v8378
      %8412 = vst.msk [vmem:[%s334 + $0xc8] sm:$0xff] %vm8386, %v8379
      %8413 = vst.msk [vmem:[%s334 + $0xd0] sm:$0xff] %vm8386, %v8380
      %8414 = vst.msk [vmem:[%s334 + $0xd8] sm:$0xff] %vm8386, %v8381
      %8415 = vst.msk [vmem:[%s334 + $0xe0] sm:$0xff] %vm8386, %v8382
      %8416 = vst.msk [vmem:[%s334 + $0xe8] sm:$0xff] %vm8386, %v8383
      %8417 = vst.msk [vmem:[%s334 + $0xf0] sm:$0xff] %vm8386, %v8384
      %8418 = vst.msk [vmem:[%s334 + $0xf8] sm:$0xff] %vm8386, %v8385
      %p8419 = scmp.lt.s32.totalorder %s22, 1
      %s8420 = scalar_select %p8419, %s22, 1
      %s8421 = smul.addr %s8420, 32
      %s8422 = smul.addr %s8421, 8
      %s8423 = scalar_lea.vmem %s9, %s8422
      // Predicated region
      $region57: #{wave_unet_forward.1} parent=55 // pred_check
        %p8424 = pneg %p234
      $region58: #{wave_unet_forward.1} parent=55 // pred_check_branch
        %8426 = sbr.rel (%p8424) target = $region60
      $region59: #{wave_unet_forward.1} parent=55 // pred_region
        _
      $region60: #{wave_unet_forward.1} parent=55 // pred_fallthru
        _
    $region56: #{wave_unet_forward.1} parent=5 // pred_fallthru
      _
    %p8427 = scmp.le.s32.totalorder 2, %s17
    // Predicated region
    $region61: #{wave_unet_forward.1} parent=5 // pred_check
      %p8428 = pneg %p8427
    $region62: #{wave_unet_forward.1} parent=5 // pred_check_branch
      %8430 = sbr.rel (%p8428) target = $region64
    $region63: #{wave_unet_forward.1} parent=5 // pred_region
      %s8431 = ssub.s32 %s17, 2
      // Predicated region
      $region65: #{wave_unet_forward.1} parent=63 // pred_check
        %p8432 = pneg %p240
      $region66: #{wave_unet_forward.1} parent=63 // pred_check_branch
        %8434 = sbr.rel (%p8432) target = $region68
      $region67: #{wave_unet_forward.1} parent=63 // pred_region
        %p8435 = scmp.lt.s32.totalorder %s23, 1
        %s8436 = scalar_select %p8435, %s23, 1
        %s8437 = smul.addr %s8436, 32
        %s8438 = smul.addr %s8437, 8
        %s8439 = scalar_lea.vmem %s9, %s8438
      $region68: #{wave_unet_forward.1} parent=63 // pred_fallthru
        _
    $region64: #{wave_unet_forward.1} parent=5 // pred_fallthru
      _
  $region6: #{wave_unet_forward.1} parent=0 // loop_footer
    %s21 = sadd.s32 1, %s17
  $region7: #{wave_unet_forward.1} parent=0 // loop_footer_branch
    %16 = sbr.rel target = $region3
  $region8: #{wave_unet_forward.1} parent=0 // loop_exit
    _

</llo_original>
